<compile_context>
chip_gen: v7x
topology: tpu7x:2x2x1
jax: 0.10.0
libtpu: 0.0.40
codegen_flags: <defaults>
</compile_context>

<pallas_src>
import functools

import numpy as np
import jax
import jax.numpy as jnp
from jax import lax
from jax.experimental import pallas as pl
from jax.experimental.pallas import tpu as pltpu


# ---------------------------------------------------------------------------
# Network geometry (CIFAR-10: c=3, h=w=32) -- single source of truth so the
# kernel's pool lane-group sizes and the folded-weight strides cannot drift.
# ---------------------------------------------------------------------------
_H = 32                 # input height / width
_C_IN = 3               # input channels
_LANE_IN = 128          # 32*3 = 96 input lanes, padded to a full lane group
_C1, _C2, _C3, _C4 = 4, 8, 16, 32          # conv output channels
_POOL1_STRIDE = 2 * _C2                    # lane stride of conv3's input (16)
_POOL2_STRIDE = 2 * _C4                    # lane stride folded into fc1 (64)
_LATENT = 100
_LATENT_PAD = 128       # lane-dense output width


# ---------------------------------------------------------------------------
# Fused encoder kernel factory (B_TILE images per grid step)
# ---------------------------------------------------------------------------
def _make_encoder_kernel(bt):
    r0 = 32 * bt          # stacked input rows (stride 32 per image)
    r1 = r0 - 2           # conv1 output rows
    r2 = r0 - 4           # conv2 output rows
    p1_rows = 16 * bt     # pooled-1 rows (stride 16 per image)
    r3 = p1_rows - 2      # conv3 output rows
    r4 = p1_rows - 4      # conv4 output rows

    def kernel(x_ref, sel1_ref, sel2_ref,
               w1_ref, b1_ref, w2_ref, b2_ref,
               w3_ref, b3_ref, w4_ref, b4_ref,
               wf1_ref, bf1_ref, wf2_ref, bf2_ref,
               wf3_ref, bf3_ref, wf4_ref, bf4_ref,
               o_ref):

        def conv_relu(a, w_ref, b_ref, rows_out):
            # Valid 3x3 conv as 3 banded matmuls over shifted row windows.
            # Image-boundary output rows are garbage and are never read.
            a16 = a.astype(jnp.bfloat16)
            acc = jnp.dot(a16[0:rows_out, :], w_ref[0],
                          preferred_element_type=jnp.float32)
            for di in (1, 2):
                acc = acc + jnp.dot(a16[di:di + rows_out, :], w_ref[di],
                                    preferred_element_type=jnp.float32)
            return jnp.maximum(acc + b_ref[...], 0.0)

        def pool2x2(a, c, sel_ref):
            # MaxPool2d(2): adjacent-row max + adjacent-channel-block max,
            # then a 0/1 bf16 selector matmul picks the even rows (and, for
            # pool2, regroups rows as (spatial_row, image)).  Exactly one
            # nonzero per selector row -> selected values are exact.
            rows, lanes = a.shape
            m = jnp.maximum(a[:rows - 1, :], a[1:rows, :])
            m = jnp.maximum(m[:, :lanes - c], m[:, c:lanes])
            return jnp.dot(sel_ref[...], m.astype(jnp.bfloat16),
                           preferred_element_type=jnp.float32)

        x = x_ref[...]                                   # (32*bt, 128) bf16
        a1 = conv_relu(x, w1_ref, b1_ref, r1)            # (r1, 120)
        a2 = conv_relu(a1, w2_ref, b2_ref, r2)           # (r2, 224)
        p1 = pool2x2(a2, _C2, sel1_ref)                  # (16*bt, 216) lane-sparse
        a3 = conv_relu(p1, w3_ref, b3_ref, r3)           # (r3, 192)
        a4 = conv_relu(a3, w4_ref, b4_ref, r4)           # (r4, 320)
        p2 = pool2x2(a4, _C4, sel2_ref)                  # (5*bt, 288), row = q*bt + b

        # fc1: NCHW-flatten permutation + pool-lane sparsity folded into wf1.
        # p2 rows are grouped by spatial row q, so each term is a static,
        # contiguous (bt, 288) slice -- fc runs with M = bt.
        p2_16 = p2.astype(jnp.bfloat16)
        z = jnp.dot(p2_16[0:bt, :], wf1_ref[0],
                    preferred_element_type=jnp.float32)
        for q in (1, 2, 3, 4):
            z = z + jnp.dot(p2_16[q * bt:(q + 1) * bt, :], wf1_ref[q],
                            preferred_element_type=jnp.float32)
        z = jnp.maximum(z + bf1_ref[...], 0.0)                                # (bt, 512)
        z = jnp.maximum(jnp.dot(z.astype(jnp.bfloat16), wf2_ref[...],
                                preferred_element_type=jnp.float32)
                        + bf2_ref[...], 0.0)                                  # (bt, 256)
        z = jnp.maximum(jnp.dot(z.astype(jnp.bfloat16), wf3_ref[...],
                                preferred_element_type=jnp.float32)
                        + bf3_ref[...], 0.0)                                  # (bt, 128)
        z = jnp.tanh(jnp.dot(z, wf4_ref[...],            # f32 matmul (tiny, tanh input)
                             preferred_element_type=jnp.float32)
                     + bf4_ref[...])                                          # (bt, 128)
        o_ref[...] = z.astype(o_ref.dtype)

    return kernel


# ---------------------------------------------------------------------------
# Host-side weight / selector preparation (done once, outside the kernel)
# ---------------------------------------------------------------------------
def _banded_conv_weight(w_oihw, w_in, stride_in, k_pad=None):
    """(Cout,Cin,3,3) -> (3, K, (w_in-2)*Cout) banded matrix.

    Input lane layout: lane = j_in*stride_in + ci (stride_in >= Cin supports
    the un-compacted post-pool layout).  Output lane layout: j_out*Cout + co.
    """
    w_ = np.asarray(w_oihw, np.float32)
    cout, cin, kh, kw = w_.shape
    assert stride_in >= cin
    w_out = w_in - (kw - 1)
    l_in = (w_in - 1) * stride_in + cin
    k_dim = l_in if k_pad is None else k_pad
    assert k_dim >= l_in
    W = np.zeros((kh, k_dim, w_out * cout), np.float32)
    for di in range(kh):
        for dj in range(kw):
            blk = w_[:, :, di, dj].T                       # (cin, cout)
            for j in range(w_out):
                r0 = (j + dj) * stride_in
                W[di, r0:r0 + cin, j * cout:(j + 1) * cout] = blk
    return W


def _fc1_folded(w_fc1, h_sp=5, w_sp=5, cin=_C4, stride=_POOL2_STRIDE):
    """Fold NCHW flatten + pool2 lane sparsity into fc1's weight: (5, 288, 512)."""
    w_ = np.asarray(w_fc1, np.float32)                     # (512, 800)
    fout = w_.shape[0]
    w4 = w_.reshape(fout, cin, h_sp, w_sp)                 # (out, c, h, w)
    l_in = (w_sp - 1) * stride + cin                       # 288
    W = np.zeros((h_sp, l_in, fout), np.float32)
    for hh in range(h_sp):
        for ww in range(w_sp):
            W[hh, ww * stride:ww * stride + cin, :] = w4[:, :, hh, ww].T
    return W


def _tiled_bias(b, reps):
    return np.tile(np.asarray(b, np.float32), reps).reshape(1, -1)


def _pool_selectors(bt):
    """0/1 bf16 row selectors for the two max-pools, block-diagonal over bt images."""
    # pool1: m1 has 32*bt-5 rows; output row b*16 + q picks m1 row b*32 + 2q.
    sel1 = np.zeros((16 * bt, 32 * bt - 5), np.float32)
    for b in range(bt):
        for q in range(14):
            sel1[b * 16 + q, b * 32 + 2 * q] = 1.0
    # pool2: m2 has 16*bt-5 rows; output row q*bt + b picks m2 row b*16 + 2q
    # (rows regrouped by spatial row so fc1 uses contiguous slices).
    sel2 = np.zeros((5 * bt, 16 * bt - 5), np.float32)
    for b in range(bt):
        for q in range(5):
            sel2[q * bt + b, b * 16 + 2 * q] = 1.0
    return jnp.asarray(sel1, jnp.bfloat16), jnp.asarray(sel2, jnp.bfloat16)


def prep_params(params):
    (w1, b1) = params["conv1"]; (w2, b2) = params["conv2"]
    (w3, b3) = params["conv3"]; (w4, b4) = params["conv4"]
    (f1w, f1b) = params["fc1"]; (f2w, f2b) = params["fc2"]
    (f3w, f3b) = params["fc3"]; (f4w, f4b) = params["fc4"]
    raw = {
        "w1": _banded_conv_weight(w1, 32, _C_IN, k_pad=_LANE_IN),   # (3,128,120)
        "b1": _tiled_bias(b1, 30),
        "w2": _banded_conv_weight(w2, 30, _C1),                     # (3,120,224)
        "b2": _tiled_bias(b2, 28),
        "w3": _banded_conv_weight(w3, 14, _POOL1_STRIDE),           # (3,216,192)
        "b3": _tiled_bias(b3, 12),
        "w4": _banded_conv_weight(w4, 12, _POOL1_STRIDE),           # (3,192,320)
        "b4": _tiled_bias(b4, 10),
        "wf1": _fc1_folded(f1w),                                    # (5,288,512)
        "bf1": np.asarray(f1b, np.float32).reshape(1, -1),
        "wf2": np.asarray(f2w, np.float32).T,                       # (512,256)
        "bf2": np.asarray(f2b, np.float32).reshape(1, -1),
        "wf3": np.asarray(f3w, np.float32).T,                       # (256,128)
        "bf3": np.asarray(f3b, np.float32).reshape(1, -1),
        # fc4 kept f32 and lane-padded 100 -> 128 (tanh(0)=0 in the pad lanes).
        "wf4": np.pad(np.asarray(f4w, np.float32).T,
                      ((0, 0), (0, _LATENT_PAD - _LATENT))),        # (128,128)
        "bf4": np.pad(np.asarray(f4b, np.float32).reshape(1, -1),
                      ((0, 0), (0, _LATENT_PAD - _LATENT))),
    }
    bf16_keys = ("w1", "w2", "w3", "w4", "wf1", "wf2", "wf3")
    return {k: jnp.asarray(v, jnp.bfloat16 if k in bf16_keys else jnp.float32)
            for k, v in raw.items()}


# ---------------------------------------------------------------------------
# Forward pass
# ---------------------------------------------------------------------------
_WEIGHT_ORDER = ["w1", "b1", "w2", "b2", "w3", "b3", "w4", "b4",
                 "wf1", "bf1", "wf2", "bf2", "wf3", "bf3", "wf4", "bf4"]


@functools.partial(jax.jit, static_argnames=("b_tile",))
def encoder_forward(prepped, x_nchw, b_tile=8):
    n = x_nchw.shape[0]
    n_pad = -(-n // b_tile) * b_tile                       # pad batch to B_TILE multiple
    x = x_nchw.astype(jnp.float32)
    if n_pad != n:
        x = jnp.pad(x, ((0, n_pad - n), (0, 0), (0, 0), (0, 0)))
    # NCHW -> NHWC -> (N,32,96) -> pad lanes to 128 -> bf16 -> stack images along rows.
    x = jnp.transpose(x, (0, 2, 3, 1)).reshape(n_pad, _H, _H * _C_IN)
    x = jnp.pad(x, ((0, 0), (0, 0), (0, _LANE_IN - _H * _C_IN)))
    x = x.reshape(n_pad * _H, _LANE_IN).astype(jnp.bfloat16)

    sel1, sel2 = _pool_selectors(b_tile)
    consts = [sel1, sel2] + [prepped[k] for k in _WEIGHT_ORDER]

    def _const_spec(arr):
        nd = arr.ndim
        return pl.BlockSpec(arr.shape, lambda i, nd=nd: (0,) * nd)

    out = pl.pallas_call(
        _make_encoder_kernel(b_tile),
        out_shape=jax.ShapeDtypeStruct((n_pad, _LATENT_PAD), jnp.float32),
        grid=(n_pad // b_tile,),
        in_specs=[pl.BlockSpec((_H * b_tile, _LANE_IN), lambda i: (i, 0))]
                 + [_const_spec(a) for a in consts],
        out_specs=pl.BlockSpec((b_tile, _LATENT_PAD), lambda i: (i, 0)),
        compiler_params=pltpu.CompilerParams(
            dimension_semantics=("parallel",),
            vmem_limit_bytes=32 * 1024 * 1024),
    )(x, *consts)
    return out[:n, :_LATENT]


# ---------------------------------------------------------------------------
# Parameter init (PyTorch default uniform fan-in init) + plain-JAX reference
# ---------------------------------------------------------------------------
def init_params(key, c=3, latent=100):
    def conv_p(k, cin, cout):
        k1, k2 = jax.random.split(k)
        bound = 1.0 / float(np.sqrt(cin * 9.0))
        w = jax.random.uniform(k1, (cout, cin, 3, 3), jnp.float32, -bound, bound)
        b = jax.random.uniform(k2, (cout,), jnp.float32, -bound, bound)
        return w, b

    def lin_p(k, fin, fout):
        k1, k2 = jax.random.split(k)
        bound = 1.0 / float(np.sqrt(fin))
        w = jax.random.uniform(k1, (fout, fin), jnp.float32, -bound, bound)
        b = jax.random.uniform(k2, (fout,), jnp.float32, -bound, bound)
        return w, b

    ks = jax.random.split(key, 8)
    return {"conv1": conv_p(ks[0], c, _C1), "conv2": conv_p(ks[1], _C1, _C2),
            "conv3": conv_p(ks[2], _C2, _C3), "conv4": conv_p(ks[3], _C3, _C4),
            "fc1": lin_p(ks[4], 800, 512), "fc2": lin_p(ks[5], 512, 256),
            "fc3": lin_p(ks[6], 256, 128), "fc4": lin_p(ks[7], 128, latent)}


def encoder_reference(params, x_nchw):
    x = x_nchw.astype(jnp.float32)

    def conv(x, w, b):
        y = lax.conv_general_dilated(x, w, (1, 1), "VALID",
                                     dimension_numbers=("NCHW", "OIHW", "NCHW"))
        return jax.nn.relu(y + b.reshape(1, -1, 1, 1))

    def pool(x):
        return lax.reduce_window(x, -jnp.inf, lax.max,
                                 (1, 1, 2, 2), (1, 1, 2, 2), "VALID")

    x = conv(x, *params["conv1"]); x = conv(x, *params["conv2"]); x = pool(x)
    x = conv(x, *params["conv3"]); x = conv(x, *params["conv4"]); x = pool(x)
    x = x.reshape(x.shape[0], -1)
    w, b = params["fc1"]; x = jax.nn.relu(x @ w.T + b)
    w, b = params["fc2"]; x = jax.nn.relu(x @ w.T + b)
    w, b = params["fc3"]; x = jax.nn.relu(x @ w.T + b)
    w, b = params["fc4"]; x = jnp.tanh(x @ w.T + b)
    return x


if __name__ == "__main__":
    key = jax.random.PRNGKey(0)
    pkey, xkey = jax.random.split(key)
    params = init_params(pkey, c=3, latent=100)
    prepped = prep_params(params)
    # batch=10 with B_TILE=8 exercises batch padding AND a 2-step parallel grid.
    x = jax.random.normal(xkey, (10, 3, 32, 32), dtype=jnp.float32)

    out = jax.block_until_ready(encoder_forward(prepped, x, b_tile=8))

    assert out.shape == (10, 100), out.shape
    assert bool(jnp.all(jnp.isfinite(out)))
    assert bool(jnp.all(jnp.abs(out) <= 1.0 + 1e-6))  # tanh range

    ref = jax.block_until_ready(jax.jit(encoder_reference)(params, x))
    max_err = float(jnp.max(jnp.abs(out - ref)))
    assert max_err < 5e-2, f"kernel vs reference mismatch: {max_err}"
    print("KERNEL_OK")
</pallas_src>

<mosaic_0001>
module attributes {stable_mosaic.version = 11 : i64} {
  func.func @kernel(%arg0: i32, %arg1: memref<256x128xbf16, #tpu.memory_space<vmem>>, %arg2: memref<128x251xbf16, #tpu.memory_space<vmem>>, %arg3: memref<40x123xbf16, #tpu.memory_space<vmem>>, %arg4: memref<3x128x120xbf16, #tpu.memory_space<vmem>>, %arg5: memref<1x120xf32, #tpu.memory_space<vmem>>, %arg6: memref<3x120x224xbf16, #tpu.memory_space<vmem>>, %arg7: memref<1x224xf32, #tpu.memory_space<vmem>>, %arg8: memref<3x216x192xbf16, #tpu.memory_space<vmem>>, %arg9: memref<1x192xf32, #tpu.memory_space<vmem>>, %arg10: memref<3x192x320xbf16, #tpu.memory_space<vmem>>, %arg11: memref<1x320xf32, #tpu.memory_space<vmem>>, %arg12: memref<5x288x512xbf16, #tpu.memory_space<vmem>>, %arg13: memref<1x512xf32, #tpu.memory_space<vmem>>, %arg14: memref<512x256xbf16, #tpu.memory_space<vmem>>, %arg15: memref<1x256xf32, #tpu.memory_space<vmem>>, %arg16: memref<256x128xbf16, #tpu.memory_space<vmem>>, %arg17: memref<1x128xf32, #tpu.memory_space<vmem>>, %arg18: memref<128x128xf32, #tpu.memory_space<vmem>>, %arg19: memref<1x128xf32, #tpu.memory_space<vmem>>, %arg20: memref<8x128xf32, #tpu.memory_space<vmem>>) attributes {dimension_semantics = [#tpu.dimension_semantics<parallel>], iteration_bounds = array<i64: 2>, scalar_prefetch = 0 : i64, scratch_operands = 0 : i64, tpu.core_type = #tpu.core_type<tc>, window_params = [{transform_indices = @transform_0, window_bounds = array<i64: 256, 128>}, {pipeline_mode = #tpu.pipeline_mode<synchronous>, transform_indices = @transform_1, window_bounds = array<i64: 128, 251>}, {pipeline_mode = #tpu.pipeline_mode<synchronous>, transform_indices = @transform_2, window_bounds = array<i64: 40, 123>}, {pipeline_mode = #tpu.pipeline_mode<synchronous>, transform_indices = @transform_3, window_bounds = array<i64: 3, 128, 120>}, {pipeline_mode = #tpu.pipeline_mode<synchronous>, transform_indices = @transform_4, window_bounds = array<i64: 1, 120>}, {pipeline_mode = #tpu.pipeline_mode<synchronous>, transform_indices = @transform_5, window_bounds = array<i64: 3, 120, 224>}, {pipeline_mode = #tpu.pipeline_mode<synchronous>, transform_indices = @transform_6, window_bounds = array<i64: 1, 224>}, {pipeline_mode = #tpu.pipeline_mode<synchronous>, transform_indices = @transform_7, window_bounds = array<i64: 3, 216, 192>}, {pipeline_mode = #tpu.pipeline_mode<synchronous>, transform_indices = @transform_8, window_bounds = array<i64: 1, 192>}, {pipeline_mode = #tpu.pipeline_mode<synchronous>, transform_indices = @transform_9, window_bounds = array<i64: 3, 192, 320>}, {pipeline_mode = #tpu.pipeline_mode<synchronous>, transform_indices = @transform_10, window_bounds = array<i64: 1, 320>}, {pipeline_mode = #tpu.pipeline_mode<synchronous>, transform_indices = @transform_11, window_bounds = array<i64: 5, 288, 512>}, {pipeline_mode = #tpu.pipeline_mode<synchronous>, transform_indices = @transform_12, window_bounds = array<i64: 1, 512>}, {pipeline_mode = #tpu.pipeline_mode<synchronous>, transform_indices = @transform_13, window_bounds = array<i64: 512, 256>}, {pipeline_mode = #tpu.pipeline_mode<synchronous>, transform_indices = @transform_14, window_bounds = array<i64: 1, 256>}, {pipeline_mode = #tpu.pipeline_mode<synchronous>, transform_indices = @transform_15, window_bounds = array<i64: 256, 128>}, {pipeline_mode = #tpu.pipeline_mode<synchronous>, transform_indices = @transform_16, window_bounds = array<i64: 1, 128>}, {pipeline_mode = #tpu.pipeline_mode<synchronous>, transform_indices = @transform_17, window_bounds = array<i64: 128, 128>}, {pipeline_mode = #tpu.pipeline_mode<synchronous>, transform_indices = @transform_18, window_bounds = array<i64: 1, 128>}, {transform_indices = @transform_19, window_bounds = array<i64: 8, 128>}]} {
    %c0 = arith.constant 0 : index
    %c0_0 = arith.constant 0 : index
    %0 = vector.load %arg1[%c0, %c0_0] : memref<256x128xbf16, #tpu.memory_space<vmem>>, vector<256x128xbf16>
    %1 = vector.extract_strided_slice %0 {offsets = [0, 0], sizes = [254, 128], strides = [1, 1]} : vector<256x128xbf16> to vector<254x128xbf16>
    %c0_1 = arith.constant 0 : index
    %c0_2 = arith.constant 0 : index
    %c0_3 = arith.constant 0 : index
    %2 = vector.load %arg4[%c0_1, %c0_2, %c0_3] : memref<3x128x120xbf16, #tpu.memory_space<vmem>>, vector<1x128x120xbf16>
    %3 = vector.shape_cast %2 : vector<1x128x120xbf16> to vector<128x120xbf16>
    %cst = arith.constant dense<0.000000e+00> : vector<254x120xf32>
    %4 = tpu.matmul %1, %3, %cst {dimension_numbers = #tpu.dot_dimension_numbers<[1], [0], [0], [1], [0, 0, 1, 1], [], []>} : vector<254x128xbf16>, vector<128x120xbf16>, vector<254x120xf32> -> vector<254x120xf32>
    %5 = vector.extract_strided_slice %0 {offsets = [1, 0], sizes = [254, 128], strides = [1, 1]} : vector<256x128xbf16> to vector<254x128xbf16>
    %c1 = arith.constant 1 : index
    %c0_4 = arith.constant 0 : index
    %c0_5 = arith.constant 0 : index
    %6 = vector.load %arg4[%c1, %c0_4, %c0_5] : memref<3x128x120xbf16, #tpu.memory_space<vmem>>, vector<1x128x120xbf16>
    %7 = vector.shape_cast %6 : vector<1x128x120xbf16> to vector<128x120xbf16>
    %cst_6 = arith.constant dense<0.000000e+00> : vector<254x120xf32>
    %8 = tpu.matmul %5, %7, %cst_6 {dimension_numbers = #tpu.dot_dimension_numbers<[1], [0], [0], [1], [0, 0, 1, 1], [], []>} : vector<254x128xbf16>, vector<128x120xbf16>, vector<254x120xf32> -> vector<254x120xf32>
    %9 = arith.addf %4, %8 : vector<254x120xf32>
    %10 = vector.extract_strided_slice %0 {offsets = [2, 0], sizes = [254, 128], strides = [1, 1]} : vector<256x128xbf16> to vector<254x128xbf16>
    %c2 = arith.constant 2 : index
    %c0_7 = arith.constant 0 : index
    %c0_8 = arith.constant 0 : index
    %11 = vector.load %arg4[%c2, %c0_7, %c0_8] : memref<3x128x120xbf16, #tpu.memory_space<vmem>>, vector<1x128x120xbf16>
    %12 = vector.shape_cast %11 : vector<1x128x120xbf16> to vector<128x120xbf16>
    %cst_9 = arith.constant dense<0.000000e+00> : vector<254x120xf32>
    %13 = tpu.matmul %10, %12, %cst_9 {dimension_numbers = #tpu.dot_dimension_numbers<[1], [0], [0], [1], [0, 0, 1, 1], [], []>} : vector<254x128xbf16>, vector<128x120xbf16>, vector<254x120xf32> -> vector<254x120xf32>
    %14 = arith.addf %9, %13 : vector<254x120xf32>
    %c0_10 = arith.constant 0 : index
    %c0_11 = arith.constant 0 : index
    %15 = vector.load %arg5[%c0_10, %c0_11] : memref<1x120xf32, #tpu.memory_space<vmem>>, vector<1x120xf32>
    %16 = vector.broadcast %15 : vector<1x120xf32> to vector<254x120xf32>
    %17 = arith.addf %14, %16 : vector<254x120xf32>
    %cst_12 = arith.constant 0.000000e+00 : f32
    %18 = vector.broadcast %cst_12 : f32 to vector<254x120xf32>
    %19 = arith.maximumf %17, %18 : vector<254x120xf32>
    %20 = arith.truncf %19 : vector<254x120xf32> to vector<254x120xbf16>
    %21 = vector.extract_strided_slice %20 {offsets = [0, 0], sizes = [252, 120], strides = [1, 1]} : vector<254x120xbf16> to vector<252x120xbf16>
    %c0_13 = arith.constant 0 : index
    %c0_14 = arith.constant 0 : index
    %c0_15 = arith.constant 0 : index
    %22 = vector.load %arg6[%c0_13, %c0_14, %c0_15] : memref<3x120x224xbf16, #tpu.memory_space<vmem>>, vector<1x120x224xbf16>
    %23 = vector.shape_cast %22 : vector<1x120x224xbf16> to vector<120x224xbf16>
    %cst_16 = arith.constant dense<0.000000e+00> : vector<252x224xf32>
    %24 = tpu.matmul %21, %23, %cst_16 {dimension_numbers = #tpu.dot_dimension_numbers<[1], [0], [0], [1], [0, 0, 1, 1], [], []>} : vector<252x120xbf16>, vector<120x224xbf16>, vector<252x224xf32> -> vector<252x224xf32>
    %25 = vector.extract_strided_slice %20 {offsets = [1, 0], sizes = [252, 120], strides = [1, 1]} : vector<254x120xbf16> to vector<252x120xbf16>
    %c1_17 = arith.constant 1 : index
    %c0_18 = arith.constant 0 : index
    %c0_19 = arith.constant 0 : index
    %26 = vector.load %arg6[%c1_17, %c0_18, %c0_19] : memref<3x120x224xbf16, #tpu.memory_space<vmem>>, vector<1x120x224xbf16>
    %27 = vector.shape_cast %26 : vector<1x120x224xbf16> to vector<120x224xbf16>
    %cst_20 = arith.constant dense<0.000000e+00> : vector<252x224xf32>
    %28 = tpu.matmul %25, %27, %cst_20 {dimension_numbers = #tpu.dot_dimension_numbers<[1], [0], [0], [1], [0, 0, 1, 1], [], []>} : vector<252x120xbf16>, vector<120x224xbf16>, vector<252x224xf32> -> vector<252x224xf32>
    %29 = arith.addf %24, %28 : vector<252x224xf32>
    %30 = vector.extract_strided_slice %20 {offsets = [2, 0], sizes = [252, 120], strides = [1, 1]} : vector<254x120xbf16> to vector<252x120xbf16>
    %c2_21 = arith.constant 2 : index
    %c0_22 = arith.constant 0 : index
    %c0_23 = arith.constant 0 : index
    %31 = vector.load %arg6[%c2_21, %c0_22, %c0_23] : memref<3x120x224xbf16, #tpu.memory_space<vmem>>, vector<1x120x224xbf16>
    %32 = vector.shape_cast %31 : vector<1x120x224xbf16> to vector<120x224xbf16>
    %cst_24 = arith.constant dense<0.000000e+00> : vector<252x224xf32>
    %33 = tpu.matmul %30, %32, %cst_24 {dimension_numbers = #tpu.dot_dimension_numbers<[1], [0], [0], [1], [0, 0, 1, 1], [], []>} : vector<252x120xbf16>, vector<120x224xbf16>, vector<252x224xf32> -> vector<252x224xf32>
    %34 = arith.addf %29, %33 : vector<252x224xf32>
    %c0_25 = arith.constant 0 : index
    %c0_26 = arith.constant 0 : index
    %35 = vector.load %arg7[%c0_25, %c0_26] : memref<1x224xf32, #tpu.memory_space<vmem>>, vector<1x224xf32>
    %36 = vector.broadcast %35 : vector<1x224xf32> to vector<252x224xf32>
    %37 = arith.addf %34, %36 : vector<252x224xf32>
    %cst_27 = arith.constant 0.000000e+00 : f32
    %38 = vector.broadcast %cst_27 : f32 to vector<252x224xf32>
    %39 = arith.maximumf %37, %38 : vector<252x224xf32>
    %40 = vector.extract_strided_slice %39 {offsets = [0, 0], sizes = [251, 224], strides = [1, 1]} : vector<252x224xf32> to vector<251x224xf32>
    %41 = vector.extract_strided_slice %39 {offsets = [1, 0], sizes = [251, 224], strides = [1, 1]} : vector<252x224xf32> to vector<251x224xf32>
    %42 = arith.maximumf %40, %41 : vector<251x224xf32>
    %43 = vector.extract_strided_slice %42 {offsets = [0, 0], sizes = [251, 216], strides = [1, 1]} : vector<251x224xf32> to vector<251x216xf32>
    %44 = vector.extract_strided_slice %42 {offsets = [0, 8], sizes = [251, 216], strides = [1, 1]} : vector<251x224xf32> to vector<251x216xf32>
    %45 = arith.maximumf %43, %44 : vector<251x216xf32>
    %c0_28 = arith.constant 0 : index
    %c0_29 = arith.constant 0 : index
    %46 = vector.load %arg2[%c0_28, %c0_29] : memref<128x251xbf16, #tpu.memory_space<vmem>>, vector<128x251xbf16>
    %47 = arith.truncf %45 : vector<251x216xf32> to vector<251x216xbf16>
    %cst_30 = arith.constant dense<0.000000e+00> : vector<128x216xf32>
    %48 = tpu.matmul %46, %47, %cst_30 {dimension_numbers = #tpu.dot_dimension_numbers<[1], [0], [0], [1], [0, 0, 1, 1], [], []>} : vector<128x251xbf16>, vector<251x216xbf16>, vector<128x216xf32> -> vector<128x216xf32>
    %49 = arith.truncf %48 : vector<128x216xf32> to vector<128x216xbf16>
    %50 = vector.extract_strided_slice %49 {offsets = [0, 0], sizes = [126, 216], strides = [1, 1]} : vector<128x216xbf16> to vector<126x216xbf16>
    %c0_31 = arith.constant 0 : index
    %c0_32 = arith.constant 0 : index
    %c0_33 = arith.constant 0 : index
    %51 = vector.load %arg8[%c0_31, %c0_32, %c0_33] : memref<3x216x192xbf16, #tpu.memory_space<vmem>>, vector<1x216x192xbf16>
    %52 = vector.shape_cast %51 : vector<1x216x192xbf16> to vector<216x192xbf16>
    %cst_34 = arith.constant dense<0.000000e+00> : vector<126x192xf32>
    %53 = tpu.matmul %50, %52, %cst_34 {dimension_numbers = #tpu.dot_dimension_numbers<[1], [0], [0], [1], [0, 0, 1, 1], [], []>} : vector<126x216xbf16>, vector<216x192xbf16>, vector<126x192xf32> -> vector<126x192xf32>
    %54 = vector.extract_strided_slice %49 {offsets = [1, 0], sizes = [126, 216], strides = [1, 1]} : vector<128x216xbf16> to vector<126x216xbf16>
    %c1_35 = arith.constant 1 : index
    %c0_36 = arith.constant 0 : index
    %c0_37 = arith.constant 0 : index
    %55 = vector.load %arg8[%c1_35, %c0_36, %c0_37] : memref<3x216x192xbf16, #tpu.memory_space<vmem>>, vector<1x216x192xbf16>
    %56 = vector.shape_cast %55 : vector<1x216x192xbf16> to vector<216x192xbf16>
    %cst_38 = arith.constant dense<0.000000e+00> : vector<126x192xf32>
    %57 = tpu.matmul %54, %56, %cst_38 {dimension_numbers = #tpu.dot_dimension_numbers<[1], [0], [0], [1], [0, 0, 1, 1], [], []>} : vector<126x216xbf16>, vector<216x192xbf16>, vector<126x192xf32> -> vector<126x192xf32>
    %58 = arith.addf %53, %57 : vector<126x192xf32>
    %59 = vector.extract_strided_slice %49 {offsets = [2, 0], sizes = [126, 216], strides = [1, 1]} : vector<128x216xbf16> to vector<126x216xbf16>
    %c2_39 = arith.constant 2 : index
    %c0_40 = arith.constant 0 : index
    %c0_41 = arith.constant 0 : index
    %60 = vector.load %arg8[%c2_39, %c0_40, %c0_41] : memref<3x216x192xbf16, #tpu.memory_space<vmem>>, vector<1x216x192xbf16>
    %61 = vector.shape_cast %60 : vector<1x216x192xbf16> to vector<216x192xbf16>
    %cst_42 = arith.constant dense<0.000000e+00> : vector<126x192xf32>
    %62 = tpu.matmul %59, %61, %cst_42 {dimension_numbers = #tpu.dot_dimension_numbers<[1], [0], [0], [1], [0, 0, 1, 1], [], []>} : vector<126x216xbf16>, vector<216x192xbf16>, vector<126x192xf32> -> vector<126x192xf32>
    %63 = arith.addf %58, %62 : vector<126x192xf32>
    %c0_43 = arith.constant 0 : index
    %c0_44 = arith.constant 0 : index
    %64 = vector.load %arg9[%c0_43, %c0_44] : memref<1x192xf32, #tpu.memory_space<vmem>>, vector<1x192xf32>
    %65 = vector.broadcast %64 : vector<1x192xf32> to vector<126x192xf32>
    %66 = arith.addf %63, %65 : vector<126x192xf32>
    %cst_45 = arith.constant 0.000000e+00 : f32
    %67 = vector.broadcast %cst_45 : f32 to vector<126x192xf32>
    %68 = arith.maximumf %66, %67 : vector<126x192xf32>
    %69 = arith.truncf %68 : vector<126x192xf32> to vector<126x192xbf16>
    %70 = vector.extract_strided_slice %69 {offsets = [0, 0], sizes = [124, 192], strides = [1, 1]} : vector<126x192xbf16> to vector<124x192xbf16>
    %c0_46 = arith.constant 0 : index
    %c0_47 = arith.constant 0 : index
    %c0_48 = arith.constant 0 : index
    %71 = vector.load %arg10[%c0_46, %c0_47, %c0_48] : memref<3x192x320xbf16, #tpu.memory_space<vmem>>, vector<1x192x320xbf16>
    %72 = vector.shape_cast %71 : vector<1x192x320xbf16> to vector<192x320xbf16>
    %cst_49 = arith.constant dense<0.000000e+00> : vector<124x320xf32>
    %73 = tpu.matmul %70, %72, %cst_49 {dimension_numbers = #tpu.dot_dimension_numbers<[1], [0], [0], [1], [0, 0, 1, 1], [], []>} : vector<124x192xbf16>, vector<192x320xbf16>, vector<124x320xf32> -> vector<124x320xf32>
    %74 = vector.extract_strided_slice %69 {offsets = [1, 0], sizes = [124, 192], strides = [1, 1]} : vector<126x192xbf16> to vector<124x192xbf16>
    %c1_50 = arith.constant 1 : index
    %c0_51 = arith.constant 0 : index
    %c0_52 = arith.constant 0 : index
    %75 = vector.load %arg10[%c1_50, %c0_51, %c0_52] : memref<3x192x320xbf16, #tpu.memory_space<vmem>>, vector<1x192x320xbf16>
    %76 = vector.shape_cast %75 : vector<1x192x320xbf16> to vector<192x320xbf16>
    %cst_53 = arith.constant dense<0.000000e+00> : vector<124x320xf32>
    %77 = tpu.matmul %74, %76, %cst_53 {dimension_numbers = #tpu.dot_dimension_numbers<[1], [0], [0], [1], [0, 0, 1, 1], [], []>} : vector<124x192xbf16>, vector<192x320xbf16>, vector<124x320xf32> -> vector<124x320xf32>
    %78 = arith.addf %73, %77 : vector<124x320xf32>
    %79 = vector.extract_strided_slice %69 {offsets = [2, 0], sizes = [124, 192], strides = [1, 1]} : vector<126x192xbf16> to vector<124x192xbf16>
    %c2_54 = arith.constant 2 : index
    %c0_55 = arith.constant 0 : index
    %c0_56 = arith.constant 0 : index
    %80 = vector.load %arg10[%c2_54, %c0_55, %c0_56] : memref<3x192x320xbf16, #tpu.memory_space<vmem>>, vector<1x192x320xbf16>
    %81 = vector.shape_cast %80 : vector<1x192x320xbf16> to vector<192x320xbf16>
    %cst_57 = arith.constant dense<0.000000e+00> : vector<124x320xf32>
    %82 = tpu.matmul %79, %81, %cst_57 {dimension_numbers = #tpu.dot_dimension_numbers<[1], [0], [0], [1], [0, 0, 1, 1], [], []>} : vector<124x192xbf16>, vector<192x320xbf16>, vector<124x320xf32> -> vector<124x320xf32>
    %83 = arith.addf %78, %82 : vector<124x320xf32>
    %c0_58 = arith.constant 0 : index
    %c0_59 = arith.constant 0 : index
    %84 = vector.load %arg11[%c0_58, %c0_59] : memref<1x320xf32, #tpu.memory_space<vmem>>, vector<1x320xf32>
    %85 = vector.broadcast %84 : vector<1x320xf32> to vector<124x320xf32>
    %86 = arith.addf %83, %85 : vector<124x320xf32>
    %cst_60 = arith.constant 0.000000e+00 : f32
    %87 = vector.broadcast %cst_60 : f32 to vector<124x320xf32>
    %88 = arith.maximumf %86, %87 : vector<124x320xf32>
    %89 = vector.extract_strided_slice %88 {offsets = [0, 0], sizes = [123, 320], strides = [1, 1]} : vector<124x320xf32> to vector<123x320xf32>
    %90 = vector.extract_strided_slice %88 {offsets = [1, 0], sizes = [123, 320], strides = [1, 1]} : vector<124x320xf32> to vector<123x320xf32>
    %91 = arith.maximumf %89, %90 : vector<123x320xf32>
    %92 = vector.extract_strided_slice %91 {offsets = [0, 0], sizes = [123, 288], strides = [1, 1]} : vector<123x320xf32> to vector<123x288xf32>
    %93 = vector.extract_strided_slice %91 {offsets = [0, 32], sizes = [123, 288], strides = [1, 1]} : vector<123x320xf32> to vector<123x288xf32>
    %94 = arith.maximumf %92, %93 : vector<123x288xf32>
    %c0_61 = arith.constant 0 : index
    %c0_62 = arith.constant 0 : index
    %95 = vector.load %arg3[%c0_61, %c0_62] : memref<40x123xbf16, #tpu.memory_space<vmem>>, vector<40x123xbf16>
    %96 = arith.truncf %94 : vector<123x288xf32> to vector<123x288xbf16>
    %cst_63 = arith.constant dense<0.000000e+00> : vector<40x288xf32>
    %97 = tpu.matmul %95, %96, %cst_63 {dimension_numbers = #tpu.dot_dimension_numbers<[1], [0], [0], [1], [0, 0, 1, 1], [], []>} : vector<40x123xbf16>, vector<123x288xbf16>, vector<40x288xf32> -> vector<40x288xf32>
    %98 = arith.truncf %97 : vector<40x288xf32> to vector<40x288xbf16>
    %99 = vector.extract_strided_slice %98 {offsets = [0, 0], sizes = [8, 288], strides = [1, 1]} : vector<40x288xbf16> to vector<8x288xbf16>
    %c0_64 = arith.constant 0 : index
    %c0_65 = arith.constant 0 : index
    %c0_66 = arith.constant 0 : index
    %100 = vector.load %arg12[%c0_64, %c0_65, %c0_66] : memref<5x288x512xbf16, #tpu.memory_space<vmem>>, vector<1x288x512xbf16>
    %101 = vector.shape_cast %100 : vector<1x288x512xbf16> to vector<288x512xbf16>
    %cst_67 = arith.constant dense<0.000000e+00> : vector<8x512xf32>
    %102 = tpu.matmul %99, %101, %cst_67 {dimension_numbers = #tpu.dot_dimension_numbers<[1], [0], [0], [1], [0, 0, 1, 1], [], []>} : vector<8x288xbf16>, vector<288x512xbf16>, vector<8x512xf32> -> vector<8x512xf32>
    %103 = vector.extract_strided_slice %98 {offsets = [8, 0], sizes = [8, 288], strides = [1, 1]} : vector<40x288xbf16> to vector<8x288xbf16>
    %c1_68 = arith.constant 1 : index
    %c0_69 = arith.constant 0 : index
    %c0_70 = arith.constant 0 : index
    %104 = vector.load %arg12[%c1_68, %c0_69, %c0_70] : memref<5x288x512xbf16, #tpu.memory_space<vmem>>, vector<1x288x512xbf16>
    %105 = vector.shape_cast %104 : vector<1x288x512xbf16> to vector<288x512xbf16>
    %cst_71 = arith.constant dense<0.000000e+00> : vector<8x512xf32>
    %106 = tpu.matmul %103, %105, %cst_71 {dimension_numbers = #tpu.dot_dimension_numbers<[1], [0], [0], [1], [0, 0, 1, 1], [], []>} : vector<8x288xbf16>, vector<288x512xbf16>, vector<8x512xf32> -> vector<8x512xf32>
    %107 = arith.addf %102, %106 : vector<8x512xf32>
    %108 = vector.extract_strided_slice %98 {offsets = [16, 0], sizes = [8, 288], strides = [1, 1]} : vector<40x288xbf16> to vector<8x288xbf16>
    %c2_72 = arith.constant 2 : index
    %c0_73 = arith.constant 0 : index
    %c0_74 = arith.constant 0 : index
    %109 = vector.load %arg12[%c2_72, %c0_73, %c0_74] : memref<5x288x512xbf16, #tpu.memory_space<vmem>>, vector<1x288x512xbf16>
    %110 = vector.shape_cast %109 : vector<1x288x512xbf16> to vector<288x512xbf16>
    %cst_75 = arith.constant dense<0.000000e+00> : vector<8x512xf32>
    %111 = tpu.matmul %108, %110, %cst_75 {dimension_numbers = #tpu.dot_dimension_numbers<[1], [0], [0], [1], [0, 0, 1, 1], [], []>} : vector<8x288xbf16>, vector<288x512xbf16>, vector<8x512xf32> -> vector<8x512xf32>
    %112 = arith.addf %107, %111 : vector<8x512xf32>
    %113 = vector.extract_strided_slice %98 {offsets = [24, 0], sizes = [8, 288], strides = [1, 1]} : vector<40x288xbf16> to vector<8x288xbf16>
    %c3 = arith.constant 3 : index
    %c0_76 = arith.constant 0 : index
    %c0_77 = arith.constant 0 : index
    %114 = vector.load %arg12[%c3, %c0_76, %c0_77] : memref<5x288x512xbf16, #tpu.memory_space<vmem>>, vector<1x288x512xbf16>
    %115 = vector.shape_cast %114 : vector<1x288x512xbf16> to vector<288x512xbf16>
    %cst_78 = arith.constant dense<0.000000e+00> : vector<8x512xf32>
    %116 = tpu.matmul %113, %115, %cst_78 {dimension_numbers = #tpu.dot_dimension_numbers<[1], [0], [0], [1], [0, 0, 1, 1], [], []>} : vector<8x288xbf16>, vector<288x512xbf16>, vector<8x512xf32> -> vector<8x512xf32>
    %117 = arith.addf %112, %116 : vector<8x512xf32>
    %118 = vector.extract_strided_slice %98 {offsets = [32, 0], sizes = [8, 288], strides = [1, 1]} : vector<40x288xbf16> to vector<8x288xbf16>
    %c4 = arith.constant 4 : index
    %c0_79 = arith.constant 0 : index
    %c0_80 = arith.constant 0 : index
    %119 = vector.load %arg12[%c4, %c0_79, %c0_80] : memref<5x288x512xbf16, #tpu.memory_space<vmem>>, vector<1x288x512xbf16>
    %120 = vector.shape_cast %119 : vector<1x288x512xbf16> to vector<288x512xbf16>
    %cst_81 = arith.constant dense<0.000000e+00> : vector<8x512xf32>
    %121 = tpu.matmul %118, %120, %cst_81 {dimension_numbers = #tpu.dot_dimension_numbers<[1], [0], [0], [1], [0, 0, 1, 1], [], []>} : vector<8x288xbf16>, vector<288x512xbf16>, vector<8x512xf32> -> vector<8x512xf32>
    %122 = arith.addf %117, %121 : vector<8x512xf32>
    %c0_82 = arith.constant 0 : index
    %c0_83 = arith.constant 0 : index
    %123 = vector.load %arg13[%c0_82, %c0_83] : memref<1x512xf32, #tpu.memory_space<vmem>>, vector<1x512xf32>
    %124 = vector.broadcast %123 : vector<1x512xf32> to vector<8x512xf32>
    %125 = arith.addf %122, %124 : vector<8x512xf32>
    %cst_84 = arith.constant 0.000000e+00 : f32
    %126 = vector.broadcast %cst_84 : f32 to vector<8x512xf32>
    %127 = arith.maximumf %125, %126 : vector<8x512xf32>
    %128 = arith.truncf %127 : vector<8x512xf32> to vector<8x512xbf16>
    %c0_85 = arith.constant 0 : index
    %c0_86 = arith.constant 0 : index
    %129 = vector.load %arg14[%c0_85, %c0_86] : memref<512x256xbf16, #tpu.memory_space<vmem>>, vector<512x256xbf16>
    %cst_87 = arith.constant dense<0.000000e+00> : vector<8x256xf32>
    %130 = tpu.matmul %128, %129, %cst_87 {dimension_numbers = #tpu.dot_dimension_numbers<[1], [0], [0], [1], [0, 0, 1, 1], [], []>} : vector<8x512xbf16>, vector<512x256xbf16>, vector<8x256xf32> -> vector<8x256xf32>
    %c0_88 = arith.constant 0 : index
    %c0_89 = arith.constant 0 : index
    %131 = vector.load %arg15[%c0_88, %c0_89] : memref<1x256xf32, #tpu.memory_space<vmem>>, vector<1x256xf32>
    %132 = vector.broadcast %131 : vector<1x256xf32> to vector<8x256xf32>
    %133 = arith.addf %130, %132 : vector<8x256xf32>
    %cst_90 = arith.constant 0.000000e+00 : f32
    %134 = vector.broadcast %cst_90 : f32 to vector<8x256xf32>
    %135 = arith.maximumf %133, %134 : vector<8x256xf32>
    %136 = arith.truncf %135 : vector<8x256xf32> to vector<8x256xbf16>
    %c0_91 = arith.constant 0 : index
    %c0_92 = arith.constant 0 : index
    %137 = vector.load %arg16[%c0_91, %c0_92] : memref<256x128xbf16, #tpu.memory_space<vmem>>, vector<256x128xbf16>
    %cst_93 = arith.constant dense<0.000000e+00> : vector<8x128xf32>
    %138 = tpu.matmul %136, %137, %cst_93 {dimension_numbers = #tpu.dot_dimension_numbers<[1], [0], [0], [1], [0, 0, 1, 1], [], []>} : vector<8x256xbf16>, vector<256x128xbf16>, vector<8x128xf32> -> vector<8x128xf32>
    %c0_94 = arith.constant 0 : index
    %c0_95 = arith.constant 0 : index
    %139 = vector.load %arg17[%c0_94, %c0_95] : memref<1x128xf32, #tpu.memory_space<vmem>>, vector<1x128xf32>
    %140 = vector.broadcast %139 : vector<1x128xf32> to vector<8x128xf32>
    %141 = arith.addf %138, %140 : vector<8x128xf32>
    %cst_96 = arith.constant 0.000000e+00 : f32
    %142 = vector.broadcast %cst_96 : f32 to vector<8x128xf32>
    %143 = arith.maximumf %141, %142 : vector<8x128xf32>
    %c0_97 = arith.constant 0 : index
    %c0_98 = arith.constant 0 : index
    %144 = vector.load %arg18[%c0_97, %c0_98] : memref<128x128xf32, #tpu.memory_space<vmem>>, vector<128x128xf32>
    %cst_99 = arith.constant dense<0.000000e+00> : vector<8x128xf32>
    %145 = tpu.matmul %143, %144, %cst_99 {dimension_numbers = #tpu.dot_dimension_numbers<[1], [0], [0], [1], [0, 0, 1, 1], [], []>} : vector<8x128xf32>, vector<128x128xf32>, vector<8x128xf32> -> vector<8x128xf32>
    %c0_100 = arith.constant 0 : index
    %c0_101 = arith.constant 0 : index
    %146 = vector.load %arg19[%c0_100, %c0_101] : memref<1x128xf32, #tpu.memory_space<vmem>>, vector<1x128xf32>
    %147 = vector.broadcast %146 : vector<1x128xf32> to vector<8x128xf32>
    %148 = arith.addf %145, %147 : vector<8x128xf32>
    %149 = math.tanh %148 : vector<8x128xf32>
    %c0_102 = arith.constant 0 : index
    %c0_103 = arith.constant 0 : index
    %150 = vector.load %arg20[%c0_102, %c0_103] : memref<8x128xf32, #tpu.memory_space<vmem>>, vector<8x128xf32>
    tpu.vector_store %arg20[%c0_102, %c0_103], %149 {strides = array<i32>} : memref<8x128xf32, #tpu.memory_space<vmem>>, vector<8x128xf32>,
    return
  }
  func.func @transform_0(%arg0: i32) -> (i32, i32) {
    %c0_i32 = arith.constant 0 : i32
    %c0_i32_0 = arith.constant 0 : i32
    return %arg0, %c0_i32 : i32, i32
  }
  func.func @transform_1(%arg0: i32) -> (i32, i32) {
    %c0_i32 = arith.constant 0 : i32
    %c0_i32_0 = arith.constant 0 : i32
    %c0_i32_1 = arith.constant 0 : i32
    return %c0_i32, %c0_i32_0 : i32, i32
  }
  func.func @transform_2(%arg0: i32) -> (i32, i32) {
    %c0_i32 = arith.constant 0 : i32
    %c0_i32_0 = arith.constant 0 : i32
    %c0_i32_1 = arith.constant 0 : i32
    return %c0_i32, %c0_i32_0 : i32, i32
  }
  func.func @transform_3(%arg0: i32) -> (i32, i32, i32) {
    %c0_i32 = arith.constant 0 : i32
    %c0_i32_0 = arith.constant 0 : i32
    %c0_i32_1 = arith.constant 0 : i32
    %c0_i32_2 = arith.constant 0 : i32
    return %c0_i32, %c0_i32_0, %c0_i32_1 : i32, i32, i32
  }
  func.func @transform_4(%arg0: i32) -> (i32, i32) {
    %c0_i32 = arith.constant 0 : i32
    %c0_i32_0 = arith.constant 0 : i32
    %c0_i32_1 = arith.constant 0 : i32
    return %c0_i32, %c0_i32_0 : i32, i32
  }
  func.func @transform_5(%arg0: i32) -> (i32, i32, i32) {
    %c0_i32 = arith.constant 0 : i32
    %c0_i32_0 = arith.constant 0 : i32
    %c0_i32_1 = arith.constant 0 : i32
    %c0_i32_2 = arith.constant 0 : i32
    return %c0_i32, %c0_i32_0, %c0_i32_1 : i32, i32, i32
  }
  func.func @transform_6(%arg0: i32) -> (i32, i32) {
    %c0_i32 = arith.constant 0 : i32
    %c0_i32_0 = arith.constant 0 : i32
    %c0_i32_1 = arith.constant 0 : i32
    return %c0_i32, %c0_i32_0 : i32, i32
  }
  func.func @transform_7(%arg0: i32) -> (i32, i32, i32) {
    %c0_i32 = arith.constant 0 : i32
    %c0_i32_0 = arith.constant 0 : i32
    %c0_i32_1 = arith.constant 0 : i32
    %c0_i32_2 = arith.constant 0 : i32
    return %c0_i32, %c0_i32_0, %c0_i32_1 : i32, i32, i32
  }
  func.func @transform_8(%arg0: i32) -> (i32, i32) {
    %c0_i32 = arith.constant 0 : i32
    %c0_i32_0 = arith.constant 0 : i32
    %c0_i32_1 = arith.constant 0 : i32
    return %c0_i32, %c0_i32_0 : i32, i32
  }
  func.func @transform_9(%arg0: i32) -> (i32, i32, i32) {
    %c0_i32 = arith.constant 0 : i32
    %c0_i32_0 = arith.constant 0 : i32
    %c0_i32_1 = arith.constant 0 : i32
    %c0_i32_2 = arith.constant 0 : i32
    return %c0_i32, %c0_i32_0, %c0_i32_1 : i32, i32, i32
  }
  func.func @transform_10(%arg0: i32) -> (i32, i32) {
    %c0_i32 = arith.constant 0 : i32
    %c0_i32_0 = arith.constant 0 : i32
    %c0_i32_1 = arith.constant 0 : i32
    return %c0_i32, %c0_i32_0 : i32, i32
  }
  func.func @transform_11(%arg0: i32) -> (i32, i32, i32) {
    %c0_i32 = arith.constant 0 : i32
    %c0_i32_0 = arith.constant 0 : i32
    %c0_i32_1 = arith.constant 0 : i32
    %c0_i32_2 = arith.constant 0 : i32
    return %c0_i32, %c0_i32_0, %c0_i32_1 : i32, i32, i32
  }
  func.func @transform_12(%arg0: i32) -> (i32, i32) {
    %c0_i32 = arith.constant 0 : i32
    %c0_i32_0 = arith.constant 0 : i32
    %c0_i32_1 = arith.constant 0 : i32
    return %c0_i32, %c0_i32_0 : i32, i32
  }
  func.func @transform_13(%arg0: i32) -> (i32, i32) {
    %c0_i32 = arith.constant 0 : i32
    %c0_i32_0 = arith.constant 0 : i32
    %c0_i32_1 = arith.constant 0 : i32
    return %c0_i32, %c0_i32_0 : i32, i32
  }
  func.func @transform_14(%arg0: i32) -> (i32, i32) {
    %c0_i32 = arith.constant 0 : i32
    %c0_i32_0 = arith.constant 0 : i32
    %c0_i32_1 = arith.constant 0 : i32
    return %c0_i32, %c0_i32_0 : i32, i32
  }
  func.func @transform_15(%arg0: i32) -> (i32, i32) {
    %c0_i32 = arith.constant 0 : i32
    %c0_i32_0 = arith.constant 0 : i32
    %c0_i32_1 = arith.constant 0 : i32
    return %c0_i32, %c0_i32_0 : i32, i32
  }
  func.func @transform_16(%arg0: i32) -> (i32, i32) {
    %c0_i32 = arith.constant 0 : i32
    %c0_i32_0 = arith.constant 0 : i32
    %c0_i32_1 = arith.constant 0 : i32
    return %c0_i32, %c0_i32_0 : i32, i32
  }
  func.func @transform_17(%arg0: i32) -> (i32, i32) {
    %c0_i32 = arith.constant 0 : i32
    %c0_i32_0 = arith.constant 0 : i32
    %c0_i32_1 = arith.constant 0 : i32
    return %c0_i32, %c0_i32_0 : i32, i32
  }
  func.func @transform_18(%arg0: i32) -> (i32, i32) {
    %c0_i32 = arith.constant 0 : i32
    %c0_i32_0 = arith.constant 0 : i32
    %c0_i32_1 = arith.constant 0 : i32
    return %c0_i32, %c0_i32_0 : i32, i32
  }
  func.func @transform_19(%arg0: i32) -> (i32, i32) {
    %c0_i32 = arith.constant 0 : i32
    %c0_i32_0 = arith.constant 0 : i32
    return %arg0, %c0_i32 : i32, i32
  }
}

</mosaic_0001>

<llo_original>
// kernel: encoder_forward.1
$region0: #{encoder_forward.1}
  #allocation0 [shape = 'u32[]', space=smem, size = 0x4, offset = 0x4, fixed_abs, tag = 'smem constant byte address 0x4 - core index']
  #allocation1 [shape = 'u32[144,128]{1,0:T(1,128)}', space=vmem, size = 0x12000, scoped, tag = 'internal scratch']
  %s0 = inlined_call_operand.vmem [shape: bf16[512,128], index: 0, kind: input, shape index: {}]
  %s1 = inlined_call_operand.vmem [shape: bf16[128,251], index: 1, kind: input, shape index: {}]
  %s2 = inlined_call_operand.vmem [shape: bf16[40,123], index: 2, kind: input, shape index: {}]
  %s3 = inlined_call_operand.vmem [shape: bf16[3,128,120], index: 3, kind: input, shape index: {}]
  %s4 = inlined_call_operand.vmem [shape: f32[1,120], index: 4, kind: input, shape index: {}]
  %s5 = inlined_call_operand.vmem [shape: bf16[3,120,224], index: 5, kind: input, shape index: {}]
  %s6 = inlined_call_operand.vmem [shape: f32[1,224], index: 6, kind: input, shape index: {}]
  %s7 = inlined_call_operand.vmem [shape: bf16[3,216,192], index: 7, kind: input, shape index: {}]
  %s8 = inlined_call_operand.vmem [shape: f32[1,192], index: 8, kind: input, shape index: {}]
  %s9 = inlined_call_operand.vmem [shape: bf16[3,192,320], index: 9, kind: input, shape index: {}]
  %s10 = inlined_call_operand.vmem [shape: f32[1,320], index: 10, kind: input, shape index: {}]
  %s11 = inlined_call_operand.vmem [shape: bf16[5,288,512], index: 11, kind: input, shape index: {}]
  %s12 = inlined_call_operand.vmem [shape: f32[1,512], index: 12, kind: input, shape index: {}]
  %s13 = inlined_call_operand.vmem [shape: bf16[512,256], index: 13, kind: input, shape index: {}]
  %s14 = inlined_call_operand.vmem [shape: f32[1,256], index: 14, kind: input, shape index: {}]
  %s15 = inlined_call_operand.vmem [shape: bf16[256,128], index: 15, kind: input, shape index: {}]
  %s16 = inlined_call_operand.vmem [shape: f32[1,128], index: 16, kind: input, shape index: {}]
  %s17 = inlined_call_operand.vmem [shape: f32[128,128], index: 17, kind: input, shape index: {}]
  %s18 = inlined_call_operand.vmem [shape: f32[1,128], index: 18, kind: input, shape index: {}]
  %s19 = inlined_call_operand.hbm [shape: f32[16,128], index: 19, kind: output, shape index: {}]
  %s20 = sld [smem:[#allocation0]]
  $region109: #{encoder_forward.1} parent=0
    _
  %s22 = ssub.s32 1, %s20
  %s23 = scalar_select 0, %s22, %s20
  $region1: #{encoder_forward.1} parent=0
    #allocation2 [shape = 'u8[8192]{0}', space=vmem, size = 0x2000, scoped, tag = 'output window, operand 0']
    #allocation3 [shape = 's32[2]{0}', space=sflag, size = 0x8, scoped, tag = 'scoped memory for encoder_forward.1']
    %24 = vsyncpa [#allocation3], 0
    %s25 = scalar_lea.sflag [#allocation3], 1
    %26 = vsyncpa %s25, 0
    loop: start=0, step=1, limit=4
    $region2: #{encoder_forward.1} parent=1 // loop_pre_header
      _
    $region3: #{encoder_forward.1} parent=1 // loop_header
      %s28 = sphi 0, %s32
      %p29 = scmp.ge.s32.totalorder %s28, 4
      %s38 = sphi 0, %s40
      %s41 = sphi 0, %s38
      %s42 = sphi 0, %s41
      %s58 = sphi 0, %s42
      %s62 = sphi 0, %s62
      %s64 = sphi 0, %s62
      %s65 = sphi 0, %s64
      %s79 = sphi 0, %s65
      %s83 = sphi 0, %s83
      %s85 = sphi 0, %s83
      %s86 = sphi 0, %s85
      %s100 = sphi 0, %s86
      %s104 = sphi 0, %s104
      %s106 = sphi 0, %s104
      %s107 = sphi 0, %s106
      %s121 = sphi 0, %s107
      %s125 = sphi 0, %s125
      %s127 = sphi 0, %s125
      %s128 = sphi 0, %s127
      %s142 = sphi 0, %s128
      %s146 = sphi 0, %s146
      %s148 = sphi 0, %s146
      %s149 = sphi 0, %s148
      %s163 = sphi 0, %s149
      %s167 = sphi 0, %s167
      %s169 = sphi 0, %s167
      %s170 = sphi 0, %s169
      %s184 = sphi 0, %s170
      %s188 = sphi 0, %s188
      %s190 = sphi 0, %s188
      %s191 = sphi 0, %s190
      %s205 = sphi 0, %s191
      %s209 = sphi 0, %s209
      %s211 = sphi 0, %s209
      %s212 = sphi 0, %s211
      %s226 = sphi 0, %s212
      %s230 = sphi 0, %s230
      %s232 = sphi 0, %s230
      %s233 = sphi 0, %s232
      %s247 = sphi 0, %s233
      %s251 = sphi 0, %s251
      %s253 = sphi 0, %s251
      %s254 = sphi 0, %s253
      %s268 = sphi 0, %s254
      %s272 = sphi 0, %s272
      %s274 = sphi 0, %s272
      %s275 = sphi 0, %s274
      %s289 = sphi 0, %s275
      %s293 = sphi 0, %s293
      %s295 = sphi 0, %s293
      %s296 = sphi 0, %s295
      %s310 = sphi 0, %s296
      %s314 = sphi 0, %s314
      %s316 = sphi 0, %s314
      %s317 = sphi 0, %s316
      %s331 = sphi 0, %s317
      %s335 = sphi 0, %s335
      %s337 = sphi 0, %s335
      %s338 = sphi 0, %s337
      %s352 = sphi 0, %s338
      %s356 = sphi 0, %s356
      %s358 = sphi 0, %s356
      %s359 = sphi 0, %s358
      %s373 = sphi 0, %s359
      %s377 = sphi 0, %s377
      %s379 = sphi 0, %s377
      %s380 = sphi 0, %s379
      %s394 = sphi 0, %s380
      %s398 = sphi 0, %s398
      %s400 = sphi 0, %s398
      %s401 = sphi 0, %s400
      %s415 = sphi 0, %s401
      %s419 = sphi 0, %s419
      %s421 = sphi 0, %s419
      %s422 = sphi 0, %s421
      %s436 = sphi 0, %s422
      %s442 = sphi 0, %s444
      %s445 = sphi 0, %s442
      %s446 = sphi 0, %s445
      %s462 = sphi 0, %s446
    $region4: #{encoder_forward.1} parent=1 // loop_header_branch
      %31 = sbr.rel (%p29) target = $region8
    $region5: #{encoder_forward.1} parent=1 // loop_body
      %s33 = ssub.s32 %s28, 1
      %s34 = ssub.s32 %s28, 2
      %s35 = sadd.s32 %s28, 1
      %s36 = ssub.s32 %s28, %s35
      %p37 = scmp.eq.s32.totalorder %s36, 0
      %s39 = sadd.s32 %s38, 1
      %s40 = scalar_select %p37, %s38, %s39
      %p43 = pneg %p37
      %p44 = scmp.eq.s32.totalorder %s28, 1
      %p45 = por %p43, %p44
      %p46 = scmp.ne.s32.totalorder %s38, %s41
      %p47 = scmp.eq.s32.totalorder %s28, 0
      %p48 = por %p46, %p47
      %p49 = scmp.ne.s32.totalorder %s38, %s41
      %p50 = scmp.eq.s32.totalorder %s33, 1
      %p51 = por %p49, %p50
      %p52 = scmp.ne.s32.totalorder %s41, %s42
      %p53 = scmp.eq.s32.totalorder %s33, 0
      %p54 = por %p52, %p53
      %p55 = scmp.ne.s32.totalorder %s41, %s42
      %p56 = scmp.eq.s32.totalorder %s34, 1
      %p57 = por %p55, %p56
      %p59 = scmp.ne.s32.totalorder %s42, %s58
      %p60 = scmp.eq.s32.totalorder %s34, 0
      %p61 = por %p59, %p60
      %s63 = sadd.s32 %s62, 1
      %p66 = scmp.eq.s32.totalorder %s28, 1
      %p67 = scmp.ne.s32.totalorder %s62, %s64
      %p68 = scmp.eq.s32.totalorder %s28, 0
      %p69 = por %p67, %p68
      %p70 = scmp.ne.s32.totalorder %s62, %s64
      %p71 = scmp.eq.s32.totalorder %s33, 1
      %p72 = por %p70, %p71
      %p73 = scmp.ne.s32.totalorder %s64, %s65
      %p74 = scmp.eq.s32.totalorder %s33, 0
      %p75 = por %p73, %p74
      %p76 = scmp.ne.s32.totalorder %s64, %s65
      %p77 = scmp.eq.s32.totalorder %s34, 1
      %p78 = por %p76, %p77
      %p80 = scmp.ne.s32.totalorder %s65, %s79
      %p81 = scmp.eq.s32.totalorder %s34, 0
      %p82 = por %p80, %p81
      %s84 = sadd.s32 %s83, 1
      %p87 = scmp.eq.s32.totalorder %s28, 1
      %p88 = scmp.ne.s32.totalorder %s83, %s85
      %p89 = scmp.eq.s32.totalorder %s28, 0
      %p90 = por %p88, %p89
      %p91 = scmp.ne.s32.totalorder %s83, %s85
      %p92 = scmp.eq.s32.totalorder %s33, 1
      %p93 = por %p91, %p92
      %p94 = scmp.ne.s32.totalorder %s85, %s86
      %p95 = scmp.eq.s32.totalorder %s33, 0
      %p96 = por %p94, %p95
      %p97 = scmp.ne.s32.totalorder %s85, %s86
      %p98 = scmp.eq.s32.totalorder %s34, 1
      %p99 = por %p97, %p98
      %p101 = scmp.ne.s32.totalorder %s86, %s100
      %p102 = scmp.eq.s32.totalorder %s34, 0
      %p103 = por %p101, %p102
      %s105 = sadd.s32 %s104, 1
      %p108 = scmp.eq.s32.totalorder %s28, 1
      %p109 = scmp.ne.s32.totalorder %s104, %s106
      %p110 = scmp.eq.s32.totalorder %s28, 0
      %p111 = por %p109, %p110
      %p112 = scmp.ne.s32.totalorder %s104, %s106
      %p113 = scmp.eq.s32.totalorder %s33, 1
      %p114 = por %p112, %p113
      %p115 = scmp.ne.s32.totalorder %s106, %s107
      %p116 = scmp.eq.s32.totalorder %s33, 0
      %p117 = por %p115, %p116
      %p118 = scmp.ne.s32.totalorder %s106, %s107
      %p119 = scmp.eq.s32.totalorder %s34, 1
      %p120 = por %p118, %p119
      %p122 = scmp.ne.s32.totalorder %s107, %s121
      %p123 = scmp.eq.s32.totalorder %s34, 0
      %p124 = por %p122, %p123
      %s126 = sadd.s32 %s125, 1
      %p129 = scmp.eq.s32.totalorder %s28, 1
      %p130 = scmp.ne.s32.totalorder %s125, %s127
      %p131 = scmp.eq.s32.totalorder %s28, 0
      %p132 = por %p130, %p131
      %p133 = scmp.ne.s32.totalorder %s125, %s127
      %p134 = scmp.eq.s32.totalorder %s33, 1
      %p135 = por %p133, %p134
      %p136 = scmp.ne.s32.totalorder %s127, %s128
      %p137 = scmp.eq.s32.totalorder %s33, 0
      %p138 = por %p136, %p137
      %p139 = scmp.ne.s32.totalorder %s127, %s128
      %p140 = scmp.eq.s32.totalorder %s34, 1
      %p141 = por %p139, %p140
      %p143 = scmp.ne.s32.totalorder %s128, %s142
      %p144 = scmp.eq.s32.totalorder %s34, 0
      %p145 = por %p143, %p144
      %s147 = sadd.s32 %s146, 1
      %p150 = scmp.eq.s32.totalorder %s28, 1
      %p151 = scmp.ne.s32.totalorder %s146, %s148
      %p152 = scmp.eq.s32.totalorder %s28, 0
      %p153 = por %p151, %p152
      %p154 = scmp.ne.s32.totalorder %s146, %s148
      %p155 = scmp.eq.s32.totalorder %s33, 1
      %p156 = por %p154, %p155
      %p157 = scmp.ne.s32.totalorder %s148, %s149
      %p158 = scmp.eq.s32.totalorder %s33, 0
      %p159 = por %p157, %p158
      %p160 = scmp.ne.s32.totalorder %s148, %s149
      %p161 = scmp.eq.s32.totalorder %s34, 1
      %p162 = por %p160, %p161
      %p164 = scmp.ne.s32.totalorder %s149, %s163
      %p165 = scmp.eq.s32.totalorder %s34, 0
      %p166 = por %p164, %p165
      %s168 = sadd.s32 %s167, 1
      %p171 = scmp.eq.s32.totalorder %s28, 1
      %p172 = scmp.ne.s32.totalorder %s167, %s169
      %p173 = scmp.eq.s32.totalorder %s28, 0
      %p174 = por %p172, %p173
      %p175 = scmp.ne.s32.totalorder %s167, %s169
      %p176 = scmp.eq.s32.totalorder %s33, 1
      %p177 = por %p175, %p176
      %p178 = scmp.ne.s32.totalorder %s169, %s170
      %p179 = scmp.eq.s32.totalorder %s33, 0
      %p180 = por %p178, %p179
      %p181 = scmp.ne.s32.totalorder %s169, %s170
      %p182 = scmp.eq.s32.totalorder %s34, 1
      %p183 = por %p181, %p182
      %p185 = scmp.ne.s32.totalorder %s170, %s184
      %p186 = scmp.eq.s32.totalorder %s34, 0
      %p187 = por %p185, %p186
      %s189 = sadd.s32 %s188, 1
      %p192 = scmp.eq.s32.totalorder %s28, 1
      %p193 = scmp.ne.s32.totalorder %s188, %s190
      %p194 = scmp.eq.s32.totalorder %s28, 0
      %p195 = por %p193, %p194
      %p196 = scmp.ne.s32.totalorder %s188, %s190
      %p197 = scmp.eq.s32.totalorder %s33, 1
      %p198 = por %p196, %p197
      %p199 = scmp.ne.s32.totalorder %s190, %s191
      %p200 = scmp.eq.s32.totalorder %s33, 0
      %p201 = por %p199, %p200
      %p202 = scmp.ne.s32.totalorder %s190, %s191
      %p203 = scmp.eq.s32.totalorder %s34, 1
      %p204 = por %p202, %p203
      %p206 = scmp.ne.s32.totalorder %s191, %s205
      %p207 = scmp.eq.s32.totalorder %s34, 0
      %p208 = por %p206, %p207
      %s210 = sadd.s32 %s209, 1
      %p213 = scmp.eq.s32.totalorder %s28, 1
      %p214 = scmp.ne.s32.totalorder %s209, %s211
      %p215 = scmp.eq.s32.totalorder %s28, 0
      %p216 = por %p214, %p215
      %p217 = scmp.ne.s32.totalorder %s209, %s211
      %p218 = scmp.eq.s32.totalorder %s33, 1
      %p219 = por %p217, %p218
      %p220 = scmp.ne.s32.totalorder %s211, %s212
      %p221 = scmp.eq.s32.totalorder %s33, 0
      %p222 = por %p220, %p221
      %p223 = scmp.ne.s32.totalorder %s211, %s212
      %p224 = scmp.eq.s32.totalorder %s34, 1
      %p225 = por %p223, %p224
      %p227 = scmp.ne.s32.totalorder %s212, %s226
      %p228 = scmp.eq.s32.totalorder %s34, 0
      %p229 = por %p227, %p228
      %s231 = sadd.s32 %s230, 1
      %p234 = scmp.eq.s32.totalorder %s28, 1
      %p235 = scmp.ne.s32.totalorder %s230, %s232
      %p236 = scmp.eq.s32.totalorder %s28, 0
      %p237 = por %p235, %p236
      %p238 = scmp.ne.s32.totalorder %s230, %s232
      %p239 = scmp.eq.s32.totalorder %s33, 1
      %p240 = por %p238, %p239
      %p241 = scmp.ne.s32.totalorder %s232, %s233
      %p242 = scmp.eq.s32.totalorder %s33, 0
      %p243 = por %p241, %p242
      %p244 = scmp.ne.s32.totalorder %s232, %s233
      %p245 = scmp.eq.s32.totalorder %s34, 1
      %p246 = por %p244, %p245
      %p248 = scmp.ne.s32.totalorder %s233, %s247
      %p249 = scmp.eq.s32.totalorder %s34, 0
      %p250 = por %p248, %p249
      %s252 = sadd.s32 %s251, 1
      %p255 = scmp.eq.s32.totalorder %s28, 1
      %p256 = scmp.ne.s32.totalorder %s251, %s253
      %p257 = scmp.eq.s32.totalorder %s28, 0
      %p258 = por %p256, %p257
      %p259 = scmp.ne.s32.totalorder %s251, %s253
      %p260 = scmp.eq.s32.totalorder %s33, 1
      %p261 = por %p259, %p260
      %p262 = scmp.ne.s32.totalorder %s253, %s254
      %p263 = scmp.eq.s32.totalorder %s33, 0
      %p264 = por %p262, %p263
      %p265 = scmp.ne.s32.totalorder %s253, %s254
      %p266 = scmp.eq.s32.totalorder %s34, 1
      %p267 = por %p265, %p266
      %p269 = scmp.ne.s32.totalorder %s254, %s268
      %p270 = scmp.eq.s32.totalorder %s34, 0
      %p271 = por %p269, %p270
      %s273 = sadd.s32 %s272, 1
      %p276 = scmp.eq.s32.totalorder %s28, 1
      %p277 = scmp.ne.s32.totalorder %s272, %s274
      %p278 = scmp.eq.s32.totalorder %s28, 0
      %p279 = por %p277, %p278
      %p280 = scmp.ne.s32.totalorder %s272, %s274
      %p281 = scmp.eq.s32.totalorder %s33, 1
      %p282 = por %p280, %p281
      %p283 = scmp.ne.s32.totalorder %s274, %s275
      %p284 = scmp.eq.s32.totalorder %s33, 0
      %p285 = por %p283, %p284
      %p286 = scmp.ne.s32.totalorder %s274, %s275
      %p287 = scmp.eq.s32.totalorder %s34, 1
      %p288 = por %p286, %p287
      %p290 = scmp.ne.s32.totalorder %s275, %s289
      %p291 = scmp.eq.s32.totalorder %s34, 0
      %p292 = por %p290, %p291
      %s294 = sadd.s32 %s293, 1
      %p297 = scmp.eq.s32.totalorder %s28, 1
      %p298 = scmp.ne.s32.totalorder %s293, %s295
      %p299 = scmp.eq.s32.totalorder %s28, 0
      %p300 = por %p298, %p299
      %p301 = scmp.ne.s32.totalorder %s293, %s295
      %p302 = scmp.eq.s32.totalorder %s33, 1
      %p303 = por %p301, %p302
      %p304 = scmp.ne.s32.totalorder %s295, %s296
      %p305 = scmp.eq.s32.totalorder %s33, 0
      %p306 = por %p304, %p305
      %p307 = scmp.ne.s32.totalorder %s295, %s296
      %p308 = scmp.eq.s32.totalorder %s34, 1
      %p309 = por %p307, %p308
      %p311 = scmp.ne.s32.totalorder %s296, %s310
      %p312 = scmp.eq.s32.totalorder %s34, 0
      %p313 = por %p311, %p312
      %s315 = sadd.s32 %s314, 1
      %p318 = scmp.eq.s32.totalorder %s28, 1
      %p319 = scmp.ne.s32.totalorder %s314, %s316
      %p320 = scmp.eq.s32.totalorder %s28, 0
      %p321 = por %p319, %p320
      %p322 = scmp.ne.s32.totalorder %s314, %s316
      %p323 = scmp.eq.s32.totalorder %s33, 1
      %p324 = por %p322, %p323
      %p325 = scmp.ne.s32.totalorder %s316, %s317
      %p326 = scmp.eq.s32.totalorder %s33, 0
      %p327 = por %p325, %p326
      %p328 = scmp.ne.s32.totalorder %s316, %s317
      %p329 = scmp.eq.s32.totalorder %s34, 1
      %p330 = por %p328, %p329
      %p332 = scmp.ne.s32.totalorder %s317, %s331
      %p333 = scmp.eq.s32.totalorder %s34, 0
      %p334 = por %p332, %p333
      %s336 = sadd.s32 %s335, 1
      %p339 = scmp.eq.s32.totalorder %s28, 1
      %p340 = scmp.ne.s32.totalorder %s335, %s337
      %p341 = scmp.eq.s32.totalorder %s28, 0
      %p342 = por %p340, %p341
      %p343 = scmp.ne.s32.totalorder %s335, %s337
      %p344 = scmp.eq.s32.totalorder %s33, 1
      %p345 = por %p343, %p344
      %p346 = scmp.ne.s32.totalorder %s337, %s338
      %p347 = scmp.eq.s32.totalorder %s33, 0
      %p348 = por %p346, %p347
      %p349 = scmp.ne.s32.totalorder %s337, %s338
      %p350 = scmp.eq.s32.totalorder %s34, 1
      %p351 = por %p349, %p350
      %p353 = scmp.ne.s32.totalorder %s338, %s352
      %p354 = scmp.eq.s32.totalorder %s34, 0
      %p355 = por %p353, %p354
      %s357 = sadd.s32 %s356, 1
      %p360 = scmp.eq.s32.totalorder %s28, 1
      %p361 = scmp.ne.s32.totalorder %s356, %s358
      %p362 = scmp.eq.s32.totalorder %s28, 0
      %p363 = por %p361, %p362
      %p364 = scmp.ne.s32.totalorder %s356, %s358
      %p365 = scmp.eq.s32.totalorder %s33, 1
      %p366 = por %p364, %p365
      %p367 = scmp.ne.s32.totalorder %s358, %s359
      %p368 = scmp.eq.s32.totalorder %s33, 0
      %p369 = por %p367, %p368
      %p370 = scmp.ne.s32.totalorder %s358, %s359
      %p371 = scmp.eq.s32.totalorder %s34, 1
      %p372 = por %p370, %p371
      %p374 = scmp.ne.s32.totalorder %s359, %s373
      %p375 = scmp.eq.s32.totalorder %s34, 0
      %p376 = por %p374, %p375
      %s378 = sadd.s32 %s377, 1
      %p381 = scmp.eq.s32.totalorder %s28, 1
      %p382 = scmp.ne.s32.totalorder %s377, %s379
      %p383 = scmp.eq.s32.totalorder %s28, 0
      %p384 = por %p382, %p383
      %p385 = scmp.ne.s32.totalorder %s377, %s379
      %p386 = scmp.eq.s32.totalorder %s33, 1
      %p387 = por %p385, %p386
      %p388 = scmp.ne.s32.totalorder %s379, %s380
      %p389 = scmp.eq.s32.totalorder %s33, 0
      %p390 = por %p388, %p389
      %p391 = scmp.ne.s32.totalorder %s379, %s380
      %p392 = scmp.eq.s32.totalorder %s34, 1
      %p393 = por %p391, %p392
      %p395 = scmp.ne.s32.totalorder %s380, %s394
      %p396 = scmp.eq.s32.totalorder %s34, 0
      %p397 = por %p395, %p396
      %s399 = sadd.s32 %s398, 1
      %p402 = scmp.eq.s32.totalorder %s28, 1
      %p403 = scmp.ne.s32.totalorder %s398, %s400
      %p404 = scmp.eq.s32.totalorder %s28, 0
      %p405 = por %p403, %p404
      %p406 = scmp.ne.s32.totalorder %s398, %s400
      %p407 = scmp.eq.s32.totalorder %s33, 1
      %p408 = por %p406, %p407
      %p409 = scmp.ne.s32.totalorder %s400, %s401
      %p410 = scmp.eq.s32.totalorder %s33, 0
      %p411 = por %p409, %p410
      %p412 = scmp.ne.s32.totalorder %s400, %s401
      %p413 = scmp.eq.s32.totalorder %s34, 1
      %p414 = por %p412, %p413
      %p416 = scmp.ne.s32.totalorder %s401, %s415
      %p417 = scmp.eq.s32.totalorder %s34, 0
      %p418 = por %p416, %p417
      %s420 = sadd.s32 %s419, 1
      %p423 = scmp.eq.s32.totalorder %s28, 1
      %p424 = scmp.ne.s32.totalorder %s419, %s421
      %p425 = scmp.eq.s32.totalorder %s28, 0
      %p426 = por %p424, %p425
      %p427 = scmp.ne.s32.totalorder %s419, %s421
      %p428 = scmp.eq.s32.totalorder %s33, 1
      %p429 = por %p427, %p428
      %p430 = scmp.ne.s32.totalorder %s421, %s422
      %p431 = scmp.eq.s32.totalorder %s33, 0
      %p432 = por %p430, %p431
      %p433 = scmp.ne.s32.totalorder %s421, %s422
      %p434 = scmp.eq.s32.totalorder %s34, 1
      %p435 = por %p433, %p434
      %p437 = scmp.ne.s32.totalorder %s422, %s436
      %p438 = scmp.eq.s32.totalorder %s34, 0
      %p439 = por %p437, %p438
      %s440 = ssub.s32 %s28, %s35
      %p441 = scmp.eq.s32.totalorder %s440, 0
      %s443 = sadd.s32 %s442, 1
      %s444 = scalar_select %p441, %s442, %s443
      %p447 = pneg %p441
      %p448 = scmp.eq.s32.totalorder %s28, 1
      %p449 = por %p447, %p448
      %p450 = scmp.ne.s32.totalorder %s442, %s445
      %p451 = scmp.eq.s32.totalorder %s28, 0
      %p452 = por %p450, %p451
      %p453 = scmp.ne.s32.totalorder %s442, %s445
      %p454 = scmp.eq.s32.totalorder %s33, 1
      %p455 = por %p453, %p454
      %p456 = scmp.ne.s32.totalorder %s445, %s446
      %p457 = scmp.eq.s32.totalorder %s33, 0
      %p458 = por %p456, %p457
      %p459 = scmp.ne.s32.totalorder %s445, %s446
      %p460 = scmp.eq.s32.totalorder %s34, 1
      %p461 = por %p459, %p460
      %p463 = scmp.ne.s32.totalorder %s446, %s462
      %p464 = scmp.eq.s32.totalorder %s34, 0
      %p465 = por %p463, %p464
      %p466 = scmp.le.s32.totalorder 1, %s28
      %p467 = scmp.lt.s32.totalorder %s28, 3
      %p468 = pnand %p466, %p467
      %p469 = pneg %p468
      // Predicated region
      $region9: #{encoder_forward.1} parent=5 // pred_check
        _
      $region10: #{encoder_forward.1} parent=5 // pred_check_branch
        %471 = sbr.rel (%p468) target = $region12
      $region11: #{encoder_forward.1} parent=5 // pred_region
        %s472 = ssub.s32 %s28, 1
        // Predicated region
        $region13: #{encoder_forward.1} parent=11 // pred_check
          %p473 = pneg %p75
        $region14: #{encoder_forward.1} parent=11 // pred_check_branch
          %475 = sbr.rel (%p473) target = $region16
        $region15: #{encoder_forward.1} parent=11 // pred_region
          _
        $region16: #{encoder_forward.1} parent=11 // pred_fallthru
          _
        // Predicated region
        $region17: #{encoder_forward.1} parent=11 // pred_check
          %p476 = pneg %p96
        $region18: #{encoder_forward.1} parent=11 // pred_check_branch
          %478 = sbr.rel (%p476) target = $region20
        $region19: #{encoder_forward.1} parent=11 // pred_region
          _
        $region20: #{encoder_forward.1} parent=11 // pred_fallthru
          _
        // Predicated region
        $region21: #{encoder_forward.1} parent=11 // pred_check
          %p479 = pneg %p117
        $region22: #{encoder_forward.1} parent=11 // pred_check_branch
          %481 = sbr.rel (%p479) target = $region24
        $region23: #{encoder_forward.1} parent=11 // pred_region
          _
        $region24: #{encoder_forward.1} parent=11 // pred_fallthru
          _
        // Predicated region
        $region25: #{encoder_forward.1} parent=11 // pred_check
          %p482 = pneg %p138
        $region26: #{encoder_forward.1} parent=11 // pred_check_branch
          %484 = sbr.rel (%p482) target = $region28
        $region27: #{encoder_forward.1} parent=11 // pred_region
          _
        $region28: #{encoder_forward.1} parent=11 // pred_fallthru
          _
        // Predicated region
        $region29: #{encoder_forward.1} parent=11 // pred_check
          %p485 = pneg %p159
        $region30: #{encoder_forward.1} parent=11 // pred_check_branch
          %487 = sbr.rel (%p485) target = $region32
        $region31: #{encoder_forward.1} parent=11 // pred_region
          _
        $region32: #{encoder_forward.1} parent=11 // pred_fallthru
          _
        // Predicated region
        $region33: #{encoder_forward.1} parent=11 // pred_check
          %p488 = pneg %p180
        $region34: #{encoder_forward.1} parent=11 // pred_check_branch
          %490 = sbr.rel (%p488) target = $region36
        $region35: #{encoder_forward.1} parent=11 // pred_region
          _
        $region36: #{encoder_forward.1} parent=11 // pred_fallthru
          _
        // Predicated region
        $region37: #{encoder_forward.1} parent=11 // pred_check
          %p491 = pneg %p201
        $region38: #{encoder_forward.1} parent=11 // pred_check_branch
          %493 = sbr.rel (%p491) target = $region40
        $region39: #{encoder_forward.1} parent=11 // pred_region
          _
        $region40: #{encoder_forward.1} parent=11 // pred_fallthru
          _
        // Predicated region
        $region41: #{encoder_forward.1} parent=11 // pred_check
          %p494 = pneg %p222
        $region42: #{encoder_forward.1} parent=11 // pred_check_branch
          %496 = sbr.rel (%p494) target = $region44
        $region43: #{encoder_forward.1} parent=11 // pred_region
          _
        $region44: #{encoder_forward.1} parent=11 // pred_fallthru
          _
        // Predicated region
        $region45: #{encoder_forward.1} parent=11 // pred_check
          %p497 = pneg %p243
        $region46: #{encoder_forward.1} parent=11 // pred_check_branch
          %499 = sbr.rel (%p497) target = $region48
        $region47: #{encoder_forward.1} parent=11 // pred_region
          _
        $region48: #{encoder_forward.1} parent=11 // pred_fallthru
          _
        // Predicated region
        $region49: #{encoder_forward.1} parent=11 // pred_check
          %p500 = pneg %p264
        $region50: #{encoder_forward.1} parent=11 // pred_check_branch
          %502 = sbr.rel (%p500) target = $region52
        $region51: #{encoder_forward.1} parent=11 // pred_region
          _
        $region52: #{encoder_forward.1} parent=11 // pred_fallthru
          _
        // Predicated region
        $region53: #{encoder_forward.1} parent=11 // pred_check
          %p503 = pneg %p285
        $region54: #{encoder_forward.1} parent=11 // pred_check_branch
          %505 = sbr.rel (%p503) target = $region56
        $region55: #{encoder_forward.1} parent=11 // pred_region
          _
        $region56: #{encoder_forward.1} parent=11 // pred_fallthru
          _
        // Predicated region
        $region57: #{encoder_forward.1} parent=11 // pred_check
          %p506 = pneg %p306
        $region58: #{encoder_forward.1} parent=11 // pred_check_branch
          %508 = sbr.rel (%p506) target = $region60
        $region59: #{encoder_forward.1} parent=11 // pred_region
          _
        $region60: #{encoder_forward.1} parent=11 // pred_fallthru
          _
        // Predicated region
        $region61: #{encoder_forward.1} parent=11 // pred_check
          %p509 = pneg %p327
        $region62: #{encoder_forward.1} parent=11 // pred_check_branch
          %511 = sbr.rel (%p509) target = $region64
        $region63: #{encoder_forward.1} parent=11 // pred_region
          _
        $region64: #{encoder_forward.1} parent=11 // pred_fallthru
          _
        // Predicated region
        $region65: #{encoder_forward.1} parent=11 // pred_check
          %p512 = pneg %p348
        $region66: #{encoder_forward.1} parent=11 // pred_check_branch
          %514 = sbr.rel (%p512) target = $region68
        $region67: #{encoder_forward.1} parent=11 // pred_region
          _
        $region68: #{encoder_forward.1} parent=11 // pred_fallthru
          _
        // Predicated region
        $region69: #{encoder_forward.1} parent=11 // pred_check
          %p515 = pneg %p369
        $region70: #{encoder_forward.1} parent=11 // pred_check_branch
          %517 = sbr.rel (%p515) target = $region72
        $region71: #{encoder_forward.1} parent=11 // pred_region
          _
        $region72: #{encoder_forward.1} parent=11 // pred_fallthru
          _
        // Predicated region
        $region73: #{encoder_forward.1} parent=11 // pred_check
          %p518 = pneg %p390
        $region74: #{encoder_forward.1} parent=11 // pred_check_branch
          %520 = sbr.rel (%p518) target = $region76
        $region75: #{encoder_forward.1} parent=11 // pred_region
          _
        $region76: #{encoder_forward.1} parent=11 // pred_fallthru
          _
        // Predicated region
        $region77: #{encoder_forward.1} parent=11 // pred_check
          %p521 = pneg %p411
        $region78: #{encoder_forward.1} parent=11 // pred_check_branch
          %523 = sbr.rel (%p521) target = $region80
        $region79: #{encoder_forward.1} parent=11 // pred_region
          _
        $region80: #{encoder_forward.1} parent=11 // pred_fallthru
          _
        // Predicated region
        $region81: #{encoder_forward.1} parent=11 // pred_check
          %p524 = pneg %p432
        $region82: #{encoder_forward.1} parent=11 // pred_check_branch
          %526 = sbr.rel (%p524) target = $region84
        $region83: #{encoder_forward.1} parent=11 // pred_region
          _
        $region84: #{encoder_forward.1} parent=11 // pred_fallthru
          _
      $region12: #{encoder_forward.1} parent=5 // pred_fallthru
        _
      %p527 = scmp.lt.s32.totalorder %s28, 2
      // Predicated region
      $region85: #{encoder_forward.1} parent=5 // pred_check
        %p528 = pneg %p527
      $region86: #{encoder_forward.1} parent=5 // pred_check_branch
        %530 = sbr.rel (%p528) target = $region88
      $region87: #{encoder_forward.1} parent=5 // pred_region
        // Predicated region
        $region89: #{encoder_forward.1} parent=87 // pred_check
          %p531 = pneg %p48
        $region90: #{encoder_forward.1} parent=87 // pred_check_branch
          %533 = sbr.rel (%p531) target = $region92
        $region91: #{encoder_forward.1} parent=87 // pred_region
          %s534 = smul.u32 32, %s28
          %p535 = scmp.lt.s32.totalorder %s534, 63
          %s536 = scalar_select %p535, %s534, 63
          %s537 = smul.addr %s536, 4
          %s538 = scalar_lea.vmem %s0, %s537
          %s539 = smul.u32 32, %s28
        $region92: #{encoder_forward.1} parent=87 // pred_fallthru
          _
      $region88: #{encoder_forward.1} parent=5 // pred_fallthru
        _
      %p540 = scmp.le.s32.totalorder 1, %s28
      %p541 = scmp.lt.s32.totalorder %s28, 3
      %p542 = pnand %p540, %p541
      %p543 = pneg %p542
      // Predicated region
      $region93: #{encoder_forward.1} parent=5 // pred_check
        _
      $region94: #{encoder_forward.1} parent=5 // pred_check_branch
        %545 = sbr.rel (%p542) target = $region96
      $region95: #{encoder_forward.1} parent=5 // pred_region
        %s546 = ssub.s32 %s28, 1
        %s547 = smul.u32 32, %s33
        %p548 = scmp.lt.s32.totalorder %s547, 63
        %s549 = scalar_select %p548, %s547, 63
        %s550 = smul.addr %s549, 4
        %s551 = scalar_lea.vmem %s0, %s550
        %p552 = pneg %p54
        %p553 = pneg %p51
        %p554 = pneg %p75
        %p555 = pneg %p72
        %p556 = pneg %p96
        %p557 = pneg %p93
        %p558 = pneg %p117
        %p559 = pneg %p114
        %p560 = pneg %p138
        %p561 = pneg %p135
        %p562 = pneg %p159
        %p563 = pneg %p156
        %p564 = pneg %p180
        %p565 = pneg %p177
        %p566 = pneg %p201
        %p567 = pneg %p198
        %p568 = pneg %p222
        %p569 = pneg %p219
        %p570 = pneg %p243
        %p571 = pneg %p240
        %p572 = pneg %p264
        %p573 = pneg %p261
        %p574 = pneg %p285
        %p575 = pneg %p282
        %p576 = pneg %p306
        %p577 = pneg %p303
        %p578 = pneg %p327
        %p579 = pneg %p324
        %p580 = pneg %p348
        %p581 = pneg %p345
        %p582 = pneg %p369
        %p583 = pneg %p366
        %p584 = pneg %p390
        %p585 = pneg %p387
        %p586 = pneg %p411
        %p587 = pneg %p408
        %p588 = pneg %p432
        %p589 = pneg %p429
        %p590 = pneg %p458
        %p591 = pneg %p455
        %s592 = sand.u32 %s445, 1
        %s593 = scalar_lea.sflag [#allocation3], %s592
        %s594 = sand.u32 %s445, 1
        %s595 = smul.addr %s594, 8
        %s596 = scalar_lea.vmem [#allocation2], %s595
        %s597 = smul.u32 32, %s33
        %p598 = scmp.lt.s32.totalorder %s597, 63
        %s599 = scalar_select %p598, %s597, 63
        %s600 = smul.addr %s599, 4
        %s601 = scalar_lea.vmem %s0, %s600
        %s602 = smul.u32 32, %s33
        %v604 = vld [vmem:[%s601] sm:$0xf]
        %v605 = vld [vmem:[%s601 + $0x4] sm:$0xf]
        %v606 = vld [vmem:[%s601 + $0x8] sm:$0xf]
        %v607 = vld [vmem:[%s601 + $0xc] sm:$0xf]
        %v608 = vld [vmem:[%s601 + $0x10] sm:$0xf]
        %v609 = vld [vmem:[%s601 + $0x14] sm:$0xf]
        %v610 = vld [vmem:[%s601 + $0x18] sm:$0xf]
        %v611 = vld [vmem:[%s601 + $0x1c] sm:$0xf]
        %v612 = vld [vmem:[%s601 + $0x20] sm:$0xf]
        %v613 = vld [vmem:[%s601 + $0x24] sm:$0xf]
        %v614 = vld [vmem:[%s601 + $0x28] sm:$0xf]
        %v615 = vld [vmem:[%s601 + $0x2c] sm:$0xf]
        %v616 = vld [vmem:[%s601 + $0x30] sm:$0xf]
        %v617 = vld [vmem:[%s601 + $0x34] sm:$0xf]
        %v618 = vld [vmem:[%s601 + $0x38] sm:$0xf]
        %v619 = vld [vmem:[%s601 + $0x3c] sm:$0xf]
        %v620 = vld [vmem:[%s601 + $0x40] sm:$0xf]
        %v621 = vld [vmem:[%s601 + $0x44] sm:$0xf]
        %v622 = vld [vmem:[%s601 + $0x48] sm:$0xf]
        %v623 = vld [vmem:[%s601 + $0x4c] sm:$0xf]
        %v624 = vld [vmem:[%s601 + $0x50] sm:$0xf]
        %v625 = vld [vmem:[%s601 + $0x54] sm:$0xf]
        %v626 = vld [vmem:[%s601 + $0x58] sm:$0xf]
        %v627 = vld [vmem:[%s601 + $0x5c] sm:$0xf]
        %v628 = vld [vmem:[%s601 + $0x60] sm:$0xf]
        %v629 = vld [vmem:[%s601 + $0x64] sm:$0xf]
        %v630 = vld [vmem:[%s601 + $0x68] sm:$0xf]
        %v631 = vld [vmem:[%s601 + $0x6c] sm:$0xf]
        %v632 = vld [vmem:[%s601 + $0x70] sm:$0xf]
        %v633 = vld [vmem:[%s601 + $0x74] sm:$0xf]
        %v634 = vld [vmem:[%s601 + $0x78] sm:$0xf]
        %v635 = vld [vmem:[%s601 + $0x7c] sm:$0xf]
        %v636 = vld [vmem:[%s3] sm:$0xf]
        %v637 = vld [vmem:[%s3 + $0x4] sm:$0xf]
        %v638 = vld [vmem:[%s3 + $0x8] sm:$0xf]
        %v639 = vld [vmem:[%s3 + $0xc] sm:$0xf]
        %v640 = vld [vmem:[%s3 + $0x10] sm:$0xf]
        %v641 = vld [vmem:[%s3 + $0x14] sm:$0xf]
        %v642 = vld [vmem:[%s3 + $0x18] sm:$0xf]
        %v643 = vld [vmem:[%s3 + $0x1c] sm:$0xf]
        %v644 = vld [vmem:[%s3 + $0x20] sm:$0xf]
        %v645 = vld [vmem:[%s3 + $0x24] sm:$0xf]
        %v646 = vld [vmem:[%s3 + $0x28] sm:$0xf]
        %v647 = vld [vmem:[%s3 + $0x2c] sm:$0xf]
        %v648 = vld [vmem:[%s3 + $0x30] sm:$0xf]
        %v649 = vld [vmem:[%s3 + $0x34] sm:$0xf]
        %v650 = vld [vmem:[%s3 + $0x38] sm:$0xf]
        %v651 = vld [vmem:[%s3 + $0x3c] sm:$0xf]
        %s652 = scalar_lea.vmem %s3, 64
        %v653 = vld [vmem:[%s652] sm:$0xf]
        %v654 = vld [vmem:[%s652 + $0x4] sm:$0xf]
        %v655 = vld [vmem:[%s652 + $0x8] sm:$0xf]
        %v656 = vld [vmem:[%s652 + $0xc] sm:$0xf]
        %v657 = vld [vmem:[%s652 + $0x10] sm:$0xf]
        %v658 = vld [vmem:[%s652 + $0x14] sm:$0xf]
        %v659 = vld [vmem:[%s652 + $0x18] sm:$0xf]
        %v660 = vld [vmem:[%s652 + $0x1c] sm:$0xf]
        %v661 = vld [vmem:[%s652 + $0x20] sm:$0xf]
        %v662 = vld [vmem:[%s652 + $0x24] sm:$0xf]
        %v663 = vld [vmem:[%s652 + $0x28] sm:$0xf]
        %v664 = vld [vmem:[%s652 + $0x2c] sm:$0xf]
        %v665 = vld [vmem:[%s652 + $0x30] sm:$0xf]
        %v666 = vld [vmem:[%s652 + $0x34] sm:$0xf]
        %v667 = vld [vmem:[%s652 + $0x38] sm:$0xf]
        %v668 = vld [vmem:[%s652 + $0x3c] sm:$0xf]
        %v701 = vunpack.c.l.b16 %v604
        %v702 = vunpack.c.l.b16 %v605
        %v703 = vunpack.c.l.b16 %v606
        %v704 = vunpack.c.l.b16 %v607
        %v705 = vunpack.c.l.b16 %v608
        %v706 = vunpack.c.l.b16 %v609
        %v707 = vunpack.c.l.b16 %v610
        %v708 = vunpack.c.l.b16 %v611
        %v709 = vunpack.c.l.b16 %v612
        %v710 = vunpack.c.l.b16 %v613
        %v711 = vunpack.c.l.b16 %v614
        %v712 = vunpack.c.l.b16 %v615
        %v713 = vunpack.c.l.b16 %v616
        %v714 = vunpack.c.l.b16 %v617
        %v715 = vunpack.c.l.b16 %v618
        %v716 = vunpack.c.l.b16 %v619
        %v717 = vunpack.c.l.b16 %v620
        %v718 = vunpack.c.l.b16 %v621
        %v719 = vunpack.c.l.b16 %v622
        %v720 = vunpack.c.l.b16 %v623
        %v721 = vunpack.c.l.b16 %v624
        %v722 = vunpack.c.l.b16 %v625
        %v723 = vunpack.c.l.b16 %v626
        %v724 = vunpack.c.l.b16 %v627
        %v725 = vunpack.c.l.b16 %v628
        %v726 = vunpack.c.l.b16 %v629
        %v727 = vunpack.c.l.b16 %v630
        %v728 = vunpack.c.l.b16 %v631
        %v729 = vunpack.c.l.b16 %v632
        %v730 = vunpack.c.l.b16 %v633
        %v731 = vunpack.c.l.b16 %v634
        %v732 = vunpack.c.l.b16 %v635
        %v733 = vpack.c.b16 %v702, %v701
        %v734 = vpack.c.b16 %v704, %v703
        %v735 = vpack.c.b16 %v706, %v705
        %v736 = vpack.c.b16 %v708, %v707
        %v737 = vpack.c.b16 %v710, %v709
        %v738 = vpack.c.b16 %v712, %v711
        %v739 = vpack.c.b16 %v714, %v713
        %v740 = vpack.c.b16 %v716, %v715
        %v741 = vpack.c.b16 %v718, %v717
        %v742 = vpack.c.b16 %v720, %v719
        %v743 = vpack.c.b16 %v722, %v721
        %v744 = vpack.c.b16 %v724, %v723
        %v745 = vpack.c.b16 %v726, %v725
        %v746 = vpack.c.b16 %v728, %v727
        %v747 = vpack.c.b16 %v730, %v729
        %v748 = vpack.c.b16 %v732, %v731
        %vm749 = vsmask.f32 7424
        %v751 = vshrl.u32 %v733, 16
        %v753 = vshll.u32 %v733, 16
        %v755 = vrot.slane %v753, 1
        %v756 = vor.u32 %v751, %v755
        %v758 = vshll.u32 %v734, 16
        %v760 = vrot.slane %v758, 1
        %v761 = vsel %vm749, %v756, %v760
        %v762 = vshrl.u32 %v734, 16
        %v764 = vor.u32 %v762, %v760
        %v766 = vshll.u32 %v735, 16
        %v768 = vrot.slane %v766, 1
        %v769 = vsel %vm749, %v764, %v768
        %v770 = vshrl.u32 %v735, 16
        %v772 = vor.u32 %v770, %v768
        %v774 = vshll.u32 %v736, 16
        %v776 = vrot.slane %v774, 1
        %v777 = vsel %vm749, %v772, %v776
        %v778 = vshrl.u32 %v736, 16
        %v780 = vor.u32 %v778, %v776
        %v782 = vshll.u32 %v737, 16
        %v784 = vrot.slane %v782, 1
        %v785 = vsel %vm749, %v780, %v784
        %v786 = vshrl.u32 %v737, 16
        %v788 = vor.u32 %v786, %v784
        %v790 = vshll.u32 %v738, 16
        %v792 = vrot.slane %v790, 1
        %v793 = vsel %vm749, %v788, %v792
        %v794 = vshrl.u32 %v738, 16
        %v796 = vor.u32 %v794, %v792
        %v798 = vshll.u32 %v739, 16
        %v800 = vrot.slane %v798, 1
        %v801 = vsel %vm749, %v796, %v800
        %v802 = vshrl.u32 %v739, 16
        %v804 = vor.u32 %v802, %v800
        %v806 = vshll.u32 %v740, 16
        %v808 = vrot.slane %v806, 1
        %v809 = vsel %vm749, %v804, %v808
        %v810 = vshrl.u32 %v740, 16
        %v812 = vor.u32 %v810, %v808
        %v814 = vshll.u32 %v741, 16
        %v816 = vrot.slane %v814, 1
        %v817 = vsel %vm749, %v812, %v816
        %v818 = vshrl.u32 %v741, 16
        %v820 = vor.u32 %v818, %v816
        %v822 = vshll.u32 %v742, 16
        %v824 = vrot.slane %v822, 1
        %v825 = vsel %vm749, %v820, %v824
        %v826 = vshrl.u32 %v742, 16
        %v828 = vor.u32 %v826, %v824
        %v830 = vshll.u32 %v743, 16
        %v832 = vrot.slane %v830, 1
        %v833 = vsel %vm749, %v828, %v832
        %v834 = vshrl.u32 %v743, 16
        %v836 = vor.u32 %v834, %v832
        %v838 = vshll.u32 %v744, 16
        %v840 = vrot.slane %v838, 1
        %v841 = vsel %vm749, %v836, %v840
        %v842 = vshrl.u32 %v744, 16
        %v844 = vor.u32 %v842, %v840
        %v846 = vshll.u32 %v745, 16
        %v848 = vrot.slane %v846, 1
        %v849 = vsel %vm749, %v844, %v848
        %v850 = vshrl.u32 %v745, 16
        %v852 = vor.u32 %v850, %v848
        %v854 = vshll.u32 %v746, 16
        %v856 = vrot.slane %v854, 1
        %v857 = vsel %vm749, %v852, %v856
        %v858 = vshrl.u32 %v746, 16
        %v860 = vor.u32 %v858, %v856
        %v862 = vshll.u32 %v747, 16
        %v864 = vrot.slane %v862, 1
        %v865 = vsel %vm749, %v860, %v864
        %v866 = vshrl.u32 %v747, 16
        %v868 = vor.u32 %v866, %v864
        %v870 = vshll.u32 %v748, 16
        %v872 = vrot.slane %v870, 1
        %v873 = vsel %vm749, %v868, %v872
        %v874 = vshrl.u32 %v748, 16
        %v876 = vor.u32 %v874, %v872
        %v909 = vunpack.c.l.b16 %v653
        %v910 = vunpack.c.l.b16 %v654
        %v911 = vunpack.c.l.b16 %v655
        %v912 = vunpack.c.l.b16 %v656
        %v913 = vunpack.c.l.b16 %v657
        %v914 = vunpack.c.l.b16 %v658
        %v915 = vunpack.c.l.b16 %v659
        %v916 = vunpack.c.l.b16 %v660
        %v917 = vunpack.c.l.b16 %v661
        %v918 = vunpack.c.l.b16 %v662
        %v919 = vunpack.c.l.b16 %v663
        %v920 = vunpack.c.l.b16 %v664
        %v921 = vunpack.c.l.b16 %v665
        %v922 = vunpack.c.l.b16 %v666
        %v923 = vunpack.c.l.b16 %v667
        %v924 = vunpack.c.l.b16 %v668
        %v925 = vpack.c.b16 %v910, %v909
        %v926 = vpack.c.b16 %v912, %v911
        %v927 = vpack.c.b16 %v914, %v913
        %v928 = vpack.c.b16 %v916, %v915
        %v929 = vpack.c.b16 %v918, %v917
        %v930 = vpack.c.b16 %v920, %v919
        %v931 = vpack.c.b16 %v922, %v921
        %v932 = vpack.c.b16 %v924, %v923
        %941 = vmatprep.subr.bf16.mxu0 0
        %942 = vmatpush1.bf16.msra.mxu0 %v925
        %943 = vmatprep.subr.bf16.mxu0 0
        %944 = vmatpush1.bf16.msra.mxu0 %v926
        %945 = vmatprep.subr.bf16.mxu0 0
        %946 = vmatpush1.bf16.msra.mxu0 %v927
        %947 = vmatprep.subr.bf16.mxu0 0
        %948 = vmatpush1.bf16.msra.mxu0 %v928
        %949 = vmatprep.subr.bf16.mxu0 0
        %950 = vmatpush1.bf16.msra.mxu0 %v929
        %951 = vmatprep.subr.bf16.mxu0 0
        %952 = vmatpush1.bf16.msra.mxu0 %v930
        %953 = vmatprep.subr.bf16.mxu0 0
        %954 = vmatpush1.bf16.msra.mxu0 %v931
        %955 = vmatprep.subr.bf16.mxu0 0
        %956 = vmatpush1.bf16.msra.mxu0 %v932
        %957 = vmatprep.subr.bf16.mxu0 0
        %958 = vmatpush1.bf16.msra.mxu0 0
        %959 = vmatprep.subr.bf16.mxu0 0
        %960 = vmatpush1.bf16.msra.mxu0 0
        %961 = vmatprep.subr.bf16.mxu0 0
        %962 = vmatpush1.bf16.msra.mxu0 0
        %963 = vmatprep.subr.bf16.mxu0 0
        %964 = vmatpush1.bf16.msra.mxu0 0
        %965 = vmatprep.subr.bf16.mxu0 0
        %966 = vmatpush1.bf16.msra.mxu0 0
        %967 = vmatprep.subr.bf16.mxu0 0
        %968 = vmatpush1.bf16.msra.mxu0 0
        %969 = vmatprep.subr.bf16.mxu0 0
        %970 = vmatpush1.bf16.msra.mxu0 0
        %971 = vmatprep.subr.bf16.mxu0 0
        %972 = vmatpush1.bf16.msra.mxu0 0
        %973 = vmatprep.mubr.bf16.mxu0 0
        %974 = vmatmul.mubr.bf16.gmra.mrb[0].mxu0 %v761
        %v975 = vpop.f32.mrb[0].mxu0
        %v976 = vadd.f32 0.0, %v975
        %v977 = vpop.f32.mrb[0].mxu0
        %v978 = vpop.f32.mrb[0].mxu0
        %v979 = vadd.f32 0.0, %v978
        %v980 = vpop.f32.mrb[0].mxu0
        %981 = vmatprep.mubr.bf16.mxu0 0
        %982 = vmatmul.mubr.bf16.gmra.mrb[0].mxu0 %v769
        %v983 = vpop.f32.mrb[0].mxu0
        %v984 = vadd.f32 0.0, %v983
        %v985 = vpop.f32.mrb[0].mxu0
        %v986 = vpop.f32.mrb[0].mxu0
        %v987 = vadd.f32 0.0, %v986
        %v988 = vpop.f32.mrb[0].mxu0
        %989 = vmatprep.mubr.bf16.mxu0 0
        %990 = vmatmul.mubr.bf16.gmra.mrb[0].mxu0 %v777
        %v991 = vpop.f32.mrb[0].mxu0
        %v992 = vadd.f32 0.0, %v991
        %v993 = vpop.f32.mrb[0].mxu0
        %v994 = vpop.f32.mrb[0].mxu0
        %v995 = vadd.f32 0.0, %v994
        %v996 = vpop.f32.mrb[0].mxu0
        %997 = vmatprep.mubr.bf16.mxu0 0
        %998 = vmatmul.mubr.bf16.gmra.mrb[0].mxu0 %v785
        %v999 = vpop.f32.mrb[0].mxu0
        %v1000 = vadd.f32 0.0, %v999
        %v1001 = vpop.f32.mrb[0].mxu0
        %v1002 = vpop.f32.mrb[0].mxu0
        %v1003 = vadd.f32 0.0, %v1002
        %v1004 = vpop.f32.mrb[0].mxu0
        %1005 = vmatprep.mubr.bf16.mxu0 0
        %1006 = vmatmul.mubr.bf16.gmra.mrb[0].mxu0 %v793
        %v1007 = vpop.f32.mrb[0].mxu0
        %v1008 = vadd.f32 0.0, %v1007
        %v1009 = vpop.f32.mrb[0].mxu0
        %v1010 = vpop.f32.mrb[0].mxu0
        %v1011 = vadd.f32 0.0, %v1010
        %v1012 = vpop.f32.mrb[0].mxu0
        %1013 = vmatprep.mubr.bf16.mxu0 0
        %1014 = vmatmul.mubr.bf16.gmra.mrb[0].mxu0 %v801
        %v1015 = vpop.f32.mrb[0].mxu0
        %v1016 = vadd.f32 0.0, %v1015
        %v1017 = vpop.f32.mrb[0].mxu0
        %v1018 = vpop.f32.mrb[0].mxu0
        %v1019 = vadd.f32 0.0, %v1018
        %v1020 = vpop.f32.mrb[0].mxu0
        %1021 = vmatprep.mubr.bf16.mxu0 0
        %1022 = vmatmul.mubr.bf16.gmra.mrb[0].mxu0 %v809
        %v1023 = vpop.f32.mrb[0].mxu0
        %v1024 = vadd.f32 0.0, %v1023
        %v1025 = vpop.f32.mrb[0].mxu0
        %v1026 = vpop.f32.mrb[0].mxu0
        %v1027 = vadd.f32 0.0, %v1026
        %v1028 = vpop.f32.mrb[0].mxu0
        %1029 = vmatprep.mubr.bf16.mxu0 0
        %1030 = vmatmul.mubr.bf16.gmra.mrb[0].mxu0 %v817
        %v1031 = vpop.f32.mrb[0].mxu0
        %v1032 = vadd.f32 0.0, %v1031
        %v1033 = vpop.f32.mrb[0].mxu0
        %v1034 = vpop.f32.mrb[0].mxu0
        %v1035 = vadd.f32 0.0, %v1034
        %v1036 = vpop.f32.mrb[0].mxu0
        %1037 = vmatprep.mubr.bf16.mxu0 0
        %1038 = vmatmul.mubr.bf16.gmra.mrb[0].mxu0 %v825
        %v1039 = vpop.f32.mrb[0].mxu0
        %v1040 = vadd.f32 0.0, %v1039
        %v1041 = vpop.f32.mrb[0].mxu0
        %v1042 = vpop.f32.mrb[0].mxu0
        %v1043 = vadd.f32 0.0, %v1042
        %v1044 = vpop.f32.mrb[0].mxu0
        %1045 = vmatprep.mubr.bf16.mxu0 0
        %1046 = vmatmul.mubr.bf16.gmra.mrb[0].mxu0 %v833
        %v1047 = vpop.f32.mrb[0].mxu0
        %v1048 = vadd.f32 0.0, %v1047
        %v1049 = vpop.f32.mrb[0].mxu0
        %v1050 = vpop.f32.mrb[0].mxu0
        %v1051 = vadd.f32 0.0, %v1050
        %v1052 = vpop.f32.mrb[0].mxu0
        %1053 = vmatprep.mubr.bf16.mxu0 0
        %1054 = vmatmul.mubr.bf16.gmra.mrb[0].mxu0 %v841
        %v1055 = vpop.f32.mrb[0].mxu0
        %v1056 = vadd.f32 0.0, %v1055
        %v1057 = vpop.f32.mrb[0].mxu0
        %v1058 = vpop.f32.mrb[0].mxu0
        %v1059 = vadd.f32 0.0, %v1058
        %v1060 = vpop.f32.mrb[0].mxu0
        %1061 = vmatprep.mubr.bf16.mxu0 0
        %1062 = vmatmul.mubr.bf16.gmra.mrb[0].mxu0 %v849
        %v1063 = vpop.f32.mrb[0].mxu0
        %v1064 = vadd.f32 0.0, %v1063
        %v1065 = vpop.f32.mrb[0].mxu0
        %v1066 = vpop.f32.mrb[0].mxu0
        %v1067 = vadd.f32 0.0, %v1066
        %v1068 = vpop.f32.mrb[0].mxu0
        %1069 = vmatprep.mubr.bf16.mxu0 0
        %1070 = vmatmul.mubr.bf16.gmra.mrb[0].mxu0 %v857
        %v1071 = vpop.f32.mrb[0].mxu0
        %v1072 = vadd.f32 0.0, %v1071
        %v1073 = vpop.f32.mrb[0].mxu0
        %v1074 = vpop.f32.mrb[0].mxu0
        %v1075 = vadd.f32 0.0, %v1074
        %v1076 = vpop.f32.mrb[0].mxu0
        %1077 = vmatprep.mubr.bf16.mxu0 0
        %1078 = vmatmul.mubr.bf16.gmra.mrb[0].mxu0 %v865
        %v1079 = vpop.f32.mrb[0].mxu0
        %v1080 = vadd.f32 0.0, %v1079
        %v1081 = vpop.f32.mrb[0].mxu0
        %v1082 = vpop.f32.mrb[0].mxu0
        %v1083 = vadd.f32 0.0, %v1082
        %v1084 = vpop.f32.mrb[0].mxu0
        %1085 = vmatprep.mubr.bf16.mxu0 0
        %1086 = vmatmul.mubr.bf16.gmra.mrb[0].mxu0 %v873
        %v1087 = vpop.f32.mrb[0].mxu0
        %v1088 = vadd.f32 0.0, %v1087
        %v1089 = vpop.f32.mrb[0].mxu0
        %v1090 = vpop.f32.mrb[0].mxu0
        %v1091 = vadd.f32 0.0, %v1090
        %v1092 = vpop.f32.mrb[0].mxu0
        %1093 = vmatprep.mubr.bf16.mxu0 0
        %1094 = vmatmul.mubr.bf16.gmra.mrb[0].mxu0 %v876
        %v1095 = vpop.f32.mrb[0].mxu0
        %v1096 = vadd.f32 0.0, %v1095
        %v1097 = vpop.f32.mrb[0].mxu0
        %v1098 = vpop.f32.mrb[0].mxu0
        %v1099 = vadd.f32 0.0, %v1098
        %v1100 = vpop.f32.mrb[0].mxu0
        %1101 = vdwg.mxu0
        %v1134 = vunpack.c.l.b16 %v636
        %v1135 = vunpack.c.l.b16 %v637
        %v1136 = vunpack.c.l.b16 %v638
        %v1137 = vunpack.c.l.b16 %v639
        %v1138 = vunpack.c.l.b16 %v640
        %v1139 = vunpack.c.l.b16 %v641
        %v1140 = vunpack.c.l.b16 %v642
        %v1141 = vunpack.c.l.b16 %v643
        %v1142 = vunpack.c.l.b16 %v644
        %v1143 = vunpack.c.l.b16 %v645
        %v1144 = vunpack.c.l.b16 %v646
        %v1145 = vunpack.c.l.b16 %v647
        %v1146 = vunpack.c.l.b16 %v648
        %v1147 = vunpack.c.l.b16 %v649
        %v1148 = vunpack.c.l.b16 %v650
        %v1149 = vunpack.c.l.b16 %v651
        %v1150 = vpack.c.b16 %v1135, %v1134
        %v1151 = vpack.c.b16 %v1137, %v1136
        %v1152 = vpack.c.b16 %v1139, %v1138
        %v1153 = vpack.c.b16 %v1141, %v1140
        %v1154 = vpack.c.b16 %v1143, %v1142
        %v1155 = vpack.c.b16 %v1145, %v1144
        %v1156 = vpack.c.b16 %v1147, %v1146
        %v1157 = vpack.c.b16 %v1149, %v1148
        %1166 = vmatprep.subr.bf16.mxu0 0
        %1167 = vmatpush1.bf16.msra.mxu0 %v1150
        %1168 = vmatprep.subr.bf16.mxu0 0
        %1169 = vmatpush1.bf16.msra.mxu0 %v1151
        %1170 = vmatprep.subr.bf16.mxu0 0
        %1171 = vmatpush1.bf16.msra.mxu0 %v1152
        %1172 = vmatprep.subr.bf16.mxu0 0
        %1173 = vmatpush1.bf16.msra.mxu0 %v1153
        %1174 = vmatprep.subr.bf16.mxu0 0
        %1175 = vmatpush1.bf16.msra.mxu0 %v1154
        %1176 = vmatprep.subr.bf16.mxu0 0
        %1177 = vmatpush1.bf16.msra.mxu0 %v1155
        %1178 = vmatprep.subr.bf16.mxu0 0
        %1179 = vmatpush1.bf16.msra.mxu0 %v1156
        %1180 = vmatprep.subr.bf16.mxu0 0
        %1181 = vmatpush1.bf16.msra.mxu0 %v1157
        %1182 = vmatprep.subr.bf16.mxu0 0
        %1183 = vmatpush1.bf16.msra.mxu0 0
        %1184 = vmatprep.subr.bf16.mxu0 0
        %1185 = vmatpush1.bf16.msra.mxu0 0
        %1186 = vmatprep.subr.bf16.mxu0 0
        %1187 = vmatpush1.bf16.msra.mxu0 0
        %1188 = vmatprep.subr.bf16.mxu0 0
        %1189 = vmatpush1.bf16.msra.mxu0 0
        %1190 = vmatprep.subr.bf16.mxu0 0
        %1191 = vmatpush1.bf16.msra.mxu0 0
        %1192 = vmatprep.subr.bf16.mxu0 0
        %1193 = vmatpush1.bf16.msra.mxu0 0
        %1194 = vmatprep.subr.bf16.mxu0 0
        %1195 = vmatpush1.bf16.msra.mxu0 0
        %1196 = vmatprep.subr.bf16.mxu0 0
        %1197 = vmatpush1.bf16.msra.mxu0 0
        %1198 = vmatprep.mubr.bf16.mxu0 0
        %1199 = vmatmul.mubr.bf16.gmra.mrb[0].mxu0 %v733
        %v1200 = vpop.f32.mrb[0].mxu0
        %v1201 = vadd.f32 %v976, %v1200
        %v1202 = vpop.f32.mrb[0].mxu0
        %v1203 = vpop.f32.mrb[0].mxu0
        %v1204 = vadd.f32 %v979, %v1203
        %v1205 = vpop.f32.mrb[0].mxu0
        %1206 = vmatprep.mubr.bf16.mxu0 0
        %1207 = vmatmul.mubr.bf16.gmra.mrb[0].mxu0 %v734
        %v1208 = vpop.f32.mrb[0].mxu0
        %v1209 = vadd.f32 %v984, %v1208
        %v1210 = vpop.f32.mrb[0].mxu0
        %v1211 = vpop.f32.mrb[0].mxu0
        %v1212 = vadd.f32 %v987, %v1211
        %v1213 = vpop.f32.mrb[0].mxu0
        %1214 = vmatprep.mubr.bf16.mxu0 0
        %1215 = vmatmul.mubr.bf16.gmra.mrb[0].mxu0 %v735
        %v1216 = vpop.f32.mrb[0].mxu0
        %v1217 = vadd.f32 %v992, %v1216
        %v1218 = vpop.f32.mrb[0].mxu0
        %v1219 = vpop.f32.mrb[0].mxu0
        %v1220 = vadd.f32 %v995, %v1219
        %v1221 = vpop.f32.mrb[0].mxu0
        %1222 = vmatprep.mubr.bf16.mxu0 0
        %1223 = vmatmul.mubr.bf16.gmra.mrb[0].mxu0 %v736
        %v1224 = vpop.f32.mrb[0].mxu0
        %v1225 = vadd.f32 %v1000, %v1224
        %v1226 = vpop.f32.mrb[0].mxu0
        %v1227 = vpop.f32.mrb[0].mxu0
        %v1228 = vadd.f32 %v1003, %v1227
        %v1229 = vpop.f32.mrb[0].mxu0
        %1230 = vmatprep.mubr.bf16.mxu0 0
        %1231 = vmatmul.mubr.bf16.gmra.mrb[0].mxu0 %v737
        %v1232 = vpop.f32.mrb[0].mxu0
        %v1233 = vadd.f32 %v1008, %v1232
        %v1234 = vpop.f32.mrb[0].mxu0
        %v1235 = vpop.f32.mrb[0].mxu0
        %v1236 = vadd.f32 %v1011, %v1235
        %v1237 = vpop.f32.mrb[0].mxu0
        %1238 = vmatprep.mubr.bf16.mxu0 0
        %1239 = vmatmul.mubr.bf16.gmra.mrb[0].mxu0 %v738
        %v1240 = vpop.f32.mrb[0].mxu0
        %v1241 = vadd.f32 %v1016, %v1240
        %v1242 = vpop.f32.mrb[0].mxu0
        %v1243 = vpop.f32.mrb[0].mxu0
        %v1244 = vadd.f32 %v1019, %v1243
        %v1245 = vpop.f32.mrb[0].mxu0
        %1246 = vmatprep.mubr.bf16.mxu0 0
        %1247 = vmatmul.mubr.bf16.gmra.mrb[0].mxu0 %v739
        %v1248 = vpop.f32.mrb[0].mxu0
        %v1249 = vadd.f32 %v1024, %v1248
        %v1250 = vpop.f32.mrb[0].mxu0
        %v1251 = vpop.f32.mrb[0].mxu0
        %v1252 = vadd.f32 %v1027, %v1251
        %v1253 = vpop.f32.mrb[0].mxu0
        %1254 = vmatprep.mubr.bf16.mxu0 0
        %1255 = vmatmul.mubr.bf16.gmra.mrb[0].mxu0 %v740
        %v1256 = vpop.f32.mrb[0].mxu0
        %v1257 = vadd.f32 %v1032, %v1256
        %v1258 = vpop.f32.mrb[0].mxu0
        %v1259 = vpop.f32.mrb[0].mxu0
        %v1260 = vadd.f32 %v1035, %v1259
        %v1261 = vpop.f32.mrb[0].mxu0
        %1262 = vmatprep.mubr.bf16.mxu0 0
        %1263 = vmatmul.mubr.bf16.gmra.mrb[0].mxu0 %v741
        %v1264 = vpop.f32.mrb[0].mxu0
        %v1265 = vadd.f32 %v1040, %v1264
        %v1266 = vpop.f32.mrb[0].mxu0
        %v1267 = vpop.f32.mrb[0].mxu0
        %v1268 = vadd.f32 %v1043, %v1267
        %v1269 = vpop.f32.mrb[0].mxu0
        %1270 = vmatprep.mubr.bf16.mxu0 0
        %1271 = vmatmul.mubr.bf16.gmra.mrb[0].mxu0 %v742
        %v1272 = vpop.f32.mrb[0].mxu0
        %v1273 = vadd.f32 %v1048, %v1272
        %v1274 = vpop.f32.mrb[0].mxu0
        %v1275 = vpop.f32.mrb[0].mxu0
        %v1276 = vadd.f32 %v1051, %v1275
        %v1277 = vpop.f32.mrb[0].mxu0
        %1278 = vmatprep.mubr.bf16.mxu0 0
        %1279 = vmatmul.mubr.bf16.gmra.mrb[0].mxu0 %v743
        %v1280 = vpop.f32.mrb[0].mxu0
        %v1281 = vadd.f32 %v1056, %v1280
        %v1282 = vpop.f32.mrb[0].mxu0
        %v1283 = vpop.f32.mrb[0].mxu0
        %v1284 = vadd.f32 %v1059, %v1283
        %v1285 = vpop.f32.mrb[0].mxu0
        %1286 = vmatprep.mubr.bf16.mxu0 0
        %1287 = vmatmul.mubr.bf16.gmra.mrb[0].mxu0 %v744
        %v1288 = vpop.f32.mrb[0].mxu0
        %v1289 = vadd.f32 %v1064, %v1288
        %v1290 = vpop.f32.mrb[0].mxu0
        %v1291 = vpop.f32.mrb[0].mxu0
        %v1292 = vadd.f32 %v1067, %v1291
        %v1293 = vpop.f32.mrb[0].mxu0
        %1294 = vmatprep.mubr.bf16.mxu0 0
        %1295 = vmatmul.mubr.bf16.gmra.mrb[0].mxu0 %v745
        %v1296 = vpop.f32.mrb[0].mxu0
        %v1297 = vadd.f32 %v1072, %v1296
        %v1298 = vpop.f32.mrb[0].mxu0
        %v1299 = vpop.f32.mrb[0].mxu0
        %v1300 = vadd.f32 %v1075, %v1299
        %v1301 = vpop.f32.mrb[0].mxu0
        %1302 = vmatprep.mubr.bf16.mxu0 0
        %1303 = vmatmul.mubr.bf16.gmra.mrb[0].mxu0 %v746
        %v1304 = vpop.f32.mrb[0].mxu0
        %v1305 = vadd.f32 %v1080, %v1304
        %v1306 = vpop.f32.mrb[0].mxu0
        %v1307 = vpop.f32.mrb[0].mxu0
        %v1308 = vadd.f32 %v1083, %v1307
        %v1309 = vpop.f32.mrb[0].mxu0
        %1310 = vmatprep.mubr.bf16.mxu0 0
        %1311 = vmatmul.mubr.bf16.gmra.mrb[0].mxu0 %v747
        %v1312 = vpop.f32.mrb[0].mxu0
        %v1313 = vadd.f32 %v1088, %v1312
        %v1314 = vpop.f32.mrb[0].mxu0
        %v1315 = vpop.f32.mrb[0].mxu0
        %v1316 = vadd.f32 %v1091, %v1315
        %v1317 = vpop.f32.mrb[0].mxu0
        %1318 = vmatprep.mubr.bf16.mxu0 0
        %1319 = vmatmul.mubr.bf16.gmra.mrb[0].mxu0 %v748
        %v1320 = vpop.f32.mrb[0].mxu0
        %v1321 = vadd.f32 %v1096, %v1320
        %v1322 = vpop.f32.mrb[0].mxu0
        %v1323 = vpop.f32.mrb[0].mxu0
        %v1324 = vadd.f32 %v1099, %v1323
        %v1325 = vpop.f32.mrb[0].mxu0
        %1326 = vdwg.mxu0
        %s1327 = scalar_lea.vmem %s3, 128
        %v1328 = vld [vmem:[%s1327] sm:$0xf]
        %v1329 = vld [vmem:[%s1327 + $0x4] sm:$0xf]
        %v1330 = vld [vmem:[%s1327 + $0x8] sm:$0xf]
        %v1331 = vld [vmem:[%s1327 + $0xc] sm:$0xf]
        %v1332 = vld [vmem:[%s1327 + $0x10] sm:$0xf]
        %v1333 = vld [vmem:[%s1327 + $0x14] sm:$0xf]
        %v1334 = vld [vmem:[%s1327 + $0x18] sm:$0xf]
        %v1335 = vld [vmem:[%s1327 + $0x1c] sm:$0xf]
        %v1336 = vld [vmem:[%s1327 + $0x20] sm:$0xf]
        %v1337 = vld [vmem:[%s1327 + $0x24] sm:$0xf]
        %v1338 = vld [vmem:[%s1327 + $0x28] sm:$0xf]
        %v1339 = vld [vmem:[%s1327 + $0x2c] sm:$0xf]
        %v1340 = vld [vmem:[%s1327 + $0x30] sm:$0xf]
        %v1341 = vld [vmem:[%s1327 + $0x34] sm:$0xf]
        %v1342 = vld [vmem:[%s1327 + $0x38] sm:$0xf]
        %v1343 = vld [vmem:[%s1327 + $0x3c] sm:$0xf]
        %vm1344 = vcmask 1046528
        %v1345 = vrot.slane %v733, 1
        %v1346 = vrot.slane %v734, 1
        %v1347 = vsel %vm1344, %v1345, %v1346
        %v1348 = vrot.slane %v735, 1
        %v1349 = vsel %vm1344, %v1346, %v1348
        %v1350 = vrot.slane %v736, 1
        %v1351 = vsel %vm1344, %v1348, %v1350
        %v1352 = vrot.slane %v737, 1
        %v1353 = vsel %vm1344, %v1350, %v1352
        %v1354 = vrot.slane %v738, 1
        %v1355 = vsel %vm1344, %v1352, %v1354
        %v1356 = vrot.slane %v739, 1
        %v1357 = vsel %vm1344, %v1354, %v1356
        %v1358 = vrot.slane %v740, 1
        %v1359 = vsel %vm1344, %v1356, %v1358
        %v1360 = vrot.slane %v741, 1
        %v1361 = vsel %vm1344, %v1358, %v1360
        %v1362 = vrot.slane %v742, 1
        %v1363 = vsel %vm1344, %v1360, %v1362
        %v1364 = vrot.slane %v743, 1
        %v1365 = vsel %vm1344, %v1362, %v1364
        %v1366 = vrot.slane %v744, 1
        %v1367 = vsel %vm1344, %v1364, %v1366
        %v1368 = vrot.slane %v745, 1
        %v1369 = vsel %vm1344, %v1366, %v1368
        %v1370 = vrot.slane %v746, 1
        %v1371 = vsel %vm1344, %v1368, %v1370
        %v1372 = vrot.slane %v747, 1
        %v1373 = vsel %vm1344, %v1370, %v1372
        %v1374 = vrot.slane %v748, 1
        %v1375 = vsel %vm1344, %v1372, %v1374
        %v1408 = vunpack.c.l.b16 %v1328
        %v1409 = vunpack.c.l.b16 %v1329
        %v1410 = vunpack.c.l.b16 %v1330
        %v1411 = vunpack.c.l.b16 %v1331
        %v1412 = vunpack.c.l.b16 %v1332
        %v1413 = vunpack.c.l.b16 %v1333
        %v1414 = vunpack.c.l.b16 %v1334
        %v1415 = vunpack.c.l.b16 %v1335
        %v1416 = vunpack.c.l.b16 %v1336
        %v1417 = vunpack.c.l.b16 %v1337
        %v1418 = vunpack.c.l.b16 %v1338
        %v1419 = vunpack.c.l.b16 %v1339
        %v1420 = vunpack.c.l.b16 %v1340
        %v1421 = vunpack.c.l.b16 %v1341
        %v1422 = vunpack.c.l.b16 %v1342
        %v1423 = vunpack.c.l.b16 %v1343
        %v1424 = vpack.c.b16 %v1409, %v1408
        %v1425 = vpack.c.b16 %v1411, %v1410
        %v1426 = vpack.c.b16 %v1413, %v1412
        %v1427 = vpack.c.b16 %v1415, %v1414
        %v1428 = vpack.c.b16 %v1417, %v1416
        %v1429 = vpack.c.b16 %v1419, %v1418
        %v1430 = vpack.c.b16 %v1421, %v1420
        %v1431 = vpack.c.b16 %v1423, %v1422
        %1440 = vmatprep.subr.bf16.mxu0 0
        %1441 = vmatpush1.bf16.msra.mxu0 %v1424
        %1442 = vmatprep.subr.bf16.mxu0 0
        %1443 = vmatpush1.bf16.msra.mxu0 %v1425
        %1444 = vmatprep.subr.bf16.mxu0 0
        %1445 = vmatpush1.bf16.msra.mxu0 %v1426
        %1446 = vmatprep.subr.bf16.mxu0 0
        %1447 = vmatpush1.bf16.msra.mxu0 %v1427
        %1448 = vmatprep.subr.bf16.mxu0 0
        %1449 = vmatpush1.bf16.msra.mxu0 %v1428
        %1450 = vmatprep.subr.bf16.mxu0 0
        %1451 = vmatpush1.bf16.msra.mxu0 %v1429
        %1452 = vmatprep.subr.bf16.mxu0 0
        %1453 = vmatpush1.bf16.msra.mxu0 %v1430
        %1454 = vmatprep.subr.bf16.mxu0 0
        %1455 = vmatpush1.bf16.msra.mxu0 %v1431
        %1456 = vmatprep.subr.bf16.mxu0 0
        %1457 = vmatpush1.bf16.msra.mxu0 0
        %1458 = vmatprep.subr.bf16.mxu0 0
        %1459 = vmatpush1.bf16.msra.mxu0 0
        %1460 = vmatprep.subr.bf16.mxu0 0
        %1461 = vmatpush1.bf16.msra.mxu0 0
        %1462 = vmatprep.subr.bf16.mxu0 0
        %1463 = vmatpush1.bf16.msra.mxu0 0
        %1464 = vmatprep.subr.bf16.mxu0 0
        %1465 = vmatpush1.bf16.msra.mxu0 0
        %1466 = vmatprep.subr.bf16.mxu0 0
        %1467 = vmatpush1.bf16.msra.mxu0 0
        %1468 = vmatprep.subr.bf16.mxu0 0
        %1469 = vmatpush1.bf16.msra.mxu0 0
        %1470 = vmatprep.subr.bf16.mxu0 0
        %1471 = vmatpush1.bf16.msra.mxu0 0
        %1472 = vmatprep.mubr.bf16.mxu0 0
        %1473 = vmatmul.mubr.bf16.gmra.mrb[0].mxu0 %v1347
        %v1474 = vpop.f32.mrb[0].mxu0
        %v1475 = vadd.f32 0.0, %v1474
        %v1476 = vpop.f32.mrb[0].mxu0
        %v1477 = vpop.f32.mrb[0].mxu0
        %v1478 = vadd.f32 0.0, %v1477
        %v1479 = vpop.f32.mrb[0].mxu0
        %1480 = vmatprep.mubr.bf16.mxu0 0
        %1481 = vmatmul.mubr.bf16.gmra.mrb[0].mxu0 %v1349
        %v1482 = vpop.f32.mrb[0].mxu0
        %v1483 = vadd.f32 0.0, %v1482
        %v1484 = vpop.f32.mrb[0].mxu0
        %v1485 = vpop.f32.mrb[0].mxu0
        %v1486 = vadd.f32 0.0, %v1485
        %v1487 = vpop.f32.mrb[0].mxu0
        %1488 = vmatprep.mubr.bf16.mxu0 0
        %1489 = vmatmul.mubr.bf16.gmra.mrb[0].mxu0 %v1351
        %v1490 = vpop.f32.mrb[0].mxu0
        %v1491 = vadd.f32 0.0, %v1490
        %v1492 = vpop.f32.mrb[0].mxu0
        %v1493 = vpop.f32.mrb[0].mxu0
        %v1494 = vadd.f32 0.0, %v1493
        %v1495 = vpop.f32.mrb[0].mxu0
        %1496 = vmatprep.mubr.bf16.mxu0 0
        %1497 = vmatmul.mubr.bf16.gmra.mrb[0].mxu0 %v1353
        %v1498 = vpop.f32.mrb[0].mxu0
        %v1499 = vadd.f32 0.0, %v1498
        %v1500 = vpop.f32.mrb[0].mxu0
        %v1501 = vpop.f32.mrb[0].mxu0
        %v1502 = vadd.f32 0.0, %v1501
        %v1503 = vpop.f32.mrb[0].mxu0
        %1504 = vmatprep.mubr.bf16.mxu0 0
        %1505 = vmatmul.mubr.bf16.gmra.mrb[0].mxu0 %v1355
        %v1506 = vpop.f32.mrb[0].mxu0
        %v1507 = vadd.f32 0.0, %v1506
        %v1508 = vpop.f32.mrb[0].mxu0
        %v1509 = vpop.f32.mrb[0].mxu0
        %v1510 = vadd.f32 0.0, %v1509
        %v1511 = vpop.f32.mrb[0].mxu0
        %1512 = vmatprep.mubr.bf16.mxu0 0
        %1513 = vmatmul.mubr.bf16.gmra.mrb[0].mxu0 %v1357
        %v1514 = vpop.f32.mrb[0].mxu0
        %v1515 = vadd.f32 0.0, %v1514
        %v1516 = vpop.f32.mrb[0].mxu0
        %v1517 = vpop.f32.mrb[0].mxu0
        %v1518 = vadd.f32 0.0, %v1517
        %v1519 = vpop.f32.mrb[0].mxu0
        %1520 = vmatprep.mubr.bf16.mxu0 0
        %1521 = vmatmul.mubr.bf16.gmra.mrb[0].mxu0 %v1359
        %v1522 = vpop.f32.mrb[0].mxu0
        %v1523 = vadd.f32 0.0, %v1522
        %v1524 = vpop.f32.mrb[0].mxu0
        %v1525 = vpop.f32.mrb[0].mxu0
        %v1526 = vadd.f32 0.0, %v1525
        %v1527 = vpop.f32.mrb[0].mxu0
        %1528 = vmatprep.mubr.bf16.mxu0 0
        %1529 = vmatmul.mubr.bf16.gmra.mrb[0].mxu0 %v1361
        %v1530 = vpop.f32.mrb[0].mxu0
        %v1531 = vadd.f32 0.0, %v1530
        %v1532 = vpop.f32.mrb[0].mxu0
        %v1533 = vpop.f32.mrb[0].mxu0
        %v1534 = vadd.f32 0.0, %v1533
        %v1535 = vpop.f32.mrb[0].mxu0
        %1536 = vmatprep.mubr.bf16.mxu0 0
        %1537 = vmatmul.mubr.bf16.gmra.mrb[0].mxu0 %v1363
        %v1538 = vpop.f32.mrb[0].mxu0
        %v1539 = vadd.f32 0.0, %v1538
        %v1540 = vpop.f32.mrb[0].mxu0
        %v1541 = vpop.f32.mrb[0].mxu0
        %v1542 = vadd.f32 0.0, %v1541
        %v1543 = vpop.f32.mrb[0].mxu0
        %1544 = vmatprep.mubr.bf16.mxu0 0
        %1545 = vmatmul.mubr.bf16.gmra.mrb[0].mxu0 %v1365
        %v1546 = vpop.f32.mrb[0].mxu0
        %v1547 = vadd.f32 0.0, %v1546
        %v1548 = vpop.f32.mrb[0].mxu0
        %v1549 = vpop.f32.mrb[0].mxu0
        %v1550 = vadd.f32 0.0, %v1549
        %v1551 = vpop.f32.mrb[0].mxu0
        %1552 = vmatprep.mubr.bf16.mxu0 0
        %1553 = vmatmul.mubr.bf16.gmra.mrb[0].mxu0 %v1367
        %v1554 = vpop.f32.mrb[0].mxu0
        %v1555 = vadd.f32 0.0, %v1554
        %v1556 = vpop.f32.mrb[0].mxu0
        %v1557 = vpop.f32.mrb[0].mxu0
        %v1558 = vadd.f32 0.0, %v1557
        %v1559 = vpop.f32.mrb[0].mxu0
        %1560 = vmatprep.mubr.bf16.mxu0 0
        %1561 = vmatmul.mubr.bf16.gmra.mrb[0].mxu0 %v1369
        %v1562 = vpop.f32.mrb[0].mxu0
        %v1563 = vadd.f32 0.0, %v1562
        %v1564 = vpop.f32.mrb[0].mxu0
        %v1565 = vpop.f32.mrb[0].mxu0
        %v1566 = vadd.f32 0.0, %v1565
        %v1567 = vpop.f32.mrb[0].mxu0
        %1568 = vmatprep.mubr.bf16.mxu0 0
        %1569 = vmatmul.mubr.bf16.gmra.mrb[0].mxu0 %v1371
        %v1570 = vpop.f32.mrb[0].mxu0
        %v1571 = vadd.f32 0.0, %v1570
        %v1572 = vpop.f32.mrb[0].mxu0
        %v1573 = vpop.f32.mrb[0].mxu0
        %v1574 = vadd.f32 0.0, %v1573
        %v1575 = vpop.f32.mrb[0].mxu0
        %1576 = vmatprep.mubr.bf16.mxu0 0
        %1577 = vmatmul.mubr.bf16.gmra.mrb[0].mxu0 %v1373
        %v1578 = vpop.f32.mrb[0].mxu0
        %v1579 = vadd.f32 0.0, %v1578
        %v1580 = vpop.f32.mrb[0].mxu0
        %v1581 = vpop.f32.mrb[0].mxu0
        %v1582 = vadd.f32 0.0, %v1581
        %v1583 = vpop.f32.mrb[0].mxu0
        %1584 = vmatprep.mubr.bf16.mxu0 0
        %1585 = vmatmul.mubr.bf16.gmra.mrb[0].mxu0 %v1375
        %v1586 = vpop.f32.mrb[0].mxu0
        %v1587 = vadd.f32 0.0, %v1586
        %v1588 = vpop.f32.mrb[0].mxu0
        %v1589 = vpop.f32.mrb[0].mxu0
        %v1590 = vadd.f32 0.0, %v1589
        %v1591 = vpop.f32.mrb[0].mxu0
        %1592 = vmatprep.mubr.bf16.mxu0 0
        %1593 = vmatmul.mubr.bf16.gmra.mrb[0].mxu0 %v1374
        %v1594 = vpop.f32.mrb[0].mxu0
        %v1595 = vadd.f32 0.0, %v1594
        %v1596 = vpop.f32.mrb[0].mxu0
        %v1597 = vpop.f32.mrb[0].mxu0
        %v1598 = vadd.f32 0.0, %v1597
        %v1599 = vpop.f32.mrb[0].mxu0
        %1600 = vdwg.mxu0
        %v1601 = vadd.f32 %v1201, %v1475
        %v1602 = vadd.f32 %v1204, %v1478
        %v1603 = vadd.f32 %v1209, %v1483
        %v1604 = vadd.f32 %v1212, %v1486
        %v1605 = vadd.f32 %v1217, %v1491
        %v1606 = vadd.f32 %v1220, %v1494
        %v1607 = vadd.f32 %v1225, %v1499
        %v1608 = vadd.f32 %v1228, %v1502
        %v1609 = vadd.f32 %v1233, %v1507
        %v1610 = vadd.f32 %v1236, %v1510
        %v1611 = vadd.f32 %v1241, %v1515
        %v1612 = vadd.f32 %v1244, %v1518
        %v1613 = vadd.f32 %v1249, %v1523
        %v1614 = vadd.f32 %v1252, %v1526
        %v1615 = vadd.f32 %v1257, %v1531
        %v1616 = vadd.f32 %v1260, %v1534
        %v1617 = vadd.f32 %v1265, %v1539
        %v1618 = vadd.f32 %v1268, %v1542
        %v1619 = vadd.f32 %v1273, %v1547
        %v1620 = vadd.f32 %v1276, %v1550
        %v1621 = vadd.f32 %v1281, %v1555
        %v1622 = vadd.f32 %v1284, %v1558
        %v1623 = vadd.f32 %v1289, %v1563
        %v1624 = vadd.f32 %v1292, %v1566
        %v1625 = vadd.f32 %v1297, %v1571
        %v1626 = vadd.f32 %v1300, %v1574
        %v1627 = vadd.f32 %v1305, %v1579
        %v1628 = vadd.f32 %v1308, %v1582
        %v1629 = vadd.f32 %v1313, %v1587
        %v1630 = vadd.f32 %v1316, %v1590
        %v1631 = vadd.f32 %v1321, %v1595
        %v1632 = vadd.f32 %v1324, %v1598
        %v1633 = vld [vmem:[%s4] sm:$0x1]
        %v1635 = vlaneseq
        %v1636 = vshrl.u32 %v1635, 7
        %v1637 = vsub.s32 0, %v1636
        %v1638 = vrot.slane %v1633, %v1637
        %v1640 = vadd.f32 %v1601, %v1638
        %v1641 = vadd.f32 %v1602, %v1638
        %v1642 = vadd.f32 %v1603, %v1638
        %v1643 = vadd.f32 %v1604, %v1638
        %v1644 = vadd.f32 %v1605, %v1638
        %v1645 = vadd.f32 %v1606, %v1638
        %v1646 = vadd.f32 %v1607, %v1638
        %v1647 = vadd.f32 %v1608, %v1638
        %v1648 = vadd.f32 %v1609, %v1638
        %v1649 = vadd.f32 %v1610, %v1638
        %v1650 = vadd.f32 %v1611, %v1638
        %v1651 = vadd.f32 %v1612, %v1638
        %v1652 = vadd.f32 %v1613, %v1638
        %v1653 = vadd.f32 %v1614, %v1638
        %v1654 = vadd.f32 %v1615, %v1638
        %v1655 = vadd.f32 %v1616, %v1638
        %v1656 = vadd.f32 %v1617, %v1638
        %v1657 = vadd.f32 %v1618, %v1638
        %v1658 = vadd.f32 %v1619, %v1638
        %v1659 = vadd.f32 %v1620, %v1638
        %v1660 = vadd.f32 %v1621, %v1638
        %v1661 = vadd.f32 %v1622, %v1638
        %v1662 = vadd.f32 %v1623, %v1638
        %v1663 = vadd.f32 %v1624, %v1638
        %v1664 = vadd.f32 %v1625, %v1638
        %v1665 = vadd.f32 %v1626, %v1638
        %v1666 = vadd.f32 %v1627, %v1638
        %v1667 = vadd.f32 %v1628, %v1638
        %v1668 = vadd.f32 %v1629, %v1638
        %v1669 = vadd.f32 %v1630, %v1638
        %v1670 = vadd.f32 %v1631, %v1638
        %v1671 = vadd.f32 %v1632, %v1638
        %v1672 = vmax.f32 %v1640, 0.0
        %v1673 = vmax.f32 %v1641, 0.0
        %v1674 = vmax.f32 %v1642, 0.0
        %v1675 = vmax.f32 %v1643, 0.0
        %v1676 = vmax.f32 %v1644, 0.0
        %v1677 = vmax.f32 %v1645, 0.0
        %v1678 = vmax.f32 %v1646, 0.0
        %v1679 = vmax.f32 %v1647, 0.0
        %v1680 = vmax.f32 %v1648, 0.0
        %v1681 = vmax.f32 %v1649, 0.0
        %v1682 = vmax.f32 %v1650, 0.0
        %v1683 = vmax.f32 %v1651, 0.0
        %v1684 = vmax.f32 %v1652, 0.0
        %v1685 = vmax.f32 %v1653, 0.0
        %v1686 = vmax.f32 %v1654, 0.0
        %v1687 = vmax.f32 %v1655, 0.0
        %v1688 = vmax.f32 %v1656, 0.0
        %v1689 = vmax.f32 %v1657, 0.0
        %v1690 = vmax.f32 %v1658, 0.0
        %v1691 = vmax.f32 %v1659, 0.0
        %v1692 = vmax.f32 %v1660, 0.0
        %v1693 = vmax.f32 %v1661, 0.0
        %v1694 = vmax.f32 %v1662, 0.0
        %v1695 = vmax.f32 %v1663, 0.0
        %v1696 = vmax.f32 %v1664, 0.0
        %v1697 = vmax.f32 %v1665, 0.0
        %v1698 = vmax.f32 %v1666, 0.0
        %v1699 = vmax.f32 %v1667, 0.0
        %v1700 = vmax.f32 %v1668, 0.0
        %v1701 = vmax.f32 %v1669, 0.0
        %v1702 = vmax.f32 %v1670, 0.0
        %v1703 = vmax.f32 %v1671, 0.0
        %v1704 = vpack.c.bf16 %v1673, %v1672
        %v1705 = vpack.c.bf16 %v1675, %v1674
        %v1706 = vpack.c.bf16 %v1677, %v1676
        %v1707 = vpack.c.bf16 %v1679, %v1678
        %v1708 = vpack.c.bf16 %v1681, %v1680
        %v1709 = vpack.c.bf16 %v1683, %v1682
        %v1710 = vpack.c.bf16 %v1685, %v1684
        %v1711 = vpack.c.bf16 %v1687, %v1686
        %v1712 = vpack.c.bf16 %v1689, %v1688
        %v1713 = vpack.c.bf16 %v1691, %v1690
        %v1714 = vpack.c.bf16 %v1693, %v1692
        %v1715 = vpack.c.bf16 %v1695, %v1694
        %v1716 = vpack.c.bf16 %v1697, %v1696
        %v1717 = vpack.c.bf16 %v1699, %v1698
        %v1718 = vpack.c.bf16 %v1701, %v1700
        %v1719 = vpack.c.bf16 %v1703, %v1702
        %v1720 = vld [vmem:[%s5] sm:$0xff]
        %v1721 = vld [vmem:[%s5 + $0x8] sm:$0xff]
        %v1722 = vld [vmem:[%s5 + $0x10] sm:$0xff]
        %v1723 = vld [vmem:[%s5 + $0x18] sm:$0xff]
        %v1724 = vld [vmem:[%s5 + $0x20] sm:$0xff]
        %v1725 = vld [vmem:[%s5 + $0x28] sm:$0xff]
        %v1726 = vld [vmem:[%s5 + $0x30] sm:$0xff]
        %v1727 = vld [vmem:[%s5 + $0x38] sm:$0xff]
        %v1728 = vld [vmem:[%s5 + $0x40] sm:$0xff]
        %v1729 = vld [vmem:[%s5 + $0x48] sm:$0xff]
        %v1730 = vld [vmem:[%s5 + $0x50] sm:$0xff]
        %v1731 = vld [vmem:[%s5 + $0x58] sm:$0xff]
        %v1732 = vld [vmem:[%s5 + $0x60] sm:$0xff]
        %v1733 = vld [vmem:[%s5 + $0x68] sm:$0xff]
        %v1734 = vld [vmem:[%s5 + $0x70] sm:$0xff]
        %s1735 = scalar_lea.vmem %s5, 120
        %v1736 = vld [vmem:[%s1735] sm:$0xff]
        %v1737 = vld [vmem:[%s1735 + $0x8] sm:$0xff]
        %v1738 = vld [vmem:[%s1735 + $0x10] sm:$0xff]
        %v1739 = vld [vmem:[%s1735 + $0x18] sm:$0xff]
        %v1740 = vld [vmem:[%s1735 + $0x20] sm:$0xff]
        %v1741 = vld [vmem:[%s1735 + $0x28] sm:$0xff]
        %v1742 = vld [vmem:[%s1735 + $0x30] sm:$0xff]
        %v1743 = vld [vmem:[%s1735 + $0x38] sm:$0xff]
        %v1744 = vld [vmem:[%s1735 + $0x40] sm:$0xff]
        %v1745 = vld [vmem:[%s1735 + $0x48] sm:$0xff]
        %v1746 = vld [vmem:[%s1735 + $0x50] sm:$0xff]
        %v1747 = vld [vmem:[%s1735 + $0x58] sm:$0xff]
        %v1748 = vld [vmem:[%s1735 + $0x60] sm:$0xff]
        %v1749 = vld [vmem:[%s1735 + $0x68] sm:$0xff]
        %v1750 = vld [vmem:[%s1735 + $0x70] sm:$0xff]
        %v1752 = vshrl.u32 %v1704, 16
        %v1754 = vshll.u32 %v1704, 16
        %v1756 = vrot.slane %v1754, 1
        %v1757 = vor.u32 %v1752, %v1756
        %v1759 = vshll.u32 %v1705, 16
        %v1761 = vrot.slane %v1759, 1
        %v1762 = vsel %vm749, %v1757, %v1761
        %v1763 = vshrl.u32 %v1705, 16
        %v1765 = vor.u32 %v1763, %v1761
        %v1767 = vshll.u32 %v1706, 16
        %v1769 = vrot.slane %v1767, 1
        %v1770 = vsel %vm749, %v1765, %v1769
        %v1771 = vshrl.u32 %v1706, 16
        %v1773 = vor.u32 %v1771, %v1769
        %v1775 = vshll.u32 %v1707, 16
        %v1777 = vrot.slane %v1775, 1
        %v1778 = vsel %vm749, %v1773, %v1777
        %v1779 = vshrl.u32 %v1707, 16
        %v1781 = vor.u32 %v1779, %v1777
        %v1783 = vshll.u32 %v1708, 16
        %v1785 = vrot.slane %v1783, 1
        %v1786 = vsel %vm749, %v1781, %v1785
        %v1787 = vshrl.u32 %v1708, 16
        %v1789 = vor.u32 %v1787, %v1785
        %v1791 = vshll.u32 %v1709, 16
        %v1793 = vrot.slane %v1791, 1
        %v1794 = vsel %vm749, %v1789, %v1793
        %v1795 = vshrl.u32 %v1709, 16
        %v1797 = vor.u32 %v1795, %v1793
        %v1799 = vshll.u32 %v1710, 16
        %v1801 = vrot.slane %v1799, 1
        %v1802 = vsel %vm749, %v1797, %v1801
        %v1803 = vshrl.u32 %v1710, 16
        %v1805 = vor.u32 %v1803, %v1801
        %v1807 = vshll.u32 %v1711, 16
        %v1809 = vrot.slane %v1807, 1
        %v1810 = vsel %vm749, %v1805, %v1809
        %v1811 = vshrl.u32 %v1711, 16
        %v1813 = vor.u32 %v1811, %v1809
        %v1815 = vshll.u32 %v1712, 16
        %v1817 = vrot.slane %v1815, 1
        %v1818 = vsel %vm749, %v1813, %v1817
        %v1819 = vshrl.u32 %v1712, 16
        %v1821 = vor.u32 %v1819, %v1817
        %v1823 = vshll.u32 %v1713, 16
        %v1825 = vrot.slane %v1823, 1
        %v1826 = vsel %vm749, %v1821, %v1825
        %v1827 = vshrl.u32 %v1713, 16
        %v1829 = vor.u32 %v1827, %v1825
        %v1831 = vshll.u32 %v1714, 16
        %v1833 = vrot.slane %v1831, 1
        %v1834 = vsel %vm749, %v1829, %v1833
        %v1835 = vshrl.u32 %v1714, 16
        %v1837 = vor.u32 %v1835, %v1833
        %v1839 = vshll.u32 %v1715, 16
        %v1841 = vrot.slane %v1839, 1
        %v1842 = vsel %vm749, %v1837, %v1841
        %v1843 = vshrl.u32 %v1715, 16
        %v1845 = vor.u32 %v1843, %v1841
        %v1847 = vshll.u32 %v1716, 16
        %v1849 = vrot.slane %v1847, 1
        %v1850 = vsel %vm749, %v1845, %v1849
        %v1851 = vshrl.u32 %v1716, 16
        %v1853 = vor.u32 %v1851, %v1849
        %v1855 = vshll.u32 %v1717, 16
        %v1857 = vrot.slane %v1855, 1
        %v1858 = vsel %vm749, %v1853, %v1857
        %v1859 = vshrl.u32 %v1717, 16
        %v1861 = vor.u32 %v1859, %v1857
        %v1863 = vshll.u32 %v1718, 16
        %v1865 = vrot.slane %v1863, 1
        %v1866 = vsel %vm749, %v1861, %v1865
        %v1867 = vshrl.u32 %v1718, 16
        %v1869 = vor.u32 %v1867, %v1865
        %v1871 = vshll.u32 %v1719, 16
        %v1873 = vrot.slane %v1871, 1
        %v1874 = vsel %vm749, %v1869, %v1873
        %v1875 = vshrl.u32 %v1719, 16
        %v1877 = vor.u32 %v1875, %v1873
        %v1893 = vunpack.c.l.b16 %v1736
        %v1894 = vunpack.c.h.b16 %v1736
        %v1895 = vunpack.c.l.b16 %v1737
        %v1896 = vunpack.c.h.b16 %v1737
        %v1897 = vunpack.c.l.b16 %v1738
        %v1898 = vunpack.c.h.b16 %v1738
        %v1899 = vunpack.c.l.b16 %v1739
        %v1900 = vunpack.c.h.b16 %v1739
        %v1901 = vunpack.c.l.b16 %v1740
        %v1902 = vunpack.c.h.b16 %v1740
        %v1903 = vunpack.c.l.b16 %v1741
        %v1904 = vunpack.c.h.b16 %v1741
        %v1905 = vunpack.c.l.b16 %v1742
        %v1906 = vunpack.c.h.b16 %v1742
        %v1907 = vunpack.c.l.b16 %v1743
        %v1908 = vunpack.c.h.b16 %v1743
        %v1909 = vunpack.c.l.b16 %v1744
        %v1910 = vunpack.c.h.b16 %v1744
        %v1911 = vunpack.c.l.b16 %v1745
        %v1912 = vunpack.c.h.b16 %v1745
        %v1913 = vunpack.c.l.b16 %v1746
        %v1914 = vunpack.c.h.b16 %v1746
        %v1915 = vunpack.c.l.b16 %v1747
        %v1916 = vunpack.c.h.b16 %v1747
        %v1917 = vunpack.c.l.b16 %v1748
        %v1918 = vunpack.c.h.b16 %v1748
        %v1919 = vunpack.c.l.b16 %v1749
        %v1920 = vunpack.c.h.b16 %v1749
        %v1921 = vunpack.c.l.b16 %v1750
        %v1922 = vunpack.c.h.b16 %v1750
        %v1923 = vpack.c.b16 %v1895, %v1893
        %v1924 = vpack.c.b16 %v1896, %v1894
        %v1925 = vpack.c.b16 %v1899, %v1897
        %v1926 = vpack.c.b16 %v1900, %v1898
        %v1927 = vpack.c.b16 %v1903, %v1901
        %v1928 = vpack.c.b16 %v1904, %v1902
        %v1929 = vpack.c.b16 %v1907, %v1905
        %v1930 = vpack.c.b16 %v1908, %v1906
        %v1931 = vpack.c.b16 %v1911, %v1909
        %v1932 = vpack.c.b16 %v1912, %v1910
        %v1933 = vpack.c.b16 %v1915, %v1913
        %v1934 = vpack.c.b16 %v1916, %v1914
        %v1935 = vpack.c.b16 %v1919, %v1917
        %v1936 = vpack.c.b16 %v1920, %v1918
        %v1937 = vpack.c.b16 %v1921, %v1921
        %v1938 = vpack.c.b16 %v1922, %v1922
        %vm1953 = vcmask 982016
        %v1955 = vsel %vm1953, %v1762, 0
        %v1958 = vsel %vm1953, %v1770, 0
        %v1961 = vsel %vm1953, %v1778, 0
        %v1964 = vsel %vm1953, %v1786, 0
        %v1967 = vsel %vm1953, %v1794, 0
        %v1970 = vsel %vm1953, %v1802, 0
        %v1973 = vsel %vm1953, %v1810, 0
        %v1976 = vsel %vm1953, %v1818, 0
        %v1979 = vsel %vm1953, %v1826, 0
        %v1982 = vsel %vm1953, %v1834, 0
        %v1985 = vsel %vm1953, %v1842, 0
        %v1988 = vsel %vm1953, %v1850, 0
        %v1991 = vsel %vm1953, %v1858, 0
        %v1994 = vsel %vm1953, %v1866, 0
        %v1997 = vsel %vm1953, %v1874, 0
        %v2000 = vsel %vm1953, %v1877, 0
        %vm2002 = vcmask 1043456
        %v2004 = vsel %vm2002, %v1937, 0
        %v2007 = vsel %vm2002, %v1938, 0
        %2009 = vmatprep.subr.bf16.mxu0 %v1924
        %2010 = vmatpush1.bf16.msra.mxu0 %v1923
        %2011 = vmatprep.subr.bf16.mxu0 %v1926
        %2012 = vmatpush1.bf16.msra.mxu0 %v1925
        %2013 = vmatprep.subr.bf16.mxu0 %v1928
        %2014 = vmatpush1.bf16.msra.mxu0 %v1927
        %2015 = vmatprep.subr.bf16.mxu0 %v1930
        %2016 = vmatpush1.bf16.msra.mxu0 %v1929
        %2017 = vmatprep.subr.bf16.mxu0 %v1932
        %2018 = vmatpush1.bf16.msra.mxu0 %v1931
        %2019 = vmatprep.subr.bf16.mxu0 %v1934
        %2020 = vmatpush1.bf16.msra.mxu0 %v1933
        %2021 = vmatprep.subr.bf16.mxu0 %v1936
        %2022 = vmatpush1.bf16.msra.mxu0 %v1935
        %2023 = vmatprep.subr.bf16.mxu0 %v2007
        %2024 = vmatpush1.bf16.msra.mxu0 %v2004
        %2025 = vmatprep.subr.bf16.mxu0 0
        %2026 = vmatpush1.bf16.msra.mxu0 0
        %2027 = vmatprep.subr.bf16.mxu0 0
        %2028 = vmatpush1.bf16.msra.mxu0 0
        %2029 = vmatprep.subr.bf16.mxu0 0
        %2030 = vmatpush1.bf16.msra.mxu0 0
        %2031 = vmatprep.subr.bf16.mxu0 0
        %2032 = vmatpush1.bf16.msra.mxu0 0
        %2033 = vmatprep.subr.bf16.mxu0 0
        %2034 = vmatpush1.bf16.msra.mxu0 0
        %2035 = vmatprep.subr.bf16.mxu0 0
        %2036 = vmatpush1.bf16.msra.mxu0 0
        %2037 = vmatprep.subr.bf16.mxu0 0
        %2038 = vmatpush1.bf16.msra.mxu0 0
        %2039 = vmatprep.subr.bf16.mxu0 0
        %2040 = vmatpush1.bf16.msra.mxu0 0
        %2041 = vmatprep.mubr.bf16.mxu0 0
        %2042 = vmatmul.mubr.bf16.gmra.mrb[0].mxu0 %v1955
        %v2043 = vpop.f32.mrb[0].mxu0
        %v2044 = vadd.f32 0.0, %v2043
        %v2045 = vpop.f32.mrb[0].mxu0
        %v2046 = vadd.f32 0.0, %v2045
        %v2047 = vpop.f32.mrb[0].mxu0
        %v2048 = vadd.f32 0.0, %v2047
        %v2049 = vpop.f32.mrb[0].mxu0
        %v2050 = vadd.f32 0.0, %v2049
        %2051 = vmatprep.mubr.bf16.mxu0 0
        %2052 = vmatmul.mubr.bf16.gmra.mrb[0].mxu0 %v1958
        %v2053 = vpop.f32.mrb[0].mxu0
        %v2054 = vadd.f32 0.0, %v2053
        %v2055 = vpop.f32.mrb[0].mxu0
        %v2056 = vadd.f32 0.0, %v2055
        %v2057 = vpop.f32.mrb[0].mxu0
        %v2058 = vadd.f32 0.0, %v2057
        %v2059 = vpop.f32.mrb[0].mxu0
        %v2060 = vadd.f32 0.0, %v2059
        %2061 = vmatprep.mubr.bf16.mxu0 0
        %2062 = vmatmul.mubr.bf16.gmra.mrb[0].mxu0 %v1961
        %v2063 = vpop.f32.mrb[0].mxu0
        %v2064 = vadd.f32 0.0, %v2063
        %v2065 = vpop.f32.mrb[0].mxu0
        %v2066 = vadd.f32 0.0, %v2065
        %v2067 = vpop.f32.mrb[0].mxu0
        %v2068 = vadd.f32 0.0, %v2067
        %v2069 = vpop.f32.mrb[0].mxu0
        %v2070 = vadd.f32 0.0, %v2069
        %2071 = vmatprep.mubr.bf16.mxu0 0
        %2072 = vmatmul.mubr.bf16.gmra.mrb[0].mxu0 %v1964
        %v2073 = vpop.f32.mrb[0].mxu0
        %v2074 = vadd.f32 0.0, %v2073
        %v2075 = vpop.f32.mrb[0].mxu0
        %v2076 = vadd.f32 0.0, %v2075
        %v2077 = vpop.f32.mrb[0].mxu0
        %v2078 = vadd.f32 0.0, %v2077
        %v2079 = vpop.f32.mrb[0].mxu0
        %v2080 = vadd.f32 0.0, %v2079
        %2081 = vmatprep.mubr.bf16.mxu0 0
        %2082 = vmatmul.mubr.bf16.gmra.mrb[0].mxu0 %v1967
        %v2083 = vpop.f32.mrb[0].mxu0
        %v2084 = vadd.f32 0.0, %v2083
        %v2085 = vpop.f32.mrb[0].mxu0
        %v2086 = vadd.f32 0.0, %v2085
        %v2087 = vpop.f32.mrb[0].mxu0
        %v2088 = vadd.f32 0.0, %v2087
        %v2089 = vpop.f32.mrb[0].mxu0
        %v2090 = vadd.f32 0.0, %v2089
        %2091 = vmatprep.mubr.bf16.mxu0 0
        %2092 = vmatmul.mubr.bf16.gmra.mrb[0].mxu0 %v1970
        %v2093 = vpop.f32.mrb[0].mxu0
        %v2094 = vadd.f32 0.0, %v2093
        %v2095 = vpop.f32.mrb[0].mxu0
        %v2096 = vadd.f32 0.0, %v2095
        %v2097 = vpop.f32.mrb[0].mxu0
        %v2098 = vadd.f32 0.0, %v2097
        %v2099 = vpop.f32.mrb[0].mxu0
        %v2100 = vadd.f32 0.0, %v2099
        %2101 = vmatprep.mubr.bf16.mxu0 0
        %2102 = vmatmul.mubr.bf16.gmra.mrb[0].mxu0 %v1973
        %v2103 = vpop.f32.mrb[0].mxu0
        %v2104 = vadd.f32 0.0, %v2103
        %v2105 = vpop.f32.mrb[0].mxu0
        %v2106 = vadd.f32 0.0, %v2105
        %v2107 = vpop.f32.mrb[0].mxu0
        %v2108 = vadd.f32 0.0, %v2107
        %v2109 = vpop.f32.mrb[0].mxu0
        %v2110 = vadd.f32 0.0, %v2109
        %2111 = vmatprep.mubr.bf16.mxu0 0
        %2112 = vmatmul.mubr.bf16.gmra.mrb[0].mxu0 %v1976
        %v2113 = vpop.f32.mrb[0].mxu0
        %v2114 = vadd.f32 0.0, %v2113
        %v2115 = vpop.f32.mrb[0].mxu0
        %v2116 = vadd.f32 0.0, %v2115
        %v2117 = vpop.f32.mrb[0].mxu0
        %v2118 = vadd.f32 0.0, %v2117
        %v2119 = vpop.f32.mrb[0].mxu0
        %v2120 = vadd.f32 0.0, %v2119
        %2121 = vmatprep.mubr.bf16.mxu0 0
        %2122 = vmatmul.mubr.bf16.gmra.mrb[0].mxu0 %v1979
        %v2123 = vpop.f32.mrb[0].mxu0
        %v2124 = vadd.f32 0.0, %v2123
        %v2125 = vpop.f32.mrb[0].mxu0
        %v2126 = vadd.f32 0.0, %v2125
        %v2127 = vpop.f32.mrb[0].mxu0
        %v2128 = vadd.f32 0.0, %v2127
        %v2129 = vpop.f32.mrb[0].mxu0
        %v2130 = vadd.f32 0.0, %v2129
        %2131 = vmatprep.mubr.bf16.mxu0 0
        %2132 = vmatmul.mubr.bf16.gmra.mrb[0].mxu0 %v1982
        %v2133 = vpop.f32.mrb[0].mxu0
        %v2134 = vadd.f32 0.0, %v2133
        %v2135 = vpop.f32.mrb[0].mxu0
        %v2136 = vadd.f32 0.0, %v2135
        %v2137 = vpop.f32.mrb[0].mxu0
        %v2138 = vadd.f32 0.0, %v2137
        %v2139 = vpop.f32.mrb[0].mxu0
        %v2140 = vadd.f32 0.0, %v2139
        %2141 = vmatprep.mubr.bf16.mxu0 0
        %2142 = vmatmul.mubr.bf16.gmra.mrb[0].mxu0 %v1985
        %v2143 = vpop.f32.mrb[0].mxu0
        %v2144 = vadd.f32 0.0, %v2143
        %v2145 = vpop.f32.mrb[0].mxu0
        %v2146 = vadd.f32 0.0, %v2145
        %v2147 = vpop.f32.mrb[0].mxu0
        %v2148 = vadd.f32 0.0, %v2147
        %v2149 = vpop.f32.mrb[0].mxu0
        %v2150 = vadd.f32 0.0, %v2149
        %2151 = vmatprep.mubr.bf16.mxu0 0
        %2152 = vmatmul.mubr.bf16.gmra.mrb[0].mxu0 %v1988
        %v2153 = vpop.f32.mrb[0].mxu0
        %v2154 = vadd.f32 0.0, %v2153
        %v2155 = vpop.f32.mrb[0].mxu0
        %v2156 = vadd.f32 0.0, %v2155
        %v2157 = vpop.f32.mrb[0].mxu0
        %v2158 = vadd.f32 0.0, %v2157
        %v2159 = vpop.f32.mrb[0].mxu0
        %v2160 = vadd.f32 0.0, %v2159
        %2161 = vmatprep.mubr.bf16.mxu0 0
        %2162 = vmatmul.mubr.bf16.gmra.mrb[0].mxu0 %v1991
        %v2163 = vpop.f32.mrb[0].mxu0
        %v2164 = vadd.f32 0.0, %v2163
        %v2165 = vpop.f32.mrb[0].mxu0
        %v2166 = vadd.f32 0.0, %v2165
        %v2167 = vpop.f32.mrb[0].mxu0
        %v2168 = vadd.f32 0.0, %v2167
        %v2169 = vpop.f32.mrb[0].mxu0
        %v2170 = vadd.f32 0.0, %v2169
        %2171 = vmatprep.mubr.bf16.mxu0 0
        %2172 = vmatmul.mubr.bf16.gmra.mrb[0].mxu0 %v1994
        %v2173 = vpop.f32.mrb[0].mxu0
        %v2174 = vadd.f32 0.0, %v2173
        %v2175 = vpop.f32.mrb[0].mxu0
        %v2176 = vadd.f32 0.0, %v2175
        %v2177 = vpop.f32.mrb[0].mxu0
        %v2178 = vadd.f32 0.0, %v2177
        %v2179 = vpop.f32.mrb[0].mxu0
        %v2180 = vadd.f32 0.0, %v2179
        %2181 = vmatprep.mubr.bf16.mxu0 0
        %2182 = vmatmul.mubr.bf16.gmra.mrb[0].mxu0 %v1997
        %v2183 = vpop.f32.mrb[0].mxu0
        %v2184 = vadd.f32 0.0, %v2183
        %v2185 = vpop.f32.mrb[0].mxu0
        %v2186 = vadd.f32 0.0, %v2185
        %v2187 = vpop.f32.mrb[0].mxu0
        %v2188 = vadd.f32 0.0, %v2187
        %v2189 = vpop.f32.mrb[0].mxu0
        %v2190 = vadd.f32 0.0, %v2189
        %2191 = vmatprep.mubr.bf16.mxu0 0
        %2192 = vmatmul.mubr.bf16.gmra.mrb[0].mxu0 %v2000
        %v2193 = vpop.f32.mrb[0].mxu0
        %v2194 = vadd.f32 0.0, %v2193
        %v2195 = vpop.f32.mrb[0].mxu0
        %v2196 = vadd.f32 0.0, %v2195
        %v2197 = vpop.f32.mrb[0].mxu0
        %v2198 = vadd.f32 0.0, %v2197
        %v2199 = vpop.f32.mrb[0].mxu0
        %v2200 = vadd.f32 0.0, %v2199
        %2201 = vdwg.mxu0
        %v2217 = vunpack.c.l.b16 %v1720
        %v2218 = vunpack.c.h.b16 %v1720
        %v2219 = vunpack.c.l.b16 %v1721
        %v2220 = vunpack.c.h.b16 %v1721
        %v2221 = vunpack.c.l.b16 %v1722
        %v2222 = vunpack.c.h.b16 %v1722
        %v2223 = vunpack.c.l.b16 %v1723
        %v2224 = vunpack.c.h.b16 %v1723
        %v2225 = vunpack.c.l.b16 %v1724
        %v2226 = vunpack.c.h.b16 %v1724
        %v2227 = vunpack.c.l.b16 %v1725
        %v2228 = vunpack.c.h.b16 %v1725
        %v2229 = vunpack.c.l.b16 %v1726
        %v2230 = vunpack.c.h.b16 %v1726
        %v2231 = vunpack.c.l.b16 %v1727
        %v2232 = vunpack.c.h.b16 %v1727
        %v2233 = vunpack.c.l.b16 %v1728
        %v2234 = vunpack.c.h.b16 %v1728
        %v2235 = vunpack.c.l.b16 %v1729
        %v2236 = vunpack.c.h.b16 %v1729
        %v2237 = vunpack.c.l.b16 %v1730
        %v2238 = vunpack.c.h.b16 %v1730
        %v2239 = vunpack.c.l.b16 %v1731
        %v2240 = vunpack.c.h.b16 %v1731
        %v2241 = vunpack.c.l.b16 %v1732
        %v2242 = vunpack.c.h.b16 %v1732
        %v2243 = vunpack.c.l.b16 %v1733
        %v2244 = vunpack.c.h.b16 %v1733
        %v2245 = vunpack.c.l.b16 %v1734
        %v2246 = vunpack.c.h.b16 %v1734
        %v2247 = vpack.c.b16 %v2219, %v2217
        %v2248 = vpack.c.b16 %v2220, %v2218
        %v2249 = vpack.c.b16 %v2223, %v2221
        %v2250 = vpack.c.b16 %v2224, %v2222
        %v2251 = vpack.c.b16 %v2227, %v2225
        %v2252 = vpack.c.b16 %v2228, %v2226
        %v2253 = vpack.c.b16 %v2231, %v2229
        %v2254 = vpack.c.b16 %v2232, %v2230
        %v2255 = vpack.c.b16 %v2235, %v2233
        %v2256 = vpack.c.b16 %v2236, %v2234
        %v2257 = vpack.c.b16 %v2239, %v2237
        %v2258 = vpack.c.b16 %v2240, %v2238
        %v2259 = vpack.c.b16 %v2243, %v2241
        %v2260 = vpack.c.b16 %v2244, %v2242
        %v2261 = vpack.c.b16 %v2245, %v2245
        %v2262 = vpack.c.b16 %v2246, %v2246
        %v2277 = vsel %vm1953, %v1704, 0
        %v2279 = vsel %vm1953, %v1705, 0
        %v2281 = vsel %vm1953, %v1706, 0
        %v2283 = vsel %vm1953, %v1707, 0
        %v2285 = vsel %vm1953, %v1708, 0
        %v2287 = vsel %vm1953, %v1709, 0
        %v2289 = vsel %vm1953, %v1710, 0
        %v2291 = vsel %vm1953, %v1711, 0
        %v2293 = vsel %vm1953, %v1712, 0
        %v2295 = vsel %vm1953, %v1713, 0
        %v2297 = vsel %vm1953, %v1714, 0
        %v2299 = vsel %vm1953, %v1715, 0
        %v2301 = vsel %vm1953, %v1716, 0
        %v2303 = vsel %vm1953, %v1717, 0
        %v2305 = vsel %vm1953, %v1718, 0
        %v2307 = vsel %vm1953, %v1719, 0
        %v2310 = vsel %vm2002, %v2261, 0
        %v2313 = vsel %vm2002, %v2262, 0
        %2315 = vmatprep.subr.bf16.mxu0 %v2248
        %2316 = vmatpush1.bf16.msra.mxu0 %v2247
        %2317 = vmatprep.subr.bf16.mxu0 %v2250
        %2318 = vmatpush1.bf16.msra.mxu0 %v2249
        %2319 = vmatprep.subr.bf16.mxu0 %v2252
        %2320 = vmatpush1.bf16.msra.mxu0 %v2251
        %2321 = vmatprep.subr.bf16.mxu0 %v2254
        %2322 = vmatpush1.bf16.msra.mxu0 %v2253
        %2323 = vmatprep.subr.bf16.mxu0 %v2256
        %2324 = vmatpush1.bf16.msra.mxu0 %v2255
        %2325 = vmatprep.subr.bf16.mxu0 %v2258
        %2326 = vmatpush1.bf16.msra.mxu0 %v2257
        %2327 = vmatprep.subr.bf16.mxu0 %v2260
        %2328 = vmatpush1.bf16.msra.mxu0 %v2259
        %2329 = vmatprep.subr.bf16.mxu0 %v2313
        %2330 = vmatpush1.bf16.msra.mxu0 %v2310
        %2331 = vmatprep.subr.bf16.mxu0 0
        %2332 = vmatpush1.bf16.msra.mxu0 0
        %2333 = vmatprep.subr.bf16.mxu0 0
        %2334 = vmatpush1.bf16.msra.mxu0 0
        %2335 = vmatprep.subr.bf16.mxu0 0
        %2336 = vmatpush1.bf16.msra.mxu0 0
        %2337 = vmatprep.subr.bf16.mxu0 0
        %2338 = vmatpush1.bf16.msra.mxu0 0
        %2339 = vmatprep.subr.bf16.mxu0 0
        %2340 = vmatpush1.bf16.msra.mxu0 0
        %2341 = vmatprep.subr.bf16.mxu0 0
        %2342 = vmatpush1.bf16.msra.mxu0 0
        %2343 = vmatprep.subr.bf16.mxu0 0
        %2344 = vmatpush1.bf16.msra.mxu0 0
        %2345 = vmatprep.subr.bf16.mxu0 0
        %2346 = vmatpush1.bf16.msra.mxu0 0
        %2347 = vmatprep.mubr.bf16.mxu0 0
        %2348 = vmatmul.mubr.bf16.gmra.mrb[0].mxu0 %v2277
        %v2349 = vpop.f32.mrb[0].mxu0
        %v2350 = vadd.f32 %v2044, %v2349
        %v2351 = vpop.f32.mrb[0].mxu0
        %v2352 = vadd.f32 %v2046, %v2351
        %v2353 = vpop.f32.mrb[0].mxu0
        %v2354 = vadd.f32 %v2048, %v2353
        %v2355 = vpop.f32.mrb[0].mxu0
        %v2356 = vadd.f32 %v2050, %v2355
        %2357 = vmatprep.mubr.bf16.mxu0 0
        %2358 = vmatmul.mubr.bf16.gmra.mrb[0].mxu0 %v2279
        %v2359 = vpop.f32.mrb[0].mxu0
        %v2360 = vadd.f32 %v2054, %v2359
        %v2361 = vpop.f32.mrb[0].mxu0
        %v2362 = vadd.f32 %v2056, %v2361
        %v2363 = vpop.f32.mrb[0].mxu0
        %v2364 = vadd.f32 %v2058, %v2363
        %v2365 = vpop.f32.mrb[0].mxu0
        %v2366 = vadd.f32 %v2060, %v2365
        %2367 = vmatprep.mubr.bf16.mxu0 0
        %2368 = vmatmul.mubr.bf16.gmra.mrb[0].mxu0 %v2281
        %v2369 = vpop.f32.mrb[0].mxu0
        %v2370 = vadd.f32 %v2064, %v2369
        %v2371 = vpop.f32.mrb[0].mxu0
        %v2372 = vadd.f32 %v2066, %v2371
        %v2373 = vpop.f32.mrb[0].mxu0
        %v2374 = vadd.f32 %v2068, %v2373
        %v2375 = vpop.f32.mrb[0].mxu0
        %v2376 = vadd.f32 %v2070, %v2375
        %2377 = vmatprep.mubr.bf16.mxu0 0
        %2378 = vmatmul.mubr.bf16.gmra.mrb[0].mxu0 %v2283
        %v2379 = vpop.f32.mrb[0].mxu0
        %v2380 = vadd.f32 %v2074, %v2379
        %v2381 = vpop.f32.mrb[0].mxu0
        %v2382 = vadd.f32 %v2076, %v2381
        %v2383 = vpop.f32.mrb[0].mxu0
        %v2384 = vadd.f32 %v2078, %v2383
        %v2385 = vpop.f32.mrb[0].mxu0
        %v2386 = vadd.f32 %v2080, %v2385
        %2387 = vmatprep.mubr.bf16.mxu0 0
        %2388 = vmatmul.mubr.bf16.gmra.mrb[0].mxu0 %v2285
        %v2389 = vpop.f32.mrb[0].mxu0
        %v2390 = vadd.f32 %v2084, %v2389
        %v2391 = vpop.f32.mrb[0].mxu0
        %v2392 = vadd.f32 %v2086, %v2391
        %v2393 = vpop.f32.mrb[0].mxu0
        %v2394 = vadd.f32 %v2088, %v2393
        %v2395 = vpop.f32.mrb[0].mxu0
        %v2396 = vadd.f32 %v2090, %v2395
        %2397 = vmatprep.mubr.bf16.mxu0 0
        %2398 = vmatmul.mubr.bf16.gmra.mrb[0].mxu0 %v2287
        %v2399 = vpop.f32.mrb[0].mxu0
        %v2400 = vadd.f32 %v2094, %v2399
        %v2401 = vpop.f32.mrb[0].mxu0
        %v2402 = vadd.f32 %v2096, %v2401
        %v2403 = vpop.f32.mrb[0].mxu0
        %v2404 = vadd.f32 %v2098, %v2403
        %v2405 = vpop.f32.mrb[0].mxu0
        %v2406 = vadd.f32 %v2100, %v2405
        %2407 = vmatprep.mubr.bf16.mxu0 0
        %2408 = vmatmul.mubr.bf16.gmra.mrb[0].mxu0 %v2289
        %v2409 = vpop.f32.mrb[0].mxu0
        %v2410 = vadd.f32 %v2104, %v2409
        %v2411 = vpop.f32.mrb[0].mxu0
        %v2412 = vadd.f32 %v2106, %v2411
        %v2413 = vpop.f32.mrb[0].mxu0
        %v2414 = vadd.f32 %v2108, %v2413
        %v2415 = vpop.f32.mrb[0].mxu0
        %v2416 = vadd.f32 %v2110, %v2415
        %2417 = vmatprep.mubr.bf16.mxu0 0
        %2418 = vmatmul.mubr.bf16.gmra.mrb[0].mxu0 %v2291
        %v2419 = vpop.f32.mrb[0].mxu0
        %v2420 = vadd.f32 %v2114, %v2419
        %v2421 = vpop.f32.mrb[0].mxu0
        %v2422 = vadd.f32 %v2116, %v2421
        %v2423 = vpop.f32.mrb[0].mxu0
        %v2424 = vadd.f32 %v2118, %v2423
        %v2425 = vpop.f32.mrb[0].mxu0
        %v2426 = vadd.f32 %v2120, %v2425
        %2427 = vmatprep.mubr.bf16.mxu0 0
        %2428 = vmatmul.mubr.bf16.gmra.mrb[0].mxu0 %v2293
        %v2429 = vpop.f32.mrb[0].mxu0
        %v2430 = vadd.f32 %v2124, %v2429
        %v2431 = vpop.f32.mrb[0].mxu0
        %v2432 = vadd.f32 %v2126, %v2431
        %v2433 = vpop.f32.mrb[0].mxu0
        %v2434 = vadd.f32 %v2128, %v2433
        %v2435 = vpop.f32.mrb[0].mxu0
        %v2436 = vadd.f32 %v2130, %v2435
        %2437 = vmatprep.mubr.bf16.mxu0 0
        %2438 = vmatmul.mubr.bf16.gmra.mrb[0].mxu0 %v2295
        %v2439 = vpop.f32.mrb[0].mxu0
        %v2440 = vadd.f32 %v2134, %v2439
        %v2441 = vpop.f32.mrb[0].mxu0
        %v2442 = vadd.f32 %v2136, %v2441
        %v2443 = vpop.f32.mrb[0].mxu0
        %v2444 = vadd.f32 %v2138, %v2443
        %v2445 = vpop.f32.mrb[0].mxu0
        %v2446 = vadd.f32 %v2140, %v2445
        %2447 = vmatprep.mubr.bf16.mxu0 0
        %2448 = vmatmul.mubr.bf16.gmra.mrb[0].mxu0 %v2297
        %v2449 = vpop.f32.mrb[0].mxu0
        %v2450 = vadd.f32 %v2144, %v2449
        %v2451 = vpop.f32.mrb[0].mxu0
        %v2452 = vadd.f32 %v2146, %v2451
        %v2453 = vpop.f32.mrb[0].mxu0
        %v2454 = vadd.f32 %v2148, %v2453
        %v2455 = vpop.f32.mrb[0].mxu0
        %v2456 = vadd.f32 %v2150, %v2455
        %2457 = vmatprep.mubr.bf16.mxu0 0
        %2458 = vmatmul.mubr.bf16.gmra.mrb[0].mxu0 %v2299
        %v2459 = vpop.f32.mrb[0].mxu0
        %v2460 = vadd.f32 %v2154, %v2459
        %v2461 = vpop.f32.mrb[0].mxu0
        %v2462 = vadd.f32 %v2156, %v2461
        %v2463 = vpop.f32.mrb[0].mxu0
        %v2464 = vadd.f32 %v2158, %v2463
        %v2465 = vpop.f32.mrb[0].mxu0
        %v2466 = vadd.f32 %v2160, %v2465
        %2467 = vmatprep.mubr.bf16.mxu0 0
        %2468 = vmatmul.mubr.bf16.gmra.mrb[0].mxu0 %v2301
        %v2469 = vpop.f32.mrb[0].mxu0
        %v2470 = vadd.f32 %v2164, %v2469
        %v2471 = vpop.f32.mrb[0].mxu0
        %v2472 = vadd.f32 %v2166, %v2471
        %v2473 = vpop.f32.mrb[0].mxu0
        %v2474 = vadd.f32 %v2168, %v2473
        %v2475 = vpop.f32.mrb[0].mxu0
        %v2476 = vadd.f32 %v2170, %v2475
        %2477 = vmatprep.mubr.bf16.mxu0 0
        %2478 = vmatmul.mubr.bf16.gmra.mrb[0].mxu0 %v2303
        %v2479 = vpop.f32.mrb[0].mxu0
        %v2480 = vadd.f32 %v2174, %v2479
        %v2481 = vpop.f32.mrb[0].mxu0
        %v2482 = vadd.f32 %v2176, %v2481
        %v2483 = vpop.f32.mrb[0].mxu0
        %v2484 = vadd.f32 %v2178, %v2483
        %v2485 = vpop.f32.mrb[0].mxu0
        %v2486 = vadd.f32 %v2180, %v2485
        %2487 = vmatprep.mubr.bf16.mxu0 0
        %2488 = vmatmul.mubr.bf16.gmra.mrb[0].mxu0 %v2305
        %v2489 = vpop.f32.mrb[0].mxu0
        %v2490 = vadd.f32 %v2184, %v2489
        %v2491 = vpop.f32.mrb[0].mxu0
        %v2492 = vadd.f32 %v2186, %v2491
        %v2493 = vpop.f32.mrb[0].mxu0
        %v2494 = vadd.f32 %v2188, %v2493
        %v2495 = vpop.f32.mrb[0].mxu0
        %v2496 = vadd.f32 %v2190, %v2495
        %2497 = vmatprep.mubr.bf16.mxu0 0
        %2498 = vmatmul.mubr.bf16.gmra.mrb[0].mxu0 %v2307
        %v2499 = vpop.f32.mrb[0].mxu0
        %v2500 = vadd.f32 %v2194, %v2499
        %v2501 = vpop.f32.mrb[0].mxu0
        %v2502 = vadd.f32 %v2196, %v2501
        %v2503 = vpop.f32.mrb[0].mxu0
        %v2504 = vadd.f32 %v2198, %v2503
        %v2505 = vpop.f32.mrb[0].mxu0
        %v2506 = vadd.f32 %v2200, %v2505
        %2507 = vdwg.mxu0
        %s2508 = scalar_lea.vmem %s5, 240
        %v2509 = vld [vmem:[%s2508] sm:$0xff]
        %v2510 = vld [vmem:[%s2508 + $0x8] sm:$0xff]
        %v2511 = vld [vmem:[%s2508 + $0x10] sm:$0xff]
        %v2512 = vld [vmem:[%s2508 + $0x18] sm:$0xff]
        %v2513 = vld [vmem:[%s2508 + $0x20] sm:$0xff]
        %v2514 = vld [vmem:[%s2508 + $0x28] sm:$0xff]
        %v2515 = vld [vmem:[%s2508 + $0x30] sm:$0xff]
        %v2516 = vld [vmem:[%s2508 + $0x38] sm:$0xff]
        %v2517 = vld [vmem:[%s2508 + $0x40] sm:$0xff]
        %v2518 = vld [vmem:[%s2508 + $0x48] sm:$0xff]
        %v2519 = vld [vmem:[%s2508 + $0x50] sm:$0xff]
        %v2520 = vld [vmem:[%s2508 + $0x58] sm:$0xff]
        %v2521 = vld [vmem:[%s2508 + $0x60] sm:$0xff]
        %v2522 = vld [vmem:[%s2508 + $0x68] sm:$0xff]
        %v2523 = vld [vmem:[%s2508 + $0x70] sm:$0xff]
        %v2540 = vrot.slane %v1704, 1
        %v2541 = vrot.slane %v1705, 1
        %v2542 = vsel %vm1344, %v2540, %v2541
        %v2543 = vrot.slane %v1706, 1
        %v2544 = vsel %vm1344, %v2541, %v2543
        %v2545 = vrot.slane %v1707, 1
        %v2546 = vsel %vm1344, %v2543, %v2545
        %v2547 = vrot.slane %v1708, 1
        %v2548 = vsel %vm1344, %v2545, %v2547
        %v2549 = vrot.slane %v1709, 1
        %v2550 = vsel %vm1344, %v2547, %v2549
        %v2551 = vrot.slane %v1710, 1
        %v2552 = vsel %vm1344, %v2549, %v2551
        %v2553 = vrot.slane %v1711, 1
        %v2554 = vsel %vm1344, %v2551, %v2553
        %v2555 = vrot.slane %v1712, 1
        %v2556 = vsel %vm1344, %v2553, %v2555
        %v2557 = vrot.slane %v1713, 1
        %v2558 = vsel %vm1344, %v2555, %v2557
        %v2559 = vrot.slane %v1714, 1
        %v2560 = vsel %vm1344, %v2557, %v2559
        %v2561 = vrot.slane %v1715, 1
        %v2562 = vsel %vm1344, %v2559, %v2561
        %v2563 = vrot.slane %v1716, 1
        %v2564 = vsel %vm1344, %v2561, %v2563
        %v2565 = vrot.slane %v1717, 1
        %v2566 = vsel %vm1344, %v2563, %v2565
        %v2567 = vrot.slane %v1718, 1
        %v2568 = vsel %vm1344, %v2565, %v2567
        %v2569 = vrot.slane %v1719, 1
        %v2570 = vsel %vm1344, %v2567, %v2569
        %v2586 = vunpack.c.l.b16 %v2509
        %v2587 = vunpack.c.h.b16 %v2509
        %v2588 = vunpack.c.l.b16 %v2510
        %v2589 = vunpack.c.h.b16 %v2510
        %v2590 = vunpack.c.l.b16 %v2511
        %v2591 = vunpack.c.h.b16 %v2511
        %v2592 = vunpack.c.l.b16 %v2512
        %v2593 = vunpack.c.h.b16 %v2512
        %v2594 = vunpack.c.l.b16 %v2513
        %v2595 = vunpack.c.h.b16 %v2513
        %v2596 = vunpack.c.l.b16 %v2514
        %v2597 = vunpack.c.h.b16 %v2514
        %v2598 = vunpack.c.l.b16 %v2515
        %v2599 = vunpack.c.h.b16 %v2515
        %v2600 = vunpack.c.l.b16 %v2516
        %v2601 = vunpack.c.h.b16 %v2516
        %v2602 = vunpack.c.l.b16 %v2517
        %v2603 = vunpack.c.h.b16 %v2517
        %v2604 = vunpack.c.l.b16 %v2518
        %v2605 = vunpack.c.h.b16 %v2518
        %v2606 = vunpack.c.l.b16 %v2519
        %v2607 = vunpack.c.h.b16 %v2519
        %v2608 = vunpack.c.l.b16 %v2520
        %v2609 = vunpack.c.h.b16 %v2520
        %v2610 = vunpack.c.l.b16 %v2521
        %v2611 = vunpack.c.h.b16 %v2521
        %v2612 = vunpack.c.l.b16 %v2522
        %v2613 = vunpack.c.h.b16 %v2522
        %v2614 = vunpack.c.l.b16 %v2523
        %v2615 = vunpack.c.h.b16 %v2523
        %v2616 = vpack.c.b16 %v2588, %v2586
        %v2617 = vpack.c.b16 %v2589, %v2587
        %v2618 = vpack.c.b16 %v2592, %v2590
        %v2619 = vpack.c.b16 %v2593, %v2591
        %v2620 = vpack.c.b16 %v2596, %v2594
        %v2621 = vpack.c.b16 %v2597, %v2595
        %v2622 = vpack.c.b16 %v2600, %v2598
        %v2623 = vpack.c.b16 %v2601, %v2599
        %v2624 = vpack.c.b16 %v2604, %v2602
        %v2625 = vpack.c.b16 %v2605, %v2603
        %v2626 = vpack.c.b16 %v2608, %v2606
        %v2627 = vpack.c.b16 %v2609, %v2607
        %v2628 = vpack.c.b16 %v2612, %v2610
        %v2629 = vpack.c.b16 %v2613, %v2611
        %v2630 = vpack.c.b16 %v2614, %v2614
        %v2631 = vpack.c.b16 %v2615, %v2615
        %v2647 = vsel %vm1953, %v2542, 0
        %v2650 = vsel %vm1953, %v2544, 0
        %v2653 = vsel %vm1953, %v2546, 0
        %v2656 = vsel %vm1953, %v2548, 0
        %v2659 = vsel %vm1953, %v2550, 0
        %v2662 = vsel %vm1953, %v2552, 0
        %v2665 = vsel %vm1953, %v2554, 0
        %v2668 = vsel %vm1953, %v2556, 0
        %v2671 = vsel %vm1953, %v2558, 0
        %v2674 = vsel %vm1953, %v2560, 0
        %v2677 = vsel %vm1953, %v2562, 0
        %v2680 = vsel %vm1953, %v2564, 0
        %v2683 = vsel %vm1953, %v2566, 0
        %v2686 = vsel %vm1953, %v2568, 0
        %v2689 = vsel %vm1953, %v2570, 0
        %v2692 = vsel %vm1953, %v2569, 0
        %v2695 = vsel %vm2002, %v2630, 0
        %v2698 = vsel %vm2002, %v2631, 0
        %2700 = vmatprep.subr.bf16.mxu0 %v2617
        %2701 = vmatpush1.bf16.msra.mxu0 %v2616
        %2702 = vmatprep.subr.bf16.mxu0 %v2619
        %2703 = vmatpush1.bf16.msra.mxu0 %v2618
        %2704 = vmatprep.subr.bf16.mxu0 %v2621
        %2705 = vmatpush1.bf16.msra.mxu0 %v2620
        %2706 = vmatprep.subr.bf16.mxu0 %v2623
        %2707 = vmatpush1.bf16.msra.mxu0 %v2622
        %2708 = vmatprep.subr.bf16.mxu0 %v2625
        %2709 = vmatpush1.bf16.msra.mxu0 %v2624
        %2710 = vmatprep.subr.bf16.mxu0 %v2627
        %2711 = vmatpush1.bf16.msra.mxu0 %v2626
        %2712 = vmatprep.subr.bf16.mxu0 %v2629
        %2713 = vmatpush1.bf16.msra.mxu0 %v2628
        %2714 = vmatprep.subr.bf16.mxu0 %v2698
        %2715 = vmatpush1.bf16.msra.mxu0 %v2695
        %2716 = vmatprep.subr.bf16.mxu0 0
        %2717 = vmatpush1.bf16.msra.mxu0 0
        %2718 = vmatprep.subr.bf16.mxu0 0
        %2719 = vmatpush1.bf16.msra.mxu0 0
        %2720 = vmatprep.subr.bf16.mxu0 0
        %2721 = vmatpush1.bf16.msra.mxu0 0
        %2722 = vmatprep.subr.bf16.mxu0 0
        %2723 = vmatpush1.bf16.msra.mxu0 0
        %2724 = vmatprep.subr.bf16.mxu0 0
        %2725 = vmatpush1.bf16.msra.mxu0 0
        %2726 = vmatprep.subr.bf16.mxu0 0
        %2727 = vmatpush1.bf16.msra.mxu0 0
        %2728 = vmatprep.subr.bf16.mxu0 0
        %2729 = vmatpush1.bf16.msra.mxu0 0
        %2730 = vmatprep.subr.bf16.mxu0 0
        %2731 = vmatpush1.bf16.msra.mxu0 0
        %2732 = vmatprep.mubr.bf16.mxu0 0
        %2733 = vmatmul.mubr.bf16.gmra.mrb[0].mxu0 %v2647
        %v2734 = vpop.f32.mrb[0].mxu0
        %v2735 = vadd.f32 0.0, %v2734
        %v2736 = vpop.f32.mrb[0].mxu0
        %v2737 = vadd.f32 0.0, %v2736
        %v2738 = vpop.f32.mrb[0].mxu0
        %v2739 = vadd.f32 0.0, %v2738
        %v2740 = vpop.f32.mrb[0].mxu0
        %v2741 = vadd.f32 0.0, %v2740
        %2742 = vmatprep.mubr.bf16.mxu0 0
        %2743 = vmatmul.mubr.bf16.gmra.mrb[0].mxu0 %v2650
        %v2744 = vpop.f32.mrb[0].mxu0
        %v2745 = vadd.f32 0.0, %v2744
        %v2746 = vpop.f32.mrb[0].mxu0
        %v2747 = vadd.f32 0.0, %v2746
        %v2748 = vpop.f32.mrb[0].mxu0
        %v2749 = vadd.f32 0.0, %v2748
        %v2750 = vpop.f32.mrb[0].mxu0
        %v2751 = vadd.f32 0.0, %v2750
        %2752 = vmatprep.mubr.bf16.mxu0 0
        %2753 = vmatmul.mubr.bf16.gmra.mrb[0].mxu0 %v2653
        %v2754 = vpop.f32.mrb[0].mxu0
        %v2755 = vadd.f32 0.0, %v2754
        %v2756 = vpop.f32.mrb[0].mxu0
        %v2757 = vadd.f32 0.0, %v2756
        %v2758 = vpop.f32.mrb[0].mxu0
        %v2759 = vadd.f32 0.0, %v2758
        %v2760 = vpop.f32.mrb[0].mxu0
        %v2761 = vadd.f32 0.0, %v2760
        %2762 = vmatprep.mubr.bf16.mxu0 0
        %2763 = vmatmul.mubr.bf16.gmra.mrb[0].mxu0 %v2656
        %v2764 = vpop.f32.mrb[0].mxu0
        %v2765 = vadd.f32 0.0, %v2764
        %v2766 = vpop.f32.mrb[0].mxu0
        %v2767 = vadd.f32 0.0, %v2766
        %v2768 = vpop.f32.mrb[0].mxu0
        %v2769 = vadd.f32 0.0, %v2768
        %v2770 = vpop.f32.mrb[0].mxu0
        %v2771 = vadd.f32 0.0, %v2770
        %2772 = vmatprep.mubr.bf16.mxu0 0
        %2773 = vmatmul.mubr.bf16.gmra.mrb[0].mxu0 %v2659
        %v2774 = vpop.f32.mrb[0].mxu0
        %v2775 = vadd.f32 0.0, %v2774
        %v2776 = vpop.f32.mrb[0].mxu0
        %v2777 = vadd.f32 0.0, %v2776
        %v2778 = vpop.f32.mrb[0].mxu0
        %v2779 = vadd.f32 0.0, %v2778
        %v2780 = vpop.f32.mrb[0].mxu0
        %v2781 = vadd.f32 0.0, %v2780
        %2782 = vmatprep.mubr.bf16.mxu0 0
        %2783 = vmatmul.mubr.bf16.gmra.mrb[0].mxu0 %v2662
        %v2784 = vpop.f32.mrb[0].mxu0
        %v2785 = vadd.f32 0.0, %v2784
        %v2786 = vpop.f32.mrb[0].mxu0
        %v2787 = vadd.f32 0.0, %v2786
        %v2788 = vpop.f32.mrb[0].mxu0
        %v2789 = vadd.f32 0.0, %v2788
        %v2790 = vpop.f32.mrb[0].mxu0
        %v2791 = vadd.f32 0.0, %v2790
        %2792 = vmatprep.mubr.bf16.mxu0 0
        %2793 = vmatmul.mubr.bf16.gmra.mrb[0].mxu0 %v2665
        %v2794 = vpop.f32.mrb[0].mxu0
        %v2795 = vadd.f32 0.0, %v2794
        %v2796 = vpop.f32.mrb[0].mxu0
        %v2797 = vadd.f32 0.0, %v2796
        %v2798 = vpop.f32.mrb[0].mxu0
        %v2799 = vadd.f32 0.0, %v2798
        %v2800 = vpop.f32.mrb[0].mxu0
        %v2801 = vadd.f32 0.0, %v2800
        %2802 = vmatprep.mubr.bf16.mxu0 0
        %2803 = vmatmul.mubr.bf16.gmra.mrb[0].mxu0 %v2668
        %v2804 = vpop.f32.mrb[0].mxu0
        %v2805 = vadd.f32 0.0, %v2804
        %v2806 = vpop.f32.mrb[0].mxu0
        %v2807 = vadd.f32 0.0, %v2806
        %v2808 = vpop.f32.mrb[0].mxu0
        %v2809 = vadd.f32 0.0, %v2808
        %v2810 = vpop.f32.mrb[0].mxu0
        %v2811 = vadd.f32 0.0, %v2810
        %2812 = vmatprep.mubr.bf16.mxu0 0
        %2813 = vmatmul.mubr.bf16.gmra.mrb[0].mxu0 %v2671
        %v2814 = vpop.f32.mrb[0].mxu0
        %v2815 = vadd.f32 0.0, %v2814
        %v2816 = vpop.f32.mrb[0].mxu0
        %v2817 = vadd.f32 0.0, %v2816
        %v2818 = vpop.f32.mrb[0].mxu0
        %v2819 = vadd.f32 0.0, %v2818
        %v2820 = vpop.f32.mrb[0].mxu0
        %v2821 = vadd.f32 0.0, %v2820
        %2822 = vmatprep.mubr.bf16.mxu0 0
        %2823 = vmatmul.mubr.bf16.gmra.mrb[0].mxu0 %v2674
        %v2824 = vpop.f32.mrb[0].mxu0
        %v2825 = vadd.f32 0.0, %v2824
        %v2826 = vpop.f32.mrb[0].mxu0
        %v2827 = vadd.f32 0.0, %v2826
        %v2828 = vpop.f32.mrb[0].mxu0
        %v2829 = vadd.f32 0.0, %v2828
        %v2830 = vpop.f32.mrb[0].mxu0
        %v2831 = vadd.f32 0.0, %v2830
        %2832 = vmatprep.mubr.bf16.mxu0 0
        %2833 = vmatmul.mubr.bf16.gmra.mrb[0].mxu0 %v2677
        %v2834 = vpop.f32.mrb[0].mxu0
        %v2835 = vadd.f32 0.0, %v2834
        %v2836 = vpop.f32.mrb[0].mxu0
        %v2837 = vadd.f32 0.0, %v2836
        %v2838 = vpop.f32.mrb[0].mxu0
        %v2839 = vadd.f32 0.0, %v2838
        %v2840 = vpop.f32.mrb[0].mxu0
        %v2841 = vadd.f32 0.0, %v2840
        %2842 = vmatprep.mubr.bf16.mxu0 0
        %2843 = vmatmul.mubr.bf16.gmra.mrb[0].mxu0 %v2680
        %v2844 = vpop.f32.mrb[0].mxu0
        %v2845 = vadd.f32 0.0, %v2844
        %v2846 = vpop.f32.mrb[0].mxu0
        %v2847 = vadd.f32 0.0, %v2846
        %v2848 = vpop.f32.mrb[0].mxu0
        %v2849 = vadd.f32 0.0, %v2848
        %v2850 = vpop.f32.mrb[0].mxu0
        %v2851 = vadd.f32 0.0, %v2850
        %2852 = vmatprep.mubr.bf16.mxu0 0
        %2853 = vmatmul.mubr.bf16.gmra.mrb[0].mxu0 %v2683
        %v2854 = vpop.f32.mrb[0].mxu0
        %v2855 = vadd.f32 0.0, %v2854
        %v2856 = vpop.f32.mrb[0].mxu0
        %v2857 = vadd.f32 0.0, %v2856
        %v2858 = vpop.f32.mrb[0].mxu0
        %v2859 = vadd.f32 0.0, %v2858
        %v2860 = vpop.f32.mrb[0].mxu0
        %v2861 = vadd.f32 0.0, %v2860
        %2862 = vmatprep.mubr.bf16.mxu0 0
        %2863 = vmatmul.mubr.bf16.gmra.mrb[0].mxu0 %v2686
        %v2864 = vpop.f32.mrb[0].mxu0
        %v2865 = vadd.f32 0.0, %v2864
        %v2866 = vpop.f32.mrb[0].mxu0
        %v2867 = vadd.f32 0.0, %v2866
        %v2868 = vpop.f32.mrb[0].mxu0
        %v2869 = vadd.f32 0.0, %v2868
        %v2870 = vpop.f32.mrb[0].mxu0
        %v2871 = vadd.f32 0.0, %v2870
        %2872 = vmatprep.mubr.bf16.mxu0 0
        %2873 = vmatmul.mubr.bf16.gmra.mrb[0].mxu0 %v2689
        %v2874 = vpop.f32.mrb[0].mxu0
        %v2875 = vadd.f32 0.0, %v2874
        %v2876 = vpop.f32.mrb[0].mxu0
        %v2877 = vadd.f32 0.0, %v2876
        %v2878 = vpop.f32.mrb[0].mxu0
        %v2879 = vadd.f32 0.0, %v2878
        %v2880 = vpop.f32.mrb[0].mxu0
        %v2881 = vadd.f32 0.0, %v2880
        %2882 = vmatprep.mubr.bf16.mxu0 0
        %2883 = vmatmul.mubr.bf16.gmra.mrb[0].mxu0 %v2692
        %v2884 = vpop.f32.mrb[0].mxu0
        %v2885 = vadd.f32 0.0, %v2884
        %v2886 = vpop.f32.mrb[0].mxu0
        %v2887 = vadd.f32 0.0, %v2886
        %v2888 = vpop.f32.mrb[0].mxu0
        %v2889 = vadd.f32 0.0, %v2888
        %v2890 = vpop.f32.mrb[0].mxu0
        %v2891 = vadd.f32 0.0, %v2890
        %2892 = vdwg.mxu0
        %v2893 = vadd.f32 %v2350, %v2735
        %v2894 = vadd.f32 %v2352, %v2737
        %v2895 = vadd.f32 %v2354, %v2739
        %v2896 = vadd.f32 %v2356, %v2741
        %v2897 = vadd.f32 %v2360, %v2745
        %v2898 = vadd.f32 %v2362, %v2747
        %v2899 = vadd.f32 %v2364, %v2749
        %v2900 = vadd.f32 %v2366, %v2751
        %v2901 = vadd.f32 %v2370, %v2755
        %v2902 = vadd.f32 %v2372, %v2757
        %v2903 = vadd.f32 %v2374, %v2759
        %v2904 = vadd.f32 %v2376, %v2761
        %v2905 = vadd.f32 %v2380, %v2765
        %v2906 = vadd.f32 %v2382, %v2767
        %v2907 = vadd.f32 %v2384, %v2769
        %v2908 = vadd.f32 %v2386, %v2771
        %v2909 = vadd.f32 %v2390, %v2775
        %v2910 = vadd.f32 %v2392, %v2777
        %v2911 = vadd.f32 %v2394, %v2779
        %v2912 = vadd.f32 %v2396, %v2781
        %v2913 = vadd.f32 %v2400, %v2785
        %v2914 = vadd.f32 %v2402, %v2787
        %v2915 = vadd.f32 %v2404, %v2789
        %v2916 = vadd.f32 %v2406, %v2791
        %v2917 = vadd.f32 %v2410, %v2795
        %v2918 = vadd.f32 %v2412, %v2797
        %v2919 = vadd.f32 %v2414, %v2799
        %v2920 = vadd.f32 %v2416, %v2801
        %v2921 = vadd.f32 %v2420, %v2805
        %v2922 = vadd.f32 %v2422, %v2807
        %v2923 = vadd.f32 %v2424, %v2809
        %v2924 = vadd.f32 %v2426, %v2811
        %v2925 = vadd.f32 %v2430, %v2815
        %v2926 = vadd.f32 %v2432, %v2817
        %v2927 = vadd.f32 %v2434, %v2819
        %v2928 = vadd.f32 %v2436, %v2821
        %v2929 = vadd.f32 %v2440, %v2825
        %v2930 = vadd.f32 %v2442, %v2827
        %v2931 = vadd.f32 %v2444, %v2829
        %v2932 = vadd.f32 %v2446, %v2831
        %v2933 = vadd.f32 %v2450, %v2835
        %v2934 = vadd.f32 %v2452, %v2837
        %v2935 = vadd.f32 %v2454, %v2839
        %v2936 = vadd.f32 %v2456, %v2841
        %v2937 = vadd.f32 %v2460, %v2845
        %v2938 = vadd.f32 %v2462, %v2847
        %v2939 = vadd.f32 %v2464, %v2849
        %v2940 = vadd.f32 %v2466, %v2851
        %v2941 = vadd.f32 %v2470, %v2855
        %v2942 = vadd.f32 %v2472, %v2857
        %v2943 = vadd.f32 %v2474, %v2859
        %v2944 = vadd.f32 %v2476, %v2861
        %v2945 = vadd.f32 %v2480, %v2865
        %v2946 = vadd.f32 %v2482, %v2867
        %v2947 = vadd.f32 %v2484, %v2869
        %v2948 = vadd.f32 %v2486, %v2871
        %v2949 = vadd.f32 %v2490, %v2875
        %v2950 = vadd.f32 %v2492, %v2877
        %v2951 = vadd.f32 %v2494, %v2879
        %v2952 = vadd.f32 %v2496, %v2881
        %v2953 = vadd.f32 %v2500, %v2885
        %v2954 = vadd.f32 %v2502, %v2887
        %v2955 = vadd.f32 %v2504, %v2889
        %v2956 = vadd.f32 %v2506, %v2891
        %v2957 = vld [vmem:[%s6] sm:$0x3]
        %v2959 = vlaneseq
        %v2960 = vshrl.u32 %v2959, 7
        %v2961 = vsub.s32 0, %v2960
        %v2962 = vrot.slane %v2957, %v2961
        %v2963 = vlaneseq
        %v2964 = vshrl.u32 %v2963, 7
        %v2965 = vsub.s32 1, %v2964
        %v2966 = vrot.slane %v2957, %v2965
        %v2969 = vadd.f32 %v2893, %v2962
        %v2970 = vadd.f32 %v2894, %v2966
        %v2971 = vadd.f32 %v2895, %v2962
        %v2972 = vadd.f32 %v2896, %v2966
        %v2973 = vadd.f32 %v2897, %v2962
        %v2974 = vadd.f32 %v2898, %v2966
        %v2975 = vadd.f32 %v2899, %v2962
        %v2976 = vadd.f32 %v2900, %v2966
        %v2977 = vadd.f32 %v2901, %v2962
        %v2978 = vadd.f32 %v2902, %v2966
        %v2979 = vadd.f32 %v2903, %v2962
        %v2980 = vadd.f32 %v2904, %v2966
        %v2981 = vadd.f32 %v2905, %v2962
        %v2982 = vadd.f32 %v2906, %v2966
        %v2983 = vadd.f32 %v2907, %v2962
        %v2984 = vadd.f32 %v2908, %v2966
        %v2985 = vadd.f32 %v2909, %v2962
        %v2986 = vadd.f32 %v2910, %v2966
        %v2987 = vadd.f32 %v2911, %v2962
        %v2988 = vadd.f32 %v2912, %v2966
        %v2989 = vadd.f32 %v2913, %v2962
        %v2990 = vadd.f32 %v2914, %v2966
        %v2991 = vadd.f32 %v2915, %v2962
        %v2992 = vadd.f32 %v2916, %v2966
        %v2993 = vadd.f32 %v2917, %v2962
        %v2994 = vadd.f32 %v2918, %v2966
        %v2995 = vadd.f32 %v2919, %v2962
        %v2996 = vadd.f32 %v2920, %v2966
        %v2997 = vadd.f32 %v2921, %v2962
        %v2998 = vadd.f32 %v2922, %v2966
        %v2999 = vadd.f32 %v2923, %v2962
        %v3000 = vadd.f32 %v2924, %v2966
        %v3001 = vadd.f32 %v2925, %v2962
        %v3002 = vadd.f32 %v2926, %v2966
        %v3003 = vadd.f32 %v2927, %v2962
        %v3004 = vadd.f32 %v2928, %v2966
        %v3005 = vadd.f32 %v2929, %v2962
        %v3006 = vadd.f32 %v2930, %v2966
        %v3007 = vadd.f32 %v2931, %v2962
        %v3008 = vadd.f32 %v2932, %v2966
        %v3009 = vadd.f32 %v2933, %v2962
        %v3010 = vadd.f32 %v2934, %v2966
        %v3011 = vadd.f32 %v2935, %v2962
        %v3012 = vadd.f32 %v2936, %v2966
        %v3013 = vadd.f32 %v2937, %v2962
        %v3014 = vadd.f32 %v2938, %v2966
        %v3015 = vadd.f32 %v2939, %v2962
        %v3016 = vadd.f32 %v2940, %v2966
        %v3017 = vadd.f32 %v2941, %v2962
        %v3018 = vadd.f32 %v2942, %v2966
        %v3019 = vadd.f32 %v2943, %v2962
        %v3020 = vadd.f32 %v2944, %v2966
        %v3021 = vadd.f32 %v2945, %v2962
        %v3022 = vadd.f32 %v2946, %v2966
        %v3023 = vadd.f32 %v2947, %v2962
        %v3024 = vadd.f32 %v2948, %v2966
        %v3025 = vadd.f32 %v2949, %v2962
        %v3026 = vadd.f32 %v2950, %v2966
        %v3027 = vadd.f32 %v2951, %v2962
        %v3028 = vadd.f32 %v2952, %v2966
        %v3029 = vadd.f32 %v2953, %v2962
        %v3030 = vadd.f32 %v2954, %v2966
        %v3031 = vadd.f32 %v2955, %v2962
        %v3032 = vadd.f32 %v2956, %v2966
        %v3033 = vmax.f32 %v2969, 0.0
        %v3034 = vmax.f32 %v2970, 0.0
        %v3035 = vmax.f32 %v2971, 0.0
        %v3036 = vmax.f32 %v2972, 0.0
        %v3037 = vmax.f32 %v2973, 0.0
        %v3038 = vmax.f32 %v2974, 0.0
        %v3039 = vmax.f32 %v2975, 0.0
        %v3040 = vmax.f32 %v2976, 0.0
        %v3041 = vmax.f32 %v2977, 0.0
        %v3042 = vmax.f32 %v2978, 0.0
        %v3043 = vmax.f32 %v2979, 0.0
        %v3044 = vmax.f32 %v2980, 0.0
        %v3045 = vmax.f32 %v2981, 0.0
        %v3046 = vmax.f32 %v2982, 0.0
        %v3047 = vmax.f32 %v2983, 0.0
        %v3048 = vmax.f32 %v2984, 0.0
        %v3049 = vmax.f32 %v2985, 0.0
        %v3050 = vmax.f32 %v2986, 0.0
        %v3051 = vmax.f32 %v2987, 0.0
        %v3052 = vmax.f32 %v2988, 0.0
        %v3053 = vmax.f32 %v2989, 0.0
        %v3054 = vmax.f32 %v2990, 0.0
        %v3055 = vmax.f32 %v2991, 0.0
        %v3056 = vmax.f32 %v2992, 0.0
        %v3057 = vmax.f32 %v2993, 0.0
        %v3058 = vmax.f32 %v2994, 0.0
        %v3059 = vmax.f32 %v2995, 0.0
        %v3060 = vmax.f32 %v2996, 0.0
        %v3061 = vmax.f32 %v2997, 0.0
        %v3062 = vmax.f32 %v2998, 0.0
        %v3063 = vmax.f32 %v2999, 0.0
        %v3064 = vmax.f32 %v3000, 0.0
        %v3065 = vmax.f32 %v3001, 0.0
        %v3066 = vmax.f32 %v3002, 0.0
        %v3067 = vmax.f32 %v3003, 0.0
        %v3068 = vmax.f32 %v3004, 0.0
        %v3069 = vmax.f32 %v3005, 0.0
        %v3070 = vmax.f32 %v3006, 0.0
        %v3071 = vmax.f32 %v3007, 0.0
        %v3072 = vmax.f32 %v3008, 0.0
        %v3073 = vmax.f32 %v3009, 0.0
        %v3074 = vmax.f32 %v3010, 0.0
        %v3075 = vmax.f32 %v3011, 0.0
        %v3076 = vmax.f32 %v3012, 0.0
        %v3077 = vmax.f32 %v3013, 0.0
        %v3078 = vmax.f32 %v3014, 0.0
        %v3079 = vmax.f32 %v3015, 0.0
        %v3080 = vmax.f32 %v3016, 0.0
        %v3081 = vmax.f32 %v3017, 0.0
        %v3082 = vmax.f32 %v3018, 0.0
        %v3083 = vmax.f32 %v3019, 0.0
        %v3084 = vmax.f32 %v3020, 0.0
        %v3085 = vmax.f32 %v3021, 0.0
        %v3086 = vmax.f32 %v3022, 0.0
        %v3087 = vmax.f32 %v3023, 0.0
        %v3088 = vmax.f32 %v3024, 0.0
        %v3089 = vmax.f32 %v3025, 0.0
        %v3090 = vmax.f32 %v3026, 0.0
        %v3091 = vmax.f32 %v3027, 0.0
        %v3092 = vmax.f32 %v3028, 0.0
        %v3093 = vmax.f32 %v3029, 0.0
        %v3094 = vmax.f32 %v3030, 0.0
        %v3095 = vmax.f32 %v3031, 0.0
        %v3096 = vmax.f32 %v3032, 0.0
        %vm3161 = vcmask 1046528
        %v3162 = vrot.slane %v3033, 1
        %v3163 = vrot.slane %v3035, 1
        %v3164 = vsel %vm3161, %v3162, %v3163
        %v3165 = vrot.slane %v3034, 1
        %v3166 = vrot.slane %v3036, 1
        %v3167 = vsel %vm3161, %v3165, %v3166
        %v3168 = vrot.slane %v3037, 1
        %v3169 = vsel %vm3161, %v3163, %v3168
        %v3170 = vrot.slane %v3038, 1
        %v3171 = vsel %vm3161, %v3166, %v3170
        %v3172 = vrot.slane %v3039, 1
        %v3173 = vsel %vm3161, %v3168, %v3172
        %v3174 = vrot.slane %v3040, 1
        %v3175 = vsel %vm3161, %v3170, %v3174
        %v3176 = vrot.slane %v3041, 1
        %v3177 = vsel %vm3161, %v3172, %v3176
        %v3178 = vrot.slane %v3042, 1
        %v3179 = vsel %vm3161, %v3174, %v3178
        %v3180 = vrot.slane %v3043, 1
        %v3181 = vsel %vm3161, %v3176, %v3180
        %v3182 = vrot.slane %v3044, 1
        %v3183 = vsel %vm3161, %v3178, %v3182
        %v3184 = vrot.slane %v3045, 1
        %v3185 = vsel %vm3161, %v3180, %v3184
        %v3186 = vrot.slane %v3046, 1
        %v3187 = vsel %vm3161, %v3182, %v3186
        %v3188 = vrot.slane %v3047, 1
        %v3189 = vsel %vm3161, %v3184, %v3188
        %v3190 = vrot.slane %v3048, 1
        %v3191 = vsel %vm3161, %v3186, %v3190
        %v3192 = vrot.slane %v3049, 1
        %v3193 = vsel %vm3161, %v3188, %v3192
        %v3194 = vrot.slane %v3050, 1
        %v3195 = vsel %vm3161, %v3190, %v3194
        %v3196 = vrot.slane %v3051, 1
        %v3197 = vsel %vm3161, %v3192, %v3196
        %v3198 = vrot.slane %v3052, 1
        %v3199 = vsel %vm3161, %v3194, %v3198
        %v3200 = vrot.slane %v3053, 1
        %v3201 = vsel %vm3161, %v3196, %v3200
        %v3202 = vrot.slane %v3054, 1
        %v3203 = vsel %vm3161, %v3198, %v3202
        %v3204 = vrot.slane %v3055, 1
        %v3205 = vsel %vm3161, %v3200, %v3204
        %v3206 = vrot.slane %v3056, 1
        %v3207 = vsel %vm3161, %v3202, %v3206
        %v3208 = vrot.slane %v3057, 1
        %v3209 = vsel %vm3161, %v3204, %v3208
        %v3210 = vrot.slane %v3058, 1
        %v3211 = vsel %vm3161, %v3206, %v3210
        %v3212 = vrot.slane %v3059, 1
        %v3213 = vsel %vm3161, %v3208, %v3212
        %v3214 = vrot.slane %v3060, 1
        %v3215 = vsel %vm3161, %v3210, %v3214
        %v3216 = vrot.slane %v3061, 1
        %v3217 = vsel %vm3161, %v3212, %v3216
        %v3218 = vrot.slane %v3062, 1
        %v3219 = vsel %vm3161, %v3214, %v3218
        %v3220 = vrot.slane %v3063, 1
        %v3221 = vsel %vm3161, %v3216, %v3220
        %v3222 = vrot.slane %v3064, 1
        %v3223 = vsel %vm3161, %v3218, %v3222
        %v3224 = vrot.slane %v3065, 1
        %v3225 = vsel %vm3161, %v3220, %v3224
        %v3226 = vrot.slane %v3066, 1
        %v3227 = vsel %vm3161, %v3222, %v3226
        %v3228 = vrot.slane %v3067, 1
        %v3229 = vsel %vm3161, %v3224, %v3228
        %v3230 = vrot.slane %v3068, 1
        %v3231 = vsel %vm3161, %v3226, %v3230
        %v3232 = vrot.slane %v3069, 1
        %v3233 = vsel %vm3161, %v3228, %v3232
        %v3234 = vrot.slane %v3070, 1
        %v3235 = vsel %vm3161, %v3230, %v3234
        %v3236 = vrot.slane %v3071, 1
        %v3237 = vsel %vm3161, %v3232, %v3236
        %v3238 = vrot.slane %v3072, 1
        %v3239 = vsel %vm3161, %v3234, %v3238
        %v3240 = vrot.slane %v3073, 1
        %v3241 = vsel %vm3161, %v3236, %v3240
        %v3242 = vrot.slane %v3074, 1
        %v3243 = vsel %vm3161, %v3238, %v3242
        %v3244 = vrot.slane %v3075, 1
        %v3245 = vsel %vm3161, %v3240, %v3244
        %v3246 = vrot.slane %v3076, 1
        %v3247 = vsel %vm3161, %v3242, %v3246
        %v3248 = vrot.slane %v3077, 1
        %v3249 = vsel %vm3161, %v3244, %v3248
        %v3250 = vrot.slane %v3078, 1
        %v3251 = vsel %vm3161, %v3246, %v3250
        %v3252 = vrot.slane %v3079, 1
        %v3253 = vsel %vm3161, %v3248, %v3252
        %v3254 = vrot.slane %v3080, 1
        %v3255 = vsel %vm3161, %v3250, %v3254
        %v3256 = vrot.slane %v3081, 1
        %v3257 = vsel %vm3161, %v3252, %v3256
        %v3258 = vrot.slane %v3082, 1
        %v3259 = vsel %vm3161, %v3254, %v3258
        %v3260 = vrot.slane %v3083, 1
        %v3261 = vsel %vm3161, %v3256, %v3260
        %v3262 = vrot.slane %v3084, 1
        %v3263 = vsel %vm3161, %v3258, %v3262
        %v3264 = vrot.slane %v3085, 1
        %v3265 = vsel %vm3161, %v3260, %v3264
        %v3266 = vrot.slane %v3086, 1
        %v3267 = vsel %vm3161, %v3262, %v3266
        %v3268 = vrot.slane %v3087, 1
        %v3269 = vsel %vm3161, %v3264, %v3268
        %v3270 = vrot.slane %v3088, 1
        %v3271 = vsel %vm3161, %v3266, %v3270
        %v3272 = vrot.slane %v3089, 1
        %v3273 = vsel %vm3161, %v3268, %v3272
        %v3274 = vrot.slane %v3090, 1
        %v3275 = vsel %vm3161, %v3270, %v3274
        %v3276 = vrot.slane %v3091, 1
        %v3277 = vsel %vm3161, %v3272, %v3276
        %v3278 = vrot.slane %v3092, 1
        %v3279 = vsel %vm3161, %v3274, %v3278
        %v3280 = vrot.slane %v3093, 1
        %v3281 = vsel %vm3161, %v3276, %v3280
        %v3282 = vrot.slane %v3094, 1
        %v3283 = vsel %vm3161, %v3278, %v3282
        %v3284 = vrot.slane %v3095, 1
        %v3285 = vsel %vm3161, %v3280, %v3284
        %v3286 = vrot.slane %v3096, 1
        %v3287 = vsel %vm3161, %v3282, %v3286
        %v3352 = vmax.f32 %v3033, %v3164
        %v3353 = vmax.f32 %v3034, %v3167
        %v3354 = vmax.f32 %v3035, %v3169
        %v3355 = vmax.f32 %v3036, %v3171
        %v3356 = vmax.f32 %v3037, %v3173
        %v3357 = vmax.f32 %v3038, %v3175
        %v3358 = vmax.f32 %v3039, %v3177
        %v3359 = vmax.f32 %v3040, %v3179
        %v3360 = vmax.f32 %v3041, %v3181
        %v3361 = vmax.f32 %v3042, %v3183
        %v3362 = vmax.f32 %v3043, %v3185
        %v3363 = vmax.f32 %v3044, %v3187
        %v3364 = vmax.f32 %v3045, %v3189
        %v3365 = vmax.f32 %v3046, %v3191
        %v3366 = vmax.f32 %v3047, %v3193
        %v3367 = vmax.f32 %v3048, %v3195
        %v3368 = vmax.f32 %v3049, %v3197
        %v3369 = vmax.f32 %v3050, %v3199
        %v3370 = vmax.f32 %v3051, %v3201
        %v3371 = vmax.f32 %v3052, %v3203
        %v3372 = vmax.f32 %v3053, %v3205
        %v3373 = vmax.f32 %v3054, %v3207
        %v3374 = vmax.f32 %v3055, %v3209
        %v3375 = vmax.f32 %v3056, %v3211
        %v3376 = vmax.f32 %v3057, %v3213
        %v3377 = vmax.f32 %v3058, %v3215
        %v3378 = vmax.f32 %v3059, %v3217
        %v3379 = vmax.f32 %v3060, %v3219
        %v3380 = vmax.f32 %v3061, %v3221
        %v3381 = vmax.f32 %v3062, %v3223
        %v3382 = vmax.f32 %v3063, %v3225
        %v3383 = vmax.f32 %v3064, %v3227
        %v3384 = vmax.f32 %v3065, %v3229
        %v3385 = vmax.f32 %v3066, %v3231
        %v3386 = vmax.f32 %v3067, %v3233
        %v3387 = vmax.f32 %v3068, %v3235
        %v3388 = vmax.f32 %v3069, %v3237
        %v3389 = vmax.f32 %v3070, %v3239
        %v3390 = vmax.f32 %v3071, %v3241
        %v3391 = vmax.f32 %v3072, %v3243
        %v3392 = vmax.f32 %v3073, %v3245
        %v3393 = vmax.f32 %v3074, %v3247
        %v3394 = vmax.f32 %v3075, %v3249
        %v3395 = vmax.f32 %v3076, %v3251
        %v3396 = vmax.f32 %v3077, %v3253
        %v3397 = vmax.f32 %v3078, %v3255
        %v3398 = vmax.f32 %v3079, %v3257
        %v3399 = vmax.f32 %v3080, %v3259
        %v3400 = vmax.f32 %v3081, %v3261
        %v3401 = vmax.f32 %v3082, %v3263
        %v3402 = vmax.f32 %v3083, %v3265
        %v3403 = vmax.f32 %v3084, %v3267
        %v3404 = vmax.f32 %v3085, %v3269
        %v3405 = vmax.f32 %v3086, %v3271
        %v3406 = vmax.f32 %v3087, %v3273
        %v3407 = vmax.f32 %v3088, %v3275
        %v3408 = vmax.f32 %v3089, %v3277
        %v3409 = vmax.f32 %v3090, %v3279
        %v3410 = vmax.f32 %v3091, %v3281
        %v3411 = vmax.f32 %v3092, %v3283
        %v3412 = vmax.f32 %v3093, %v3285
        %v3413 = vmax.f32 %v3094, %v3287
        %v3414 = vmax.f32 %v3095, %v3284
        %v3415 = vmax.f32 %v3096, %v3286
        %3480 = vrot.lane.b32.xlu0 %v3352, 120
        %v3481 = vpop.permute.xlu0 %3480
        %3482 = vrot.lane.b32.xlu0 %v3353, 120
        %v3483 = vpop.permute.xlu0 %3482
        %3484 = vrot.lane.b32.xlu0 %v3354, 120
        %v3485 = vpop.permute.xlu0 %3484
        %3486 = vrot.lane.b32.xlu0 %v3355, 120
        %v3487 = vpop.permute.xlu0 %3486
        %3488 = vrot.lane.b32.xlu0 %v3356, 120
        %v3489 = vpop.permute.xlu0 %3488
        %3490 = vrot.lane.b32.xlu0 %v3357, 120
        %v3491 = vpop.permute.xlu0 %3490
        %3492 = vrot.lane.b32.xlu0 %v3358, 120
        %v3493 = vpop.permute.xlu0 %3492
        %3494 = vrot.lane.b32.xlu0 %v3359, 120
        %v3495 = vpop.permute.xlu0 %3494
        %3496 = vrot.lane.b32.xlu0 %v3360, 120
        %v3497 = vpop.permute.xlu0 %3496
        %3498 = vrot.lane.b32.xlu0 %v3361, 120
        %v3499 = vpop.permute.xlu0 %3498
        %3500 = vrot.lane.b32.xlu0 %v3362, 120
        %v3501 = vpop.permute.xlu0 %3500
        %3502 = vrot.lane.b32.xlu0 %v3363, 120
        %v3503 = vpop.permute.xlu0 %3502
        %3504 = vrot.lane.b32.xlu0 %v3364, 120
        %v3505 = vpop.permute.xlu0 %3504
        %3506 = vrot.lane.b32.xlu0 %v3365, 120
        %v3507 = vpop.permute.xlu0 %3506
        %3508 = vrot.lane.b32.xlu0 %v3366, 120
        %v3509 = vpop.permute.xlu0 %3508
        %3510 = vrot.lane.b32.xlu0 %v3367, 120
        %v3511 = vpop.permute.xlu0 %3510
        %3512 = vrot.lane.b32.xlu0 %v3368, 120
        %v3513 = vpop.permute.xlu0 %3512
        %3514 = vrot.lane.b32.xlu0 %v3369, 120
        %v3515 = vpop.permute.xlu0 %3514
        %3516 = vrot.lane.b32.xlu0 %v3370, 120
        %v3517 = vpop.permute.xlu0 %3516
        %3518 = vrot.lane.b32.xlu0 %v3371, 120
        %v3519 = vpop.permute.xlu0 %3518
        %3520 = vrot.lane.b32.xlu0 %v3372, 120
        %v3521 = vpop.permute.xlu0 %3520
        %3522 = vrot.lane.b32.xlu0 %v3373, 120
        %v3523 = vpop.permute.xlu0 %3522
        %3524 = vrot.lane.b32.xlu0 %v3374, 120
        %v3525 = vpop.permute.xlu0 %3524
        %3526 = vrot.lane.b32.xlu0 %v3375, 120
        %v3527 = vpop.permute.xlu0 %3526
        %3528 = vrot.lane.b32.xlu0 %v3376, 120
        %v3529 = vpop.permute.xlu0 %3528
        %3530 = vrot.lane.b32.xlu0 %v3377, 120
        %v3531 = vpop.permute.xlu0 %3530
        %3532 = vrot.lane.b32.xlu0 %v3378, 120
        %v3533 = vpop.permute.xlu0 %3532
        %3534 = vrot.lane.b32.xlu0 %v3379, 120
        %v3535 = vpop.permute.xlu0 %3534
        %3536 = vrot.lane.b32.xlu0 %v3380, 120
        %v3537 = vpop.permute.xlu0 %3536
        %3538 = vrot.lane.b32.xlu0 %v3381, 120
        %v3539 = vpop.permute.xlu0 %3538
        %3540 = vrot.lane.b32.xlu0 %v3382, 120
        %v3541 = vpop.permute.xlu0 %3540
        %3542 = vrot.lane.b32.xlu0 %v3383, 120
        %v3543 = vpop.permute.xlu0 %3542
        %3544 = vrot.lane.b32.xlu0 %v3384, 120
        %v3545 = vpop.permute.xlu0 %3544
        %3546 = vrot.lane.b32.xlu0 %v3385, 120
        %v3547 = vpop.permute.xlu0 %3546
        %3548 = vrot.lane.b32.xlu0 %v3386, 120
        %v3549 = vpop.permute.xlu0 %3548
        %3550 = vrot.lane.b32.xlu0 %v3387, 120
        %v3551 = vpop.permute.xlu0 %3550
        %3552 = vrot.lane.b32.xlu0 %v3388, 120
        %v3553 = vpop.permute.xlu0 %3552
        %3554 = vrot.lane.b32.xlu0 %v3389, 120
        %v3555 = vpop.permute.xlu0 %3554
        %3556 = vrot.lane.b32.xlu0 %v3390, 120
        %v3557 = vpop.permute.xlu0 %3556
        %3558 = vrot.lane.b32.xlu0 %v3391, 120
        %v3559 = vpop.permute.xlu0 %3558
        %3560 = vrot.lane.b32.xlu0 %v3392, 120
        %v3561 = vpop.permute.xlu0 %3560
        %3562 = vrot.lane.b32.xlu0 %v3393, 120
        %v3563 = vpop.permute.xlu0 %3562
        %3564 = vrot.lane.b32.xlu0 %v3394, 120
        %v3565 = vpop.permute.xlu0 %3564
        %3566 = vrot.lane.b32.xlu0 %v3395, 120
        %v3567 = vpop.permute.xlu0 %3566
        %3568 = vrot.lane.b32.xlu0 %v3396, 120
        %v3569 = vpop.permute.xlu0 %3568
        %3570 = vrot.lane.b32.xlu0 %v3397, 120
        %v3571 = vpop.permute.xlu0 %3570
        %3572 = vrot.lane.b32.xlu0 %v3398, 120
        %v3573 = vpop.permute.xlu0 %3572
        %3574 = vrot.lane.b32.xlu0 %v3399, 120
        %v3575 = vpop.permute.xlu0 %3574
        %3576 = vrot.lane.b32.xlu0 %v3400, 120
        %v3577 = vpop.permute.xlu0 %3576
        %3578 = vrot.lane.b32.xlu0 %v3401, 120
        %v3579 = vpop.permute.xlu0 %3578
        %3580 = vrot.lane.b32.xlu0 %v3402, 120
        %v3581 = vpop.permute.xlu0 %3580
        %3582 = vrot.lane.b32.xlu0 %v3403, 120
        %v3583 = vpop.permute.xlu0 %3582
        %3584 = vrot.lane.b32.xlu0 %v3404, 120
        %v3585 = vpop.permute.xlu0 %3584
        %3586 = vrot.lane.b32.xlu0 %v3405, 120
        %v3587 = vpop.permute.xlu0 %3586
        %3588 = vrot.lane.b32.xlu0 %v3406, 120
        %v3589 = vpop.permute.xlu0 %3588
        %3590 = vrot.lane.b32.xlu0 %v3407, 120
        %v3591 = vpop.permute.xlu0 %3590
        %3592 = vrot.lane.b32.xlu0 %v3408, 120
        %v3593 = vpop.permute.xlu0 %3592
        %3594 = vrot.lane.b32.xlu0 %v3409, 120
        %v3595 = vpop.permute.xlu0 %3594
        %3596 = vrot.lane.b32.xlu0 %v3410, 120
        %v3597 = vpop.permute.xlu0 %3596
        %3598 = vrot.lane.b32.xlu0 %v3411, 120
        %v3599 = vpop.permute.xlu0 %3598
        %3600 = vrot.lane.b32.xlu0 %v3412, 120
        %v3601 = vpop.permute.xlu0 %3600
        %3602 = vrot.lane.b32.xlu0 %v3413, 120
        %v3603 = vpop.permute.xlu0 %3602
        %3604 = vrot.lane.b32.xlu0 %v3414, 120
        %v3605 = vpop.permute.xlu0 %3604
        %3606 = vrot.lane.b32.xlu0 %v3415, 120
        %v3607 = vpop.permute.xlu0 %3606
        %v3608 = vsel %vm1953, %v3481, %v3483
        %v3609 = vsel %vm1953, %v3485, %v3487
        %v3610 = vsel %vm1953, %v3489, %v3491
        %v3611 = vsel %vm1953, %v3493, %v3495
        %v3612 = vsel %vm1953, %v3497, %v3499
        %v3613 = vsel %vm1953, %v3501, %v3503
        %v3614 = vsel %vm1953, %v3505, %v3507
        %v3615 = vsel %vm1953, %v3509, %v3511
        %v3616 = vsel %vm1953, %v3513, %v3515
        %v3617 = vsel %vm1953, %v3517, %v3519
        %v3618 = vsel %vm1953, %v3521, %v3523
        %v3619 = vsel %vm1953, %v3525, %v3527
        %v3620 = vsel %vm1953, %v3529, %v3531
        %v3621 = vsel %vm1953, %v3533, %v3535
        %v3622 = vsel %vm1953, %v3537, %v3539
        %v3623 = vsel %vm1953, %v3541, %v3543
        %v3624 = vsel %vm1953, %v3545, %v3547
        %v3625 = vsel %vm1953, %v3549, %v3551
        %v3626 = vsel %vm1953, %v3553, %v3555
        %v3627 = vsel %vm1953, %v3557, %v3559
        %v3628 = vsel %vm1953, %v3561, %v3563
        %v3629 = vsel %vm1953, %v3565, %v3567
        %v3630 = vsel %vm1953, %v3569, %v3571
        %v3631 = vsel %vm1953, %v3573, %v3575
        %v3632 = vsel %vm1953, %v3577, %v3579
        %v3633 = vsel %vm1953, %v3581, %v3583
        %v3634 = vsel %vm1953, %v3585, %v3587
        %v3635 = vsel %vm1953, %v3589, %v3591
        %v3636 = vsel %vm1953, %v3593, %v3595
        %v3637 = vsel %vm1953, %v3597, %v3599
        %v3638 = vsel %vm1953, %v3601, %v3603
        %v3639 = vsel %vm1953, %v3605, %v3607
        %v3704 = vmax.f32 %v3352, %v3608
        %v3705 = vmax.f32 %v3353, %v3483
        %v3706 = vmax.f32 %v3354, %v3609
        %v3707 = vmax.f32 %v3355, %v3487
        %v3708 = vmax.f32 %v3356, %v3610
        %v3709 = vmax.f32 %v3357, %v3491
        %v3710 = vmax.f32 %v3358, %v3611
        %v3711 = vmax.f32 %v3359, %v3495
        %v3712 = vmax.f32 %v3360, %v3612
        %v3713 = vmax.f32 %v3361, %v3499
        %v3714 = vmax.f32 %v3362, %v3613
        %v3715 = vmax.f32 %v3363, %v3503
        %v3716 = vmax.f32 %v3364, %v3614
        %v3717 = vmax.f32 %v3365, %v3507
        %v3718 = vmax.f32 %v3366, %v3615
        %v3719 = vmax.f32 %v3367, %v3511
        %v3720 = vmax.f32 %v3368, %v3616
        %v3721 = vmax.f32 %v3369, %v3515
        %v3722 = vmax.f32 %v3370, %v3617
        %v3723 = vmax.f32 %v3371, %v3519
        %v3724 = vmax.f32 %v3372, %v3618
        %v3725 = vmax.f32 %v3373, %v3523
        %v3726 = vmax.f32 %v3374, %v3619
        %v3727 = vmax.f32 %v3375, %v3527
        %v3728 = vmax.f32 %v3376, %v3620
        %v3729 = vmax.f32 %v3377, %v3531
        %v3730 = vmax.f32 %v3378, %v3621
        %v3731 = vmax.f32 %v3379, %v3535
        %v3732 = vmax.f32 %v3380, %v3622
        %v3733 = vmax.f32 %v3381, %v3539
        %v3734 = vmax.f32 %v3382, %v3623
        %v3735 = vmax.f32 %v3383, %v3543
        %v3736 = vmax.f32 %v3384, %v3624
        %v3737 = vmax.f32 %v3385, %v3547
        %v3738 = vmax.f32 %v3386, %v3625
        %v3739 = vmax.f32 %v3387, %v3551
        %v3740 = vmax.f32 %v3388, %v3626
        %v3741 = vmax.f32 %v3389, %v3555
        %v3742 = vmax.f32 %v3390, %v3627
        %v3743 = vmax.f32 %v3391, %v3559
        %v3744 = vmax.f32 %v3392, %v3628
        %v3745 = vmax.f32 %v3393, %v3563
        %v3746 = vmax.f32 %v3394, %v3629
        %v3747 = vmax.f32 %v3395, %v3567
        %v3748 = vmax.f32 %v3396, %v3630
        %v3749 = vmax.f32 %v3397, %v3571
        %v3750 = vmax.f32 %v3398, %v3631
        %v3751 = vmax.f32 %v3399, %v3575
        %v3752 = vmax.f32 %v3400, %v3632
        %v3753 = vmax.f32 %v3401, %v3579
        %v3754 = vmax.f32 %v3402, %v3633
        %v3755 = vmax.f32 %v3403, %v3583
        %v3756 = vmax.f32 %v3404, %v3634
        %v3757 = vmax.f32 %v3405, %v3587
        %v3758 = vmax.f32 %v3406, %v3635
        %v3759 = vmax.f32 %v3407, %v3591
        %v3760 = vmax.f32 %v3408, %v3636
        %v3761 = vmax.f32 %v3409, %v3595
        %v3762 = vmax.f32 %v3410, %v3637
        %v3763 = vmax.f32 %v3411, %v3599
        %v3764 = vmax.f32 %v3412, %v3638
        %v3765 = vmax.f32 %v3413, %v3603
        %v3766 = vmax.f32 %v3414, %v3639
        %v3767 = vmax.f32 %v3415, %v3607
        %v3768 = vld [vmem:[%s1] sm:$0xff]
        %v3769 = vld [vmem:[%s1 + $0x8] sm:$0xff]
        %v3770 = vld [vmem:[%s1 + $0x10] sm:$0xff]
        %v3771 = vld [vmem:[%s1 + $0x18] sm:$0xff]
        %v3772 = vld [vmem:[%s1 + $0x20] sm:$0xff]
        %v3773 = vld [vmem:[%s1 + $0x28] sm:$0xff]
        %v3774 = vld [vmem:[%s1 + $0x30] sm:$0xff]
        %v3775 = vld [vmem:[%s1 + $0x38] sm:$0xff]
        %v3776 = vld [vmem:[%s1 + $0x40] sm:$0xff]
        %v3777 = vld [vmem:[%s1 + $0x48] sm:$0xff]
        %v3778 = vld [vmem:[%s1 + $0x50] sm:$0xff]
        %v3779 = vld [vmem:[%s1 + $0x58] sm:$0xff]
        %v3780 = vld [vmem:[%s1 + $0x60] sm:$0xff]
        %v3781 = vld [vmem:[%s1 + $0x68] sm:$0xff]
        %v3782 = vld [vmem:[%s1 + $0x70] sm:$0xff]
        %v3783 = vld [vmem:[%s1 + $0x78] sm:$0xff]
        %v3784 = vpack.c.bf16 %v3706, %v3704
        %v3785 = vpack.c.bf16 %v3707, %v3705
        %v3786 = vpack.c.bf16 %v3710, %v3708
        %v3787 = vpack.c.bf16 %v3711, %v3709
        %v3788 = vpack.c.bf16 %v3714, %v3712
        %v3789 = vpack.c.bf16 %v3715, %v3713
        %v3790 = vpack.c.bf16 %v3718, %v3716
        %v3791 = vpack.c.bf16 %v3719, %v3717
        %v3792 = vpack.c.bf16 %v3722, %v3720
        %v3793 = vpack.c.bf16 %v3723, %v3721
        %v3794 = vpack.c.bf16 %v3726, %v3724
        %v3795 = vpack.c.bf16 %v3727, %v3725
        %v3796 = vpack.c.bf16 %v3730, %v3728
        %v3797 = vpack.c.bf16 %v3731, %v3729
        %v3798 = vpack.c.bf16 %v3734, %v3732
        %v3799 = vpack.c.bf16 %v3735, %v3733
        %v3800 = vpack.c.bf16 %v3738, %v3736
        %v3801 = vpack.c.bf16 %v3739, %v3737
        %v3802 = vpack.c.bf16 %v3742, %v3740
        %v3803 = vpack.c.bf16 %v3743, %v3741
        %v3804 = vpack.c.bf16 %v3746, %v3744
        %v3805 = vpack.c.bf16 %v3747, %v3745
        %v3806 = vpack.c.bf16 %v3750, %v3748
        %v3807 = vpack.c.bf16 %v3751, %v3749
        %v3808 = vpack.c.bf16 %v3754, %v3752
        %v3809 = vpack.c.bf16 %v3755, %v3753
        %v3810 = vpack.c.bf16 %v3758, %v3756
        %v3811 = vpack.c.bf16 %v3759, %v3757
        %v3812 = vpack.c.bf16 %v3762, %v3760
        %v3813 = vpack.c.bf16 %v3763, %v3761
        %v3814 = vpack.c.bf16 %v3766, %v3764
        %v3815 = vpack.c.bf16 %v3767, %v3765
        %v3832 = vunpack.c.l.b16 %v3768
        %v3833 = vunpack.c.h.b16 %v3768
        %v3834 = vunpack.c.l.b16 %v3769
        %v3835 = vunpack.c.h.b16 %v3769
        %v3836 = vunpack.c.l.b16 %v3770
        %v3837 = vunpack.c.h.b16 %v3770
        %v3838 = vunpack.c.l.b16 %v3771
        %v3839 = vunpack.c.h.b16 %v3771
        %v3840 = vunpack.c.l.b16 %v3772
        %v3841 = vunpack.c.h.b16 %v3772
        %v3842 = vunpack.c.l.b16 %v3773
        %v3843 = vunpack.c.h.b16 %v3773
        %v3844 = vunpack.c.l.b16 %v3774
        %v3845 = vunpack.c.h.b16 %v3774
        %v3846 = vunpack.c.l.b16 %v3775
        %v3847 = vunpack.c.h.b16 %v3775
        %v3848 = vunpack.c.l.b16 %v3776
        %v3849 = vunpack.c.h.b16 %v3776
        %v3850 = vunpack.c.l.b16 %v3777
        %v3851 = vunpack.c.h.b16 %v3777
        %v3852 = vunpack.c.l.b16 %v3778
        %v3853 = vunpack.c.h.b16 %v3778
        %v3854 = vunpack.c.l.b16 %v3779
        %v3855 = vunpack.c.h.b16 %v3779
        %v3856 = vunpack.c.l.b16 %v3780
        %v3857 = vunpack.c.h.b16 %v3780
        %v3858 = vunpack.c.l.b16 %v3781
        %v3859 = vunpack.c.h.b16 %v3781
        %v3860 = vunpack.c.l.b16 %v3782
        %v3861 = vunpack.c.h.b16 %v3782
        %v3862 = vunpack.c.l.b16 %v3783
        %v3863 = vunpack.c.h.b16 %v3783
        %v3864 = vpack.c.b16 %v3834, %v3832
        %v3865 = vpack.c.b16 %v3835, %v3833
        %v3866 = vpack.c.b16 %v3838, %v3836
        %v3867 = vpack.c.b16 %v3839, %v3837
        %v3868 = vpack.c.b16 %v3842, %v3840
        %v3869 = vpack.c.b16 %v3843, %v3841
        %v3870 = vpack.c.b16 %v3846, %v3844
        %v3871 = vpack.c.b16 %v3847, %v3845
        %v3872 = vpack.c.b16 %v3850, %v3848
        %v3873 = vpack.c.b16 %v3851, %v3849
        %v3874 = vpack.c.b16 %v3854, %v3852
        %v3875 = vpack.c.b16 %v3855, %v3853
        %v3876 = vpack.c.b16 %v3858, %v3856
        %v3877 = vpack.c.b16 %v3859, %v3857
        %v3878 = vpack.c.b16 %v3862, %v3860
        %v3879 = vpack.c.b16 %v3863, %v3861
        %vm3888 = vcmask 1006592
        %v3890 = vsel %vm3888, %v3865, 0
        %v3893 = vsel %vm3888, %v3867, 0
        %v3896 = vsel %vm3888, %v3869, 0
        %v3899 = vsel %vm3888, %v3871, 0
        %v3902 = vsel %vm3888, %v3873, 0
        %v3905 = vsel %vm3888, %v3875, 0
        %v3908 = vsel %vm3888, %v3877, 0
        %v3911 = vsel %vm3888, %v3879, 0
        %vm3913 = vcmask 1044480
        %vm3914 = vcmask 1045504
        %v3915 = vsel %vm3913, 4294967295, 65535
        %v3916 = vsel %vm3914, %v3915, 0
        %v3918 = vand.u32 %v3814, %v3916
        %v3921 = vand.u32 %v3815, %v3916
        %3923 = vmatprep.subr.bf16.mxu0 %v3785
        %3924 = vmatpush1.bf16.msra.mxu0 %v3784
        %3925 = vmatprep.subr.bf16.mxu0 %v3787
        %3926 = vmatpush1.bf16.msra.mxu0 %v3786
        %3927 = vmatprep.subr.bf16.mxu0 %v3789
        %3928 = vmatpush1.bf16.msra.mxu0 %v3788
        %3929 = vmatprep.subr.bf16.mxu0 %v3791
        %3930 = vmatpush1.bf16.msra.mxu0 %v3790
        %3931 = vmatprep.subr.bf16.mxu0 %v3793
        %3932 = vmatpush1.bf16.msra.mxu0 %v3792
        %3933 = vmatprep.subr.bf16.mxu0 %v3795
        %3934 = vmatpush1.bf16.msra.mxu0 %v3794
        %3935 = vmatprep.subr.bf16.mxu0 %v3797
        %3936 = vmatpush1.bf16.msra.mxu0 %v3796
        %3937 = vmatprep.subr.bf16.mxu0 %v3799
        %3938 = vmatpush1.bf16.msra.mxu0 %v3798
        %3939 = vmatprep.subr.bf16.mxu0 %v3801
        %3940 = vmatpush1.bf16.msra.mxu0 %v3800
        %3941 = vmatprep.subr.bf16.mxu0 %v3803
        %3942 = vmatpush1.bf16.msra.mxu0 %v3802
        %3943 = vmatprep.subr.bf16.mxu0 %v3805
        %3944 = vmatpush1.bf16.msra.mxu0 %v3804
        %3945 = vmatprep.subr.bf16.mxu0 %v3807
        %3946 = vmatpush1.bf16.msra.mxu0 %v3806
        %3947 = vmatprep.subr.bf16.mxu0 %v3809
        %3948 = vmatpush1.bf16.msra.mxu0 %v3808
        %3949 = vmatprep.subr.bf16.mxu0 %v3811
        %3950 = vmatpush1.bf16.msra.mxu0 %v3810
        %3951 = vmatprep.subr.bf16.mxu0 %v3813
        %3952 = vmatpush1.bf16.msra.mxu0 %v3812
        %3953 = vmatprep.subr.bf16.mxu0 %v3921
        %3954 = vmatpush1.bf16.msra.mxu0 %v3918
        %3955 = vmatprep.mubr.bf16.mxu0 %v3890
        %3956 = vmatmul.mubr.bf16.gmra.mrb[0].mxu0 %v3864
        %v3957 = vpop.f32.mrb[0].mxu0
        %v3958 = vadd.f32 0.0, %v3957
        %v3959 = vpop.f32.mrb[0].mxu0
        %v3960 = vadd.f32 0.0, %v3959
        %v3961 = vpop.f32.mrb[0].mxu0
        %v3962 = vadd.f32 0.0, %v3961
        %v3963 = vpop.f32.mrb[0].mxu0
        %v3964 = vadd.f32 0.0, %v3963
        %3965 = vmatprep.mubr.bf16.mxu0 %v3893
        %3966 = vmatmul.mubr.bf16.gmra.mrb[0].mxu0 %v3866
        %v3967 = vpop.f32.mrb[0].mxu0
        %v3968 = vadd.f32 0.0, %v3967
        %v3969 = vpop.f32.mrb[0].mxu0
        %v3970 = vadd.f32 0.0, %v3969
        %v3971 = vpop.f32.mrb[0].mxu0
        %v3972 = vadd.f32 0.0, %v3971
        %v3973 = vpop.f32.mrb[0].mxu0
        %v3974 = vadd.f32 0.0, %v3973
        %3975 = vmatprep.mubr.bf16.mxu0 %v3896
        %3976 = vmatmul.mubr.bf16.gmra.mrb[0].mxu0 %v3868
        %v3977 = vpop.f32.mrb[0].mxu0
        %v3978 = vadd.f32 0.0, %v3977
        %v3979 = vpop.f32.mrb[0].mxu0
        %v3980 = vadd.f32 0.0, %v3979
        %v3981 = vpop.f32.mrb[0].mxu0
        %v3982 = vadd.f32 0.0, %v3981
        %v3983 = vpop.f32.mrb[0].mxu0
        %v3984 = vadd.f32 0.0, %v3983
        %3985 = vmatprep.mubr.bf16.mxu0 %v3899
        %3986 = vmatmul.mubr.bf16.gmra.mrb[0].mxu0 %v3870
        %v3987 = vpop.f32.mrb[0].mxu0
        %v3988 = vadd.f32 0.0, %v3987
        %v3989 = vpop.f32.mrb[0].mxu0
        %v3990 = vadd.f32 0.0, %v3989
        %v3991 = vpop.f32.mrb[0].mxu0
        %v3992 = vadd.f32 0.0, %v3991
        %v3993 = vpop.f32.mrb[0].mxu0
        %v3994 = vadd.f32 0.0, %v3993
        %3995 = vmatprep.mubr.bf16.mxu0 %v3902
        %3996 = vmatmul.mubr.bf16.gmra.mrb[0].mxu0 %v3872
        %v3997 = vpop.f32.mrb[0].mxu0
        %v3998 = vadd.f32 0.0, %v3997
        %v3999 = vpop.f32.mrb[0].mxu0
        %v4000 = vadd.f32 0.0, %v3999
        %v4001 = vpop.f32.mrb[0].mxu0
        %v4002 = vadd.f32 0.0, %v4001
        %v4003 = vpop.f32.mrb[0].mxu0
        %v4004 = vadd.f32 0.0, %v4003
        %4005 = vmatprep.mubr.bf16.mxu0 %v3905
        %4006 = vmatmul.mubr.bf16.gmra.mrb[0].mxu0 %v3874
        %v4007 = vpop.f32.mrb[0].mxu0
        %v4008 = vadd.f32 0.0, %v4007
        %v4009 = vpop.f32.mrb[0].mxu0
        %v4010 = vadd.f32 0.0, %v4009
        %v4011 = vpop.f32.mrb[0].mxu0
        %v4012 = vadd.f32 0.0, %v4011
        %v4013 = vpop.f32.mrb[0].mxu0
        %v4014 = vadd.f32 0.0, %v4013
        %4015 = vmatprep.mubr.bf16.mxu0 %v3908
        %4016 = vmatmul.mubr.bf16.gmra.mrb[0].mxu0 %v3876
        %v4017 = vpop.f32.mrb[0].mxu0
        %v4018 = vadd.f32 0.0, %v4017
        %v4019 = vpop.f32.mrb[0].mxu0
        %v4020 = vadd.f32 0.0, %v4019
        %v4021 = vpop.f32.mrb[0].mxu0
        %v4022 = vadd.f32 0.0, %v4021
        %v4023 = vpop.f32.mrb[0].mxu0
        %v4024 = vadd.f32 0.0, %v4023
        %4025 = vmatprep.mubr.bf16.mxu0 %v3911
        %4026 = vmatmul.mubr.bf16.gmra.mrb[0].mxu0 %v3878
        %v4027 = vpop.f32.mrb[0].mxu0
        %v4028 = vadd.f32 0.0, %v4027
        %v4029 = vpop.f32.mrb[0].mxu0
        %v4030 = vadd.f32 0.0, %v4029
        %v4031 = vpop.f32.mrb[0].mxu0
        %v4032 = vadd.f32 0.0, %v4031
        %v4033 = vpop.f32.mrb[0].mxu0
        %v4034 = vadd.f32 0.0, %v4033
        %4035 = vdwg.mxu0
        %v4036 = vpack.c.bf16 %v3962, %v3958
        %v4037 = vpack.c.bf16 %v3964, %v3960
        %v4038 = vpack.c.bf16 %v3972, %v3968
        %v4039 = vpack.c.bf16 %v3974, %v3970
        %v4040 = vpack.c.bf16 %v3982, %v3978
        %v4041 = vpack.c.bf16 %v3984, %v3980
        %v4042 = vpack.c.bf16 %v3992, %v3988
        %v4043 = vpack.c.bf16 %v3994, %v3990
        %v4044 = vpack.c.bf16 %v4002, %v3998
        %v4045 = vpack.c.bf16 %v4004, %v4000
        %v4046 = vpack.c.bf16 %v4012, %v4008
        %v4047 = vpack.c.bf16 %v4014, %v4010
        %v4048 = vpack.c.bf16 %v4022, %v4018
        %v4049 = vpack.c.bf16 %v4024, %v4020
        %v4050 = vpack.c.bf16 %v4032, %v4028
        %v4051 = vpack.c.bf16 %v4034, %v4030
        %v4052 = vld [vmem:[%s7] sm:$0xff]
        %v4053 = vld [vmem:[%s7 + $0x8] sm:$0xff]
        %v4054 = vld [vmem:[%s7 + $0x10] sm:$0xff]
        %v4055 = vld [vmem:[%s7 + $0x18] sm:$0xff]
        %v4056 = vld [vmem:[%s7 + $0x20] sm:$0xff]
        %v4057 = vld [vmem:[%s7 + $0x28] sm:$0xff]
        %v4058 = vld [vmem:[%s7 + $0x30] sm:$0xff]
        %v4059 = vld [vmem:[%s7 + $0x38] sm:$0xff]
        %v4060 = vld [vmem:[%s7 + $0x40] sm:$0xff]
        %v4061 = vld [vmem:[%s7 + $0x48] sm:$0xff]
        %v4062 = vld [vmem:[%s7 + $0x50] sm:$0xff]
        %v4063 = vld [vmem:[%s7 + $0x58] sm:$0xff]
        %v4064 = vld [vmem:[%s7 + $0x60] sm:$0xff]
        %v4065 = vld [vmem:[%s7 + $0x68] sm:$0xff]
        %v4066 = vld [vmem:[%s7 + $0x70] sm:$0xff]
        %v4067 = vld [vmem:[%s7 + $0x78] sm:$0xff]
        %v4068 = vld [vmem:[%s7 + $0x80] sm:$0xff]
        %v4069 = vld [vmem:[%s7 + $0x88] sm:$0xff]
        %v4070 = vld [vmem:[%s7 + $0x90] sm:$0xff]
        %v4071 = vld [vmem:[%s7 + $0x98] sm:$0xff]
        %v4072 = vld [vmem:[%s7 + $0xa0] sm:$0xff]
        %v4073 = vld [vmem:[%s7 + $0xa8] sm:$0xff]
        %v4074 = vld [vmem:[%s7 + $0xb0] sm:$0xff]
        %v4075 = vld [vmem:[%s7 + $0xb8] sm:$0xff]
        %v4076 = vld [vmem:[%s7 + $0xc0] sm:$0xff]
        %v4077 = vld [vmem:[%s7 + $0xc8] sm:$0xff]
        %v4078 = vld [vmem:[%s7 + $0xd0] sm:$0xff]
        %s4079 = scalar_lea.vmem %s7, 216
        %v4080 = vld [vmem:[%s4079] sm:$0xff]
        %v4081 = vld [vmem:[%s4079 + $0x8] sm:$0xff]
        %v4082 = vld [vmem:[%s4079 + $0x10] sm:$0xff]
        %v4083 = vld [vmem:[%s4079 + $0x18] sm:$0xff]
        %v4084 = vld [vmem:[%s4079 + $0x20] sm:$0xff]
        %v4085 = vld [vmem:[%s4079 + $0x28] sm:$0xff]
        %v4086 = vld [vmem:[%s4079 + $0x30] sm:$0xff]
        %v4087 = vld [vmem:[%s4079 + $0x38] sm:$0xff]
        %v4088 = vld [vmem:[%s4079 + $0x40] sm:$0xff]
        %v4089 = vld [vmem:[%s4079 + $0x48] sm:$0xff]
        %v4090 = vld [vmem:[%s4079 + $0x50] sm:$0xff]
        %v4091 = vld [vmem:[%s4079 + $0x58] sm:$0xff]
        %v4092 = vld [vmem:[%s4079 + $0x60] sm:$0xff]
        %v4093 = vld [vmem:[%s4079 + $0x68] sm:$0xff]
        %v4094 = vld [vmem:[%s4079 + $0x70] sm:$0xff]
        %v4095 = vld [vmem:[%s4079 + $0x78] sm:$0xff]
        %v4096 = vld [vmem:[%s4079 + $0x80] sm:$0xff]
        %v4097 = vld [vmem:[%s4079 + $0x88] sm:$0xff]
        %v4098 = vld [vmem:[%s4079 + $0x90] sm:$0xff]
        %v4099 = vld [vmem:[%s4079 + $0x98] sm:$0xff]
        %v4100 = vld [vmem:[%s4079 + $0xa0] sm:$0xff]
        %v4101 = vld [vmem:[%s4079 + $0xa8] sm:$0xff]
        %v4102 = vld [vmem:[%s4079 + $0xb0] sm:$0xff]
        %v4103 = vld [vmem:[%s4079 + $0xb8] sm:$0xff]
        %v4104 = vld [vmem:[%s4079 + $0xc0] sm:$0xff]
        %v4105 = vld [vmem:[%s4079 + $0xc8] sm:$0xff]
        %v4106 = vld [vmem:[%s4079 + $0xd0] sm:$0xff]
        %v4108 = vshrl.u32 %v4036, 16
        %v4110 = vshll.u32 %v4036, 16
        %v4112 = vrot.slane %v4110, 1
        %v4113 = vor.u32 %v4108, %v4112
        %v4115 = vshll.u32 %v4038, 16
        %v4117 = vrot.slane %v4115, 1
        %v4118 = vsel %vm749, %v4113, %v4117
        %v4120 = vshrl.u32 %v4037, 16
        %v4122 = vshll.u32 %v4037, 16
        %v4124 = vrot.slane %v4122, 1
        %v4125 = vor.u32 %v4120, %v4124
        %v4127 = vshll.u32 %v4039, 16
        %v4129 = vrot.slane %v4127, 1
        %v4130 = vsel %vm749, %v4125, %v4129
        %v4131 = vshrl.u32 %v4038, 16
        %v4133 = vor.u32 %v4131, %v4117
        %v4135 = vshll.u32 %v4040, 16
        %v4137 = vrot.slane %v4135, 1
        %v4138 = vsel %vm749, %v4133, %v4137
        %v4139 = vshrl.u32 %v4039, 16
        %v4141 = vor.u32 %v4139, %v4129
        %v4143 = vshll.u32 %v4041, 16
        %v4145 = vrot.slane %v4143, 1
        %v4146 = vsel %vm749, %v4141, %v4145
        %v4147 = vshrl.u32 %v4040, 16
        %v4149 = vor.u32 %v4147, %v4137
        %v4151 = vshll.u32 %v4042, 16
        %v4153 = vrot.slane %v4151, 1
        %v4154 = vsel %vm749, %v4149, %v4153
        %v4155 = vshrl.u32 %v4041, 16
        %v4157 = vor.u32 %v4155, %v4145
        %v4159 = vshll.u32 %v4043, 16
        %v4161 = vrot.slane %v4159, 1
        %v4162 = vsel %vm749, %v4157, %v4161
        %v4163 = vshrl.u32 %v4042, 16
        %v4165 = vor.u32 %v4163, %v4153
        %v4167 = vshll.u32 %v4044, 16
        %v4169 = vrot.slane %v4167, 1
        %v4170 = vsel %vm749, %v4165, %v4169
        %v4171 = vshrl.u32 %v4043, 16
        %v4173 = vor.u32 %v4171, %v4161
        %v4175 = vshll.u32 %v4045, 16
        %v4177 = vrot.slane %v4175, 1
        %v4178 = vsel %vm749, %v4173, %v4177
        %v4179 = vshrl.u32 %v4044, 16
        %v4181 = vor.u32 %v4179, %v4169
        %v4183 = vshll.u32 %v4046, 16
        %v4185 = vrot.slane %v4183, 1
        %v4186 = vsel %vm749, %v4181, %v4185
        %v4187 = vshrl.u32 %v4045, 16
        %v4189 = vor.u32 %v4187, %v4177
        %v4191 = vshll.u32 %v4047, 16
        %v4193 = vrot.slane %v4191, 1
        %v4194 = vsel %vm749, %v4189, %v4193
        %v4195 = vshrl.u32 %v4046, 16
        %v4197 = vor.u32 %v4195, %v4185
        %v4199 = vshll.u32 %v4048, 16
        %v4201 = vrot.slane %v4199, 1
        %v4202 = vsel %vm749, %v4197, %v4201
        %v4203 = vshrl.u32 %v4047, 16
        %v4205 = vor.u32 %v4203, %v4193
        %v4207 = vshll.u32 %v4049, 16
        %v4209 = vrot.slane %v4207, 1
        %v4210 = vsel %vm749, %v4205, %v4209
        %v4211 = vshrl.u32 %v4048, 16
        %v4213 = vor.u32 %v4211, %v4201
        %v4215 = vshll.u32 %v4050, 16
        %v4217 = vrot.slane %v4215, 1
        %v4218 = vsel %vm749, %v4213, %v4217
        %v4219 = vshrl.u32 %v4049, 16
        %v4221 = vor.u32 %v4219, %v4209
        %v4223 = vshll.u32 %v4051, 16
        %v4225 = vrot.slane %v4223, 1
        %v4226 = vsel %vm749, %v4221, %v4225
        %v4227 = vshrl.u32 %v4050, 16
        %v4229 = vor.u32 %v4227, %v4217
        %v4230 = vshrl.u32 %v4051, 16
        %v4232 = vor.u32 %v4230, %v4225
        %v4268 = vunpack.c.l.b16 %v4080
        %v4269 = vunpack.c.h.b16 %v4080
        %v4270 = vunpack.c.l.b16 %v4081
        %v4271 = vunpack.c.h.b16 %v4081
        %v4272 = vunpack.c.l.b16 %v4082
        %v4273 = vunpack.c.h.b16 %v4082
        %v4274 = vunpack.c.l.b16 %v4083
        %v4275 = vunpack.c.h.b16 %v4083
        %v4276 = vunpack.c.l.b16 %v4084
        %v4277 = vunpack.c.h.b16 %v4084
        %v4278 = vunpack.c.l.b16 %v4085
        %v4279 = vunpack.c.h.b16 %v4085
        %v4280 = vunpack.c.l.b16 %v4086
        %v4281 = vunpack.c.h.b16 %v4086
        %v4282 = vunpack.c.l.b16 %v4087
        %v4283 = vunpack.c.h.b16 %v4087
        %v4284 = vunpack.c.l.b16 %v4088
        %v4285 = vunpack.c.h.b16 %v4088
        %v4286 = vunpack.c.l.b16 %v4089
        %v4287 = vunpack.c.h.b16 %v4089
        %v4288 = vunpack.c.l.b16 %v4090
        %v4289 = vunpack.c.h.b16 %v4090
        %v4290 = vunpack.c.l.b16 %v4091
        %v4291 = vunpack.c.h.b16 %v4091
        %v4292 = vunpack.c.l.b16 %v4092
        %v4293 = vunpack.c.h.b16 %v4092
        %v4294 = vunpack.c.l.b16 %v4093
        %v4295 = vunpack.c.h.b16 %v4093
        %v4296 = vunpack.c.l.b16 %v4094
        %v4297 = vunpack.c.h.b16 %v4094
        %v4298 = vunpack.c.l.b16 %v4095
        %v4299 = vunpack.c.h.b16 %v4095
        %v4300 = vunpack.c.l.b16 %v4096
        %v4301 = vunpack.c.h.b16 %v4096
        %v4302 = vunpack.c.l.b16 %v4097
        %v4303 = vunpack.c.h.b16 %v4097
        %v4304 = vunpack.c.l.b16 %v4098
        %v4305 = vunpack.c.h.b16 %v4098
        %v4306 = vunpack.c.l.b16 %v4099
        %v4307 = vunpack.c.h.b16 %v4099
        %v4308 = vunpack.c.l.b16 %v4100
        %v4309 = vunpack.c.h.b16 %v4100
        %v4310 = vunpack.c.l.b16 %v4101
        %v4311 = vunpack.c.h.b16 %v4101
        %v4312 = vunpack.c.l.b16 %v4102
        %v4313 = vunpack.c.h.b16 %v4102
        %v4314 = vunpack.c.l.b16 %v4103
        %v4315 = vunpack.c.h.b16 %v4103
        %v4316 = vunpack.c.l.b16 %v4104
        %v4317 = vunpack.c.h.b16 %v4104
        %v4318 = vunpack.c.l.b16 %v4105
        %v4319 = vunpack.c.h.b16 %v4105
        %v4320 = vunpack.c.l.b16 %v4106
        %v4321 = vunpack.c.h.b16 %v4106
        %v4322 = vpack.c.b16 %v4270, %v4268
        %v4323 = vpack.c.b16 %v4271, %v4269
        %v4324 = vpack.c.b16 %v4274, %v4272
        %v4325 = vpack.c.b16 %v4275, %v4273
        %v4326 = vpack.c.b16 %v4278, %v4276
        %v4327 = vpack.c.b16 %v4279, %v4277
        %v4328 = vpack.c.b16 %v4282, %v4280
        %v4329 = vpack.c.b16 %v4283, %v4281
        %v4330 = vpack.c.b16 %v4286, %v4284
        %v4331 = vpack.c.b16 %v4287, %v4285
        %v4332 = vpack.c.b16 %v4290, %v4288
        %v4333 = vpack.c.b16 %v4291, %v4289
        %v4334 = vpack.c.b16 %v4294, %v4292
        %v4335 = vpack.c.b16 %v4295, %v4293
        %v4336 = vpack.c.b16 %v4298, %v4296
        %v4337 = vpack.c.b16 %v4299, %v4297
        %v4338 = vpack.c.b16 %v4302, %v4300
        %v4339 = vpack.c.b16 %v4303, %v4301
        %v4340 = vpack.c.b16 %v4306, %v4304
        %v4341 = vpack.c.b16 %v4307, %v4305
        %v4342 = vpack.c.b16 %v4310, %v4308
        %v4343 = vpack.c.b16 %v4311, %v4309
        %v4344 = vpack.c.b16 %v4314, %v4312
        %v4345 = vpack.c.b16 %v4315, %v4313
        %v4346 = vpack.c.b16 %v4318, %v4316
        %v4347 = vpack.c.b16 %v4319, %v4317
        %v4348 = vpack.c.b16 %v4320, %v4320
        %v4349 = vpack.c.b16 %v4321, %v4321
        %vm4376 = vcmask 719872
        %v4378 = vsel %vm4376, %v4130, 0
        %v4381 = vsel %vm4376, %v4146, 0
        %v4384 = vsel %vm4376, %v4162, 0
        %v4387 = vsel %vm4376, %v4178, 0
        %v4390 = vsel %vm4376, %v4194, 0
        %v4393 = vsel %vm4376, %v4210, 0
        %v4396 = vsel %vm4376, %v4226, 0
        %v4399 = vsel %vm4376, %v4232, 0
        %v4402 = vsel %vm2002, %v4348, 0
        %v4405 = vsel %vm2002, %v4349, 0
        %4407 = vmatprep.subr.bf16.mxu0 %v4323
        %4408 = vmatpush1.bf16.msra.mxu0 %v4322
        %4409 = vmatprep.subr.bf16.mxu0 %v4325
        %4410 = vmatpush1.bf16.msra.mxu0 %v4324
        %4411 = vmatprep.subr.bf16.mxu0 %v4327
        %4412 = vmatpush1.bf16.msra.mxu0 %v4326
        %4413 = vmatprep.subr.bf16.mxu0 %v4329
        %4414 = vmatpush1.bf16.msra.mxu0 %v4328
        %4415 = vmatprep.subr.bf16.mxu0 %v4331
        %4416 = vmatpush1.bf16.msra.mxu0 %v4330
        %4417 = vmatprep.subr.bf16.mxu0 %v4333
        %4418 = vmatpush1.bf16.msra.mxu0 %v4332
        %4419 = vmatprep.subr.bf16.mxu0 %v4335
        %4420 = vmatpush1.bf16.msra.mxu0 %v4334
        %4421 = vmatprep.subr.bf16.mxu0 %v4337
        %4422 = vmatpush1.bf16.msra.mxu0 %v4336
        %4423 = vmatprep.subr.bf16.mxu0 %v4339
        %4424 = vmatpush1.bf16.msra.mxu0 %v4338
        %4425 = vmatprep.subr.bf16.mxu0 %v4341
        %4426 = vmatpush1.bf16.msra.mxu0 %v4340
        %4427 = vmatprep.subr.bf16.mxu0 %v4343
        %4428 = vmatpush1.bf16.msra.mxu0 %v4342
        %4429 = vmatprep.subr.bf16.mxu0 %v4345
        %4430 = vmatpush1.bf16.msra.mxu0 %v4344
        %4431 = vmatprep.subr.bf16.mxu0 %v4347
        %4432 = vmatpush1.bf16.msra.mxu0 %v4346
        %4433 = vmatprep.subr.bf16.mxu0 %v4405
        %4434 = vmatpush1.bf16.msra.mxu0 %v4402
        %4435 = vmatprep.subr.bf16.mxu0 0
        %4436 = vmatpush1.bf16.msra.mxu0 0
        %4437 = vmatprep.subr.bf16.mxu0 0
        %4438 = vmatpush1.bf16.msra.mxu0 0
        %4439 = vmatprep.mubr.bf16.mxu0 %v4378
        %4440 = vmatmul.mubr.bf16.gmra.mrb[0].mxu0 %v4118
        %v4441 = vpop.f32.mrb[0].mxu0
        %v4442 = vadd.f32 0.0, %v4441
        %v4443 = vpop.f32.mrb[0].mxu0
        %v4444 = vadd.f32 0.0, %v4443
        %v4445 = vpop.f32.mrb[0].mxu0
        %v4446 = vadd.f32 0.0, %v4445
        %v4447 = vpop.f32.mrb[0].mxu0
        %v4448 = vadd.f32 0.0, %v4447
        %4449 = vmatprep.mubr.bf16.mxu0 %v4381
        %4450 = vmatmul.mubr.bf16.gmra.mrb[0].mxu0 %v4138
        %v4451 = vpop.f32.mrb[0].mxu0
        %v4452 = vadd.f32 0.0, %v4451
        %v4453 = vpop.f32.mrb[0].mxu0
        %v4454 = vadd.f32 0.0, %v4453
        %v4455 = vpop.f32.mrb[0].mxu0
        %v4456 = vadd.f32 0.0, %v4455
        %v4457 = vpop.f32.mrb[0].mxu0
        %v4458 = vadd.f32 0.0, %v4457
        %4459 = vmatprep.mubr.bf16.mxu0 %v4384
        %4460 = vmatmul.mubr.bf16.gmra.mrb[0].mxu0 %v4154
        %v4461 = vpop.f32.mrb[0].mxu0
        %v4462 = vadd.f32 0.0, %v4461
        %v4463 = vpop.f32.mrb[0].mxu0
        %v4464 = vadd.f32 0.0, %v4463
        %v4465 = vpop.f32.mrb[0].mxu0
        %v4466 = vadd.f32 0.0, %v4465
        %v4467 = vpop.f32.mrb[0].mxu0
        %v4468 = vadd.f32 0.0, %v4467
        %4469 = vmatprep.mubr.bf16.mxu0 %v4387
        %4470 = vmatmul.mubr.bf16.gmra.mrb[0].mxu0 %v4170
        %v4471 = vpop.f32.mrb[0].mxu0
        %v4472 = vadd.f32 0.0, %v4471
        %v4473 = vpop.f32.mrb[0].mxu0
        %v4474 = vadd.f32 0.0, %v4473
        %v4475 = vpop.f32.mrb[0].mxu0
        %v4476 = vadd.f32 0.0, %v4475
        %v4477 = vpop.f32.mrb[0].mxu0
        %v4478 = vadd.f32 0.0, %v4477
        %4479 = vmatprep.mubr.bf16.mxu0 %v4390
        %4480 = vmatmul.mubr.bf16.gmra.mrb[0].mxu0 %v4186
        %v4481 = vpop.f32.mrb[0].mxu0
        %v4482 = vadd.f32 0.0, %v4481
        %v4483 = vpop.f32.mrb[0].mxu0
        %v4484 = vadd.f32 0.0, %v4483
        %v4485 = vpop.f32.mrb[0].mxu0
        %v4486 = vadd.f32 0.0, %v4485
        %v4487 = vpop.f32.mrb[0].mxu0
        %v4488 = vadd.f32 0.0, %v4487
        %4489 = vmatprep.mubr.bf16.mxu0 %v4393
        %4490 = vmatmul.mubr.bf16.gmra.mrb[0].mxu0 %v4202
        %v4491 = vpop.f32.mrb[0].mxu0
        %v4492 = vadd.f32 0.0, %v4491
        %v4493 = vpop.f32.mrb[0].mxu0
        %v4494 = vadd.f32 0.0, %v4493
        %v4495 = vpop.f32.mrb[0].mxu0
        %v4496 = vadd.f32 0.0, %v4495
        %v4497 = vpop.f32.mrb[0].mxu0
        %v4498 = vadd.f32 0.0, %v4497
        %4499 = vmatprep.mubr.bf16.mxu0 %v4396
        %4500 = vmatmul.mubr.bf16.gmra.mrb[0].mxu0 %v4218
        %v4501 = vpop.f32.mrb[0].mxu0
        %v4502 = vadd.f32 0.0, %v4501
        %v4503 = vpop.f32.mrb[0].mxu0
        %v4504 = vadd.f32 0.0, %v4503
        %v4505 = vpop.f32.mrb[0].mxu0
        %v4506 = vadd.f32 0.0, %v4505
        %v4507 = vpop.f32.mrb[0].mxu0
        %v4508 = vadd.f32 0.0, %v4507
        %4509 = vmatprep.mubr.bf16.mxu0 %v4399
        %4510 = vmatmul.mubr.bf16.gmra.mrb[0].mxu0 %v4229
        %v4511 = vpop.f32.mrb[0].mxu0
        %v4512 = vadd.f32 0.0, %v4511
        %v4513 = vpop.f32.mrb[0].mxu0
        %v4514 = vadd.f32 0.0, %v4513
        %v4515 = vpop.f32.mrb[0].mxu0
        %v4516 = vadd.f32 0.0, %v4515
        %v4517 = vpop.f32.mrb[0].mxu0
        %v4518 = vadd.f32 0.0, %v4517
        %4519 = vdwg.mxu0
        %v4547 = vunpack.c.l.b16 %v4052
        %v4548 = vunpack.c.h.b16 %v4052
        %v4549 = vunpack.c.l.b16 %v4053
        %v4550 = vunpack.c.h.b16 %v4053
        %v4551 = vunpack.c.l.b16 %v4054
        %v4552 = vunpack.c.h.b16 %v4054
        %v4553 = vunpack.c.l.b16 %v4055
        %v4554 = vunpack.c.h.b16 %v4055
        %v4555 = vunpack.c.l.b16 %v4056
        %v4556 = vunpack.c.h.b16 %v4056
        %v4557 = vunpack.c.l.b16 %v4057
        %v4558 = vunpack.c.h.b16 %v4057
        %v4559 = vunpack.c.l.b16 %v4058
        %v4560 = vunpack.c.h.b16 %v4058
        %v4561 = vunpack.c.l.b16 %v4059
        %v4562 = vunpack.c.h.b16 %v4059
        %v4563 = vunpack.c.l.b16 %v4060
        %v4564 = vunpack.c.h.b16 %v4060
        %v4565 = vunpack.c.l.b16 %v4061
        %v4566 = vunpack.c.h.b16 %v4061
        %v4567 = vunpack.c.l.b16 %v4062
        %v4568 = vunpack.c.h.b16 %v4062
        %v4569 = vunpack.c.l.b16 %v4063
        %v4570 = vunpack.c.h.b16 %v4063
        %v4571 = vunpack.c.l.b16 %v4064
        %v4572 = vunpack.c.h.b16 %v4064
        %v4573 = vunpack.c.l.b16 %v4065
        %v4574 = vunpack.c.h.b16 %v4065
        %v4575 = vunpack.c.l.b16 %v4066
        %v4576 = vunpack.c.h.b16 %v4066
        %v4577 = vunpack.c.l.b16 %v4067
        %v4578 = vunpack.c.h.b16 %v4067
        %v4579 = vunpack.c.l.b16 %v4068
        %v4580 = vunpack.c.h.b16 %v4068
        %v4581 = vunpack.c.l.b16 %v4069
        %v4582 = vunpack.c.h.b16 %v4069
        %v4583 = vunpack.c.l.b16 %v4070
        %v4584 = vunpack.c.h.b16 %v4070
        %v4585 = vunpack.c.l.b16 %v4071
        %v4586 = vunpack.c.h.b16 %v4071
        %v4587 = vunpack.c.l.b16 %v4072
        %v4588 = vunpack.c.h.b16 %v4072
        %v4589 = vunpack.c.l.b16 %v4073
        %v4590 = vunpack.c.h.b16 %v4073
        %v4591 = vunpack.c.l.b16 %v4074
        %v4592 = vunpack.c.h.b16 %v4074
        %v4593 = vunpack.c.l.b16 %v4075
        %v4594 = vunpack.c.h.b16 %v4075
        %v4595 = vunpack.c.l.b16 %v4076
        %v4596 = vunpack.c.h.b16 %v4076
        %v4597 = vunpack.c.l.b16 %v4077
        %v4598 = vunpack.c.h.b16 %v4077
        %v4599 = vunpack.c.l.b16 %v4078
        %v4600 = vunpack.c.h.b16 %v4078
        %v4601 = vpack.c.b16 %v4549, %v4547
        %v4602 = vpack.c.b16 %v4550, %v4548
        %v4603 = vpack.c.b16 %v4553, %v4551
        %v4604 = vpack.c.b16 %v4554, %v4552
        %v4605 = vpack.c.b16 %v4557, %v4555
        %v4606 = vpack.c.b16 %v4558, %v4556
        %v4607 = vpack.c.b16 %v4561, %v4559
        %v4608 = vpack.c.b16 %v4562, %v4560
        %v4609 = vpack.c.b16 %v4565, %v4563
        %v4610 = vpack.c.b16 %v4566, %v4564
        %v4611 = vpack.c.b16 %v4569, %v4567
        %v4612 = vpack.c.b16 %v4570, %v4568
        %v4613 = vpack.c.b16 %v4573, %v4571
        %v4614 = vpack.c.b16 %v4574, %v4572
        %v4615 = vpack.c.b16 %v4577, %v4575
        %v4616 = vpack.c.b16 %v4578, %v4576
        %v4617 = vpack.c.b16 %v4581, %v4579
        %v4618 = vpack.c.b16 %v4582, %v4580
        %v4619 = vpack.c.b16 %v4585, %v4583
        %v4620 = vpack.c.b16 %v4586, %v4584
        %v4621 = vpack.c.b16 %v4589, %v4587
        %v4622 = vpack.c.b16 %v4590, %v4588
        %v4623 = vpack.c.b16 %v4593, %v4591
        %v4624 = vpack.c.b16 %v4594, %v4592
        %v4625 = vpack.c.b16 %v4597, %v4595
        %v4626 = vpack.c.b16 %v4598, %v4596
        %v4627 = vpack.c.b16 %v4599, %v4599
        %v4628 = vpack.c.b16 %v4600, %v4600
        %v4655 = vsel %vm4376, %v4037, 0
        %v4657 = vsel %vm4376, %v4039, 0
        %v4659 = vsel %vm4376, %v4041, 0
        %v4661 = vsel %vm4376, %v4043, 0
        %v4663 = vsel %vm4376, %v4045, 0
        %v4665 = vsel %vm4376, %v4047, 0
        %v4667 = vsel %vm4376, %v4049, 0
        %v4669 = vsel %vm4376, %v4051, 0
        %v4672 = vsel %vm2002, %v4627, 0
        %v4675 = vsel %vm2002, %v4628, 0
        %4677 = vmatprep.subr.bf16.mxu0 %v4602
        %4678 = vmatpush1.bf16.msra.mxu0 %v4601
        %4679 = vmatprep.subr.bf16.mxu0 %v4604
        %4680 = vmatpush1.bf16.msra.mxu0 %v4603
        %4681 = vmatprep.subr.bf16.mxu0 %v4606
        %4682 = vmatpush1.bf16.msra.mxu0 %v4605
        %4683 = vmatprep.subr.bf16.mxu0 %v4608
        %4684 = vmatpush1.bf16.msra.mxu0 %v4607
        %4685 = vmatprep.subr.bf16.mxu0 %v4610
        %4686 = vmatpush1.bf16.msra.mxu0 %v4609
        %4687 = vmatprep.subr.bf16.mxu0 %v4612
        %4688 = vmatpush1.bf16.msra.mxu0 %v4611
        %4689 = vmatprep.subr.bf16.mxu0 %v4614
        %4690 = vmatpush1.bf16.msra.mxu0 %v4613
        %4691 = vmatprep.subr.bf16.mxu0 %v4616
        %4692 = vmatpush1.bf16.msra.mxu0 %v4615
        %4693 = vmatprep.subr.bf16.mxu0 %v4618
        %4694 = vmatpush1.bf16.msra.mxu0 %v4617
        %4695 = vmatprep.subr.bf16.mxu0 %v4620
        %4696 = vmatpush1.bf16.msra.mxu0 %v4619
        %4697 = vmatprep.subr.bf16.mxu0 %v4622
        %4698 = vmatpush1.bf16.msra.mxu0 %v4621
        %4699 = vmatprep.subr.bf16.mxu0 %v4624
        %4700 = vmatpush1.bf16.msra.mxu0 %v4623
        %4701 = vmatprep.subr.bf16.mxu0 %v4626
        %4702 = vmatpush1.bf16.msra.mxu0 %v4625
        %4703 = vmatprep.subr.bf16.mxu0 %v4675
        %4704 = vmatpush1.bf16.msra.mxu0 %v4672
        %4705 = vmatprep.subr.bf16.mxu0 0
        %4706 = vmatpush1.bf16.msra.mxu0 0
        %4707 = vmatprep.subr.bf16.mxu0 0
        %4708 = vmatpush1.bf16.msra.mxu0 0
        %4709 = vmatprep.mubr.bf16.mxu0 %v4655
        %4710 = vmatmul.mubr.bf16.gmra.mrb[0].mxu0 %v4036
        %v4711 = vpop.f32.mrb[0].mxu0
        %v4712 = vadd.f32 %v4442, %v4711
        %v4713 = vpop.f32.mrb[0].mxu0
        %v4714 = vadd.f32 %v4444, %v4713
        %v4715 = vpop.f32.mrb[0].mxu0
        %v4716 = vadd.f32 %v4446, %v4715
        %v4717 = vpop.f32.mrb[0].mxu0
        %v4718 = vadd.f32 %v4448, %v4717
        %4719 = vmatprep.mubr.bf16.mxu0 %v4657
        %4720 = vmatmul.mubr.bf16.gmra.mrb[0].mxu0 %v4038
        %v4721 = vpop.f32.mrb[0].mxu0
        %v4722 = vadd.f32 %v4452, %v4721
        %v4723 = vpop.f32.mrb[0].mxu0
        %v4724 = vadd.f32 %v4454, %v4723
        %v4725 = vpop.f32.mrb[0].mxu0
        %v4726 = vadd.f32 %v4456, %v4725
        %v4727 = vpop.f32.mrb[0].mxu0
        %v4728 = vadd.f32 %v4458, %v4727
        %4729 = vmatprep.mubr.bf16.mxu0 %v4659
        %4730 = vmatmul.mubr.bf16.gmra.mrb[0].mxu0 %v4040
        %v4731 = vpop.f32.mrb[0].mxu0
        %v4732 = vadd.f32 %v4462, %v4731
        %v4733 = vpop.f32.mrb[0].mxu0
        %v4734 = vadd.f32 %v4464, %v4733
        %v4735 = vpop.f32.mrb[0].mxu0
        %v4736 = vadd.f32 %v4466, %v4735
        %v4737 = vpop.f32.mrb[0].mxu0
        %v4738 = vadd.f32 %v4468, %v4737
        %4739 = vmatprep.mubr.bf16.mxu0 %v4661
        %4740 = vmatmul.mubr.bf16.gmra.mrb[0].mxu0 %v4042
        %v4741 = vpop.f32.mrb[0].mxu0
        %v4742 = vadd.f32 %v4472, %v4741
        %v4743 = vpop.f32.mrb[0].mxu0
        %v4744 = vadd.f32 %v4474, %v4743
        %v4745 = vpop.f32.mrb[0].mxu0
        %v4746 = vadd.f32 %v4476, %v4745
        %v4747 = vpop.f32.mrb[0].mxu0
        %v4748 = vadd.f32 %v4478, %v4747
        %4749 = vmatprep.mubr.bf16.mxu0 %v4663
        %4750 = vmatmul.mubr.bf16.gmra.mrb[0].mxu0 %v4044
        %v4751 = vpop.f32.mrb[0].mxu0
        %v4752 = vadd.f32 %v4482, %v4751
        %v4753 = vpop.f32.mrb[0].mxu0
        %v4754 = vadd.f32 %v4484, %v4753
        %v4755 = vpop.f32.mrb[0].mxu0
        %v4756 = vadd.f32 %v4486, %v4755
        %v4757 = vpop.f32.mrb[0].mxu0
        %v4758 = vadd.f32 %v4488, %v4757
        %4759 = vmatprep.mubr.bf16.mxu0 %v4665
        %4760 = vmatmul.mubr.bf16.gmra.mrb[0].mxu0 %v4046
        %v4761 = vpop.f32.mrb[0].mxu0
        %v4762 = vadd.f32 %v4492, %v4761
        %v4763 = vpop.f32.mrb[0].mxu0
        %v4764 = vadd.f32 %v4494, %v4763
        %v4765 = vpop.f32.mrb[0].mxu0
        %v4766 = vadd.f32 %v4496, %v4765
        %v4767 = vpop.f32.mrb[0].mxu0
        %v4768 = vadd.f32 %v4498, %v4767
        %4769 = vmatprep.mubr.bf16.mxu0 %v4667
        %4770 = vmatmul.mubr.bf16.gmra.mrb[0].mxu0 %v4048
        %v4771 = vpop.f32.mrb[0].mxu0
        %v4772 = vadd.f32 %v4502, %v4771
        %v4773 = vpop.f32.mrb[0].mxu0
        %v4774 = vadd.f32 %v4504, %v4773
        %v4775 = vpop.f32.mrb[0].mxu0
        %v4776 = vadd.f32 %v4506, %v4775
        %v4777 = vpop.f32.mrb[0].mxu0
        %v4778 = vadd.f32 %v4508, %v4777
        %4779 = vmatprep.mubr.bf16.mxu0 %v4669
        %4780 = vmatmul.mubr.bf16.gmra.mrb[0].mxu0 %v4050
        %v4781 = vpop.f32.mrb[0].mxu0
        %v4782 = vadd.f32 %v4512, %v4781
        %v4783 = vpop.f32.mrb[0].mxu0
        %v4784 = vadd.f32 %v4514, %v4783
        %v4785 = vpop.f32.mrb[0].mxu0
        %v4786 = vadd.f32 %v4516, %v4785
        %v4787 = vpop.f32.mrb[0].mxu0
        %v4788 = vadd.f32 %v4518, %v4787
        %4789 = vdwg.mxu0
        %s4790 = scalar_lea.vmem %s7, 432
        %v4791 = vld [vmem:[%s4790] sm:$0xff]
        %v4792 = vld [vmem:[%s4790 + $0x8] sm:$0xff]
        %v4793 = vld [vmem:[%s4790 + $0x10] sm:$0xff]
        %v4794 = vld [vmem:[%s4790 + $0x18] sm:$0xff]
        %v4795 = vld [vmem:[%s4790 + $0x20] sm:$0xff]
        %v4796 = vld [vmem:[%s4790 + $0x28] sm:$0xff]
        %v4797 = vld [vmem:[%s4790 + $0x30] sm:$0xff]
        %v4798 = vld [vmem:[%s4790 + $0x38] sm:$0xff]
        %v4799 = vld [vmem:[%s4790 + $0x40] sm:$0xff]
        %v4800 = vld [vmem:[%s4790 + $0x48] sm:$0xff]
        %v4801 = vld [vmem:[%s4790 + $0x50] sm:$0xff]
        %v4802 = vld [vmem:[%s4790 + $0x58] sm:$0xff]
        %v4803 = vld [vmem:[%s4790 + $0x60] sm:$0xff]
        %v4804 = vld [vmem:[%s4790 + $0x68] sm:$0xff]
        %v4805 = vld [vmem:[%s4790 + $0x70] sm:$0xff]
        %v4806 = vld [vmem:[%s4790 + $0x78] sm:$0xff]
        %v4807 = vld [vmem:[%s4790 + $0x80] sm:$0xff]
        %v4808 = vld [vmem:[%s4790 + $0x88] sm:$0xff]
        %v4809 = vld [vmem:[%s4790 + $0x90] sm:$0xff]
        %v4810 = vld [vmem:[%s4790 + $0x98] sm:$0xff]
        %v4811 = vld [vmem:[%s4790 + $0xa0] sm:$0xff]
        %v4812 = vld [vmem:[%s4790 + $0xa8] sm:$0xff]
        %v4813 = vld [vmem:[%s4790 + $0xb0] sm:$0xff]
        %v4814 = vld [vmem:[%s4790 + $0xb8] sm:$0xff]
        %v4815 = vld [vmem:[%s4790 + $0xc0] sm:$0xff]
        %v4816 = vld [vmem:[%s4790 + $0xc8] sm:$0xff]
        %v4817 = vld [vmem:[%s4790 + $0xd0] sm:$0xff]
        %v4834 = vrot.slane %v4036, 1
        %v4835 = vrot.slane %v4038, 1
        %v4836 = vsel %vm1344, %v4834, %v4835
        %v4837 = vrot.slane %v4037, 1
        %v4838 = vrot.slane %v4039, 1
        %v4839 = vsel %vm1344, %v4837, %v4838
        %v4840 = vrot.slane %v4040, 1
        %v4841 = vsel %vm1344, %v4835, %v4840
        %v4842 = vrot.slane %v4041, 1
        %v4843 = vsel %vm1344, %v4838, %v4842
        %v4844 = vrot.slane %v4042, 1
        %v4845 = vsel %vm1344, %v4840, %v4844
        %v4846 = vrot.slane %v4043, 1
        %v4847 = vsel %vm1344, %v4842, %v4846
        %v4848 = vrot.slane %v4044, 1
        %v4849 = vsel %vm1344, %v4844, %v4848
        %v4850 = vrot.slane %v4045, 1
        %v4851 = vsel %vm1344, %v4846, %v4850
        %v4852 = vrot.slane %v4046, 1
        %v4853 = vsel %vm1344, %v4848, %v4852
        %v4854 = vrot.slane %v4047, 1
        %v4855 = vsel %vm1344, %v4850, %v4854
        %v4856 = vrot.slane %v4048, 1
        %v4857 = vsel %vm1344, %v4852, %v4856
        %v4858 = vrot.slane %v4049, 1
        %v4859 = vsel %vm1344, %v4854, %v4858
        %v4860 = vrot.slane %v4050, 1
        %v4861 = vsel %vm1344, %v4856, %v4860
        %v4862 = vrot.slane %v4051, 1
        %v4863 = vsel %vm1344, %v4858, %v4862
        %v4899 = vunpack.c.l.b16 %v4791
        %v4900 = vunpack.c.h.b16 %v4791
        %v4901 = vunpack.c.l.b16 %v4792
        %v4902 = vunpack.c.h.b16 %v4792
        %v4903 = vunpack.c.l.b16 %v4793
        %v4904 = vunpack.c.h.b16 %v4793
        %v4905 = vunpack.c.l.b16 %v4794
        %v4906 = vunpack.c.h.b16 %v4794
        %v4907 = vunpack.c.l.b16 %v4795
        %v4908 = vunpack.c.h.b16 %v4795
        %v4909 = vunpack.c.l.b16 %v4796
        %v4910 = vunpack.c.h.b16 %v4796
        %v4911 = vunpack.c.l.b16 %v4797
        %v4912 = vunpack.c.h.b16 %v4797
        %v4913 = vunpack.c.l.b16 %v4798
        %v4914 = vunpack.c.h.b16 %v4798
        %v4915 = vunpack.c.l.b16 %v4799
        %v4916 = vunpack.c.h.b16 %v4799
        %v4917 = vunpack.c.l.b16 %v4800
        %v4918 = vunpack.c.h.b16 %v4800
        %v4919 = vunpack.c.l.b16 %v4801
        %v4920 = vunpack.c.h.b16 %v4801
        %v4921 = vunpack.c.l.b16 %v4802
        %v4922 = vunpack.c.h.b16 %v4802
        %v4923 = vunpack.c.l.b16 %v4803
        %v4924 = vunpack.c.h.b16 %v4803
        %v4925 = vunpack.c.l.b16 %v4804
        %v4926 = vunpack.c.h.b16 %v4804
        %v4927 = vunpack.c.l.b16 %v4805
        %v4928 = vunpack.c.h.b16 %v4805
        %v4929 = vunpack.c.l.b16 %v4806
        %v4930 = vunpack.c.h.b16 %v4806
        %v4931 = vunpack.c.l.b16 %v4807
        %v4932 = vunpack.c.h.b16 %v4807
        %v4933 = vunpack.c.l.b16 %v4808
        %v4934 = vunpack.c.h.b16 %v4808
        %v4935 = vunpack.c.l.b16 %v4809
        %v4936 = vunpack.c.h.b16 %v4809
        %v4937 = vunpack.c.l.b16 %v4810
        %v4938 = vunpack.c.h.b16 %v4810
        %v4939 = vunpack.c.l.b16 %v4811
        %v4940 = vunpack.c.h.b16 %v4811
        %v4941 = vunpack.c.l.b16 %v4812
        %v4942 = vunpack.c.h.b16 %v4812
        %v4943 = vunpack.c.l.b16 %v4813
        %v4944 = vunpack.c.h.b16 %v4813
        %v4945 = vunpack.c.l.b16 %v4814
        %v4946 = vunpack.c.h.b16 %v4814
        %v4947 = vunpack.c.l.b16 %v4815
        %v4948 = vunpack.c.h.b16 %v4815
        %v4949 = vunpack.c.l.b16 %v4816
        %v4950 = vunpack.c.h.b16 %v4816
        %v4951 = vunpack.c.l.b16 %v4817
        %v4952 = vunpack.c.h.b16 %v4817
        %v4953 = vpack.c.b16 %v4901, %v4899
        %v4954 = vpack.c.b16 %v4902, %v4900
        %v4955 = vpack.c.b16 %v4905, %v4903
        %v4956 = vpack.c.b16 %v4906, %v4904
        %v4957 = vpack.c.b16 %v4909, %v4907
        %v4958 = vpack.c.b16 %v4910, %v4908
        %v4959 = vpack.c.b16 %v4913, %v4911
        %v4960 = vpack.c.b16 %v4914, %v4912
        %v4961 = vpack.c.b16 %v4917, %v4915
        %v4962 = vpack.c.b16 %v4918, %v4916
        %v4963 = vpack.c.b16 %v4921, %v4919
        %v4964 = vpack.c.b16 %v4922, %v4920
        %v4965 = vpack.c.b16 %v4925, %v4923
        %v4966 = vpack.c.b16 %v4926, %v4924
        %v4967 = vpack.c.b16 %v4929, %v4927
        %v4968 = vpack.c.b16 %v4930, %v4928
        %v4969 = vpack.c.b16 %v4933, %v4931
        %v4970 = vpack.c.b16 %v4934, %v4932
        %v4971 = vpack.c.b16 %v4937, %v4935
        %v4972 = vpack.c.b16 %v4938, %v4936
        %v4973 = vpack.c.b16 %v4941, %v4939
        %v4974 = vpack.c.b16 %v4942, %v4940
        %v4975 = vpack.c.b16 %v4945, %v4943
        %v4976 = vpack.c.b16 %v4946, %v4944
        %v4977 = vpack.c.b16 %v4949, %v4947
        %v4978 = vpack.c.b16 %v4950, %v4948
        %v4979 = vpack.c.b16 %v4951, %v4951
        %v4980 = vpack.c.b16 %v4952, %v4952
        %v5008 = vsel %vm4376, %v4839, 0
        %v5011 = vsel %vm4376, %v4843, 0
        %v5014 = vsel %vm4376, %v4847, 0
        %v5017 = vsel %vm4376, %v4851, 0
        %v5020 = vsel %vm4376, %v4855, 0
        %v5023 = vsel %vm4376, %v4859, 0
        %v5026 = vsel %vm4376, %v4863, 0
        %v5029 = vsel %vm4376, %v4862, 0
        %v5032 = vsel %vm2002, %v4979, 0
        %v5035 = vsel %vm2002, %v4980, 0
        %5037 = vmatprep.subr.bf16.mxu0 %v4954
        %5038 = vmatpush1.bf16.msra.mxu0 %v4953
        %5039 = vmatprep.subr.bf16.mxu0 %v4956
        %5040 = vmatpush1.bf16.msra.mxu0 %v4955
        %5041 = vmatprep.subr.bf16.mxu0 %v4958
        %5042 = vmatpush1.bf16.msra.mxu0 %v4957
        %5043 = vmatprep.subr.bf16.mxu0 %v4960
        %5044 = vmatpush1.bf16.msra.mxu0 %v4959
        %5045 = vmatprep.subr.bf16.mxu0 %v4962
        %5046 = vmatpush1.bf16.msra.mxu0 %v4961
        %5047 = vmatprep.subr.bf16.mxu0 %v4964
        %5048 = vmatpush1.bf16.msra.mxu0 %v4963
        %5049 = vmatprep.subr.bf16.mxu0 %v4966
        %5050 = vmatpush1.bf16.msra.mxu0 %v4965
        %5051 = vmatprep.subr.bf16.mxu0 %v4968
        %5052 = vmatpush1.bf16.msra.mxu0 %v4967
        %5053 = vmatprep.subr.bf16.mxu0 %v4970
        %5054 = vmatpush1.bf16.msra.mxu0 %v4969
        %5055 = vmatprep.subr.bf16.mxu0 %v4972
        %5056 = vmatpush1.bf16.msra.mxu0 %v4971
        %5057 = vmatprep.subr.bf16.mxu0 %v4974
        %5058 = vmatpush1.bf16.msra.mxu0 %v4973
        %5059 = vmatprep.subr.bf16.mxu0 %v4976
        %5060 = vmatpush1.bf16.msra.mxu0 %v4975
        %5061 = vmatprep.subr.bf16.mxu0 %v4978
        %5062 = vmatpush1.bf16.msra.mxu0 %v4977
        %5063 = vmatprep.subr.bf16.mxu0 %v5035
        %5064 = vmatpush1.bf16.msra.mxu0 %v5032
        %5065 = vmatprep.subr.bf16.mxu0 0
        %5066 = vmatpush1.bf16.msra.mxu0 0
        %5067 = vmatprep.subr.bf16.mxu0 0
        %5068 = vmatpush1.bf16.msra.mxu0 0
        %5069 = vmatprep.mubr.bf16.mxu0 %v5008
        %5070 = vmatmul.mubr.bf16.gmra.mrb[0].mxu0 %v4836
        %v5071 = vpop.f32.mrb[0].mxu0
        %v5072 = vadd.f32 0.0, %v5071
        %v5073 = vpop.f32.mrb[0].mxu0
        %v5074 = vadd.f32 0.0, %v5073
        %v5075 = vpop.f32.mrb[0].mxu0
        %v5076 = vadd.f32 0.0, %v5075
        %v5077 = vpop.f32.mrb[0].mxu0
        %v5078 = vadd.f32 0.0, %v5077
        %5079 = vmatprep.mubr.bf16.mxu0 %v5011
        %5080 = vmatmul.mubr.bf16.gmra.mrb[0].mxu0 %v4841
        %v5081 = vpop.f32.mrb[0].mxu0
        %v5082 = vadd.f32 0.0, %v5081
        %v5083 = vpop.f32.mrb[0].mxu0
        %v5084 = vadd.f32 0.0, %v5083
        %v5085 = vpop.f32.mrb[0].mxu0
        %v5086 = vadd.f32 0.0, %v5085
        %v5087 = vpop.f32.mrb[0].mxu0
        %v5088 = vadd.f32 0.0, %v5087
        %5089 = vmatprep.mubr.bf16.mxu0 %v5014
        %5090 = vmatmul.mubr.bf16.gmra.mrb[0].mxu0 %v4845
        %v5091 = vpop.f32.mrb[0].mxu0
        %v5092 = vadd.f32 0.0, %v5091
        %v5093 = vpop.f32.mrb[0].mxu0
        %v5094 = vadd.f32 0.0, %v5093
        %v5095 = vpop.f32.mrb[0].mxu0
        %v5096 = vadd.f32 0.0, %v5095
        %v5097 = vpop.f32.mrb[0].mxu0
        %v5098 = vadd.f32 0.0, %v5097
        %5099 = vmatprep.mubr.bf16.mxu0 %v5017
        %5100 = vmatmul.mubr.bf16.gmra.mrb[0].mxu0 %v4849
        %v5101 = vpop.f32.mrb[0].mxu0
        %v5102 = vadd.f32 0.0, %v5101
        %v5103 = vpop.f32.mrb[0].mxu0
        %v5104 = vadd.f32 0.0, %v5103
        %v5105 = vpop.f32.mrb[0].mxu0
        %v5106 = vadd.f32 0.0, %v5105
        %v5107 = vpop.f32.mrb[0].mxu0
        %v5108 = vadd.f32 0.0, %v5107
        %5109 = vmatprep.mubr.bf16.mxu0 %v5020
        %5110 = vmatmul.mubr.bf16.gmra.mrb[0].mxu0 %v4853
        %v5111 = vpop.f32.mrb[0].mxu0
        %v5112 = vadd.f32 0.0, %v5111
        %v5113 = vpop.f32.mrb[0].mxu0
        %v5114 = vadd.f32 0.0, %v5113
        %v5115 = vpop.f32.mrb[0].mxu0
        %v5116 = vadd.f32 0.0, %v5115
        %v5117 = vpop.f32.mrb[0].mxu0
        %v5118 = vadd.f32 0.0, %v5117
        %5119 = vmatprep.mubr.bf16.mxu0 %v5023
        %5120 = vmatmul.mubr.bf16.gmra.mrb[0].mxu0 %v4857
        %v5121 = vpop.f32.mrb[0].mxu0
        %v5122 = vadd.f32 0.0, %v5121
        %v5123 = vpop.f32.mrb[0].mxu0
        %v5124 = vadd.f32 0.0, %v5123
        %v5125 = vpop.f32.mrb[0].mxu0
        %v5126 = vadd.f32 0.0, %v5125
        %v5127 = vpop.f32.mrb[0].mxu0
        %v5128 = vadd.f32 0.0, %v5127
        %5129 = vmatprep.mubr.bf16.mxu0 %v5026
        %5130 = vmatmul.mubr.bf16.gmra.mrb[0].mxu0 %v4861
        %v5131 = vpop.f32.mrb[0].mxu0
        %v5132 = vadd.f32 0.0, %v5131
        %v5133 = vpop.f32.mrb[0].mxu0
        %v5134 = vadd.f32 0.0, %v5133
        %v5135 = vpop.f32.mrb[0].mxu0
        %v5136 = vadd.f32 0.0, %v5135
        %v5137 = vpop.f32.mrb[0].mxu0
        %v5138 = vadd.f32 0.0, %v5137
        %5139 = vmatprep.mubr.bf16.mxu0 %v5029
        %5140 = vmatmul.mubr.bf16.gmra.mrb[0].mxu0 %v4860
        %v5141 = vpop.f32.mrb[0].mxu0
        %v5142 = vadd.f32 0.0, %v5141
        %v5143 = vpop.f32.mrb[0].mxu0
        %v5144 = vadd.f32 0.0, %v5143
        %v5145 = vpop.f32.mrb[0].mxu0
        %v5146 = vadd.f32 0.0, %v5145
        %v5147 = vpop.f32.mrb[0].mxu0
        %v5148 = vadd.f32 0.0, %v5147
        %5149 = vdwg.mxu0
        %v5150 = vadd.f32 %v4712, %v5072
        %v5151 = vadd.f32 %v4714, %v5074
        %v5152 = vadd.f32 %v4716, %v5076
        %v5153 = vadd.f32 %v4718, %v5078
        %v5154 = vadd.f32 %v4722, %v5082
        %v5155 = vadd.f32 %v4724, %v5084
        %v5156 = vadd.f32 %v4726, %v5086
        %v5157 = vadd.f32 %v4728, %v5088
        %v5158 = vadd.f32 %v4732, %v5092
        %v5159 = vadd.f32 %v4734, %v5094
        %v5160 = vadd.f32 %v4736, %v5096
        %v5161 = vadd.f32 %v4738, %v5098
        %v5162 = vadd.f32 %v4742, %v5102
        %v5163 = vadd.f32 %v4744, %v5104
        %v5164 = vadd.f32 %v4746, %v5106
        %v5165 = vadd.f32 %v4748, %v5108
        %v5166 = vadd.f32 %v4752, %v5112
        %v5167 = vadd.f32 %v4754, %v5114
        %v5168 = vadd.f32 %v4756, %v5116
        %v5169 = vadd.f32 %v4758, %v5118
        %v5170 = vadd.f32 %v4762, %v5122
        %v5171 = vadd.f32 %v4764, %v5124
        %v5172 = vadd.f32 %v4766, %v5126
        %v5173 = vadd.f32 %v4768, %v5128
        %v5174 = vadd.f32 %v4772, %v5132
        %v5175 = vadd.f32 %v4774, %v5134
        %v5176 = vadd.f32 %v4776, %v5136
        %v5177 = vadd.f32 %v4778, %v5138
        %v5178 = vadd.f32 %v4782, %v5142
        %v5179 = vadd.f32 %v4784, %v5144
        %v5180 = vadd.f32 %v4786, %v5146
        %v5181 = vadd.f32 %v4788, %v5148
        %v5182 = vld [vmem:[%s8] sm:$0x3]
        %v5184 = vlaneseq
        %v5185 = vshrl.u32 %v5184, 7
        %v5186 = vsub.s32 0, %v5185
        %v5187 = vrot.slane %v5182, %v5186
        %v5188 = vlaneseq
        %v5189 = vshrl.u32 %v5188, 7
        %v5190 = vsub.s32 1, %v5189
        %v5191 = vrot.slane %v5182, %v5190
        %v5194 = vadd.f32 %v5150, %v5187
        %v5195 = vadd.f32 %v5151, %v5191
        %v5196 = vadd.f32 %v5152, %v5187
        %v5197 = vadd.f32 %v5153, %v5191
        %v5198 = vadd.f32 %v5154, %v5187
        %v5199 = vadd.f32 %v5155, %v5191
        %v5200 = vadd.f32 %v5156, %v5187
        %v5201 = vadd.f32 %v5157, %v5191
        %v5202 = vadd.f32 %v5158, %v5187
        %v5203 = vadd.f32 %v5159, %v5191
        %v5204 = vadd.f32 %v5160, %v5187
        %v5205 = vadd.f32 %v5161, %v5191
        %v5206 = vadd.f32 %v5162, %v5187
        %v5207 = vadd.f32 %v5163, %v5191
        %v5208 = vadd.f32 %v5164, %v5187
        %v5209 = vadd.f32 %v5165, %v5191
        %v5210 = vadd.f32 %v5166, %v5187
        %v5211 = vadd.f32 %v5167, %v5191
        %v5212 = vadd.f32 %v5168, %v5187
        %v5213 = vadd.f32 %v5169, %v5191
        %v5214 = vadd.f32 %v5170, %v5187
        %v5215 = vadd.f32 %v5171, %v5191
        %v5216 = vadd.f32 %v5172, %v5187
        %v5217 = vadd.f32 %v5173, %v5191
        %v5218 = vadd.f32 %v5174, %v5187
        %v5219 = vadd.f32 %v5175, %v5191
        %v5220 = vadd.f32 %v5176, %v5187
        %v5221 = vadd.f32 %v5177, %v5191
        %v5222 = vadd.f32 %v5178, %v5187
        %v5223 = vadd.f32 %v5179, %v5191
        %v5224 = vadd.f32 %v5180, %v5187
        %v5225 = vadd.f32 %v5181, %v5191
        %v5226 = vmax.f32 %v5194, 0.0
        %v5227 = vmax.f32 %v5195, 0.0
        %v5228 = vmax.f32 %v5196, 0.0
        %v5229 = vmax.f32 %v5197, 0.0
        %v5230 = vmax.f32 %v5198, 0.0
        %v5231 = vmax.f32 %v5199, 0.0
        %v5232 = vmax.f32 %v5200, 0.0
        %v5233 = vmax.f32 %v5201, 0.0
        %v5234 = vmax.f32 %v5202, 0.0
        %v5235 = vmax.f32 %v5203, 0.0
        %v5236 = vmax.f32 %v5204, 0.0
        %v5237 = vmax.f32 %v5205, 0.0
        %v5238 = vmax.f32 %v5206, 0.0
        %v5239 = vmax.f32 %v5207, 0.0
        %v5240 = vmax.f32 %v5208, 0.0
        %v5241 = vmax.f32 %v5209, 0.0
        %v5242 = vmax.f32 %v5210, 0.0
        %v5243 = vmax.f32 %v5211, 0.0
        %v5244 = vmax.f32 %v5212, 0.0
        %v5245 = vmax.f32 %v5213, 0.0
        %v5246 = vmax.f32 %v5214, 0.0
        %v5247 = vmax.f32 %v5215, 0.0
        %v5248 = vmax.f32 %v5216, 0.0
        %v5249 = vmax.f32 %v5217, 0.0
        %v5250 = vmax.f32 %v5218, 0.0
        %v5251 = vmax.f32 %v5219, 0.0
        %v5252 = vmax.f32 %v5220, 0.0
        %v5253 = vmax.f32 %v5221, 0.0
        %v5254 = vmax.f32 %v5222, 0.0
        %v5255 = vmax.f32 %v5223, 0.0
        %v5256 = vmax.f32 %v5224, 0.0
        %v5257 = vmax.f32 %v5225, 0.0
        %v5258 = vpack.c.bf16 %v5228, %v5226
        %v5259 = vpack.c.bf16 %v5229, %v5227
        %v5260 = vpack.c.bf16 %v5232, %v5230
        %v5261 = vpack.c.bf16 %v5233, %v5231
        %v5262 = vpack.c.bf16 %v5236, %v5234
        %v5263 = vpack.c.bf16 %v5237, %v5235
        %v5264 = vpack.c.bf16 %v5240, %v5238
        %v5265 = vpack.c.bf16 %v5241, %v5239
        %v5266 = vpack.c.bf16 %v5244, %v5242
        %v5267 = vpack.c.bf16 %v5245, %v5243
        %v5268 = vpack.c.bf16 %v5248, %v5246
        %v5269 = vpack.c.bf16 %v5249, %v5247
        %v5270 = vpack.c.bf16 %v5252, %v5250
        %v5271 = vpack.c.bf16 %v5253, %v5251
        %v5272 = vpack.c.bf16 %v5256, %v5254
        %v5273 = vpack.c.bf16 %v5257, %v5255
        %v5274 = vld [vmem:[%s9] sm:$0xff]
        %v5275 = vld [vmem:[%s9 + $0x8] sm:$0xf]
        %v5276 = vld [vmem:[%s9 + $0xc] sm:$0xff]
        %v5277 = vld [vmem:[%s9 + $0x14] sm:$0xf]
        %v5278 = vld [vmem:[%s9 + $0x18] sm:$0xff]
        %v5279 = vld [vmem:[%s9 + $0x20] sm:$0xf]
        %v5280 = vld [vmem:[%s9 + $0x24] sm:$0xff]
        %v5281 = vld [vmem:[%s9 + $0x2c] sm:$0xf]
        %v5282 = vld [vmem:[%s9 + $0x30] sm:$0xff]
        %v5283 = vld [vmem:[%s9 + $0x38] sm:$0xf]
        %v5284 = vld [vmem:[%s9 + $0x3c] sm:$0xff]
        %v5285 = vld [vmem:[%s9 + $0x44] sm:$0xf]
        %v5286 = vld [vmem:[%s9 + $0x48] sm:$0xff]
        %v5287 = vld [vmem:[%s9 + $0x50] sm:$0xf]
        %v5288 = vld [vmem:[%s9 + $0x54] sm:$0xff]
        %v5289 = vld [vmem:[%s9 + $0x5c] sm:$0xf]
        %v5290 = vld [vmem:[%s9 + $0x60] sm:$0xff]
        %v5291 = vld [vmem:[%s9 + $0x68] sm:$0xf]
        %v5292 = vld [vmem:[%s9 + $0x6c] sm:$0xff]
        %v5293 = vld [vmem:[%s9 + $0x74] sm:$0xf]
        %v5294 = vld [vmem:[%s9 + $0x78] sm:$0xff]
        %v5295 = vld [vmem:[%s9 + $0x80] sm:$0xf]
        %v5296 = vld [vmem:[%s9 + $0x84] sm:$0xff]
        %v5297 = vld [vmem:[%s9 + $0x8c] sm:$0xf]
        %v5298 = vld [vmem:[%s9 + $0x90] sm:$0xff]
        %v5299 = vld [vmem:[%s9 + $0x98] sm:$0xf]
        %v5300 = vld [vmem:[%s9 + $0x9c] sm:$0xff]
        %v5301 = vld [vmem:[%s9 + $0xa4] sm:$0xf]
        %v5302 = vld [vmem:[%s9 + $0xa8] sm:$0xff]
        %v5303 = vld [vmem:[%s9 + $0xb0] sm:$0xf]
        %v5304 = vld [vmem:[%s9 + $0xb4] sm:$0xff]
        %v5305 = vld [vmem:[%s9 + $0xbc] sm:$0xf]
        %v5306 = vld [vmem:[%s9 + $0xc0] sm:$0xff]
        %v5307 = vld [vmem:[%s9 + $0xc8] sm:$0xf]
        %v5308 = vld [vmem:[%s9 + $0xcc] sm:$0xff]
        %v5309 = vld [vmem:[%s9 + $0xd4] sm:$0xf]
        %v5310 = vld [vmem:[%s9 + $0xd8] sm:$0xff]
        %v5311 = vld [vmem:[%s9 + $0xe0] sm:$0xf]
        %v5312 = vld [vmem:[%s9 + $0xe4] sm:$0xff]
        %v5313 = vld [vmem:[%s9 + $0xec] sm:$0xf]
        %v5314 = vld [vmem:[%s9 + $0xf0] sm:$0xff]
        %v5315 = vld [vmem:[%s9 + $0xf8] sm:$0xf]
        %v5316 = vld [vmem:[%s9 + $0xfc] sm:$0xff]
        %v5317 = vld [vmem:[%s9 + $0x104] sm:$0xf]
        %v5318 = vld [vmem:[%s9 + $0x108] sm:$0xff]
        %v5319 = vld [vmem:[%s9 + $0x110] sm:$0xf]
        %v5320 = vld [vmem:[%s9 + $0x114] sm:$0xff]
        %v5321 = vld [vmem:[%s9 + $0x11c] sm:$0xf]
        %s5322 = scalar_lea.vmem %s9, 288
        %v5323 = vld [vmem:[%s5322] sm:$0xff]
        %v5324 = vld [vmem:[%s5322 + $0x8] sm:$0xf]
        %v5325 = vld [vmem:[%s5322 + $0xc] sm:$0xff]
        %v5326 = vld [vmem:[%s5322 + $0x14] sm:$0xf]
        %v5327 = vld [vmem:[%s5322 + $0x18] sm:$0xff]
        %v5328 = vld [vmem:[%s5322 + $0x20] sm:$0xf]
        %v5329 = vld [vmem:[%s5322 + $0x24] sm:$0xff]
        %v5330 = vld [vmem:[%s5322 + $0x2c] sm:$0xf]
        %v5331 = vld [vmem:[%s5322 + $0x30] sm:$0xff]
        %v5332 = vld [vmem:[%s5322 + $0x38] sm:$0xf]
        %v5333 = vld [vmem:[%s5322 + $0x3c] sm:$0xff]
        %v5334 = vld [vmem:[%s5322 + $0x44] sm:$0xf]
        %v5335 = vld [vmem:[%s5322 + $0x48] sm:$0xff]
        %v5336 = vld [vmem:[%s5322 + $0x50] sm:$0xf]
        %v5337 = vld [vmem:[%s5322 + $0x54] sm:$0xff]
        %v5338 = vld [vmem:[%s5322 + $0x5c] sm:$0xf]
        %v5339 = vld [vmem:[%s5322 + $0x60] sm:$0xff]
        %v5340 = vld [vmem:[%s5322 + $0x68] sm:$0xf]
        %v5341 = vld [vmem:[%s5322 + $0x6c] sm:$0xff]
        %v5342 = vld [vmem:[%s5322 + $0x74] sm:$0xf]
        %v5343 = vld [vmem:[%s5322 + $0x78] sm:$0xff]
        %v5344 = vld [vmem:[%s5322 + $0x80] sm:$0xf]
        %v5345 = vld [vmem:[%s5322 + $0x84] sm:$0xff]
        %v5346 = vld [vmem:[%s5322 + $0x8c] sm:$0xf]
        %v5347 = vld [vmem:[%s5322 + $0x90] sm:$0xff]
        %v5348 = vld [vmem:[%s5322 + $0x98] sm:$0xf]
        %v5349 = vld [vmem:[%s5322 + $0x9c] sm:$0xff]
        %v5350 = vld [vmem:[%s5322 + $0xa4] sm:$0xf]
        %v5351 = vld [vmem:[%s5322 + $0xa8] sm:$0xff]
        %v5352 = vld [vmem:[%s5322 + $0xb0] sm:$0xf]
        %v5353 = vld [vmem:[%s5322 + $0xb4] sm:$0xff]
        %v5354 = vld [vmem:[%s5322 + $0xbc] sm:$0xf]
        %v5355 = vld [vmem:[%s5322 + $0xc0] sm:$0xff]
        %v5356 = vld [vmem:[%s5322 + $0xc8] sm:$0xf]
        %v5357 = vld [vmem:[%s5322 + $0xcc] sm:$0xff]
        %v5358 = vld [vmem:[%s5322 + $0xd4] sm:$0xf]
        %v5359 = vld [vmem:[%s5322 + $0xd8] sm:$0xff]
        %v5360 = vld [vmem:[%s5322 + $0xe0] sm:$0xf]
        %v5361 = vld [vmem:[%s5322 + $0xe4] sm:$0xff]
        %v5362 = vld [vmem:[%s5322 + $0xec] sm:$0xf]
        %v5363 = vld [vmem:[%s5322 + $0xf0] sm:$0xff]
        %v5364 = vld [vmem:[%s5322 + $0xf8] sm:$0xf]
        %v5365 = vld [vmem:[%s5322 + $0xfc] sm:$0xff]
        %v5366 = vld [vmem:[%s5322 + $0x104] sm:$0xf]
        %v5367 = vld [vmem:[%s5322 + $0x108] sm:$0xff]
        %v5368 = vld [vmem:[%s5322 + $0x110] sm:$0xf]
        %v5369 = vld [vmem:[%s5322 + $0x114] sm:$0xff]
        %v5370 = vld [vmem:[%s5322 + $0x11c] sm:$0xf]
        %v5372 = vshrl.u32 %v5258, 16
        %v5374 = vshll.u32 %v5258, 16
        %v5376 = vrot.slane %v5374, 1
        %v5377 = vor.u32 %v5372, %v5376
        %v5379 = vshll.u32 %v5260, 16
        %v5381 = vrot.slane %v5379, 1
        %v5382 = vsel %vm749, %v5377, %v5381
        %v5384 = vshrl.u32 %v5259, 16
        %v5386 = vshll.u32 %v5259, 16
        %v5388 = vrot.slane %v5386, 1
        %v5389 = vor.u32 %v5384, %v5388
        %v5391 = vshll.u32 %v5261, 16
        %v5393 = vrot.slane %v5391, 1
        %v5394 = vsel %vm749, %v5389, %v5393
        %v5395 = vshrl.u32 %v5260, 16
        %v5397 = vor.u32 %v5395, %v5381
        %v5399 = vshll.u32 %v5262, 16
        %v5401 = vrot.slane %v5399, 1
        %v5402 = vsel %vm749, %v5397, %v5401
        %v5403 = vshrl.u32 %v5261, 16
        %v5405 = vor.u32 %v5403, %v5393
        %v5407 = vshll.u32 %v5263, 16
        %v5409 = vrot.slane %v5407, 1
        %v5410 = vsel %vm749, %v5405, %v5409
        %v5411 = vshrl.u32 %v5262, 16
        %v5413 = vor.u32 %v5411, %v5401
        %v5415 = vshll.u32 %v5264, 16
        %v5417 = vrot.slane %v5415, 1
        %v5418 = vsel %vm749, %v5413, %v5417
        %v5419 = vshrl.u32 %v5263, 16
        %v5421 = vor.u32 %v5419, %v5409
        %v5423 = vshll.u32 %v5265, 16
        %v5425 = vrot.slane %v5423, 1
        %v5426 = vsel %vm749, %v5421, %v5425
        %v5427 = vshrl.u32 %v5264, 16
        %v5429 = vor.u32 %v5427, %v5417
        %v5431 = vshll.u32 %v5266, 16
        %v5433 = vrot.slane %v5431, 1
        %v5434 = vsel %vm749, %v5429, %v5433
        %v5435 = vshrl.u32 %v5265, 16
        %v5437 = vor.u32 %v5435, %v5425
        %v5439 = vshll.u32 %v5267, 16
        %v5441 = vrot.slane %v5439, 1
        %v5442 = vsel %vm749, %v5437, %v5441
        %v5443 = vshrl.u32 %v5266, 16
        %v5445 = vor.u32 %v5443, %v5433
        %v5447 = vshll.u32 %v5268, 16
        %v5449 = vrot.slane %v5447, 1
        %v5450 = vsel %vm749, %v5445, %v5449
        %v5451 = vshrl.u32 %v5267, 16
        %v5453 = vor.u32 %v5451, %v5441
        %v5455 = vshll.u32 %v5269, 16
        %v5457 = vrot.slane %v5455, 1
        %v5458 = vsel %vm749, %v5453, %v5457
        %v5459 = vshrl.u32 %v5268, 16
        %v5461 = vor.u32 %v5459, %v5449
        %v5463 = vshll.u32 %v5270, 16
        %v5465 = vrot.slane %v5463, 1
        %v5466 = vsel %vm749, %v5461, %v5465
        %v5467 = vshrl.u32 %v5269, 16
        %v5469 = vor.u32 %v5467, %v5457
        %v5471 = vshll.u32 %v5271, 16
        %v5473 = vrot.slane %v5471, 1
        %v5474 = vsel %vm749, %v5469, %v5473
        %v5475 = vshrl.u32 %v5270, 16
        %v5477 = vor.u32 %v5475, %v5465
        %v5479 = vshll.u32 %v5272, 16
        %v5481 = vrot.slane %v5479, 1
        %v5482 = vsel %vm749, %v5477, %v5481
        %v5483 = vshrl.u32 %v5271, 16
        %v5485 = vor.u32 %v5483, %v5473
        %v5487 = vshll.u32 %v5273, 16
        %v5489 = vrot.slane %v5487, 1
        %v5490 = vsel %vm749, %v5485, %v5489
        %v5491 = vshrl.u32 %v5272, 16
        %v5493 = vor.u32 %v5491, %v5481
        %v5494 = vshrl.u32 %v5273, 16
        %v5496 = vor.u32 %v5494, %v5489
        %v5553 = vunpack.c.l.b16 %v5323
        %v5554 = vunpack.c.h.b16 %v5323
        %v5555 = vunpack.c.l.b16 %v5324
        %v5556 = vunpack.c.l.b16 %v5325
        %v5557 = vunpack.c.h.b16 %v5325
        %v5558 = vunpack.c.l.b16 %v5326
        %v5559 = vunpack.c.l.b16 %v5327
        %v5560 = vunpack.c.h.b16 %v5327
        %v5561 = vunpack.c.l.b16 %v5328
        %v5562 = vunpack.c.l.b16 %v5329
        %v5563 = vunpack.c.h.b16 %v5329
        %v5564 = vunpack.c.l.b16 %v5330
        %v5565 = vunpack.c.l.b16 %v5331
        %v5566 = vunpack.c.h.b16 %v5331
        %v5567 = vunpack.c.l.b16 %v5332
        %v5568 = vunpack.c.l.b16 %v5333
        %v5569 = vunpack.c.h.b16 %v5333
        %v5570 = vunpack.c.l.b16 %v5334
        %v5571 = vunpack.c.l.b16 %v5335
        %v5572 = vunpack.c.h.b16 %v5335
        %v5573 = vunpack.c.l.b16 %v5336
        %v5574 = vunpack.c.l.b16 %v5337
        %v5575 = vunpack.c.h.b16 %v5337
        %v5576 = vunpack.c.l.b16 %v5338
        %v5577 = vunpack.c.l.b16 %v5339
        %v5578 = vunpack.c.h.b16 %v5339
        %v5579 = vunpack.c.l.b16 %v5340
        %v5580 = vunpack.c.l.b16 %v5341
        %v5581 = vunpack.c.h.b16 %v5341
        %v5582 = vunpack.c.l.b16 %v5342
        %v5583 = vunpack.c.l.b16 %v5343
        %v5584 = vunpack.c.h.b16 %v5343
        %v5585 = vunpack.c.l.b16 %v5344
        %v5586 = vunpack.c.l.b16 %v5345
        %v5587 = vunpack.c.h.b16 %v5345
        %v5588 = vunpack.c.l.b16 %v5346
        %v5589 = vunpack.c.l.b16 %v5347
        %v5590 = vunpack.c.h.b16 %v5347
        %v5591 = vunpack.c.l.b16 %v5348
        %v5592 = vunpack.c.l.b16 %v5349
        %v5593 = vunpack.c.h.b16 %v5349
        %v5594 = vunpack.c.l.b16 %v5350
        %v5595 = vunpack.c.l.b16 %v5351
        %v5596 = vunpack.c.h.b16 %v5351
        %v5597 = vunpack.c.l.b16 %v5352
        %v5598 = vunpack.c.l.b16 %v5353
        %v5599 = vunpack.c.h.b16 %v5353
        %v5600 = vunpack.c.l.b16 %v5354
        %v5601 = vunpack.c.l.b16 %v5355
        %v5602 = vunpack.c.h.b16 %v5355
        %v5603 = vunpack.c.l.b16 %v5356
        %v5604 = vunpack.c.l.b16 %v5357
        %v5605 = vunpack.c.h.b16 %v5357
        %v5606 = vunpack.c.l.b16 %v5358
        %v5607 = vunpack.c.l.b16 %v5359
        %v5608 = vunpack.c.h.b16 %v5359
        %v5609 = vunpack.c.l.b16 %v5360
        %v5610 = vunpack.c.l.b16 %v5361
        %v5611 = vunpack.c.h.b16 %v5361
        %v5612 = vunpack.c.l.b16 %v5362
        %v5613 = vunpack.c.l.b16 %v5363
        %v5614 = vunpack.c.h.b16 %v5363
        %v5615 = vunpack.c.l.b16 %v5364
        %v5616 = vunpack.c.l.b16 %v5365
        %v5617 = vunpack.c.h.b16 %v5365
        %v5618 = vunpack.c.l.b16 %v5366
        %v5619 = vunpack.c.l.b16 %v5367
        %v5620 = vunpack.c.h.b16 %v5367
        %v5621 = vunpack.c.l.b16 %v5368
        %v5622 = vunpack.c.l.b16 %v5369
        %v5623 = vunpack.c.h.b16 %v5369
        %v5624 = vunpack.c.l.b16 %v5370
        %v5625 = vpack.c.b16 %v5556, %v5553
        %v5626 = vpack.c.b16 %v5557, %v5554
        %v5627 = vpack.c.b16 %v5558, %v5555
        %v5628 = vpack.c.b16 %v5562, %v5559
        %v5629 = vpack.c.b16 %v5563, %v5560
        %v5630 = vpack.c.b16 %v5564, %v5561
        %v5631 = vpack.c.b16 %v5568, %v5565
        %v5632 = vpack.c.b16 %v5569, %v5566
        %v5633 = vpack.c.b16 %v5570, %v5567
        %v5634 = vpack.c.b16 %v5574, %v5571
        %v5635 = vpack.c.b16 %v5575, %v5572
        %v5636 = vpack.c.b16 %v5576, %v5573
        %v5637 = vpack.c.b16 %v5580, %v5577
        %v5638 = vpack.c.b16 %v5581, %v5578
        %v5639 = vpack.c.b16 %v5582, %v5579
        %v5640 = vpack.c.b16 %v5586, %v5583
        %v5641 = vpack.c.b16 %v5587, %v5584
        %v5642 = vpack.c.b16 %v5588, %v5585
        %v5643 = vpack.c.b16 %v5592, %v5589
        %v5644 = vpack.c.b16 %v5593, %v5590
        %v5645 = vpack.c.b16 %v5594, %v5591
        %v5646 = vpack.c.b16 %v5598, %v5595
        %v5647 = vpack.c.b16 %v5599, %v5596
        %v5648 = vpack.c.b16 %v5600, %v5597
        %v5649 = vpack.c.b16 %v5604, %v5601
        %v5650 = vpack.c.b16 %v5605, %v5602
        %v5651 = vpack.c.b16 %v5606, %v5603
        %v5652 = vpack.c.b16 %v5610, %v5607
        %v5653 = vpack.c.b16 %v5611, %v5608
        %v5654 = vpack.c.b16 %v5612, %v5609
        %v5655 = vpack.c.b16 %v5616, %v5613
        %v5656 = vpack.c.b16 %v5617, %v5614
        %v5657 = vpack.c.b16 %v5618, %v5615
        %v5658 = vpack.c.b16 %v5622, %v5619
        %v5659 = vpack.c.b16 %v5623, %v5620
        %v5660 = vpack.c.b16 %v5624, %v5621
        %vm5697 = vcmask 523264
        %v5699 = vsel %vm5697, %v5394, 0
        %v5702 = vsel %vm5697, %v5410, 0
        %v5705 = vsel %vm5697, %v5426, 0
        %v5708 = vsel %vm5697, %v5442, 0
        %v5711 = vsel %vm5697, %v5458, 0
        %v5714 = vsel %vm5697, %v5474, 0
        %v5717 = vsel %vm5697, %v5490, 0
        %v5720 = vsel %vm5697, %v5496, 0
        %5722 = vmatprep.subr.bf16.mxu0 %v5626
        %5723 = vmatpush1.bf16.msra.mxu0 %v5625
        %5724 = vmatprep.subr.bf16.mxu0 %v5629
        %5725 = vmatpush1.bf16.msra.mxu0 %v5628
        %5726 = vmatprep.subr.bf16.mxu0 %v5632
        %5727 = vmatpush1.bf16.msra.mxu0 %v5631
        %5728 = vmatprep.subr.bf16.mxu0 %v5635
        %5729 = vmatpush1.bf16.msra.mxu0 %v5634
        %5730 = vmatprep.subr.bf16.mxu0 %v5638
        %5731 = vmatpush1.bf16.msra.mxu0 %v5637
        %5732 = vmatprep.subr.bf16.mxu0 %v5641
        %5733 = vmatpush1.bf16.msra.mxu0 %v5640
        %5734 = vmatprep.subr.bf16.mxu0 %v5644
        %5735 = vmatpush1.bf16.msra.mxu0 %v5643
        %5736 = vmatprep.subr.bf16.mxu0 %v5647
        %5737 = vmatpush1.bf16.msra.mxu0 %v5646
        %5738 = vmatprep.subr.bf16.mxu0 %v5650
        %5739 = vmatpush1.bf16.msra.mxu0 %v5649
        %5740 = vmatprep.subr.bf16.mxu0 %v5653
        %5741 = vmatpush1.bf16.msra.mxu0 %v5652
        %5742 = vmatprep.subr.bf16.mxu0 %v5656
        %5743 = vmatpush1.bf16.msra.mxu0 %v5655
        %5744 = vmatprep.subr.bf16.mxu0 %v5659
        %5745 = vmatpush1.bf16.msra.mxu0 %v5658
        %5746 = vmatprep.subr.bf16.mxu0 0
        %5747 = vmatpush1.bf16.msra.mxu0 0
        %5748 = vmatprep.subr.bf16.mxu0 0
        %5749 = vmatpush1.bf16.msra.mxu0 0
        %5750 = vmatprep.subr.bf16.mxu0 0
        %5751 = vmatpush1.bf16.msra.mxu0 0
        %5752 = vmatprep.subr.bf16.mxu0 0
        %5753 = vmatpush1.bf16.msra.mxu0 0
        %5754 = vmatprep.mubr.bf16.mxu0 %v5699
        %5755 = vmatmul.mubr.bf16.gmra.mrb[0].mxu0 %v5382
        %v5756 = vpop.f32.mrb[0].mxu0
        %v5757 = vadd.f32 0.0, %v5756
        %v5758 = vpop.f32.mrb[0].mxu0
        %v5759 = vadd.f32 0.0, %v5758
        %v5760 = vpop.f32.mrb[0].mxu0
        %v5761 = vadd.f32 0.0, %v5760
        %v5762 = vpop.f32.mrb[0].mxu0
        %v5763 = vadd.f32 0.0, %v5762
        %5764 = vmatprep.mubr.bf16.mxu0 %v5702
        %5765 = vmatmul.mubr.bf16.gmra.mrb[0].mxu0 %v5402
        %v5766 = vpop.f32.mrb[0].mxu0
        %v5767 = vadd.f32 0.0, %v5766
        %v5768 = vpop.f32.mrb[0].mxu0
        %v5769 = vadd.f32 0.0, %v5768
        %v5770 = vpop.f32.mrb[0].mxu0
        %v5771 = vadd.f32 0.0, %v5770
        %v5772 = vpop.f32.mrb[0].mxu0
        %v5773 = vadd.f32 0.0, %v5772
        %5774 = vmatprep.mubr.bf16.mxu0 %v5705
        %5775 = vmatmul.mubr.bf16.gmra.mrb[0].mxu0 %v5418
        %v5776 = vpop.f32.mrb[0].mxu0
        %v5777 = vadd.f32 0.0, %v5776
        %v5778 = vpop.f32.mrb[0].mxu0
        %v5779 = vadd.f32 0.0, %v5778
        %v5780 = vpop.f32.mrb[0].mxu0
        %v5781 = vadd.f32 0.0, %v5780
        %v5782 = vpop.f32.mrb[0].mxu0
        %v5783 = vadd.f32 0.0, %v5782
        %5784 = vmatprep.mubr.bf16.mxu0 %v5708
        %5785 = vmatmul.mubr.bf16.gmra.mrb[0].mxu0 %v5434
        %v5786 = vpop.f32.mrb[0].mxu0
        %v5787 = vadd.f32 0.0, %v5786
        %v5788 = vpop.f32.mrb[0].mxu0
        %v5789 = vadd.f32 0.0, %v5788
        %v5790 = vpop.f32.mrb[0].mxu0
        %v5791 = vadd.f32 0.0, %v5790
        %v5792 = vpop.f32.mrb[0].mxu0
        %v5793 = vadd.f32 0.0, %v5792
        %5794 = vmatprep.mubr.bf16.mxu0 %v5711
        %5795 = vmatmul.mubr.bf16.gmra.mrb[0].mxu0 %v5450
        %v5796 = vpop.f32.mrb[0].mxu0
        %v5797 = vadd.f32 0.0, %v5796
        %v5798 = vpop.f32.mrb[0].mxu0
        %v5799 = vadd.f32 0.0, %v5798
        %v5800 = vpop.f32.mrb[0].mxu0
        %v5801 = vadd.f32 0.0, %v5800
        %v5802 = vpop.f32.mrb[0].mxu0
        %v5803 = vadd.f32 0.0, %v5802
        %5804 = vmatprep.mubr.bf16.mxu0 %v5714
        %5805 = vmatmul.mubr.bf16.gmra.mrb[0].mxu0 %v5466
        %v5806 = vpop.f32.mrb[0].mxu0
        %v5807 = vadd.f32 0.0, %v5806
        %v5808 = vpop.f32.mrb[0].mxu0
        %v5809 = vadd.f32 0.0, %v5808
        %v5810 = vpop.f32.mrb[0].mxu0
        %v5811 = vadd.f32 0.0, %v5810
        %v5812 = vpop.f32.mrb[0].mxu0
        %v5813 = vadd.f32 0.0, %v5812
        %5814 = vmatprep.mubr.bf16.mxu0 %v5717
        %5815 = vmatmul.mubr.bf16.gmra.mrb[0].mxu0 %v5482
        %v5816 = vpop.f32.mrb[0].mxu0
        %v5817 = vadd.f32 0.0, %v5816
        %v5818 = vpop.f32.mrb[0].mxu0
        %v5819 = vadd.f32 0.0, %v5818
        %v5820 = vpop.f32.mrb[0].mxu0
        %v5821 = vadd.f32 0.0, %v5820
        %v5822 = vpop.f32.mrb[0].mxu0
        %v5823 = vadd.f32 0.0, %v5822
        %5824 = vmatprep.mubr.bf16.mxu0 %v5720
        %5825 = vmatmul.mubr.bf16.gmra.mrb[0].mxu0 %v5493
        %v5826 = vpop.f32.mrb[0].mxu0
        %v5827 = vadd.f32 0.0, %v5826
        %v5828 = vpop.f32.mrb[0].mxu0
        %v5829 = vadd.f32 0.0, %v5828
        %v5830 = vpop.f32.mrb[0].mxu0
        %v5831 = vadd.f32 0.0, %v5830
        %v5832 = vpop.f32.mrb[0].mxu0
        %v5833 = vadd.f32 0.0, %v5832
        %5834 = vdwg.mxu0
        %5835 = vmatprep.subr.bf16.mxu0 0
        %5836 = vmatpush1.bf16.msra.mxu0 %v5627
        %5837 = vmatprep.subr.bf16.mxu0 0
        %5838 = vmatpush1.bf16.msra.mxu0 %v5630
        %5839 = vmatprep.subr.bf16.mxu0 0
        %5840 = vmatpush1.bf16.msra.mxu0 %v5633
        %5841 = vmatprep.subr.bf16.mxu0 0
        %5842 = vmatpush1.bf16.msra.mxu0 %v5636
        %5843 = vmatprep.subr.bf16.mxu0 0
        %5844 = vmatpush1.bf16.msra.mxu0 %v5639
        %5845 = vmatprep.subr.bf16.mxu0 0
        %5846 = vmatpush1.bf16.msra.mxu0 %v5642
        %5847 = vmatprep.subr.bf16.mxu0 0
        %5848 = vmatpush1.bf16.msra.mxu0 %v5645
        %5849 = vmatprep.subr.bf16.mxu0 0
        %5850 = vmatpush1.bf16.msra.mxu0 %v5648
        %5851 = vmatprep.subr.bf16.mxu0 0
        %5852 = vmatpush1.bf16.msra.mxu0 %v5651
        %5853 = vmatprep.subr.bf16.mxu0 0
        %5854 = vmatpush1.bf16.msra.mxu0 %v5654
        %5855 = vmatprep.subr.bf16.mxu0 0
        %5856 = vmatpush1.bf16.msra.mxu0 %v5657
        %5857 = vmatprep.subr.bf16.mxu0 0
        %5858 = vmatpush1.bf16.msra.mxu0 %v5660
        %5859 = vmatprep.subr.bf16.mxu0 0
        %5860 = vmatpush1.bf16.msra.mxu0 0
        %5861 = vmatprep.subr.bf16.mxu0 0
        %5862 = vmatpush1.bf16.msra.mxu0 0
        %5863 = vmatprep.subr.bf16.mxu0 0
        %5864 = vmatpush1.bf16.msra.mxu0 0
        %5865 = vmatprep.subr.bf16.mxu0 0
        %5866 = vmatpush1.bf16.msra.mxu0 0
        %5867 = vmatprep.mubr.bf16.mxu0 %v5699
        %5868 = vmatmul.mubr.bf16.gmra.mrb[0].mxu0 %v5382
        %v5869 = vpop.f32.mrb[0].mxu0
        %v5870 = vadd.f32 0.0, %v5869
        %v5871 = vpop.f32.mrb[0].mxu0
        %v5872 = vpop.f32.mrb[0].mxu0
        %v5873 = vadd.f32 0.0, %v5872
        %v5874 = vpop.f32.mrb[0].mxu0
        %5875 = vmatprep.mubr.bf16.mxu0 %v5702
        %5876 = vmatmul.mubr.bf16.gmra.mrb[0].mxu0 %v5402
        %v5877 = vpop.f32.mrb[0].mxu0
        %v5878 = vadd.f32 0.0, %v5877
        %v5879 = vpop.f32.mrb[0].mxu0
        %v5880 = vpop.f32.mrb[0].mxu0
        %v5881 = vadd.f32 0.0, %v5880
        %v5882 = vpop.f32.mrb[0].mxu0
        %5883 = vmatprep.mubr.bf16.mxu0 %v5705
        %5884 = vmatmul.mubr.bf16.gmra.mrb[0].mxu0 %v5418
        %v5885 = vpop.f32.mrb[0].mxu0
        %v5886 = vadd.f32 0.0, %v5885
        %v5887 = vpop.f32.mrb[0].mxu0
        %v5888 = vpop.f32.mrb[0].mxu0
        %v5889 = vadd.f32 0.0, %v5888
        %v5890 = vpop.f32.mrb[0].mxu0
        %5891 = vmatprep.mubr.bf16.mxu0 %v5708
        %5892 = vmatmul.mubr.bf16.gmra.mrb[0].mxu0 %v5434
        %v5893 = vpop.f32.mrb[0].mxu0
        %v5894 = vadd.f32 0.0, %v5893
        %v5895 = vpop.f32.mrb[0].mxu0
        %v5896 = vpop.f32.mrb[0].mxu0
        %v5897 = vadd.f32 0.0, %v5896
        %v5898 = vpop.f32.mrb[0].mxu0
        %5899 = vmatprep.mubr.bf16.mxu0 %v5711
        %5900 = vmatmul.mubr.bf16.gmra.mrb[0].mxu0 %v5450
        %v5901 = vpop.f32.mrb[0].mxu0
        %v5902 = vadd.f32 0.0, %v5901
        %v5903 = vpop.f32.mrb[0].mxu0
        %v5904 = vpop.f32.mrb[0].mxu0
        %v5905 = vadd.f32 0.0, %v5904
        %v5906 = vpop.f32.mrb[0].mxu0
        %5907 = vmatprep.mubr.bf16.mxu0 %v5714
        %5908 = vmatmul.mubr.bf16.gmra.mrb[0].mxu0 %v5466
        %v5909 = vpop.f32.mrb[0].mxu0
        %v5910 = vadd.f32 0.0, %v5909
        %v5911 = vpop.f32.mrb[0].mxu0
        %v5912 = vpop.f32.mrb[0].mxu0
        %v5913 = vadd.f32 0.0, %v5912
        %v5914 = vpop.f32.mrb[0].mxu0
        %5915 = vmatprep.mubr.bf16.mxu0 %v5717
        %5916 = vmatmul.mubr.bf16.gmra.mrb[0].mxu0 %v5482
        %v5917 = vpop.f32.mrb[0].mxu0
        %v5918 = vadd.f32 0.0, %v5917
        %v5919 = vpop.f32.mrb[0].mxu0
        %v5920 = vpop.f32.mrb[0].mxu0
        %v5921 = vadd.f32 0.0, %v5920
        %v5922 = vpop.f32.mrb[0].mxu0
        %5923 = vmatprep.mubr.bf16.mxu0 %v5720
        %5924 = vmatmul.mubr.bf16.gmra.mrb[0].mxu0 %v5493
        %v5925 = vpop.f32.mrb[0].mxu0
        %v5926 = vadd.f32 0.0, %v5925
        %v5927 = vpop.f32.mrb[0].mxu0
        %v5928 = vpop.f32.mrb[0].mxu0
        %v5929 = vadd.f32 0.0, %v5928
        %v5930 = vpop.f32.mrb[0].mxu0
        %5931 = vdwg.mxu0
        %v5980 = vunpack.c.l.b16 %v5274
        %v5981 = vunpack.c.h.b16 %v5274
        %v5982 = vunpack.c.l.b16 %v5275
        %v5983 = vunpack.c.l.b16 %v5276
        %v5984 = vunpack.c.h.b16 %v5276
        %v5985 = vunpack.c.l.b16 %v5277
        %v5986 = vunpack.c.l.b16 %v5278
        %v5987 = vunpack.c.h.b16 %v5278
        %v5988 = vunpack.c.l.b16 %v5279
        %v5989 = vunpack.c.l.b16 %v5280
        %v5990 = vunpack.c.h.b16 %v5280
        %v5991 = vunpack.c.l.b16 %v5281
        %v5992 = vunpack.c.l.b16 %v5282
        %v5993 = vunpack.c.h.b16 %v5282
        %v5994 = vunpack.c.l.b16 %v5283
        %v5995 = vunpack.c.l.b16 %v5284
        %v5996 = vunpack.c.h.b16 %v5284
        %v5997 = vunpack.c.l.b16 %v5285
        %v5998 = vunpack.c.l.b16 %v5286
        %v5999 = vunpack.c.h.b16 %v5286
        %v6000 = vunpack.c.l.b16 %v5287
        %v6001 = vunpack.c.l.b16 %v5288
        %v6002 = vunpack.c.h.b16 %v5288
        %v6003 = vunpack.c.l.b16 %v5289
        %v6004 = vunpack.c.l.b16 %v5290
        %v6005 = vunpack.c.h.b16 %v5290
        %v6006 = vunpack.c.l.b16 %v5291
        %v6007 = vunpack.c.l.b16 %v5292
        %v6008 = vunpack.c.h.b16 %v5292
        %v6009 = vunpack.c.l.b16 %v5293
        %v6010 = vunpack.c.l.b16 %v5294
        %v6011 = vunpack.c.h.b16 %v5294
        %v6012 = vunpack.c.l.b16 %v5295
        %v6013 = vunpack.c.l.b16 %v5296
        %v6014 = vunpack.c.h.b16 %v5296
        %v6015 = vunpack.c.l.b16 %v5297
        %v6016 = vunpack.c.l.b16 %v5298
        %v6017 = vunpack.c.h.b16 %v5298
        %v6018 = vunpack.c.l.b16 %v5299
        %v6019 = vunpack.c.l.b16 %v5300
        %v6020 = vunpack.c.h.b16 %v5300
        %v6021 = vunpack.c.l.b16 %v5301
        %v6022 = vunpack.c.l.b16 %v5302
        %v6023 = vunpack.c.h.b16 %v5302
        %v6024 = vunpack.c.l.b16 %v5303
        %v6025 = vunpack.c.l.b16 %v5304
        %v6026 = vunpack.c.h.b16 %v5304
        %v6027 = vunpack.c.l.b16 %v5305
        %v6028 = vunpack.c.l.b16 %v5306
        %v6029 = vunpack.c.h.b16 %v5306
        %v6030 = vunpack.c.l.b16 %v5307
        %v6031 = vunpack.c.l.b16 %v5308
        %v6032 = vunpack.c.h.b16 %v5308
        %v6033 = vunpack.c.l.b16 %v5309
        %v6034 = vunpack.c.l.b16 %v5310
        %v6035 = vunpack.c.h.b16 %v5310
        %v6036 = vunpack.c.l.b16 %v5311
        %v6037 = vunpack.c.l.b16 %v5312
        %v6038 = vunpack.c.h.b16 %v5312
        %v6039 = vunpack.c.l.b16 %v5313
        %v6040 = vunpack.c.l.b16 %v5314
        %v6041 = vunpack.c.h.b16 %v5314
        %v6042 = vunpack.c.l.b16 %v5315
        %v6043 = vunpack.c.l.b16 %v5316
        %v6044 = vunpack.c.h.b16 %v5316
        %v6045 = vunpack.c.l.b16 %v5317
        %v6046 = vunpack.c.l.b16 %v5318
        %v6047 = vunpack.c.h.b16 %v5318
        %v6048 = vunpack.c.l.b16 %v5319
        %v6049 = vunpack.c.l.b16 %v5320
        %v6050 = vunpack.c.h.b16 %v5320
        %v6051 = vunpack.c.l.b16 %v5321
        %v6052 = vpack.c.b16 %v5983, %v5980
        %v6053 = vpack.c.b16 %v5984, %v5981
        %v6054 = vpack.c.b16 %v5985, %v5982
        %v6055 = vpack.c.b16 %v5989, %v5986
        %v6056 = vpack.c.b16 %v5990, %v5987
        %v6057 = vpack.c.b16 %v5991, %v5988
        %v6058 = vpack.c.b16 %v5995, %v5992
        %v6059 = vpack.c.b16 %v5996, %v5993
        %v6060 = vpack.c.b16 %v5997, %v5994
        %v6061 = vpack.c.b16 %v6001, %v5998
        %v6062 = vpack.c.b16 %v6002, %v5999
        %v6063 = vpack.c.b16 %v6003, %v6000
        %v6064 = vpack.c.b16 %v6007, %v6004
        %v6065 = vpack.c.b16 %v6008, %v6005
        %v6066 = vpack.c.b16 %v6009, %v6006
        %v6067 = vpack.c.b16 %v6013, %v6010
        %v6068 = vpack.c.b16 %v6014, %v6011
        %v6069 = vpack.c.b16 %v6015, %v6012
        %v6070 = vpack.c.b16 %v6019, %v6016
        %v6071 = vpack.c.b16 %v6020, %v6017
        %v6072 = vpack.c.b16 %v6021, %v6018
        %v6073 = vpack.c.b16 %v6025, %v6022
        %v6074 = vpack.c.b16 %v6026, %v6023
        %v6075 = vpack.c.b16 %v6027, %v6024
        %v6076 = vpack.c.b16 %v6031, %v6028
        %v6077 = vpack.c.b16 %v6032, %v6029
        %v6078 = vpack.c.b16 %v6033, %v6030
        %v6079 = vpack.c.b16 %v6037, %v6034
        %v6080 = vpack.c.b16 %v6038, %v6035
        %v6081 = vpack.c.b16 %v6039, %v6036
        %v6082 = vpack.c.b16 %v6043, %v6040
        %v6083 = vpack.c.b16 %v6044, %v6041
        %v6084 = vpack.c.b16 %v6045, %v6042
        %v6085 = vpack.c.b16 %v6049, %v6046
        %v6086 = vpack.c.b16 %v6050, %v6047
        %v6087 = vpack.c.b16 %v6051, %v6048
        %v6124 = vsel %vm5697, %v5259, 0
        %v6126 = vsel %vm5697, %v5261, 0
        %v6128 = vsel %vm5697, %v5263, 0
        %v6130 = vsel %vm5697, %v5265, 0
        %v6132 = vsel %vm5697, %v5267, 0
        %v6134 = vsel %vm5697, %v5269, 0
        %v6136 = vsel %vm5697, %v5271, 0
        %v6138 = vsel %vm5697, %v5273, 0
        %6140 = vmatprep.subr.bf16.mxu0 %v6053
        %6141 = vmatpush1.bf16.msra.mxu0 %v6052
        %6142 = vmatprep.subr.bf16.mxu0 %v6056
        %6143 = vmatpush1.bf16.msra.mxu0 %v6055
        %6144 = vmatprep.subr.bf16.mxu0 %v6059
        %6145 = vmatpush1.bf16.msra.mxu0 %v6058
        %6146 = vmatprep.subr.bf16.mxu0 %v6062
        %6147 = vmatpush1.bf16.msra.mxu0 %v6061
        %6148 = vmatprep.subr.bf16.mxu0 %v6065
        %6149 = vmatpush1.bf16.msra.mxu0 %v6064
        %6150 = vmatprep.subr.bf16.mxu0 %v6068
        %6151 = vmatpush1.bf16.msra.mxu0 %v6067
        %6152 = vmatprep.subr.bf16.mxu0 %v6071
        %6153 = vmatpush1.bf16.msra.mxu0 %v6070
        %6154 = vmatprep.subr.bf16.mxu0 %v6074
        %6155 = vmatpush1.bf16.msra.mxu0 %v6073
        %6156 = vmatprep.subr.bf16.mxu0 %v6077
        %6157 = vmatpush1.bf16.msra.mxu0 %v6076
        %6158 = vmatprep.subr.bf16.mxu0 %v6080
        %6159 = vmatpush1.bf16.msra.mxu0 %v6079
        %6160 = vmatprep.subr.bf16.mxu0 %v6083
        %6161 = vmatpush1.bf16.msra.mxu0 %v6082
        %6162 = vmatprep.subr.bf16.mxu0 %v6086
        %6163 = vmatpush1.bf16.msra.mxu0 %v6085
        %6164 = vmatprep.subr.bf16.mxu0 0
        %6165 = vmatpush1.bf16.msra.mxu0 0
        %6166 = vmatprep.subr.bf16.mxu0 0
        %6167 = vmatpush1.bf16.msra.mxu0 0
        %6168 = vmatprep.subr.bf16.mxu0 0
        %6169 = vmatpush1.bf16.msra.mxu0 0
        %6170 = vmatprep.subr.bf16.mxu0 0
        %6171 = vmatpush1.bf16.msra.mxu0 0
        %6172 = vmatprep.mubr.bf16.mxu0 %v6124
        %6173 = vmatmul.mubr.bf16.gmra.mrb[0].mxu0 %v5258
        %v6174 = vpop.f32.mrb[0].mxu0
        %v6175 = vadd.f32 %v5757, %v6174
        %v6176 = vpop.f32.mrb[0].mxu0
        %v6177 = vadd.f32 %v5759, %v6176
        %v6178 = vpop.f32.mrb[0].mxu0
        %v6179 = vadd.f32 %v5761, %v6178
        %v6180 = vpop.f32.mrb[0].mxu0
        %v6181 = vadd.f32 %v5763, %v6180
        %6182 = vmatprep.mubr.bf16.mxu0 %v6126
        %6183 = vmatmul.mubr.bf16.gmra.mrb[0].mxu0 %v5260
        %v6184 = vpop.f32.mrb[0].mxu0
        %v6185 = vadd.f32 %v5767, %v6184
        %v6186 = vpop.f32.mrb[0].mxu0
        %v6187 = vadd.f32 %v5769, %v6186
        %v6188 = vpop.f32.mrb[0].mxu0
        %v6189 = vadd.f32 %v5771, %v6188
        %v6190 = vpop.f32.mrb[0].mxu0
        %v6191 = vadd.f32 %v5773, %v6190
        %6192 = vmatprep.mubr.bf16.mxu0 %v6128
        %6193 = vmatmul.mubr.bf16.gmra.mrb[0].mxu0 %v5262
        %v6194 = vpop.f32.mrb[0].mxu0
        %v6195 = vadd.f32 %v5777, %v6194
        %v6196 = vpop.f32.mrb[0].mxu0
        %v6197 = vadd.f32 %v5779, %v6196
        %v6198 = vpop.f32.mrb[0].mxu0
        %v6199 = vadd.f32 %v5781, %v6198
        %v6200 = vpop.f32.mrb[0].mxu0
        %v6201 = vadd.f32 %v5783, %v6200
        %6202 = vmatprep.mubr.bf16.mxu0 %v6130
        %6203 = vmatmul.mubr.bf16.gmra.mrb[0].mxu0 %v5264
        %v6204 = vpop.f32.mrb[0].mxu0
        %v6205 = vadd.f32 %v5787, %v6204
        %v6206 = vpop.f32.mrb[0].mxu0
        %v6207 = vadd.f32 %v5789, %v6206
        %v6208 = vpop.f32.mrb[0].mxu0
        %v6209 = vadd.f32 %v5791, %v6208
        %v6210 = vpop.f32.mrb[0].mxu0
        %v6211 = vadd.f32 %v5793, %v6210
        %6212 = vmatprep.mubr.bf16.mxu0 %v6132
        %6213 = vmatmul.mubr.bf16.gmra.mrb[0].mxu0 %v5266
        %v6214 = vpop.f32.mrb[0].mxu0
        %v6215 = vadd.f32 %v5797, %v6214
        %v6216 = vpop.f32.mrb[0].mxu0
        %v6217 = vadd.f32 %v5799, %v6216
        %v6218 = vpop.f32.mrb[0].mxu0
        %v6219 = vadd.f32 %v5801, %v6218
        %v6220 = vpop.f32.mrb[0].mxu0
        %v6221 = vadd.f32 %v5803, %v6220
        %6222 = vmatprep.mubr.bf16.mxu0 %v6134
        %6223 = vmatmul.mubr.bf16.gmra.mrb[0].mxu0 %v5268
        %v6224 = vpop.f32.mrb[0].mxu0
        %v6225 = vadd.f32 %v5807, %v6224
        %v6226 = vpop.f32.mrb[0].mxu0
        %v6227 = vadd.f32 %v5809, %v6226
        %v6228 = vpop.f32.mrb[0].mxu0
        %v6229 = vadd.f32 %v5811, %v6228
        %v6230 = vpop.f32.mrb[0].mxu0
        %v6231 = vadd.f32 %v5813, %v6230
        %6232 = vmatprep.mubr.bf16.mxu0 %v6136
        %6233 = vmatmul.mubr.bf16.gmra.mrb[0].mxu0 %v5270
        %v6234 = vpop.f32.mrb[0].mxu0
        %v6235 = vadd.f32 %v5817, %v6234
        %v6236 = vpop.f32.mrb[0].mxu0
        %v6237 = vadd.f32 %v5819, %v6236
        %v6238 = vpop.f32.mrb[0].mxu0
        %v6239 = vadd.f32 %v5821, %v6238
        %v6240 = vpop.f32.mrb[0].mxu0
        %v6241 = vadd.f32 %v5823, %v6240
        %6242 = vmatprep.mubr.bf16.mxu0 %v6138
        %6243 = vmatmul.mubr.bf16.gmra.mrb[0].mxu0 %v5272
        %v6244 = vpop.f32.mrb[0].mxu0
        %v6245 = vadd.f32 %v5827, %v6244
        %v6246 = vpop.f32.mrb[0].mxu0
        %v6247 = vadd.f32 %v5829, %v6246
        %v6248 = vpop.f32.mrb[0].mxu0
        %v6249 = vadd.f32 %v5831, %v6248
        %v6250 = vpop.f32.mrb[0].mxu0
        %v6251 = vadd.f32 %v5833, %v6250
        %6252 = vdwg.mxu0
        %6253 = vmatprep.subr.bf16.mxu0 0
        %6254 = vmatpush1.bf16.msra.mxu0 %v6054
        %6255 = vmatprep.subr.bf16.mxu0 0
        %6256 = vmatpush1.bf16.msra.mxu0 %v6057
        %6257 = vmatprep.subr.bf16.mxu0 0
        %6258 = vmatpush1.bf16.msra.mxu0 %v6060
        %6259 = vmatprep.subr.bf16.mxu0 0
        %6260 = vmatpush1.bf16.msra.mxu0 %v6063
        %6261 = vmatprep.subr.bf16.mxu0 0
        %6262 = vmatpush1.bf16.msra.mxu0 %v6066
        %6263 = vmatprep.subr.bf16.mxu0 0
        %6264 = vmatpush1.bf16.msra.mxu0 %v6069
        %6265 = vmatprep.subr.bf16.mxu0 0
        %6266 = vmatpush1.bf16.msra.mxu0 %v6072
        %6267 = vmatprep.subr.bf16.mxu0 0
        %6268 = vmatpush1.bf16.msra.mxu0 %v6075
        %6269 = vmatprep.subr.bf16.mxu0 0
        %6270 = vmatpush1.bf16.msra.mxu0 %v6078
        %6271 = vmatprep.subr.bf16.mxu0 0
        %6272 = vmatpush1.bf16.msra.mxu0 %v6081
        %6273 = vmatprep.subr.bf16.mxu0 0
        %6274 = vmatpush1.bf16.msra.mxu0 %v6084
        %6275 = vmatprep.subr.bf16.mxu0 0
        %6276 = vmatpush1.bf16.msra.mxu0 %v6087
        %6277 = vmatprep.subr.bf16.mxu0 0
        %6278 = vmatpush1.bf16.msra.mxu0 0
        %6279 = vmatprep.subr.bf16.mxu0 0
        %6280 = vmatpush1.bf16.msra.mxu0 0
        %6281 = vmatprep.subr.bf16.mxu0 0
        %6282 = vmatpush1.bf16.msra.mxu0 0
        %6283 = vmatprep.subr.bf16.mxu0 0
        %6284 = vmatpush1.bf16.msra.mxu0 0
        %6285 = vmatprep.mubr.bf16.mxu0 %v6124
        %6286 = vmatmul.mubr.bf16.gmra.mrb[0].mxu0 %v5258
        %v6287 = vpop.f32.mrb[0].mxu0
        %v6288 = vadd.f32 %v5870, %v6287
        %v6289 = vpop.f32.mrb[0].mxu0
        %v6290 = vpop.f32.mrb[0].mxu0
        %v6291 = vadd.f32 %v5873, %v6290
        %v6292 = vpop.f32.mrb[0].mxu0
        %6293 = vmatprep.mubr.bf16.mxu0 %v6126
        %6294 = vmatmul.mubr.bf16.gmra.mrb[0].mxu0 %v5260
        %v6295 = vpop.f32.mrb[0].mxu0
        %v6296 = vadd.f32 %v5878, %v6295
        %v6297 = vpop.f32.mrb[0].mxu0
        %v6298 = vpop.f32.mrb[0].mxu0
        %v6299 = vadd.f32 %v5881, %v6298
        %v6300 = vpop.f32.mrb[0].mxu0
        %6301 = vmatprep.mubr.bf16.mxu0 %v6128
        %6302 = vmatmul.mubr.bf16.gmra.mrb[0].mxu0 %v5262
        %v6303 = vpop.f32.mrb[0].mxu0
        %v6304 = vadd.f32 %v5886, %v6303
        %v6305 = vpop.f32.mrb[0].mxu0
        %v6306 = vpop.f32.mrb[0].mxu0
        %v6307 = vadd.f32 %v5889, %v6306
        %v6308 = vpop.f32.mrb[0].mxu0
        %6309 = vmatprep.mubr.bf16.mxu0 %v6130
        %6310 = vmatmul.mubr.bf16.gmra.mrb[0].mxu0 %v5264
        %v6311 = vpop.f32.mrb[0].mxu0
        %v6312 = vadd.f32 %v5894, %v6311
        %v6313 = vpop.f32.mrb[0].mxu0
        %v6314 = vpop.f32.mrb[0].mxu0
        %v6315 = vadd.f32 %v5897, %v6314
        %v6316 = vpop.f32.mrb[0].mxu0
        %6317 = vmatprep.mubr.bf16.mxu0 %v6132
        %6318 = vmatmul.mubr.bf16.gmra.mrb[0].mxu0 %v5266
        %v6319 = vpop.f32.mrb[0].mxu0
        %v6320 = vadd.f32 %v5902, %v6319
        %v6321 = vpop.f32.mrb[0].mxu0
        %v6322 = vpop.f32.mrb[0].mxu0
        %v6323 = vadd.f32 %v5905, %v6322
        %v6324 = vpop.f32.mrb[0].mxu0
        %6325 = vmatprep.mubr.bf16.mxu0 %v6134
        %6326 = vmatmul.mubr.bf16.gmra.mrb[0].mxu0 %v5268
        %v6327 = vpop.f32.mrb[0].mxu0
        %v6328 = vadd.f32 %v5910, %v6327
        %v6329 = vpop.f32.mrb[0].mxu0
        %v6330 = vpop.f32.mrb[0].mxu0
        %v6331 = vadd.f32 %v5913, %v6330
        %v6332 = vpop.f32.mrb[0].mxu0
        %6333 = vmatprep.mubr.bf16.mxu0 %v6136
        %6334 = vmatmul.mubr.bf16.gmra.mrb[0].mxu0 %v5270
        %v6335 = vpop.f32.mrb[0].mxu0
        %v6336 = vadd.f32 %v5918, %v6335
        %v6337 = vpop.f32.mrb[0].mxu0
        %v6338 = vpop.f32.mrb[0].mxu0
        %v6339 = vadd.f32 %v5921, %v6338
        %v6340 = vpop.f32.mrb[0].mxu0
        %6341 = vmatprep.mubr.bf16.mxu0 %v6138
        %6342 = vmatmul.mubr.bf16.gmra.mrb[0].mxu0 %v5272
        %v6343 = vpop.f32.mrb[0].mxu0
        %v6344 = vadd.f32 %v5926, %v6343
        %v6345 = vpop.f32.mrb[0].mxu0
        %v6346 = vpop.f32.mrb[0].mxu0
        %v6347 = vadd.f32 %v5929, %v6346
        %v6348 = vpop.f32.mrb[0].mxu0
        %6349 = vdwg.mxu0
        %s6350 = scalar_lea.vmem %s9, 576
        %v6351 = vld [vmem:[%s6350] sm:$0xff]
        %v6352 = vld [vmem:[%s6350 + $0x8] sm:$0xf]
        %v6353 = vld [vmem:[%s6350 + $0xc] sm:$0xff]
        %v6354 = vld [vmem:[%s6350 + $0x14] sm:$0xf]
        %v6355 = vld [vmem:[%s6350 + $0x18] sm:$0xff]
        %v6356 = vld [vmem:[%s6350 + $0x20] sm:$0xf]
        %v6357 = vld [vmem:[%s6350 + $0x24] sm:$0xff]
        %v6358 = vld [vmem:[%s6350 + $0x2c] sm:$0xf]
        %v6359 = vld [vmem:[%s6350 + $0x30] sm:$0xff]
        %v6360 = vld [vmem:[%s6350 + $0x38] sm:$0xf]
        %v6361 = vld [vmem:[%s6350 + $0x3c] sm:$0xff]
        %v6362 = vld [vmem:[%s6350 + $0x44] sm:$0xf]
        %v6363 = vld [vmem:[%s6350 + $0x48] sm:$0xff]
        %v6364 = vld [vmem:[%s6350 + $0x50] sm:$0xf]
        %v6365 = vld [vmem:[%s6350 + $0x54] sm:$0xff]
        %v6366 = vld [vmem:[%s6350 + $0x5c] sm:$0xf]
        %v6367 = vld [vmem:[%s6350 + $0x60] sm:$0xff]
        %v6368 = vld [vmem:[%s6350 + $0x68] sm:$0xf]
        %v6369 = vld [vmem:[%s6350 + $0x6c] sm:$0xff]
        %v6370 = vld [vmem:[%s6350 + $0x74] sm:$0xf]
        %v6371 = vld [vmem:[%s6350 + $0x78] sm:$0xff]
        %v6372 = vld [vmem:[%s6350 + $0x80] sm:$0xf]
        %v6373 = vld [vmem:[%s6350 + $0x84] sm:$0xff]
        %v6374 = vld [vmem:[%s6350 + $0x8c] sm:$0xf]
        %v6375 = vld [vmem:[%s6350 + $0x90] sm:$0xff]
        %v6376 = vld [vmem:[%s6350 + $0x98] sm:$0xf]
        %v6377 = vld [vmem:[%s6350 + $0x9c] sm:$0xff]
        %v6378 = vld [vmem:[%s6350 + $0xa4] sm:$0xf]
        %v6379 = vld [vmem:[%s6350 + $0xa8] sm:$0xff]
        %v6380 = vld [vmem:[%s6350 + $0xb0] sm:$0xf]
        %v6381 = vld [vmem:[%s6350 + $0xb4] sm:$0xff]
        %v6382 = vld [vmem:[%s6350 + $0xbc] sm:$0xf]
        %v6383 = vld [vmem:[%s6350 + $0xc0] sm:$0xff]
        %v6384 = vld [vmem:[%s6350 + $0xc8] sm:$0xf]
        %v6385 = vld [vmem:[%s6350 + $0xcc] sm:$0xff]
        %v6386 = vld [vmem:[%s6350 + $0xd4] sm:$0xf]
        %v6387 = vld [vmem:[%s6350 + $0xd8] sm:$0xff]
        %v6388 = vld [vmem:[%s6350 + $0xe0] sm:$0xf]
        %v6389 = vld [vmem:[%s6350 + $0xe4] sm:$0xff]
        %v6390 = vld [vmem:[%s6350 + $0xec] sm:$0xf]
        %v6391 = vld [vmem:[%s6350 + $0xf0] sm:$0xff]
        %v6392 = vld [vmem:[%s6350 + $0xf8] sm:$0xf]
        %v6393 = vld [vmem:[%s6350 + $0xfc] sm:$0xff]
        %v6394 = vld [vmem:[%s6350 + $0x104] sm:$0xf]
        %v6395 = vld [vmem:[%s6350 + $0x108] sm:$0xff]
        %v6396 = vld [vmem:[%s6350 + $0x110] sm:$0xf]
        %v6397 = vld [vmem:[%s6350 + $0x114] sm:$0xff]
        %v6398 = vld [vmem:[%s6350 + $0x11c] sm:$0xf]
        %v6415 = vrot.slane %v5258, 1
        %v6416 = vrot.slane %v5260, 1
        %v6417 = vsel %vm1344, %v6415, %v6416
        %v6418 = vrot.slane %v5259, 1
        %v6419 = vrot.slane %v5261, 1
        %v6420 = vsel %vm1344, %v6418, %v6419
        %v6421 = vrot.slane %v5262, 1
        %v6422 = vsel %vm1344, %v6416, %v6421
        %v6423 = vrot.slane %v5263, 1
        %v6424 = vsel %vm1344, %v6419, %v6423
        %v6425 = vrot.slane %v5264, 1
        %v6426 = vsel %vm1344, %v6421, %v6425
        %v6427 = vrot.slane %v5265, 1
        %v6428 = vsel %vm1344, %v6423, %v6427
        %v6429 = vrot.slane %v5266, 1
        %v6430 = vsel %vm1344, %v6425, %v6429
        %v6431 = vrot.slane %v5267, 1
        %v6432 = vsel %vm1344, %v6427, %v6431
        %v6433 = vrot.slane %v5268, 1
        %v6434 = vsel %vm1344, %v6429, %v6433
        %v6435 = vrot.slane %v5269, 1
        %v6436 = vsel %vm1344, %v6431, %v6435
        %v6437 = vrot.slane %v5270, 1
        %v6438 = vsel %vm1344, %v6433, %v6437
        %v6439 = vrot.slane %v5271, 1
        %v6440 = vsel %vm1344, %v6435, %v6439
        %v6441 = vrot.slane %v5272, 1
        %v6442 = vsel %vm1344, %v6437, %v6441
        %v6443 = vrot.slane %v5273, 1
        %v6444 = vsel %vm1344, %v6439, %v6443
        %v6501 = vunpack.c.l.b16 %v6351
        %v6502 = vunpack.c.h.b16 %v6351
        %v6503 = vunpack.c.l.b16 %v6352
        %v6504 = vunpack.c.l.b16 %v6353
        %v6505 = vunpack.c.h.b16 %v6353
        %v6506 = vunpack.c.l.b16 %v6354
        %v6507 = vunpack.c.l.b16 %v6355
        %v6508 = vunpack.c.h.b16 %v6355
        %v6509 = vunpack.c.l.b16 %v6356
        %v6510 = vunpack.c.l.b16 %v6357
        %v6511 = vunpack.c.h.b16 %v6357
        %v6512 = vunpack.c.l.b16 %v6358
        %v6513 = vunpack.c.l.b16 %v6359
        %v6514 = vunpack.c.h.b16 %v6359
        %v6515 = vunpack.c.l.b16 %v6360
        %v6516 = vunpack.c.l.b16 %v6361
        %v6517 = vunpack.c.h.b16 %v6361
        %v6518 = vunpack.c.l.b16 %v6362
        %v6519 = vunpack.c.l.b16 %v6363
        %v6520 = vunpack.c.h.b16 %v6363
        %v6521 = vunpack.c.l.b16 %v6364
        %v6522 = vunpack.c.l.b16 %v6365
        %v6523 = vunpack.c.h.b16 %v6365
        %v6524 = vunpack.c.l.b16 %v6366
        %v6525 = vunpack.c.l.b16 %v6367
        %v6526 = vunpack.c.h.b16 %v6367
        %v6527 = vunpack.c.l.b16 %v6368
        %v6528 = vunpack.c.l.b16 %v6369
        %v6529 = vunpack.c.h.b16 %v6369
        %v6530 = vunpack.c.l.b16 %v6370
        %v6531 = vunpack.c.l.b16 %v6371
        %v6532 = vunpack.c.h.b16 %v6371
        %v6533 = vunpack.c.l.b16 %v6372
        %v6534 = vunpack.c.l.b16 %v6373
        %v6535 = vunpack.c.h.b16 %v6373
        %v6536 = vunpack.c.l.b16 %v6374
        %v6537 = vunpack.c.l.b16 %v6375
        %v6538 = vunpack.c.h.b16 %v6375
        %v6539 = vunpack.c.l.b16 %v6376
        %v6540 = vunpack.c.l.b16 %v6377
        %v6541 = vunpack.c.h.b16 %v6377
        %v6542 = vunpack.c.l.b16 %v6378
        %v6543 = vunpack.c.l.b16 %v6379
        %v6544 = vunpack.c.h.b16 %v6379
        %v6545 = vunpack.c.l.b16 %v6380
        %v6546 = vunpack.c.l.b16 %v6381
        %v6547 = vunpack.c.h.b16 %v6381
        %v6548 = vunpack.c.l.b16 %v6382
        %v6549 = vunpack.c.l.b16 %v6383
        %v6550 = vunpack.c.h.b16 %v6383
        %v6551 = vunpack.c.l.b16 %v6384
        %v6552 = vunpack.c.l.b16 %v6385
        %v6553 = vunpack.c.h.b16 %v6385
        %v6554 = vunpack.c.l.b16 %v6386
        %v6555 = vunpack.c.l.b16 %v6387
        %v6556 = vunpack.c.h.b16 %v6387
        %v6557 = vunpack.c.l.b16 %v6388
        %v6558 = vunpack.c.l.b16 %v6389
        %v6559 = vunpack.c.h.b16 %v6389
        %v6560 = vunpack.c.l.b16 %v6390
        %v6561 = vunpack.c.l.b16 %v6391
        %v6562 = vunpack.c.h.b16 %v6391
        %v6563 = vunpack.c.l.b16 %v6392
        %v6564 = vunpack.c.l.b16 %v6393
        %v6565 = vunpack.c.h.b16 %v6393
        %v6566 = vunpack.c.l.b16 %v6394
        %v6567 = vunpack.c.l.b16 %v6395
        %v6568 = vunpack.c.h.b16 %v6395
        %v6569 = vunpack.c.l.b16 %v6396
        %v6570 = vunpack.c.l.b16 %v6397
        %v6571 = vunpack.c.h.b16 %v6397
        %v6572 = vunpack.c.l.b16 %v6398
        %v6573 = vpack.c.b16 %v6504, %v6501
        %v6574 = vpack.c.b16 %v6505, %v6502
        %v6575 = vpack.c.b16 %v6506, %v6503
        %v6576 = vpack.c.b16 %v6510, %v6507
        %v6577 = vpack.c.b16 %v6511, %v6508
        %v6578 = vpack.c.b16 %v6512, %v6509
        %v6579 = vpack.c.b16 %v6516, %v6513
        %v6580 = vpack.c.b16 %v6517, %v6514
        %v6581 = vpack.c.b16 %v6518, %v6515
        %v6582 = vpack.c.b16 %v6522, %v6519
        %v6583 = vpack.c.b16 %v6523, %v6520
        %v6584 = vpack.c.b16 %v6524, %v6521
        %v6585 = vpack.c.b16 %v6528, %v6525
        %v6586 = vpack.c.b16 %v6529, %v6526
        %v6587 = vpack.c.b16 %v6530, %v6527
        %v6588 = vpack.c.b16 %v6534, %v6531
        %v6589 = vpack.c.b16 %v6535, %v6532
        %v6590 = vpack.c.b16 %v6536, %v6533
        %v6591 = vpack.c.b16 %v6540, %v6537
        %v6592 = vpack.c.b16 %v6541, %v6538
        %v6593 = vpack.c.b16 %v6542, %v6539
        %v6594 = vpack.c.b16 %v6546, %v6543
        %v6595 = vpack.c.b16 %v6547, %v6544
        %v6596 = vpack.c.b16 %v6548, %v6545
        %v6597 = vpack.c.b16 %v6552, %v6549
        %v6598 = vpack.c.b16 %v6553, %v6550
        %v6599 = vpack.c.b16 %v6554, %v6551
        %v6600 = vpack.c.b16 %v6558, %v6555
        %v6601 = vpack.c.b16 %v6559, %v6556
        %v6602 = vpack.c.b16 %v6560, %v6557
        %v6603 = vpack.c.b16 %v6564, %v6561
        %v6604 = vpack.c.b16 %v6565, %v6562
        %v6605 = vpack.c.b16 %v6566, %v6563
        %v6606 = vpack.c.b16 %v6570, %v6567
        %v6607 = vpack.c.b16 %v6571, %v6568
        %v6608 = vpack.c.b16 %v6572, %v6569
        %v6646 = vsel %vm5697, %v6420, 0
        %v6649 = vsel %vm5697, %v6424, 0
        %v6652 = vsel %vm5697, %v6428, 0
        %v6655 = vsel %vm5697, %v6432, 0
        %v6658 = vsel %vm5697, %v6436, 0
        %v6661 = vsel %vm5697, %v6440, 0
        %v6664 = vsel %vm5697, %v6444, 0
        %v6667 = vsel %vm5697, %v6443, 0
        %6669 = vmatprep.subr.bf16.mxu0 %v6574
        %6670 = vmatpush1.bf16.msra.mxu0 %v6573
        %6671 = vmatprep.subr.bf16.mxu0 %v6577
        %6672 = vmatpush1.bf16.msra.mxu0 %v6576
        %6673 = vmatprep.subr.bf16.mxu0 %v6580
        %6674 = vmatpush1.bf16.msra.mxu0 %v6579
        %6675 = vmatprep.subr.bf16.mxu0 %v6583
        %6676 = vmatpush1.bf16.msra.mxu0 %v6582
        %6677 = vmatprep.subr.bf16.mxu0 %v6586
        %6678 = vmatpush1.bf16.msra.mxu0 %v6585
        %6679 = vmatprep.subr.bf16.mxu0 %v6589
        %6680 = vmatpush1.bf16.msra.mxu0 %v6588
        %6681 = vmatprep.subr.bf16.mxu0 %v6592
        %6682 = vmatpush1.bf16.msra.mxu0 %v6591
        %6683 = vmatprep.subr.bf16.mxu0 %v6595
        %6684 = vmatpush1.bf16.msra.mxu0 %v6594
        %6685 = vmatprep.subr.bf16.mxu0 %v6598
        %6686 = vmatpush1.bf16.msra.mxu0 %v6597
        %6687 = vmatprep.subr.bf16.mxu0 %v6601
        %6688 = vmatpush1.bf16.msra.mxu0 %v6600
        %6689 = vmatprep.subr.bf16.mxu0 %v6604
        %6690 = vmatpush1.bf16.msra.mxu0 %v6603
        %6691 = vmatprep.subr.bf16.mxu0 %v6607
        %6692 = vmatpush1.bf16.msra.mxu0 %v6606
        %6693 = vmatprep.subr.bf16.mxu0 0
        %6694 = vmatpush1.bf16.msra.mxu0 0
        %6695 = vmatprep.subr.bf16.mxu0 0
        %6696 = vmatpush1.bf16.msra.mxu0 0
        %6697 = vmatprep.subr.bf16.mxu0 0
        %6698 = vmatpush1.bf16.msra.mxu0 0
        %6699 = vmatprep.subr.bf16.mxu0 0
        %6700 = vmatpush1.bf16.msra.mxu0 0
        %6701 = vmatprep.mubr.bf16.mxu0 %v6646
        %6702 = vmatmul.mubr.bf16.gmra.mrb[0].mxu0 %v6417
        %v6703 = vpop.f32.mrb[0].mxu0
        %v6704 = vadd.f32 0.0, %v6703
        %v6705 = vpop.f32.mrb[0].mxu0
        %v6706 = vadd.f32 0.0, %v6705
        %v6707 = vpop.f32.mrb[0].mxu0
        %v6708 = vadd.f32 0.0, %v6707
        %v6709 = vpop.f32.mrb[0].mxu0
        %v6710 = vadd.f32 0.0, %v6709
        %6711 = vmatprep.mubr.bf16.mxu0 %v6649
        %6712 = vmatmul.mubr.bf16.gmra.mrb[0].mxu0 %v6422
        %v6713 = vpop.f32.mrb[0].mxu0
        %v6714 = vadd.f32 0.0, %v6713
        %v6715 = vpop.f32.mrb[0].mxu0
        %v6716 = vadd.f32 0.0, %v6715
        %v6717 = vpop.f32.mrb[0].mxu0
        %v6718 = vadd.f32 0.0, %v6717
        %v6719 = vpop.f32.mrb[0].mxu0
        %v6720 = vadd.f32 0.0, %v6719
        %6721 = vmatprep.mubr.bf16.mxu0 %v6652
        %6722 = vmatmul.mubr.bf16.gmra.mrb[0].mxu0 %v6426
        %v6723 = vpop.f32.mrb[0].mxu0
        %v6724 = vadd.f32 0.0, %v6723
        %v6725 = vpop.f32.mrb[0].mxu0
        %v6726 = vadd.f32 0.0, %v6725
        %v6727 = vpop.f32.mrb[0].mxu0
        %v6728 = vadd.f32 0.0, %v6727
        %v6729 = vpop.f32.mrb[0].mxu0
        %v6730 = vadd.f32 0.0, %v6729
        %6731 = vmatprep.mubr.bf16.mxu0 %v6655
        %6732 = vmatmul.mubr.bf16.gmra.mrb[0].mxu0 %v6430
        %v6733 = vpop.f32.mrb[0].mxu0
        %v6734 = vadd.f32 0.0, %v6733
        %v6735 = vpop.f32.mrb[0].mxu0
        %v6736 = vadd.f32 0.0, %v6735
        %v6737 = vpop.f32.mrb[0].mxu0
        %v6738 = vadd.f32 0.0, %v6737
        %v6739 = vpop.f32.mrb[0].mxu0
        %v6740 = vadd.f32 0.0, %v6739
        %6741 = vmatprep.mubr.bf16.mxu0 %v6658
        %6742 = vmatmul.mubr.bf16.gmra.mrb[0].mxu0 %v6434
        %v6743 = vpop.f32.mrb[0].mxu0
        %v6744 = vadd.f32 0.0, %v6743
        %v6745 = vpop.f32.mrb[0].mxu0
        %v6746 = vadd.f32 0.0, %v6745
        %v6747 = vpop.f32.mrb[0].mxu0
        %v6748 = vadd.f32 0.0, %v6747
        %v6749 = vpop.f32.mrb[0].mxu0
        %v6750 = vadd.f32 0.0, %v6749
        %6751 = vmatprep.mubr.bf16.mxu0 %v6661
        %6752 = vmatmul.mubr.bf16.gmra.mrb[0].mxu0 %v6438
        %v6753 = vpop.f32.mrb[0].mxu0
        %v6754 = vadd.f32 0.0, %v6753
        %v6755 = vpop.f32.mrb[0].mxu0
        %v6756 = vadd.f32 0.0, %v6755
        %v6757 = vpop.f32.mrb[0].mxu0
        %v6758 = vadd.f32 0.0, %v6757
        %v6759 = vpop.f32.mrb[0].mxu0
        %v6760 = vadd.f32 0.0, %v6759
        %6761 = vmatprep.mubr.bf16.mxu0 %v6664
        %6762 = vmatmul.mubr.bf16.gmra.mrb[0].mxu0 %v6442
        %v6763 = vpop.f32.mrb[0].mxu0
        %v6764 = vadd.f32 0.0, %v6763
        %v6765 = vpop.f32.mrb[0].mxu0
        %v6766 = vadd.f32 0.0, %v6765
        %v6767 = vpop.f32.mrb[0].mxu0
        %v6768 = vadd.f32 0.0, %v6767
        %v6769 = vpop.f32.mrb[0].mxu0
        %v6770 = vadd.f32 0.0, %v6769
        %6771 = vmatprep.mubr.bf16.mxu0 %v6667
        %6772 = vmatmul.mubr.bf16.gmra.mrb[0].mxu0 %v6441
        %v6773 = vpop.f32.mrb[0].mxu0
        %v6774 = vadd.f32 0.0, %v6773
        %v6775 = vpop.f32.mrb[0].mxu0
        %v6776 = vadd.f32 0.0, %v6775
        %v6777 = vpop.f32.mrb[0].mxu0
        %v6778 = vadd.f32 0.0, %v6777
        %v6779 = vpop.f32.mrb[0].mxu0
        %v6780 = vadd.f32 0.0, %v6779
        %6781 = vdwg.mxu0
        %6782 = vmatprep.subr.bf16.mxu0 0
        %6783 = vmatpush1.bf16.msra.mxu0 %v6575
        %6784 = vmatprep.subr.bf16.mxu0 0
        %6785 = vmatpush1.bf16.msra.mxu0 %v6578
        %6786 = vmatprep.subr.bf16.mxu0 0
        %6787 = vmatpush1.bf16.msra.mxu0 %v6581
        %6788 = vmatprep.subr.bf16.mxu0 0
        %6789 = vmatpush1.bf16.msra.mxu0 %v6584
        %6790 = vmatprep.subr.bf16.mxu0 0
        %6791 = vmatpush1.bf16.msra.mxu0 %v6587
        %6792 = vmatprep.subr.bf16.mxu0 0
        %6793 = vmatpush1.bf16.msra.mxu0 %v6590
        %6794 = vmatprep.subr.bf16.mxu0 0
        %6795 = vmatpush1.bf16.msra.mxu0 %v6593
        %6796 = vmatprep.subr.bf16.mxu0 0
        %6797 = vmatpush1.bf16.msra.mxu0 %v6596
        %6798 = vmatprep.subr.bf16.mxu0 0
        %6799 = vmatpush1.bf16.msra.mxu0 %v6599
        %6800 = vmatprep.subr.bf16.mxu0 0
        %6801 = vmatpush1.bf16.msra.mxu0 %v6602
        %6802 = vmatprep.subr.bf16.mxu0 0
        %6803 = vmatpush1.bf16.msra.mxu0 %v6605
        %6804 = vmatprep.subr.bf16.mxu0 0
        %6805 = vmatpush1.bf16.msra.mxu0 %v6608
        %6806 = vmatprep.subr.bf16.mxu0 0
        %6807 = vmatpush1.bf16.msra.mxu0 0
        %6808 = vmatprep.subr.bf16.mxu0 0
        %6809 = vmatpush1.bf16.msra.mxu0 0
        %6810 = vmatprep.subr.bf16.mxu0 0
        %6811 = vmatpush1.bf16.msra.mxu0 0
        %6812 = vmatprep.subr.bf16.mxu0 0
        %6813 = vmatpush1.bf16.msra.mxu0 0
        %6814 = vmatprep.mubr.bf16.mxu0 %v6646
        %6815 = vmatmul.mubr.bf16.gmra.mrb[0].mxu0 %v6417
        %v6816 = vpop.f32.mrb[0].mxu0
        %v6817 = vadd.f32 0.0, %v6816
        %v6818 = vpop.f32.mrb[0].mxu0
        %v6819 = vpop.f32.mrb[0].mxu0
        %v6820 = vadd.f32 0.0, %v6819
        %v6821 = vpop.f32.mrb[0].mxu0
        %6822 = vmatprep.mubr.bf16.mxu0 %v6649
        %6823 = vmatmul.mubr.bf16.gmra.mrb[0].mxu0 %v6422
        %v6824 = vpop.f32.mrb[0].mxu0
        %v6825 = vadd.f32 0.0, %v6824
        %v6826 = vpop.f32.mrb[0].mxu0
        %v6827 = vpop.f32.mrb[0].mxu0
        %v6828 = vadd.f32 0.0, %v6827
        %v6829 = vpop.f32.mrb[0].mxu0
        %6830 = vmatprep.mubr.bf16.mxu0 %v6652
        %6831 = vmatmul.mubr.bf16.gmra.mrb[0].mxu0 %v6426
        %v6832 = vpop.f32.mrb[0].mxu0
        %v6833 = vadd.f32 0.0, %v6832
        %v6834 = vpop.f32.mrb[0].mxu0
        %v6835 = vpop.f32.mrb[0].mxu0
        %v6836 = vadd.f32 0.0, %v6835
        %v6837 = vpop.f32.mrb[0].mxu0
        %6838 = vmatprep.mubr.bf16.mxu0 %v6655
        %6839 = vmatmul.mubr.bf16.gmra.mrb[0].mxu0 %v6430
        %v6840 = vpop.f32.mrb[0].mxu0
        %v6841 = vadd.f32 0.0, %v6840
        %v6842 = vpop.f32.mrb[0].mxu0
        %v6843 = vpop.f32.mrb[0].mxu0
        %v6844 = vadd.f32 0.0, %v6843
        %v6845 = vpop.f32.mrb[0].mxu0
        %6846 = vmatprep.mubr.bf16.mxu0 %v6658
        %6847 = vmatmul.mubr.bf16.gmra.mrb[0].mxu0 %v6434
        %v6848 = vpop.f32.mrb[0].mxu0
        %v6849 = vadd.f32 0.0, %v6848
        %v6850 = vpop.f32.mrb[0].mxu0
        %v6851 = vpop.f32.mrb[0].mxu0
        %v6852 = vadd.f32 0.0, %v6851
        %v6853 = vpop.f32.mrb[0].mxu0
        %6854 = vmatprep.mubr.bf16.mxu0 %v6661
        %6855 = vmatmul.mubr.bf16.gmra.mrb[0].mxu0 %v6438
        %v6856 = vpop.f32.mrb[0].mxu0
        %v6857 = vadd.f32 0.0, %v6856
        %v6858 = vpop.f32.mrb[0].mxu0
        %v6859 = vpop.f32.mrb[0].mxu0
        %v6860 = vadd.f32 0.0, %v6859
        %v6861 = vpop.f32.mrb[0].mxu0
        %6862 = vmatprep.mubr.bf16.mxu0 %v6664
        %6863 = vmatmul.mubr.bf16.gmra.mrb[0].mxu0 %v6442
        %v6864 = vpop.f32.mrb[0].mxu0
        %v6865 = vadd.f32 0.0, %v6864
        %v6866 = vpop.f32.mrb[0].mxu0
        %v6867 = vpop.f32.mrb[0].mxu0
        %v6868 = vadd.f32 0.0, %v6867
        %v6869 = vpop.f32.mrb[0].mxu0
        %6870 = vmatprep.mubr.bf16.mxu0 %v6667
        %6871 = vmatmul.mubr.bf16.gmra.mrb[0].mxu0 %v6441
        %v6872 = vpop.f32.mrb[0].mxu0
        %v6873 = vadd.f32 0.0, %v6872
        %v6874 = vpop.f32.mrb[0].mxu0
        %v6875 = vpop.f32.mrb[0].mxu0
        %v6876 = vadd.f32 0.0, %v6875
        %v6877 = vpop.f32.mrb[0].mxu0
        %6878 = vdwg.mxu0
        %v6879 = vadd.f32 %v6175, %v6704
        %v6880 = vadd.f32 %v6177, %v6706
        %v6881 = vadd.f32 %v6288, %v6817
        %v6882 = vadd.f32 %v6179, %v6708
        %v6883 = vadd.f32 %v6181, %v6710
        %v6884 = vadd.f32 %v6291, %v6820
        %v6885 = vadd.f32 %v6185, %v6714
        %v6886 = vadd.f32 %v6187, %v6716
        %v6887 = vadd.f32 %v6296, %v6825
        %v6888 = vadd.f32 %v6189, %v6718
        %v6889 = vadd.f32 %v6191, %v6720
        %v6890 = vadd.f32 %v6299, %v6828
        %v6891 = vadd.f32 %v6195, %v6724
        %v6892 = vadd.f32 %v6197, %v6726
        %v6893 = vadd.f32 %v6304, %v6833
        %v6894 = vadd.f32 %v6199, %v6728
        %v6895 = vadd.f32 %v6201, %v6730
        %v6896 = vadd.f32 %v6307, %v6836
        %v6897 = vadd.f32 %v6205, %v6734
        %v6898 = vadd.f32 %v6207, %v6736
        %v6899 = vadd.f32 %v6312, %v6841
        %v6900 = vadd.f32 %v6209, %v6738
        %v6901 = vadd.f32 %v6211, %v6740
        %v6902 = vadd.f32 %v6315, %v6844
        %v6903 = vadd.f32 %v6215, %v6744
        %v6904 = vadd.f32 %v6217, %v6746
        %v6905 = vadd.f32 %v6320, %v6849
        %v6906 = vadd.f32 %v6219, %v6748
        %v6907 = vadd.f32 %v6221, %v6750
        %v6908 = vadd.f32 %v6323, %v6852
        %v6909 = vadd.f32 %v6225, %v6754
        %v6910 = vadd.f32 %v6227, %v6756
        %v6911 = vadd.f32 %v6328, %v6857
        %v6912 = vadd.f32 %v6229, %v6758
        %v6913 = vadd.f32 %v6231, %v6760
        %v6914 = vadd.f32 %v6331, %v6860
        %v6915 = vadd.f32 %v6235, %v6764
        %v6916 = vadd.f32 %v6237, %v6766
        %v6917 = vadd.f32 %v6336, %v6865
        %v6918 = vadd.f32 %v6239, %v6768
        %v6919 = vadd.f32 %v6241, %v6770
        %v6920 = vadd.f32 %v6339, %v6868
        %v6921 = vadd.f32 %v6245, %v6774
        %v6922 = vadd.f32 %v6247, %v6776
        %v6923 = vadd.f32 %v6344, %v6873
        %v6924 = vadd.f32 %v6249, %v6778
        %v6925 = vadd.f32 %v6251, %v6780
        %v6926 = vadd.f32 %v6347, %v6876
        %v6927 = vld [vmem:[%s10] sm:$0x7]
        %v6929 = vlaneseq
        %v6930 = vshrl.u32 %v6929, 7
        %v6931 = vsub.s32 0, %v6930
        %v6932 = vrot.slane %v6927, %v6931
        %v6933 = vlaneseq
        %v6934 = vshrl.u32 %v6933, 7
        %v6935 = vsub.s32 1, %v6934
        %v6936 = vrot.slane %v6927, %v6935
        %v6937 = vlaneseq
        %v6938 = vshrl.u32 %v6937, 7
        %v6939 = vsub.s32 2, %v6938
        %v6940 = vrot.slane %v6927, %v6939
        %v6944 = vadd.f32 %v6879, %v6932
        %v6945 = vadd.f32 %v6880, %v6936
        %v6946 = vadd.f32 %v6881, %v6940
        %v6947 = vadd.f32 %v6882, %v6932
        %v6948 = vadd.f32 %v6883, %v6936
        %v6949 = vadd.f32 %v6884, %v6940
        %v6950 = vadd.f32 %v6885, %v6932
        %v6951 = vadd.f32 %v6886, %v6936
        %v6952 = vadd.f32 %v6887, %v6940
        %v6953 = vadd.f32 %v6888, %v6932
        %v6954 = vadd.f32 %v6889, %v6936
        %v6955 = vadd.f32 %v6890, %v6940
        %v6956 = vadd.f32 %v6891, %v6932
        %v6957 = vadd.f32 %v6892, %v6936
        %v6958 = vadd.f32 %v6893, %v6940
        %v6959 = vadd.f32 %v6894, %v6932
        %v6960 = vadd.f32 %v6895, %v6936
        %v6961 = vadd.f32 %v6896, %v6940
        %v6962 = vadd.f32 %v6897, %v6932
        %v6963 = vadd.f32 %v6898, %v6936
        %v6964 = vadd.f32 %v6899, %v6940
        %v6965 = vadd.f32 %v6900, %v6932
        %v6966 = vadd.f32 %v6901, %v6936
        %v6967 = vadd.f32 %v6902, %v6940
        %v6968 = vadd.f32 %v6903, %v6932
        %v6969 = vadd.f32 %v6904, %v6936
        %v6970 = vadd.f32 %v6905, %v6940
        %v6971 = vadd.f32 %v6906, %v6932
        %v6972 = vadd.f32 %v6907, %v6936
        %v6973 = vadd.f32 %v6908, %v6940
        %v6974 = vadd.f32 %v6909, %v6932
        %v6975 = vadd.f32 %v6910, %v6936
        %v6976 = vadd.f32 %v6911, %v6940
        %v6977 = vadd.f32 %v6912, %v6932
        %v6978 = vadd.f32 %v6913, %v6936
        %v6979 = vadd.f32 %v6914, %v6940
        %v6980 = vadd.f32 %v6915, %v6932
        %v6981 = vadd.f32 %v6916, %v6936
        %v6982 = vadd.f32 %v6917, %v6940
        %v6983 = vadd.f32 %v6918, %v6932
        %v6984 = vadd.f32 %v6919, %v6936
        %v6985 = vadd.f32 %v6920, %v6940
        %v6986 = vadd.f32 %v6921, %v6932
        %v6987 = vadd.f32 %v6922, %v6936
        %v6988 = vadd.f32 %v6923, %v6940
        %v6989 = vadd.f32 %v6924, %v6932
        %v6990 = vadd.f32 %v6925, %v6936
        %v6991 = vadd.f32 %v6926, %v6940
        %v6992 = vmax.f32 %v6944, 0.0
        %v6993 = vmax.f32 %v6945, 0.0
        %v6994 = vmax.f32 %v6946, 0.0
        %v6995 = vmax.f32 %v6947, 0.0
        %v6996 = vmax.f32 %v6948, 0.0
        %v6997 = vmax.f32 %v6949, 0.0
        %v6998 = vmax.f32 %v6950, 0.0
        %v6999 = vmax.f32 %v6951, 0.0
        %v7000 = vmax.f32 %v6952, 0.0
        %v7001 = vmax.f32 %v6953, 0.0
        %v7002 = vmax.f32 %v6954, 0.0
        %v7003 = vmax.f32 %v6955, 0.0
        %v7004 = vmax.f32 %v6956, 0.0
        %v7005 = vmax.f32 %v6957, 0.0
        %v7006 = vmax.f32 %v6958, 0.0
        %v7007 = vmax.f32 %v6959, 0.0
        %v7008 = vmax.f32 %v6960, 0.0
        %v7009 = vmax.f32 %v6961, 0.0
        %v7010 = vmax.f32 %v6962, 0.0
        %v7011 = vmax.f32 %v6963, 0.0
        %v7012 = vmax.f32 %v6964, 0.0
        %v7013 = vmax.f32 %v6965, 0.0
        %v7014 = vmax.f32 %v6966, 0.0
        %v7015 = vmax.f32 %v6967, 0.0
        %v7016 = vmax.f32 %v6968, 0.0
        %v7017 = vmax.f32 %v6969, 0.0
        %v7018 = vmax.f32 %v6970, 0.0
        %v7019 = vmax.f32 %v6971, 0.0
        %v7020 = vmax.f32 %v6972, 0.0
        %v7021 = vmax.f32 %v6973, 0.0
        %v7022 = vmax.f32 %v6974, 0.0
        %v7023 = vmax.f32 %v6975, 0.0
        %v7024 = vmax.f32 %v6976, 0.0
        %v7025 = vmax.f32 %v6977, 0.0
        %v7026 = vmax.f32 %v6978, 0.0
        %v7027 = vmax.f32 %v6979, 0.0
        %v7028 = vmax.f32 %v6980, 0.0
        %v7029 = vmax.f32 %v6981, 0.0
        %v7030 = vmax.f32 %v6982, 0.0
        %v7031 = vmax.f32 %v6983, 0.0
        %v7032 = vmax.f32 %v6984, 0.0
        %v7033 = vmax.f32 %v6985, 0.0
        %v7034 = vmax.f32 %v6986, 0.0
        %v7035 = vmax.f32 %v6987, 0.0
        %v7036 = vmax.f32 %v6988, 0.0
        %v7037 = vmax.f32 %v6989, 0.0
        %v7038 = vmax.f32 %v6990, 0.0
        %v7039 = vmax.f32 %v6991, 0.0
        %v7088 = vrot.slane %v6992, 1
        %v7089 = vrot.slane %v6995, 1
        %v7090 = vsel %vm3161, %v7088, %v7089
        %v7091 = vrot.slane %v6993, 1
        %v7092 = vrot.slane %v6996, 1
        %v7093 = vsel %vm3161, %v7091, %v7092
        %v7094 = vrot.slane %v6994, 1
        %v7095 = vrot.slane %v6997, 1
        %v7096 = vsel %vm3161, %v7094, %v7095
        %v7097 = vrot.slane %v6998, 1
        %v7098 = vsel %vm3161, %v7089, %v7097
        %v7099 = vrot.slane %v6999, 1
        %v7100 = vsel %vm3161, %v7092, %v7099
        %v7101 = vrot.slane %v7000, 1
        %v7102 = vsel %vm3161, %v7095, %v7101
        %v7103 = vrot.slane %v7001, 1
        %v7104 = vsel %vm3161, %v7097, %v7103
        %v7105 = vrot.slane %v7002, 1
        %v7106 = vsel %vm3161, %v7099, %v7105
        %v7107 = vrot.slane %v7003, 1
        %v7108 = vsel %vm3161, %v7101, %v7107
        %v7109 = vrot.slane %v7004, 1
        %v7110 = vsel %vm3161, %v7103, %v7109
        %v7111 = vrot.slane %v7005, 1
        %v7112 = vsel %vm3161, %v7105, %v7111
        %v7113 = vrot.slane %v7006, 1
        %v7114 = vsel %vm3161, %v7107, %v7113
        %v7115 = vrot.slane %v7007, 1
        %v7116 = vsel %vm3161, %v7109, %v7115
        %v7117 = vrot.slane %v7008, 1
        %v7118 = vsel %vm3161, %v7111, %v7117
        %v7119 = vrot.slane %v7009, 1
        %v7120 = vsel %vm3161, %v7113, %v7119
        %v7121 = vrot.slane %v7010, 1
        %v7122 = vsel %vm3161, %v7115, %v7121
        %v7123 = vrot.slane %v7011, 1
        %v7124 = vsel %vm3161, %v7117, %v7123
        %v7125 = vrot.slane %v7012, 1
        %v7126 = vsel %vm3161, %v7119, %v7125
        %v7127 = vrot.slane %v7013, 1
        %v7128 = vsel %vm3161, %v7121, %v7127
        %v7129 = vrot.slane %v7014, 1
        %v7130 = vsel %vm3161, %v7123, %v7129
        %v7131 = vrot.slane %v7015, 1
        %v7132 = vsel %vm3161, %v7125, %v7131
        %v7133 = vrot.slane %v7016, 1
        %v7134 = vsel %vm3161, %v7127, %v7133
        %v7135 = vrot.slane %v7017, 1
        %v7136 = vsel %vm3161, %v7129, %v7135
        %v7137 = vrot.slane %v7018, 1
        %v7138 = vsel %vm3161, %v7131, %v7137
        %v7139 = vrot.slane %v7019, 1
        %v7140 = vsel %vm3161, %v7133, %v7139
        %v7141 = vrot.slane %v7020, 1
        %v7142 = vsel %vm3161, %v7135, %v7141
        %v7143 = vrot.slane %v7021, 1
        %v7144 = vsel %vm3161, %v7137, %v7143
        %v7145 = vrot.slane %v7022, 1
        %v7146 = vsel %vm3161, %v7139, %v7145
        %v7147 = vrot.slane %v7023, 1
        %v7148 = vsel %vm3161, %v7141, %v7147
        %v7149 = vrot.slane %v7024, 1
        %v7150 = vsel %vm3161, %v7143, %v7149
        %v7151 = vrot.slane %v7025, 1
        %v7152 = vsel %vm3161, %v7145, %v7151
        %v7153 = vrot.slane %v7026, 1
        %v7154 = vsel %vm3161, %v7147, %v7153
        %v7155 = vrot.slane %v7027, 1
        %v7156 = vsel %vm3161, %v7149, %v7155
        %v7157 = vrot.slane %v7028, 1
        %v7158 = vsel %vm3161, %v7151, %v7157
        %v7159 = vrot.slane %v7029, 1
        %v7160 = vsel %vm3161, %v7153, %v7159
        %v7161 = vrot.slane %v7030, 1
        %v7162 = vsel %vm3161, %v7155, %v7161
        %v7163 = vrot.slane %v7031, 1
        %v7164 = vsel %vm3161, %v7157, %v7163
        %v7165 = vrot.slane %v7032, 1
        %v7166 = vsel %vm3161, %v7159, %v7165
        %v7167 = vrot.slane %v7033, 1
        %v7168 = vsel %vm3161, %v7161, %v7167
        %v7169 = vrot.slane %v7034, 1
        %v7170 = vsel %vm3161, %v7163, %v7169
        %v7171 = vrot.slane %v7035, 1
        %v7172 = vsel %vm3161, %v7165, %v7171
        %v7173 = vrot.slane %v7036, 1
        %v7174 = vsel %vm3161, %v7167, %v7173
        %v7175 = vrot.slane %v7037, 1
        %v7176 = vsel %vm3161, %v7169, %v7175
        %v7177 = vrot.slane %v7038, 1
        %v7178 = vsel %vm3161, %v7171, %v7177
        %v7179 = vrot.slane %v7039, 1
        %v7180 = vsel %vm3161, %v7173, %v7179
        %v7229 = vmax.f32 %v6992, %v7090
        %v7230 = vmax.f32 %v6993, %v7093
        %v7231 = vmax.f32 %v6994, %v7096
        %v7232 = vmax.f32 %v6995, %v7098
        %v7233 = vmax.f32 %v6996, %v7100
        %v7234 = vmax.f32 %v6997, %v7102
        %v7235 = vmax.f32 %v6998, %v7104
        %v7236 = vmax.f32 %v6999, %v7106
        %v7237 = vmax.f32 %v7000, %v7108
        %v7238 = vmax.f32 %v7001, %v7110
        %v7239 = vmax.f32 %v7002, %v7112
        %v7240 = vmax.f32 %v7003, %v7114
        %v7241 = vmax.f32 %v7004, %v7116
        %v7242 = vmax.f32 %v7005, %v7118
        %v7243 = vmax.f32 %v7006, %v7120
        %v7244 = vmax.f32 %v7007, %v7122
        %v7245 = vmax.f32 %v7008, %v7124
        %v7246 = vmax.f32 %v7009, %v7126
        %v7247 = vmax.f32 %v7010, %v7128
        %v7248 = vmax.f32 %v7011, %v7130
        %v7249 = vmax.f32 %v7012, %v7132
        %v7250 = vmax.f32 %v7013, %v7134
        %v7251 = vmax.f32 %v7014, %v7136
        %v7252 = vmax.f32 %v7015, %v7138
        %v7253 = vmax.f32 %v7016, %v7140
        %v7254 = vmax.f32 %v7017, %v7142
        %v7255 = vmax.f32 %v7018, %v7144
        %v7256 = vmax.f32 %v7019, %v7146
        %v7257 = vmax.f32 %v7020, %v7148
        %v7258 = vmax.f32 %v7021, %v7150
        %v7259 = vmax.f32 %v7022, %v7152
        %v7260 = vmax.f32 %v7023, %v7154
        %v7261 = vmax.f32 %v7024, %v7156
        %v7262 = vmax.f32 %v7025, %v7158
        %v7263 = vmax.f32 %v7026, %v7160
        %v7264 = vmax.f32 %v7027, %v7162
        %v7265 = vmax.f32 %v7028, %v7164
        %v7266 = vmax.f32 %v7029, %v7166
        %v7267 = vmax.f32 %v7030, %v7168
        %v7268 = vmax.f32 %v7031, %v7170
        %v7269 = vmax.f32 %v7032, %v7172
        %v7270 = vmax.f32 %v7033, %v7174
        %v7271 = vmax.f32 %v7034, %v7176
        %v7272 = vmax.f32 %v7035, %v7178
        %v7273 = vmax.f32 %v7036, %v7180
        %v7274 = vmax.f32 %v7037, %v7175
        %v7275 = vmax.f32 %v7038, %v7177
        %v7276 = vmax.f32 %v7039, %v7179
        %7325 = vrot.lane.b32.xlu0 %v7229, 96
        %v7326 = vpop.permute.xlu0 %7325
        %7327 = vrot.lane.b32.xlu0 %v7230, 96
        %v7328 = vpop.permute.xlu0 %7327
        %7329 = vrot.lane.b32.xlu0 %v7231, 96
        %v7330 = vpop.permute.xlu0 %7329
        %7331 = vrot.lane.b32.xlu0 %v7232, 96
        %v7332 = vpop.permute.xlu0 %7331
        %7333 = vrot.lane.b32.xlu0 %v7233, 96
        %v7334 = vpop.permute.xlu0 %7333
        %7335 = vrot.lane.b32.xlu0 %v7234, 96
        %v7336 = vpop.permute.xlu0 %7335
        %7337 = vrot.lane.b32.xlu0 %v7235, 96
        %v7338 = vpop.permute.xlu0 %7337
        %7339 = vrot.lane.b32.xlu0 %v7236, 96
        %v7340 = vpop.permute.xlu0 %7339
        %7341 = vrot.lane.b32.xlu0 %v7237, 96
        %v7342 = vpop.permute.xlu0 %7341
        %7343 = vrot.lane.b32.xlu0 %v7238, 96
        %v7344 = vpop.permute.xlu0 %7343
        %7345 = vrot.lane.b32.xlu0 %v7239, 96
        %v7346 = vpop.permute.xlu0 %7345
        %7347 = vrot.lane.b32.xlu0 %v7240, 96
        %v7348 = vpop.permute.xlu0 %7347
        %7349 = vrot.lane.b32.xlu0 %v7241, 96
        %v7350 = vpop.permute.xlu0 %7349
        %7351 = vrot.lane.b32.xlu0 %v7242, 96
        %v7352 = vpop.permute.xlu0 %7351
        %7353 = vrot.lane.b32.xlu0 %v7243, 96
        %v7354 = vpop.permute.xlu0 %7353
        %7355 = vrot.lane.b32.xlu0 %v7244, 96
        %v7356 = vpop.permute.xlu0 %7355
        %7357 = vrot.lane.b32.xlu0 %v7245, 96
        %v7358 = vpop.permute.xlu0 %7357
        %7359 = vrot.lane.b32.xlu0 %v7246, 96
        %v7360 = vpop.permute.xlu0 %7359
        %7361 = vrot.lane.b32.xlu0 %v7247, 96
        %v7362 = vpop.permute.xlu0 %7361
        %7363 = vrot.lane.b32.xlu0 %v7248, 96
        %v7364 = vpop.permute.xlu0 %7363
        %7365 = vrot.lane.b32.xlu0 %v7249, 96
        %v7366 = vpop.permute.xlu0 %7365
        %7367 = vrot.lane.b32.xlu0 %v7250, 96
        %v7368 = vpop.permute.xlu0 %7367
        %7369 = vrot.lane.b32.xlu0 %v7251, 96
        %v7370 = vpop.permute.xlu0 %7369
        %7371 = vrot.lane.b32.xlu0 %v7252, 96
        %v7372 = vpop.permute.xlu0 %7371
        %7373 = vrot.lane.b32.xlu0 %v7253, 96
        %v7374 = vpop.permute.xlu0 %7373
        %7375 = vrot.lane.b32.xlu0 %v7254, 96
        %v7376 = vpop.permute.xlu0 %7375
        %7377 = vrot.lane.b32.xlu0 %v7255, 96
        %v7378 = vpop.permute.xlu0 %7377
        %7379 = vrot.lane.b32.xlu0 %v7256, 96
        %v7380 = vpop.permute.xlu0 %7379
        %7381 = vrot.lane.b32.xlu0 %v7257, 96
        %v7382 = vpop.permute.xlu0 %7381
        %7383 = vrot.lane.b32.xlu0 %v7258, 96
        %v7384 = vpop.permute.xlu0 %7383
        %7385 = vrot.lane.b32.xlu0 %v7259, 96
        %v7386 = vpop.permute.xlu0 %7385
        %7387 = vrot.lane.b32.xlu0 %v7260, 96
        %v7388 = vpop.permute.xlu0 %7387
        %7389 = vrot.lane.b32.xlu0 %v7261, 96
        %v7390 = vpop.permute.xlu0 %7389
        %7391 = vrot.lane.b32.xlu0 %v7262, 96
        %v7392 = vpop.permute.xlu0 %7391
        %7393 = vrot.lane.b32.xlu0 %v7263, 96
        %v7394 = vpop.permute.xlu0 %7393
        %7395 = vrot.lane.b32.xlu0 %v7264, 96
        %v7396 = vpop.permute.xlu0 %7395
        %7397 = vrot.lane.b32.xlu0 %v7265, 96
        %v7398 = vpop.permute.xlu0 %7397
        %7399 = vrot.lane.b32.xlu0 %v7266, 96
        %v7400 = vpop.permute.xlu0 %7399
        %7401 = vrot.lane.b32.xlu0 %v7267, 96
        %v7402 = vpop.permute.xlu0 %7401
        %7403 = vrot.lane.b32.xlu0 %v7268, 96
        %v7404 = vpop.permute.xlu0 %7403
        %7405 = vrot.lane.b32.xlu0 %v7269, 96
        %v7406 = vpop.permute.xlu0 %7405
        %7407 = vrot.lane.b32.xlu0 %v7270, 96
        %v7408 = vpop.permute.xlu0 %7407
        %7409 = vrot.lane.b32.xlu0 %v7271, 96
        %v7410 = vpop.permute.xlu0 %7409
        %7411 = vrot.lane.b32.xlu0 %v7272, 96
        %v7412 = vpop.permute.xlu0 %7411
        %7413 = vrot.lane.b32.xlu0 %v7273, 96
        %v7414 = vpop.permute.xlu0 %7413
        %7415 = vrot.lane.b32.xlu0 %v7274, 96
        %v7416 = vpop.permute.xlu0 %7415
        %7417 = vrot.lane.b32.xlu0 %v7275, 96
        %v7418 = vpop.permute.xlu0 %7417
        %7419 = vrot.lane.b32.xlu0 %v7276, 96
        %v7420 = vpop.permute.xlu0 %7419
        %vm7421 = vcmask 785408
        %v7422 = vsel %vm7421, %v7326, %v7328
        %v7423 = vsel %vm7421, %v7328, %v7330
        %v7424 = vsel %vm7421, %v7332, %v7334
        %v7425 = vsel %vm7421, %v7334, %v7336
        %v7426 = vsel %vm7421, %v7338, %v7340
        %v7427 = vsel %vm7421, %v7340, %v7342
        %v7428 = vsel %vm7421, %v7344, %v7346
        %v7429 = vsel %vm7421, %v7346, %v7348
        %v7430 = vsel %vm7421, %v7350, %v7352
        %v7431 = vsel %vm7421, %v7352, %v7354
        %v7432 = vsel %vm7421, %v7356, %v7358
        %v7433 = vsel %vm7421, %v7358, %v7360
        %v7434 = vsel %vm7421, %v7362, %v7364
        %v7435 = vsel %vm7421, %v7364, %v7366
        %v7436 = vsel %vm7421, %v7368, %v7370
        %v7437 = vsel %vm7421, %v7370, %v7372
        %v7438 = vsel %vm7421, %v7374, %v7376
        %v7439 = vsel %vm7421, %v7376, %v7378
        %v7440 = vsel %vm7421, %v7380, %v7382
        %v7441 = vsel %vm7421, %v7382, %v7384
        %v7442 = vsel %vm7421, %v7386, %v7388
        %v7443 = vsel %vm7421, %v7388, %v7390
        %v7444 = vsel %vm7421, %v7392, %v7394
        %v7445 = vsel %vm7421, %v7394, %v7396
        %v7446 = vsel %vm7421, %v7398, %v7400
        %v7447 = vsel %vm7421, %v7400, %v7402
        %v7448 = vsel %vm7421, %v7404, %v7406
        %v7449 = vsel %vm7421, %v7406, %v7408
        %v7450 = vsel %vm7421, %v7410, %v7412
        %v7451 = vsel %vm7421, %v7412, %v7414
        %v7452 = vsel %vm7421, %v7416, %v7418
        %v7453 = vsel %vm7421, %v7418, %v7420
        %v7502 = vmax.f32 %v7229, %v7422
        %v7503 = vmax.f32 %v7230, %v7423
        %v7504 = vmax.f32 %v7231, %v7330
        %v7505 = vmax.f32 %v7232, %v7424
        %v7506 = vmax.f32 %v7233, %v7425
        %v7507 = vmax.f32 %v7234, %v7336
        %v7508 = vmax.f32 %v7235, %v7426
        %v7509 = vmax.f32 %v7236, %v7427
        %v7510 = vmax.f32 %v7237, %v7342
        %v7511 = vmax.f32 %v7238, %v7428
        %v7512 = vmax.f32 %v7239, %v7429
        %v7513 = vmax.f32 %v7240, %v7348
        %v7514 = vmax.f32 %v7241, %v7430
        %v7515 = vmax.f32 %v7242, %v7431
        %v7516 = vmax.f32 %v7243, %v7354
        %v7517 = vmax.f32 %v7244, %v7432
        %v7518 = vmax.f32 %v7245, %v7433
        %v7519 = vmax.f32 %v7246, %v7360
        %v7520 = vmax.f32 %v7247, %v7434
        %v7521 = vmax.f32 %v7248, %v7435
        %v7522 = vmax.f32 %v7249, %v7366
        %v7523 = vmax.f32 %v7250, %v7436
        %v7524 = vmax.f32 %v7251, %v7437
        %v7525 = vmax.f32 %v7252, %v7372
        %v7526 = vmax.f32 %v7253, %v7438
        %v7527 = vmax.f32 %v7254, %v7439
        %v7528 = vmax.f32 %v7255, %v7378
        %v7529 = vmax.f32 %v7256, %v7440
        %v7530 = vmax.f32 %v7257, %v7441
        %v7531 = vmax.f32 %v7258, %v7384
        %v7532 = vmax.f32 %v7259, %v7442
        %v7533 = vmax.f32 %v7260, %v7443
        %v7534 = vmax.f32 %v7261, %v7390
        %v7535 = vmax.f32 %v7262, %v7444
        %v7536 = vmax.f32 %v7263, %v7445
        %v7537 = vmax.f32 %v7264, %v7396
        %v7538 = vmax.f32 %v7265, %v7446
        %v7539 = vmax.f32 %v7266, %v7447
        %v7540 = vmax.f32 %v7267, %v7402
        %v7541 = vmax.f32 %v7268, %v7448
        %v7542 = vmax.f32 %v7269, %v7449
        %v7543 = vmax.f32 %v7270, %v7408
        %v7544 = vmax.f32 %v7271, %v7450
        %v7545 = vmax.f32 %v7272, %v7451
        %v7546 = vmax.f32 %v7273, %v7414
        %v7547 = vmax.f32 %v7274, %v7452
        %v7548 = vmax.f32 %v7275, %v7453
        %v7549 = vmax.f32 %v7276, %v7420
        %v7550 = vld [vmem:[%s2] sm:$0xf]
        %v7551 = vld [vmem:[%s2 + $0x4] sm:$0xf]
        %v7552 = vld [vmem:[%s2 + $0x8] sm:$0xf]
        %v7553 = vld [vmem:[%s2 + $0xc] sm:$0xf]
        %v7554 = vld [vmem:[%s2 + $0x10] sm:$0xf]
        %v7555 = vpack.c.bf16 %v7505, %v7502
        %v7556 = vpack.c.bf16 %v7506, %v7503
        %v7557 = vpack.c.bf16 %v7507, %v7504
        %v7558 = vpack.c.bf16 %v7511, %v7508
        %v7559 = vpack.c.bf16 %v7512, %v7509
        %v7560 = vpack.c.bf16 %v7513, %v7510
        %v7561 = vpack.c.bf16 %v7517, %v7514
        %v7562 = vpack.c.bf16 %v7518, %v7515
        %v7563 = vpack.c.bf16 %v7519, %v7516
        %v7564 = vpack.c.bf16 %v7523, %v7520
        %v7565 = vpack.c.bf16 %v7524, %v7521
        %v7566 = vpack.c.bf16 %v7525, %v7522
        %v7567 = vpack.c.bf16 %v7529, %v7526
        %v7568 = vpack.c.bf16 %v7530, %v7527
        %v7569 = vpack.c.bf16 %v7531, %v7528
        %v7570 = vpack.c.bf16 %v7535, %v7532
        %v7571 = vpack.c.bf16 %v7536, %v7533
        %v7572 = vpack.c.bf16 %v7537, %v7534
        %v7573 = vpack.c.bf16 %v7541, %v7538
        %v7574 = vpack.c.bf16 %v7542, %v7539
        %v7575 = vpack.c.bf16 %v7543, %v7540
        %v7576 = vpack.c.bf16 %v7547, %v7544
        %v7577 = vpack.c.bf16 %v7548, %v7545
        %v7578 = vpack.c.bf16 %v7549, %v7546
        %v7584 = vunpack.c.l.b16 %v7550
        %v7585 = vunpack.c.l.b16 %v7551
        %v7586 = vunpack.c.l.b16 %v7552
        %v7587 = vunpack.c.l.b16 %v7553
        %v7588 = vunpack.c.l.b16 %v7554
        %v7589 = vpack.c.b16 %v7585, %v7584
        %v7590 = vpack.c.b16 %v7587, %v7586
        %v7591 = vpack.c.b16 %v7588, %v7588
        %v7593 = vsel %vm3888, %v7589, 0
        %v7596 = vsel %vm3888, %v7590, 0
        %v7599 = vsel %vm3888, %v7591, 0
        %v7602 = vand.u32 %v7576, %v3916
        %v7605 = vand.u32 %v7577, %v3916
        %v7608 = vand.u32 %v7578, %v3916
        %7610 = vmatprep.subr.bf16.mxu0 %v7556
        %7611 = vmatpush1.bf16.msra.mxu0 %v7555
        %7612 = vmatprep.subr.bf16.mxu0 %v7559
        %7613 = vmatpush1.bf16.msra.mxu0 %v7558
        %7614 = vmatprep.subr.bf16.mxu0 %v7562
        %7615 = vmatpush1.bf16.msra.mxu0 %v7561
        %7616 = vmatprep.subr.bf16.mxu0 %v7565
        %7617 = vmatpush1.bf16.msra.mxu0 %v7564
        %7618 = vmatprep.subr.bf16.mxu0 %v7568
        %7619 = vmatpush1.bf16.msra.mxu0 %v7567
        %7620 = vmatprep.subr.bf16.mxu0 %v7571
        %7621 = vmatpush1.bf16.msra.mxu0 %v7570
        %7622 = vmatprep.subr.bf16.mxu0 %v7574
        %7623 = vmatpush1.bf16.msra.mxu0 %v7573
        %7624 = vmatprep.subr.bf16.mxu0 %v7605
        %7625 = vmatpush1.bf16.msra.mxu0 %v7602
        %7626 = vmatprep.subr.bf16.mxu0 0
        %7627 = vmatpush1.bf16.msra.mxu0 0
        %7628 = vmatprep.subr.bf16.mxu0 0
        %7629 = vmatpush1.bf16.msra.mxu0 0
        %7630 = vmatprep.subr.bf16.mxu0 0
        %7631 = vmatpush1.bf16.msra.mxu0 0
        %7632 = vmatprep.subr.bf16.mxu0 0
        %7633 = vmatpush1.bf16.msra.mxu0 0
        %7634 = vmatprep.subr.bf16.mxu0 0
        %7635 = vmatpush1.bf16.msra.mxu0 0
        %7636 = vmatprep.subr.bf16.mxu0 0
        %7637 = vmatpush1.bf16.msra.mxu0 0
        %7638 = vmatprep.subr.bf16.mxu0 0
        %7639 = vmatpush1.bf16.msra.mxu0 0
        %7640 = vmatprep.subr.bf16.mxu0 0
        %7641 = vmatpush1.bf16.msra.mxu0 0
        %7642 = vmatprep.mubr.bf16.mxu0 0
        %7643 = vmatmul.mubr.bf16.gmra.mrb[0].mxu0 %v7593
        %v7644 = vpop.f32.mrb[0].mxu0
        %v7645 = vadd.f32 0.0, %v7644
        %v7646 = vpop.f32.mrb[0].mxu0
        %v7647 = vadd.f32 0.0, %v7646
        %v7648 = vpop.f32.mrb[0].mxu0
        %v7649 = vadd.f32 0.0, %v7648
        %v7650 = vpop.f32.mrb[0].mxu0
        %v7651 = vadd.f32 0.0, %v7650
        %7652 = vmatprep.mubr.bf16.mxu0 0
        %7653 = vmatmul.mubr.bf16.gmra.mrb[0].mxu0 %v7596
        %v7654 = vpop.f32.mrb[0].mxu0
        %v7655 = vadd.f32 0.0, %v7654
        %v7656 = vpop.f32.mrb[0].mxu0
        %v7657 = vadd.f32 0.0, %v7656
        %v7658 = vpop.f32.mrb[0].mxu0
        %v7659 = vadd.f32 0.0, %v7658
        %v7660 = vpop.f32.mrb[0].mxu0
        %v7661 = vadd.f32 0.0, %v7660
        %7662 = vmatprep.mubr.bf16.mxu0 0
        %7663 = vmatmul.mubr.bf16.gmra.mrb[0].mxu0 %v7599
        %v7664 = vpop.f32.mrb[0].mxu0
        %v7665 = vadd.f32 0.0, %v7664
        %v7666 = vpop.f32.mrb[0].mxu0
        %v7667 = vadd.f32 0.0, %v7666
        %v7668 = vpop.f32.mrb[0].mxu0
        %v7669 = vpop.f32.mrb[0].mxu0
        %7670 = vdwg.mxu0
        %7671 = vmatprep.subr.bf16.mxu0 0
        %7672 = vmatpush1.bf16.msra.mxu0 %v7557
        %7673 = vmatprep.subr.bf16.mxu0 0
        %7674 = vmatpush1.bf16.msra.mxu0 %v7560
        %7675 = vmatprep.subr.bf16.mxu0 0
        %7676 = vmatpush1.bf16.msra.mxu0 %v7563
        %7677 = vmatprep.subr.bf16.mxu0 0
        %7678 = vmatpush1.bf16.msra.mxu0 %v7566
        %7679 = vmatprep.subr.bf16.mxu0 0
        %7680 = vmatpush1.bf16.msra.mxu0 %v7569
        %7681 = vmatprep.subr.bf16.mxu0 0
        %7682 = vmatpush1.bf16.msra.mxu0 %v7572
        %7683 = vmatprep.subr.bf16.mxu0 0
        %7684 = vmatpush1.bf16.msra.mxu0 %v7575
        %7685 = vmatprep.subr.bf16.mxu0 0
        %7686 = vmatpush1.bf16.msra.mxu0 %v7608
        %7687 = vmatprep.subr.bf16.mxu0 0
        %7688 = vmatpush1.bf16.msra.mxu0 0
        %7689 = vmatprep.subr.bf16.mxu0 0
        %7690 = vmatpush1.bf16.msra.mxu0 0
        %7691 = vmatprep.subr.bf16.mxu0 0
        %7692 = vmatpush1.bf16.msra.mxu0 0
        %7693 = vmatprep.subr.bf16.mxu0 0
        %7694 = vmatpush1.bf16.msra.mxu0 0
        %7695 = vmatprep.subr.bf16.mxu0 0
        %7696 = vmatpush1.bf16.msra.mxu0 0
        %7697 = vmatprep.subr.bf16.mxu0 0
        %7698 = vmatpush1.bf16.msra.mxu0 0
        %7699 = vmatprep.subr.bf16.mxu0 0
        %7700 = vmatpush1.bf16.msra.mxu0 0
        %7701 = vmatprep.subr.bf16.mxu0 0
        %7702 = vmatpush1.bf16.msra.mxu0 0
        %7703 = vmatprep.mubr.bf16.mxu0 0
        %7704 = vmatmul.mubr.bf16.gmra.mrb[0].mxu0 %v7593
        %v7705 = vpop.f32.mrb[0].mxu0
        %v7706 = vadd.f32 0.0, %v7705
        %v7707 = vpop.f32.mrb[0].mxu0
        %v7708 = vpop.f32.mrb[0].mxu0
        %v7709 = vadd.f32 0.0, %v7708
        %v7710 = vpop.f32.mrb[0].mxu0
        %7711 = vmatprep.mubr.bf16.mxu0 0
        %7712 = vmatmul.mubr.bf16.gmra.mrb[0].mxu0 %v7596
        %v7713 = vpop.f32.mrb[0].mxu0
        %v7714 = vadd.f32 0.0, %v7713
        %v7715 = vpop.f32.mrb[0].mxu0
        %v7716 = vpop.f32.mrb[0].mxu0
        %v7717 = vadd.f32 0.0, %v7716
        %v7718 = vpop.f32.mrb[0].mxu0
        %7719 = vmatprep.mubr.bf16.mxu0 0
        %7720 = vmatmul.mubr.bf16.gmra.mrb[0].mxu0 %v7599
        %v7721 = vpop.f32.mrb[0].mxu0
        %v7722 = vadd.f32 0.0, %v7721
        %v7723 = vpop.f32.mrb[0].mxu0
        %v7724 = vpop.f32.mrb[0].mxu0
        %v7725 = vpop.f32.mrb[0].mxu0
        %7726 = vdwg.mxu0
        %v7727 = vpack.c.bf16 %v7649, %v7645
        %v7728 = vpack.c.bf16 %v7651, %v7647
        %v7729 = vpack.c.bf16 %v7709, %v7706
        %v7730 = vpack.c.bf16 %v7659, %v7655
        %v7731 = vpack.c.bf16 %v7661, %v7657
        %v7732 = vpack.c.bf16 %v7717, %v7714
        %v7733 = vpack.c.bf16 %v7665, %v7665
        %v7734 = vpack.c.bf16 %v7667, %v7667
        %v7735 = vpack.c.bf16 %v7722, %v7722
        %v7736 = vld [vmem:[%s11] sm:$0xff]
        %v7737 = vld [vmem:[%s11 + $0x8] sm:$0xff]
        %v7738 = vld [vmem:[%s11 + $0x10] sm:$0xff]
        %v7739 = vld [vmem:[%s11 + $0x18] sm:$0xff]
        %v7740 = vld [vmem:[%s11 + $0x20] sm:$0xff]
        %v7741 = vld [vmem:[%s11 + $0x28] sm:$0xff]
        %v7742 = vld [vmem:[%s11 + $0x30] sm:$0xff]
        %v7743 = vld [vmem:[%s11 + $0x38] sm:$0xff]
        %v7744 = vld [vmem:[%s11 + $0x40] sm:$0xff]
        %v7745 = vld [vmem:[%s11 + $0x48] sm:$0xff]
        %v7746 = vld [vmem:[%s11 + $0x50] sm:$0xff]
        %v7747 = vld [vmem:[%s11 + $0x58] sm:$0xff]
        %v7748 = vld [vmem:[%s11 + $0x60] sm:$0xff]
        %v7749 = vld [vmem:[%s11 + $0x68] sm:$0xff]
        %v7750 = vld [vmem:[%s11 + $0x70] sm:$0xff]
        %v7751 = vld [vmem:[%s11 + $0x78] sm:$0xff]
        %v7752 = vld [vmem:[%s11 + $0x80] sm:$0xff]
        %v7753 = vld [vmem:[%s11 + $0x88] sm:$0xff]
        %v7754 = vld [vmem:[%s11 + $0x90] sm:$0xff]
        %v7755 = vld [vmem:[%s11 + $0x98] sm:$0xff]
        %v7756 = vld [vmem:[%s11 + $0xa0] sm:$0xff]
        %v7757 = vld [vmem:[%s11 + $0xa8] sm:$0xff]
        %v7758 = vld [vmem:[%s11 + $0xb0] sm:$0xff]
        %v7759 = vld [vmem:[%s11 + $0xb8] sm:$0xff]
        %v7760 = vld [vmem:[%s11 + $0xc0] sm:$0xff]
        %v7761 = vld [vmem:[%s11 + $0xc8] sm:$0xff]
        %v7762 = vld [vmem:[%s11 + $0xd0] sm:$0xff]
        %v7763 = vld [vmem:[%s11 + $0xd8] sm:$0xff]
        %v7764 = vld [vmem:[%s11 + $0xe0] sm:$0xff]
        %v7765 = vld [vmem:[%s11 + $0xe8] sm:$0xff]
        %v7766 = vld [vmem:[%s11 + $0xf0] sm:$0xff]
        %v7767 = vld [vmem:[%s11 + $0xf8] sm:$0xff]
        %v7768 = vld [vmem:[%s11 + $0x100] sm:$0xff]
        %v7769 = vld [vmem:[%s11 + $0x108] sm:$0xff]
        %v7770 = vld [vmem:[%s11 + $0x110] sm:$0xff]
        %v7771 = vld [vmem:[%s11 + $0x118] sm:$0xff]
        %v7772 = vld [vmem:[%s11 + $0x120] sm:$0xff]
        %v7773 = vld [vmem:[%s11 + $0x128] sm:$0xff]
        %v7774 = vld [vmem:[%s11 + $0x130] sm:$0xff]
        %v7775 = vld [vmem:[%s11 + $0x138] sm:$0xff]
        %v7776 = vld [vmem:[%s11 + $0x140] sm:$0xff]
        %v7777 = vld [vmem:[%s11 + $0x148] sm:$0xff]
        %v7778 = vld [vmem:[%s11 + $0x150] sm:$0xff]
        %v7779 = vld [vmem:[%s11 + $0x158] sm:$0xff]
        %v7780 = vld [vmem:[%s11 + $0x160] sm:$0xff]
        %v7781 = vld [vmem:[%s11 + $0x168] sm:$0xff]
        %v7782 = vld [vmem:[%s11 + $0x170] sm:$0xff]
        %v7783 = vld [vmem:[%s11 + $0x178] sm:$0xff]
        %v7784 = vld [vmem:[%s11 + $0x180] sm:$0xff]
        %v7785 = vld [vmem:[%s11 + $0x188] sm:$0xff]
        %v7786 = vld [vmem:[%s11 + $0x190] sm:$0xff]
        %v7787 = vld [vmem:[%s11 + $0x198] sm:$0xff]
        %v7788 = vld [vmem:[%s11 + $0x1a0] sm:$0xff]
        %v7789 = vld [vmem:[%s11 + $0x1a8] sm:$0xff]
        %v7790 = vld [vmem:[%s11 + $0x1b0] sm:$0xff]
        %v7791 = vld [vmem:[%s11 + $0x1b8] sm:$0xff]
        %v7792 = vld [vmem:[%s11 + $0x1c0] sm:$0xff]
        %v7793 = vld [vmem:[%s11 + $0x1c8] sm:$0xff]
        %v7794 = vld [vmem:[%s11 + $0x1d0] sm:$0xff]
        %v7795 = vld [vmem:[%s11 + $0x1d8] sm:$0xff]
        %v7796 = vld [vmem:[%s11 + $0x1e0] sm:$0xff]
        %v7797 = vld [vmem:[%s11 + $0x1e8] sm:$0xff]
        %v7798 = vld [vmem:[%s11 + $0x1f0] sm:$0xff]
        %v7799 = vld [vmem:[%s11 + $0x1f8] sm:$0xff]
        %v7800 = vld [vmem:[%s11 + $0x200] sm:$0xff]
        %v7801 = vld [vmem:[%s11 + $0x208] sm:$0xff]
        %v7802 = vld [vmem:[%s11 + $0x210] sm:$0xff]
        %v7803 = vld [vmem:[%s11 + $0x218] sm:$0xff]
        %v7804 = vld [vmem:[%s11 + $0x220] sm:$0xff]
        %v7805 = vld [vmem:[%s11 + $0x228] sm:$0xff]
        %v7806 = vld [vmem:[%s11 + $0x230] sm:$0xff]
        %v7807 = vld [vmem:[%s11 + $0x238] sm:$0xff]
        %s7808 = scalar_lea.vmem %s11, 576
        %v7809 = vld [vmem:[%s7808] sm:$0xff]
        %v7810 = vld [vmem:[%s7808 + $0x8] sm:$0xff]
        %v7811 = vld [vmem:[%s7808 + $0x10] sm:$0xff]
        %v7812 = vld [vmem:[%s7808 + $0x18] sm:$0xff]
        %v7813 = vld [vmem:[%s7808 + $0x20] sm:$0xff]
        %v7814 = vld [vmem:[%s7808 + $0x28] sm:$0xff]
        %v7815 = vld [vmem:[%s7808 + $0x30] sm:$0xff]
        %v7816 = vld [vmem:[%s7808 + $0x38] sm:$0xff]
        %v7817 = vld [vmem:[%s7808 + $0x40] sm:$0xff]
        %v7818 = vld [vmem:[%s7808 + $0x48] sm:$0xff]
        %v7819 = vld [vmem:[%s7808 + $0x50] sm:$0xff]
        %v7820 = vld [vmem:[%s7808 + $0x58] sm:$0xff]
        %v7821 = vld [vmem:[%s7808 + $0x60] sm:$0xff]
        %v7822 = vld [vmem:[%s7808 + $0x68] sm:$0xff]
        %v7823 = vld [vmem:[%s7808 + $0x70] sm:$0xff]
        %v7824 = vld [vmem:[%s7808 + $0x78] sm:$0xff]
        %v7825 = vld [vmem:[%s7808 + $0x80] sm:$0xff]
        %v7826 = vld [vmem:[%s7808 + $0x88] sm:$0xff]
        %v7827 = vld [vmem:[%s7808 + $0x90] sm:$0xff]
        %v7828 = vld [vmem:[%s7808 + $0x98] sm:$0xff]
        %v7829 = vld [vmem:[%s7808 + $0xa0] sm:$0xff]
        %v7830 = vld [vmem:[%s7808 + $0xa8] sm:$0xff]
        %v7831 = vld [vmem:[%s7808 + $0xb0] sm:$0xff]
        %v7832 = vld [vmem:[%s7808 + $0xb8] sm:$0xff]
        %v7833 = vld [vmem:[%s7808 + $0xc0] sm:$0xff]
        %v7834 = vld [vmem:[%s7808 + $0xc8] sm:$0xff]
        %v7835 = vld [vmem:[%s7808 + $0xd0] sm:$0xff]
        %v7836 = vld [vmem:[%s7808 + $0xd8] sm:$0xff]
        %v7837 = vld [vmem:[%s7808 + $0xe0] sm:$0xff]
        %v7838 = vld [vmem:[%s7808 + $0xe8] sm:$0xff]
        %v7839 = vld [vmem:[%s7808 + $0xf0] sm:$0xff]
        %v7840 = vld [vmem:[%s7808 + $0xf8] sm:$0xff]
        %v7841 = vld [vmem:[%s7808 + $0x100] sm:$0xff]
        %v7842 = vld [vmem:[%s7808 + $0x108] sm:$0xff]
        %v7843 = vld [vmem:[%s7808 + $0x110] sm:$0xff]
        %v7844 = vld [vmem:[%s7808 + $0x118] sm:$0xff]
        %v7845 = vld [vmem:[%s7808 + $0x120] sm:$0xff]
        %v7846 = vld [vmem:[%s7808 + $0x128] sm:$0xff]
        %v7847 = vld [vmem:[%s7808 + $0x130] sm:$0xff]
        %v7848 = vld [vmem:[%s7808 + $0x138] sm:$0xff]
        %v7849 = vld [vmem:[%s7808 + $0x140] sm:$0xff]
        %v7850 = vld [vmem:[%s7808 + $0x148] sm:$0xff]
        %v7851 = vld [vmem:[%s7808 + $0x150] sm:$0xff]
        %v7852 = vld [vmem:[%s7808 + $0x158] sm:$0xff]
        %v7853 = vld [vmem:[%s7808 + $0x160] sm:$0xff]
        %v7854 = vld [vmem:[%s7808 + $0x168] sm:$0xff]
        %v7855 = vld [vmem:[%s7808 + $0x170] sm:$0xff]
        %v7856 = vld [vmem:[%s7808 + $0x178] sm:$0xff]
        %v7857 = vld [vmem:[%s7808 + $0x180] sm:$0xff]
        %v7858 = vld [vmem:[%s7808 + $0x188] sm:$0xff]
        %v7859 = vld [vmem:[%s7808 + $0x190] sm:$0xff]
        %v7860 = vld [vmem:[%s7808 + $0x198] sm:$0xff]
        %v7861 = vld [vmem:[%s7808 + $0x1a0] sm:$0xff]
        %v7862 = vld [vmem:[%s7808 + $0x1a8] sm:$0xff]
        %v7863 = vld [vmem:[%s7808 + $0x1b0] sm:$0xff]
        %v7864 = vld [vmem:[%s7808 + $0x1b8] sm:$0xff]
        %v7865 = vld [vmem:[%s7808 + $0x1c0] sm:$0xff]
        %v7866 = vld [vmem:[%s7808 + $0x1c8] sm:$0xff]
        %v7867 = vld [vmem:[%s7808 + $0x1d0] sm:$0xff]
        %v7868 = vld [vmem:[%s7808 + $0x1d8] sm:$0xff]
        %v7869 = vld [vmem:[%s7808 + $0x1e0] sm:$0xff]
        %v7870 = vld [vmem:[%s7808 + $0x1e8] sm:$0xff]
        %v7871 = vld [vmem:[%s7808 + $0x1f0] sm:$0xff]
        %v7872 = vld [vmem:[%s7808 + $0x1f8] sm:$0xff]
        %v7873 = vld [vmem:[%s7808 + $0x200] sm:$0xff]
        %v7874 = vld [vmem:[%s7808 + $0x208] sm:$0xff]
        %v7875 = vld [vmem:[%s7808 + $0x210] sm:$0xff]
        %v7876 = vld [vmem:[%s7808 + $0x218] sm:$0xff]
        %v7877 = vld [vmem:[%s7808 + $0x220] sm:$0xff]
        %v7878 = vld [vmem:[%s7808 + $0x228] sm:$0xff]
        %v7879 = vld [vmem:[%s7808 + $0x230] sm:$0xff]
        %v7880 = vld [vmem:[%s7808 + $0x238] sm:$0xff]
        %v7884 = vrot.slane %v7727, 4
        %v7885 = vrot.slane %v7728, 4
        %v7886 = vrot.slane %v7729, 4
        %v7961 = vunpack.c.l.b16 %v7809
        %v7962 = vunpack.c.h.b16 %v7809
        %v7963 = vunpack.c.l.b16 %v7810
        %v7964 = vunpack.c.h.b16 %v7810
        %v7965 = vunpack.c.l.b16 %v7811
        %v7966 = vunpack.c.h.b16 %v7811
        %v7967 = vunpack.c.l.b16 %v7812
        %v7968 = vunpack.c.h.b16 %v7812
        %v7969 = vunpack.c.l.b16 %v7813
        %v7970 = vunpack.c.h.b16 %v7813
        %v7971 = vunpack.c.l.b16 %v7814
        %v7972 = vunpack.c.h.b16 %v7814
        %v7973 = vunpack.c.l.b16 %v7815
        %v7974 = vunpack.c.h.b16 %v7815
        %v7975 = vunpack.c.l.b16 %v7816
        %v7976 = vunpack.c.h.b16 %v7816
        %v7977 = vunpack.c.l.b16 %v7817
        %v7978 = vunpack.c.h.b16 %v7817
        %v7979 = vunpack.c.l.b16 %v7818
        %v7980 = vunpack.c.h.b16 %v7818
        %v7981 = vunpack.c.l.b16 %v7819
        %v7982 = vunpack.c.h.b16 %v7819
        %v7983 = vunpack.c.l.b16 %v7820
        %v7984 = vunpack.c.h.b16 %v7820
        %v7985 = vunpack.c.l.b16 %v7821
        %v7986 = vunpack.c.h.b16 %v7821
        %v7987 = vunpack.c.l.b16 %v7822
        %v7988 = vunpack.c.h.b16 %v7822
        %v7989 = vunpack.c.l.b16 %v7823
        %v7990 = vunpack.c.h.b16 %v7823
        %v7991 = vunpack.c.l.b16 %v7824
        %v7992 = vunpack.c.h.b16 %v7824
        %v7993 = vunpack.c.l.b16 %v7825
        %v7994 = vunpack.c.h.b16 %v7825
        %v7995 = vunpack.c.l.b16 %v7826
        %v7996 = vunpack.c.h.b16 %v7826
        %v7997 = vunpack.c.l.b16 %v7827
        %v7998 = vunpack.c.h.b16 %v7827
        %v7999 = vunpack.c.l.b16 %v7828
        %v8000 = vunpack.c.h.b16 %v7828
        %v8001 = vunpack.c.l.b16 %v7829
        %v8002 = vunpack.c.h.b16 %v7829
        %v8003 = vunpack.c.l.b16 %v7830
        %v8004 = vunpack.c.h.b16 %v7830
        %v8005 = vunpack.c.l.b16 %v7831
        %v8006 = vunpack.c.h.b16 %v7831
        %v8007 = vunpack.c.l.b16 %v7832
        %v8008 = vunpack.c.h.b16 %v7832
        %v8009 = vunpack.c.l.b16 %v7833
        %v8010 = vunpack.c.h.b16 %v7833
        %v8011 = vunpack.c.l.b16 %v7834
        %v8012 = vunpack.c.h.b16 %v7834
        %v8013 = vunpack.c.l.b16 %v7835
        %v8014 = vunpack.c.h.b16 %v7835
        %v8015 = vunpack.c.l.b16 %v7836
        %v8016 = vunpack.c.h.b16 %v7836
        %v8017 = vunpack.c.l.b16 %v7837
        %v8018 = vunpack.c.h.b16 %v7837
        %v8019 = vunpack.c.l.b16 %v7838
        %v8020 = vunpack.c.h.b16 %v7838
        %v8021 = vunpack.c.l.b16 %v7839
        %v8022 = vunpack.c.h.b16 %v7839
        %v8023 = vunpack.c.l.b16 %v7840
        %v8024 = vunpack.c.h.b16 %v7840
        %v8025 = vunpack.c.l.b16 %v7841
        %v8026 = vunpack.c.h.b16 %v7841
        %v8027 = vunpack.c.l.b16 %v7842
        %v8028 = vunpack.c.h.b16 %v7842
        %v8029 = vunpack.c.l.b16 %v7843
        %v8030 = vunpack.c.h.b16 %v7843
        %v8031 = vunpack.c.l.b16 %v7844
        %v8032 = vunpack.c.h.b16 %v7844
        %v8033 = vunpack.c.l.b16 %v7845
        %v8034 = vunpack.c.h.b16 %v7845
        %v8035 = vunpack.c.l.b16 %v7846
        %v8036 = vunpack.c.h.b16 %v7846
        %v8037 = vunpack.c.l.b16 %v7847
        %v8038 = vunpack.c.h.b16 %v7847
        %v8039 = vunpack.c.l.b16 %v7848
        %v8040 = vunpack.c.h.b16 %v7848
        %v8041 = vunpack.c.l.b16 %v7849
        %v8042 = vunpack.c.h.b16 %v7849
        %v8043 = vunpack.c.l.b16 %v7850
        %v8044 = vunpack.c.h.b16 %v7850
        %v8045 = vunpack.c.l.b16 %v7851
        %v8046 = vunpack.c.h.b16 %v7851
        %v8047 = vunpack.c.l.b16 %v7852
        %v8048 = vunpack.c.h.b16 %v7852
        %v8049 = vunpack.c.l.b16 %v7853
        %v8050 = vunpack.c.h.b16 %v7853
        %v8051 = vunpack.c.l.b16 %v7854
        %v8052 = vunpack.c.h.b16 %v7854
        %v8053 = vunpack.c.l.b16 %v7855
        %v8054 = vunpack.c.h.b16 %v7855
        %v8055 = vunpack.c.l.b16 %v7856
        %v8056 = vunpack.c.h.b16 %v7856
        %v8057 = vunpack.c.l.b16 %v7857
        %v8058 = vunpack.c.h.b16 %v7857
        %v8059 = vunpack.c.l.b16 %v7858
        %v8060 = vunpack.c.h.b16 %v7858
        %v8061 = vunpack.c.l.b16 %v7859
        %v8062 = vunpack.c.h.b16 %v7859
        %v8063 = vunpack.c.l.b16 %v7860
        %v8064 = vunpack.c.h.b16 %v7860
        %v8065 = vunpack.c.l.b16 %v7861
        %v8066 = vunpack.c.h.b16 %v7861
        %v8067 = vunpack.c.l.b16 %v7862
        %v8068 = vunpack.c.h.b16 %v7862
        %v8069 = vunpack.c.l.b16 %v7863
        %v8070 = vunpack.c.h.b16 %v7863
        %v8071 = vunpack.c.l.b16 %v7864
        %v8072 = vunpack.c.h.b16 %v7864
        %v8073 = vunpack.c.l.b16 %v7865
        %v8074 = vunpack.c.h.b16 %v7865
        %v8075 = vunpack.c.l.b16 %v7866
        %v8076 = vunpack.c.h.b16 %v7866
        %v8077 = vunpack.c.l.b16 %v7867
        %v8078 = vunpack.c.h.b16 %v7867
        %v8079 = vunpack.c.l.b16 %v7868
        %v8080 = vunpack.c.h.b16 %v7868
        %v8081 = vunpack.c.l.b16 %v7869
        %v8082 = vunpack.c.h.b16 %v7869
        %v8083 = vunpack.c.l.b16 %v7870
        %v8084 = vunpack.c.h.b16 %v7870
        %v8085 = vunpack.c.l.b16 %v7871
        %v8086 = vunpack.c.h.b16 %v7871
        %v8087 = vunpack.c.l.b16 %v7872
        %v8088 = vunpack.c.h.b16 %v7872
        %v8089 = vunpack.c.l.b16 %v7873
        %v8090 = vunpack.c.h.b16 %v7873
        %v8091 = vunpack.c.l.b16 %v7874
        %v8092 = vunpack.c.h.b16 %v7874
        %v8093 = vunpack.c.l.b16 %v7875
        %v8094 = vunpack.c.h.b16 %v7875
        %v8095 = vunpack.c.l.b16 %v7876
        %v8096 = vunpack.c.h.b16 %v7876
        %v8097 = vunpack.c.l.b16 %v7877
        %v8098 = vunpack.c.h.b16 %v7877
        %v8099 = vunpack.c.l.b16 %v7878
        %v8100 = vunpack.c.h.b16 %v7878
        %v8101 = vunpack.c.l.b16 %v7879
        %v8102 = vunpack.c.h.b16 %v7879
        %v8103 = vunpack.c.l.b16 %v7880
        %v8104 = vunpack.c.h.b16 %v7880
        %v8105 = vpack.c.b16 %v7965, %v7961
        %v8106 = vpack.c.b16 %v7966, %v7962
        %v8107 = vpack.c.b16 %v7967, %v7963
        %v8108 = vpack.c.b16 %v7968, %v7964
        %v8109 = vpack.c.b16 %v7973, %v7969
        %v8110 = vpack.c.b16 %v7974, %v7970
        %v8111 = vpack.c.b16 %v7975, %v7971
        %v8112 = vpack.c.b16 %v7976, %v7972
        %v8113 = vpack.c.b16 %v7981, %v7977
        %v8114 = vpack.c.b16 %v7982, %v7978
        %v8115 = vpack.c.b16 %v7983, %v7979
        %v8116 = vpack.c.b16 %v7984, %v7980
        %v8117 = vpack.c.b16 %v7989, %v7985
        %v8118 = vpack.c.b16 %v7990, %v7986
        %v8119 = vpack.c.b16 %v7991, %v7987
        %v8120 = vpack.c.b16 %v7992, %v7988
        %v8121 = vpack.c.b16 %v7997, %v7993
        %v8122 = vpack.c.b16 %v7998, %v7994
        %v8123 = vpack.c.b16 %v7999, %v7995
        %v8124 = vpack.c.b16 %v8000, %v7996
        %v8125 = vpack.c.b16 %v8005, %v8001
        %v8126 = vpack.c.b16 %v8006, %v8002
        %v8127 = vpack.c.b16 %v8007, %v8003
        %v8128 = vpack.c.b16 %v8008, %v8004
        %v8129 = vpack.c.b16 %v8013, %v8009
        %v8130 = vpack.c.b16 %v8014, %v8010
        %v8131 = vpack.c.b16 %v8015, %v8011
        %v8132 = vpack.c.b16 %v8016, %v8012
        %v8133 = vpack.c.b16 %v8021, %v8017
        %v8134 = vpack.c.b16 %v8022, %v8018
        %v8135 = vpack.c.b16 %v8023, %v8019
        %v8136 = vpack.c.b16 %v8024, %v8020
        %v8137 = vpack.c.b16 %v8029, %v8025
        %v8138 = vpack.c.b16 %v8030, %v8026
        %v8139 = vpack.c.b16 %v8031, %v8027
        %v8140 = vpack.c.b16 %v8032, %v8028
        %v8141 = vpack.c.b16 %v8037, %v8033
        %v8142 = vpack.c.b16 %v8038, %v8034
        %v8143 = vpack.c.b16 %v8039, %v8035
        %v8144 = vpack.c.b16 %v8040, %v8036
        %v8145 = vpack.c.b16 %v8045, %v8041
        %v8146 = vpack.c.b16 %v8046, %v8042
        %v8147 = vpack.c.b16 %v8047, %v8043
        %v8148 = vpack.c.b16 %v8048, %v8044
        %v8149 = vpack.c.b16 %v8053, %v8049
        %v8150 = vpack.c.b16 %v8054, %v8050
        %v8151 = vpack.c.b16 %v8055, %v8051
        %v8152 = vpack.c.b16 %v8056, %v8052
        %v8153 = vpack.c.b16 %v8061, %v8057
        %v8154 = vpack.c.b16 %v8062, %v8058
        %v8155 = vpack.c.b16 %v8063, %v8059
        %v8156 = vpack.c.b16 %v8064, %v8060
        %v8157 = vpack.c.b16 %v8069, %v8065
        %v8158 = vpack.c.b16 %v8070, %v8066
        %v8159 = vpack.c.b16 %v8071, %v8067
        %v8160 = vpack.c.b16 %v8072, %v8068
        %v8161 = vpack.c.b16 %v8077, %v8073
        %v8162 = vpack.c.b16 %v8078, %v8074
        %v8163 = vpack.c.b16 %v8079, %v8075
        %v8164 = vpack.c.b16 %v8080, %v8076
        %v8165 = vpack.c.b16 %v8085, %v8081
        %v8166 = vpack.c.b16 %v8086, %v8082
        %v8167 = vpack.c.b16 %v8087, %v8083
        %v8168 = vpack.c.b16 %v8088, %v8084
        %v8169 = vpack.c.b16 %v8093, %v8089
        %v8170 = vpack.c.b16 %v8094, %v8090
        %v8171 = vpack.c.b16 %v8095, %v8091
        %v8172 = vpack.c.b16 %v8096, %v8092
        %v8173 = vpack.c.b16 %v8101, %v8097
        %v8174 = vpack.c.b16 %v8102, %v8098
        %v8175 = vpack.c.b16 %v8103, %v8099
        %v8176 = vpack.c.b16 %v8104, %v8100
        %vm8249 = vcmask 261120
        %v8251 = vsel %vm8249, %v7886, 0
        %8253 = vmatprep.subr.bf16.mxu0 %v8106
        %8254 = vmatpush1.bf16.msra.mxu0 %v8105
        %8255 = vmatprep.subr.bf16.mxu0 %v8110
        %8256 = vmatpush1.bf16.msra.mxu0 %v8109
        %8257 = vmatprep.subr.bf16.mxu0 %v8114
        %8258 = vmatpush1.bf16.msra.mxu0 %v8113
        %8259 = vmatprep.subr.bf16.mxu0 %v8118
        %8260 = vmatpush1.bf16.msra.mxu0 %v8117
        %8261 = vmatprep.subr.bf16.mxu0 %v8122
        %8262 = vmatpush1.bf16.msra.mxu0 %v8121
        %8263 = vmatprep.subr.bf16.mxu0 %v8126
        %8264 = vmatpush1.bf16.msra.mxu0 %v8125
        %8265 = vmatprep.subr.bf16.mxu0 %v8130
        %8266 = vmatpush1.bf16.msra.mxu0 %v8129
        %8267 = vmatprep.subr.bf16.mxu0 %v8134
        %8268 = vmatpush1.bf16.msra.mxu0 %v8133
        %8269 = vmatprep.subr.bf16.mxu0 %v8138
        %8270 = vmatpush1.bf16.msra.mxu0 %v8137
        %8271 = vmatprep.subr.bf16.mxu0 %v8142
        %8272 = vmatpush1.bf16.msra.mxu0 %v8141
        %8273 = vmatprep.subr.bf16.mxu0 %v8146
        %8274 = vmatpush1.bf16.msra.mxu0 %v8145
        %8275 = vmatprep.subr.bf16.mxu0 %v8150
        %8276 = vmatpush1.bf16.msra.mxu0 %v8149
        %8277 = vmatprep.subr.bf16.mxu0 %v8154
        %8278 = vmatpush1.bf16.msra.mxu0 %v8153
        %8279 = vmatprep.subr.bf16.mxu0 %v8158
        %8280 = vmatpush1.bf16.msra.mxu0 %v8157
        %8281 = vmatprep.subr.bf16.mxu0 %v8162
        %8282 = vmatpush1.bf16.msra.mxu0 %v8161
        %8283 = vmatprep.subr.bf16.mxu0 %v8166
        %8284 = vmatpush1.bf16.msra.mxu0 %v8165
        %8285 = vmatprep.mubr.bf16.mxu0 %v7885
        %8286 = vmatmul.mubr.bf16.gmra.mrb[0].mxu0 %v7884
        %v8287 = vpop.f32.mrb[0].mxu0
        %v8288 = vadd.f32 0.0, %v8287
        %v8289 = vpop.f32.mrb[0].mxu0
        %v8290 = vadd.f32 0.0, %v8289
        %v8291 = vpop.f32.mrb[0].mxu0
        %v8292 = vpop.f32.mrb[0].mxu0
        %8293 = vdwg.mxu0
        %8294 = vmatprep.subr.bf16.mxu0 %v8170
        %8295 = vmatpush1.bf16.msra.mxu0 %v8169
        %8296 = vmatprep.subr.bf16.mxu0 %v8174
        %8297 = vmatpush1.bf16.msra.mxu0 %v8173
        %8298 = vmatprep.subr.bf16.mxu0 0
        %8299 = vmatpush1.bf16.msra.mxu0 0
        %8300 = vmatprep.subr.bf16.mxu0 0
        %8301 = vmatpush1.bf16.msra.mxu0 0
        %8302 = vmatprep.subr.bf16.mxu0 0
        %8303 = vmatpush1.bf16.msra.mxu0 0
        %8304 = vmatprep.subr.bf16.mxu0 0
        %8305 = vmatpush1.bf16.msra.mxu0 0
        %8306 = vmatprep.subr.bf16.mxu0 0
        %8307 = vmatpush1.bf16.msra.mxu0 0
        %8308 = vmatprep.subr.bf16.mxu0 0
        %8309 = vmatpush1.bf16.msra.mxu0 0
        %8310 = vmatprep.subr.bf16.mxu0 0
        %8311 = vmatpush1.bf16.msra.mxu0 0
        %8312 = vmatprep.subr.bf16.mxu0 0
        %8313 = vmatpush1.bf16.msra.mxu0 0
        %8314 = vmatprep.subr.bf16.mxu0 0
        %8315 = vmatpush1.bf16.msra.mxu0 0
        %8316 = vmatprep.subr.bf16.mxu0 0
        %8317 = vmatpush1.bf16.msra.mxu0 0
        %8318 = vmatprep.subr.bf16.mxu0 0
        %8319 = vmatpush1.bf16.msra.mxu0 0
        %8320 = vmatprep.subr.bf16.mxu0 0
        %8321 = vmatpush1.bf16.msra.mxu0 0
        %8322 = vmatprep.subr.bf16.mxu0 0
        %8323 = vmatpush1.bf16.msra.mxu0 0
        %8324 = vmatprep.subr.bf16.mxu0 0
        %8325 = vmatpush1.bf16.msra.mxu0 0
        %8326 = vmatprep.mubr.bf16.mxu0 0
        %8327 = vmatmul.mubr.bf16.gmra.mrb[0].mxu0 %v8251
        %v8328 = vpop.f32.mrb[0].mxu0
        %v8329 = vadd.f32 %v8288, %v8328
        %v8330 = vpop.f32.mrb[0].mxu0
        %v8331 = vadd.f32 %v8290, %v8330
        %v8332 = vpop.f32.mrb[0].mxu0
        %v8333 = vpop.f32.mrb[0].mxu0
        %8334 = vdwg.mxu0
        %8335 = vmatprep.subr.bf16.mxu0 %v8108
        %8336 = vmatpush1.bf16.msra.mxu0 %v8107
        %8337 = vmatprep.subr.bf16.mxu0 %v8112
        %8338 = vmatpush1.bf16.msra.mxu0 %v8111
        %8339 = vmatprep.subr.bf16.mxu0 %v8116
        %8340 = vmatpush1.bf16.msra.mxu0 %v8115
        %8341 = vmatprep.subr.bf16.mxu0 %v8120
        %8342 = vmatpush1.bf16.msra.mxu0 %v8119
        %8343 = vmatprep.subr.bf16.mxu0 %v8124
        %8344 = vmatpush1.bf16.msra.mxu0 %v8123
        %8345 = vmatprep.subr.bf16.mxu0 %v8128
        %8346 = vmatpush1.bf16.msra.mxu0 %v8127
        %8347 = vmatprep.subr.bf16.mxu0 %v8132
        %8348 = vmatpush1.bf16.msra.mxu0 %v8131
        %8349 = vmatprep.subr.bf16.mxu0 %v8136
        %8350 = vmatpush1.bf16.msra.mxu0 %v8135
        %8351 = vmatprep.subr.bf16.mxu0 %v8140
        %8352 = vmatpush1.bf16.msra.mxu0 %v8139
        %8353 = vmatprep.subr.bf16.mxu0 %v8144
        %8354 = vmatpush1.bf16.msra.mxu0 %v8143
        %8355 = vmatprep.subr.bf16.mxu0 %v8148
        %8356 = vmatpush1.bf16.msra.mxu0 %v8147
        %8357 = vmatprep.subr.bf16.mxu0 %v8152
        %8358 = vmatpush1.bf16.msra.mxu0 %v8151
        %8359 = vmatprep.subr.bf16.mxu0 %v8156
        %8360 = vmatpush1.bf16.msra.mxu0 %v8155
        %8361 = vmatprep.subr.bf16.mxu0 %v8160
        %8362 = vmatpush1.bf16.msra.mxu0 %v8159
        %8363 = vmatprep.subr.bf16.mxu0 %v8164
        %8364 = vmatpush1.bf16.msra.mxu0 %v8163
        %8365 = vmatprep.subr.bf16.mxu0 %v8168
        %8366 = vmatpush1.bf16.msra.mxu0 %v8167
        %8367 = vmatprep.mubr.bf16.mxu0 %v7885
        %8368 = vmatmul.mubr.bf16.gmra.mrb[0].mxu0 %v7884
        %v8369 = vpop.f32.mrb[0].mxu0
        %v8370 = vadd.f32 0.0, %v8369
        %v8371 = vpop.f32.mrb[0].mxu0
        %v8372 = vadd.f32 0.0, %v8371
        %v8373 = vpop.f32.mrb[0].mxu0
        %v8374 = vpop.f32.mrb[0].mxu0
        %8375 = vdwg.mxu0
        %8376 = vmatprep.subr.bf16.mxu0 %v8172
        %8377 = vmatpush1.bf16.msra.mxu0 %v8171
        %8378 = vmatprep.subr.bf16.mxu0 %v8176
        %8379 = vmatpush1.bf16.msra.mxu0 %v8175
        %8380 = vmatprep.subr.bf16.mxu0 0
        %8381 = vmatpush1.bf16.msra.mxu0 0
        %8382 = vmatprep.subr.bf16.mxu0 0
        %8383 = vmatpush1.bf16.msra.mxu0 0
        %8384 = vmatprep.subr.bf16.mxu0 0
        %8385 = vmatpush1.bf16.msra.mxu0 0
        %8386 = vmatprep.subr.bf16.mxu0 0
        %8387 = vmatpush1.bf16.msra.mxu0 0
        %8388 = vmatprep.subr.bf16.mxu0 0
        %8389 = vmatpush1.bf16.msra.mxu0 0
        %8390 = vmatprep.subr.bf16.mxu0 0
        %8391 = vmatpush1.bf16.msra.mxu0 0
        %8392 = vmatprep.subr.bf16.mxu0 0
        %8393 = vmatpush1.bf16.msra.mxu0 0
        %8394 = vmatprep.subr.bf16.mxu0 0
        %8395 = vmatpush1.bf16.msra.mxu0 0
        %8396 = vmatprep.subr.bf16.mxu0 0
        %8397 = vmatpush1.bf16.msra.mxu0 0
        %8398 = vmatprep.subr.bf16.mxu0 0
        %8399 = vmatpush1.bf16.msra.mxu0 0
        %8400 = vmatprep.subr.bf16.mxu0 0
        %8401 = vmatpush1.bf16.msra.mxu0 0
        %8402 = vmatprep.subr.bf16.mxu0 0
        %8403 = vmatpush1.bf16.msra.mxu0 0
        %8404 = vmatprep.subr.bf16.mxu0 0
        %8405 = vmatpush1.bf16.msra.mxu0 0
        %8406 = vmatprep.subr.bf16.mxu0 0
        %8407 = vmatpush1.bf16.msra.mxu0 0
        %8408 = vmatprep.mubr.bf16.mxu0 0
        %8409 = vmatmul.mubr.bf16.gmra.mrb[0].mxu0 %v8251
        %v8410 = vpop.f32.mrb[0].mxu0
        %v8411 = vadd.f32 %v8370, %v8410
        %v8412 = vpop.f32.mrb[0].mxu0
        %v8413 = vadd.f32 %v8372, %v8412
        %v8414 = vpop.f32.mrb[0].mxu0
        %v8415 = vpop.f32.mrb[0].mxu0
        %8416 = vdwg.mxu0
        %v8489 = vunpack.c.l.b16 %v7736
        %v8490 = vunpack.c.h.b16 %v7736
        %v8491 = vunpack.c.l.b16 %v7737
        %v8492 = vunpack.c.h.b16 %v7737
        %v8493 = vunpack.c.l.b16 %v7738
        %v8494 = vunpack.c.h.b16 %v7738
        %v8495 = vunpack.c.l.b16 %v7739
        %v8496 = vunpack.c.h.b16 %v7739
        %v8497 = vunpack.c.l.b16 %v7740
        %v8498 = vunpack.c.h.b16 %v7740
        %v8499 = vunpack.c.l.b16 %v7741
        %v8500 = vunpack.c.h.b16 %v7741
        %v8501 = vunpack.c.l.b16 %v7742
        %v8502 = vunpack.c.h.b16 %v7742
        %v8503 = vunpack.c.l.b16 %v7743
        %v8504 = vunpack.c.h.b16 %v7743
        %v8505 = vunpack.c.l.b16 %v7744
        %v8506 = vunpack.c.h.b16 %v7744
        %v8507 = vunpack.c.l.b16 %v7745
        %v8508 = vunpack.c.h.b16 %v7745
        %v8509 = vunpack.c.l.b16 %v7746
        %v8510 = vunpack.c.h.b16 %v7746
        %v8511 = vunpack.c.l.b16 %v7747
        %v8512 = vunpack.c.h.b16 %v7747
        %v8513 = vunpack.c.l.b16 %v7748
        %v8514 = vunpack.c.h.b16 %v7748
        %v8515 = vunpack.c.l.b16 %v7749
        %v8516 = vunpack.c.h.b16 %v7749
        %v8517 = vunpack.c.l.b16 %v7750
        %v8518 = vunpack.c.h.b16 %v7750
        %v8519 = vunpack.c.l.b16 %v7751
        %v8520 = vunpack.c.h.b16 %v7751
        %v8521 = vunpack.c.l.b16 %v7752
        %v8522 = vunpack.c.h.b16 %v7752
        %v8523 = vunpack.c.l.b16 %v7753
        %v8524 = vunpack.c.h.b16 %v7753
        %v8525 = vunpack.c.l.b16 %v7754
        %v8526 = vunpack.c.h.b16 %v7754
        %v8527 = vunpack.c.l.b16 %v7755
        %v8528 = vunpack.c.h.b16 %v7755
        %v8529 = vunpack.c.l.b16 %v7756
        %v8530 = vunpack.c.h.b16 %v7756
        %v8531 = vunpack.c.l.b16 %v7757
        %v8532 = vunpack.c.h.b16 %v7757
        %v8533 = vunpack.c.l.b16 %v7758
        %v8534 = vunpack.c.h.b16 %v7758
        %v8535 = vunpack.c.l.b16 %v7759
        %v8536 = vunpack.c.h.b16 %v7759
        %v8537 = vunpack.c.l.b16 %v7760
        %v8538 = vunpack.c.h.b16 %v7760
        %v8539 = vunpack.c.l.b16 %v7761
        %v8540 = vunpack.c.h.b16 %v7761
        %v8541 = vunpack.c.l.b16 %v7762
        %v8542 = vunpack.c.h.b16 %v7762
        %v8543 = vunpack.c.l.b16 %v7763
        %v8544 = vunpack.c.h.b16 %v7763
        %v8545 = vunpack.c.l.b16 %v7764
        %v8546 = vunpack.c.h.b16 %v7764
        %v8547 = vunpack.c.l.b16 %v7765
        %v8548 = vunpack.c.h.b16 %v7765
        %v8549 = vunpack.c.l.b16 %v7766
        %v8550 = vunpack.c.h.b16 %v7766
        %v8551 = vunpack.c.l.b16 %v7767
        %v8552 = vunpack.c.h.b16 %v7767
        %v8553 = vunpack.c.l.b16 %v7768
        %v8554 = vunpack.c.h.b16 %v7768
        %v8555 = vunpack.c.l.b16 %v7769
        %v8556 = vunpack.c.h.b16 %v7769
        %v8557 = vunpack.c.l.b16 %v7770
        %v8558 = vunpack.c.h.b16 %v7770
        %v8559 = vunpack.c.l.b16 %v7771
        %v8560 = vunpack.c.h.b16 %v7771
        %v8561 = vunpack.c.l.b16 %v7772
        %v8562 = vunpack.c.h.b16 %v7772
        %v8563 = vunpack.c.l.b16 %v7773
        %v8564 = vunpack.c.h.b16 %v7773
        %v8565 = vunpack.c.l.b16 %v7774
        %v8566 = vunpack.c.h.b16 %v7774
        %v8567 = vunpack.c.l.b16 %v7775
        %v8568 = vunpack.c.h.b16 %v7775
        %v8569 = vunpack.c.l.b16 %v7776
        %v8570 = vunpack.c.h.b16 %v7776
        %v8571 = vunpack.c.l.b16 %v7777
        %v8572 = vunpack.c.h.b16 %v7777
        %v8573 = vunpack.c.l.b16 %v7778
        %v8574 = vunpack.c.h.b16 %v7778
        %v8575 = vunpack.c.l.b16 %v7779
        %v8576 = vunpack.c.h.b16 %v7779
        %v8577 = vunpack.c.l.b16 %v7780
        %v8578 = vunpack.c.h.b16 %v7780
        %v8579 = vunpack.c.l.b16 %v7781
        %v8580 = vunpack.c.h.b16 %v7781
        %v8581 = vunpack.c.l.b16 %v7782
        %v8582 = vunpack.c.h.b16 %v7782
        %v8583 = vunpack.c.l.b16 %v7783
        %v8584 = vunpack.c.h.b16 %v7783
        %v8585 = vunpack.c.l.b16 %v7784
        %v8586 = vunpack.c.h.b16 %v7784
        %v8587 = vunpack.c.l.b16 %v7785
        %v8588 = vunpack.c.h.b16 %v7785
        %v8589 = vunpack.c.l.b16 %v7786
        %v8590 = vunpack.c.h.b16 %v7786
        %v8591 = vunpack.c.l.b16 %v7787
        %v8592 = vunpack.c.h.b16 %v7787
        %v8593 = vunpack.c.l.b16 %v7788
        %v8594 = vunpack.c.h.b16 %v7788
        %v8595 = vunpack.c.l.b16 %v7789
        %v8596 = vunpack.c.h.b16 %v7789
        %v8597 = vunpack.c.l.b16 %v7790
        %v8598 = vunpack.c.h.b16 %v7790
        %v8599 = vunpack.c.l.b16 %v7791
        %v8600 = vunpack.c.h.b16 %v7791
        %v8601 = vunpack.c.l.b16 %v7792
        %v8602 = vunpack.c.h.b16 %v7792
        %v8603 = vunpack.c.l.b16 %v7793
        %v8604 = vunpack.c.h.b16 %v7793
        %v8605 = vunpack.c.l.b16 %v7794
        %v8606 = vunpack.c.h.b16 %v7794
        %v8607 = vunpack.c.l.b16 %v7795
        %v8608 = vunpack.c.h.b16 %v7795
        %v8609 = vunpack.c.l.b16 %v7796
        %v8610 = vunpack.c.h.b16 %v7796
        %v8611 = vunpack.c.l.b16 %v7797
        %v8612 = vunpack.c.h.b16 %v7797
        %v8613 = vunpack.c.l.b16 %v7798
        %v8614 = vunpack.c.h.b16 %v7798
        %v8615 = vunpack.c.l.b16 %v7799
        %v8616 = vunpack.c.h.b16 %v7799
        %v8617 = vunpack.c.l.b16 %v7800
        %v8618 = vunpack.c.h.b16 %v7800
        %v8619 = vunpack.c.l.b16 %v7801
        %v8620 = vunpack.c.h.b16 %v7801
        %v8621 = vunpack.c.l.b16 %v7802
        %v8622 = vunpack.c.h.b16 %v7802
        %v8623 = vunpack.c.l.b16 %v7803
        %v8624 = vunpack.c.h.b16 %v7803
        %v8625 = vunpack.c.l.b16 %v7804
        %v8626 = vunpack.c.h.b16 %v7804
        %v8627 = vunpack.c.l.b16 %v7805
        %v8628 = vunpack.c.h.b16 %v7805
        %v8629 = vunpack.c.l.b16 %v7806
        %v8630 = vunpack.c.h.b16 %v7806
        %v8631 = vunpack.c.l.b16 %v7807
        %v8632 = vunpack.c.h.b16 %v7807
        %v8633 = vpack.c.b16 %v8493, %v8489
        %v8634 = vpack.c.b16 %v8494, %v8490
        %v8635 = vpack.c.b16 %v8495, %v8491
        %v8636 = vpack.c.b16 %v8496, %v8492
        %v8637 = vpack.c.b16 %v8501, %v8497
        %v8638 = vpack.c.b16 %v8502, %v8498
        %v8639 = vpack.c.b16 %v8503, %v8499
        %v8640 = vpack.c.b16 %v8504, %v8500
        %v8641 = vpack.c.b16 %v8509, %v8505
        %v8642 = vpack.c.b16 %v8510, %v8506
        %v8643 = vpack.c.b16 %v8511, %v8507
        %v8644 = vpack.c.b16 %v8512, %v8508
        %v8645 = vpack.c.b16 %v8517, %v8513
        %v8646 = vpack.c.b16 %v8518, %v8514
        %v8647 = vpack.c.b16 %v8519, %v8515
        %v8648 = vpack.c.b16 %v8520, %v8516
        %v8649 = vpack.c.b16 %v8525, %v8521
        %v8650 = vpack.c.b16 %v8526, %v8522
        %v8651 = vpack.c.b16 %v8527, %v8523
        %v8652 = vpack.c.b16 %v8528, %v8524
        %v8653 = vpack.c.b16 %v8533, %v8529
        %v8654 = vpack.c.b16 %v8534, %v8530
        %v8655 = vpack.c.b16 %v8535, %v8531
        %v8656 = vpack.c.b16 %v8536, %v8532
        %v8657 = vpack.c.b16 %v8541, %v8537
        %v8658 = vpack.c.b16 %v8542, %v8538
        %v8659 = vpack.c.b16 %v8543, %v8539
        %v8660 = vpack.c.b16 %v8544, %v8540
        %v8661 = vpack.c.b16 %v8549, %v8545
        %v8662 = vpack.c.b16 %v8550, %v8546
        %v8663 = vpack.c.b16 %v8551, %v8547
        %v8664 = vpack.c.b16 %v8552, %v8548
        %v8665 = vpack.c.b16 %v8557, %v8553
        %v8666 = vpack.c.b16 %v8558, %v8554
        %v8667 = vpack.c.b16 %v8559, %v8555
        %v8668 = vpack.c.b16 %v8560, %v8556
        %v8669 = vpack.c.b16 %v8565, %v8561
        %v8670 = vpack.c.b16 %v8566, %v8562
        %v8671 = vpack.c.b16 %v8567, %v8563
        %v8672 = vpack.c.b16 %v8568, %v8564
        %v8673 = vpack.c.b16 %v8573, %v8569
        %v8674 = vpack.c.b16 %v8574, %v8570
        %v8675 = vpack.c.b16 %v8575, %v8571
        %v8676 = vpack.c.b16 %v8576, %v8572
        %v8677 = vpack.c.b16 %v8581, %v8577
        %v8678 = vpack.c.b16 %v8582, %v8578
        %v8679 = vpack.c.b16 %v8583, %v8579
        %v8680 = vpack.c.b16 %v8584, %v8580
        %v8681 = vpack.c.b16 %v8589, %v8585
        %v8682 = vpack.c.b16 %v8590, %v8586
        %v8683 = vpack.c.b16 %v8591, %v8587
        %v8684 = vpack.c.b16 %v8592, %v8588
        %v8685 = vpack.c.b16 %v8597, %v8593
        %v8686 = vpack.c.b16 %v8598, %v8594
        %v8687 = vpack.c.b16 %v8599, %v8595
        %v8688 = vpack.c.b16 %v8600, %v8596
        %v8689 = vpack.c.b16 %v8605, %v8601
        %v8690 = vpack.c.b16 %v8606, %v8602
        %v8691 = vpack.c.b16 %v8607, %v8603
        %v8692 = vpack.c.b16 %v8608, %v8604
        %v8693 = vpack.c.b16 %v8613, %v8609
        %v8694 = vpack.c.b16 %v8614, %v8610
        %v8695 = vpack.c.b16 %v8615, %v8611
        %v8696 = vpack.c.b16 %v8616, %v8612
        %v8697 = vpack.c.b16 %v8621, %v8617
        %v8698 = vpack.c.b16 %v8622, %v8618
        %v8699 = vpack.c.b16 %v8623, %v8619
        %v8700 = vpack.c.b16 %v8624, %v8620
        %v8701 = vpack.c.b16 %v8629, %v8625
        %v8702 = vpack.c.b16 %v8630, %v8626
        %v8703 = vpack.c.b16 %v8631, %v8627
        %v8704 = vpack.c.b16 %v8632, %v8628
        %v8778 = vsel %vm8249, %v7729, 0
        %8780 = vmatprep.subr.bf16.mxu0 %v8634
        %8781 = vmatpush1.bf16.msra.mxu0 %v8633
        %8782 = vmatprep.subr.bf16.mxu0 %v8638
        %8783 = vmatpush1.bf16.msra.mxu0 %v8637
        %8784 = vmatprep.subr.bf16.mxu0 %v8642
        %8785 = vmatpush1.bf16.msra.mxu0 %v8641
        %8786 = vmatprep.subr.bf16.mxu0 %v8646
        %8787 = vmatpush1.bf16.msra.mxu0 %v8645
        %8788 = vmatprep.subr.bf16.mxu0 %v8650
        %8789 = vmatpush1.bf16.msra.mxu0 %v8649
        %8790 = vmatprep.subr.bf16.mxu0 %v8654
        %8791 = vmatpush1.bf16.msra.mxu0 %v8653
        %8792 = vmatprep.subr.bf16.mxu0 %v8658
        %8793 = vmatpush1.bf16.msra.mxu0 %v8657
        %8794 = vmatprep.subr.bf16.mxu0 %v8662
        %8795 = vmatpush1.bf16.msra.mxu0 %v8661
        %8796 = vmatprep.subr.bf16.mxu0 %v8666
        %8797 = vmatpush1.bf16.msra.mxu0 %v8665
        %8798 = vmatprep.subr.bf16.mxu0 %v8670
        %8799 = vmatpush1.bf16.msra.mxu0 %v8669
        %8800 = vmatprep.subr.bf16.mxu0 %v8674
        %8801 = vmatpush1.bf16.msra.mxu0 %v8673
        %8802 = vmatprep.subr.bf16.mxu0 %v8678
        %8803 = vmatpush1.bf16.msra.mxu0 %v8677
        %8804 = vmatprep.subr.bf16.mxu0 %v8682
        %8805 = vmatpush1.bf16.msra.mxu0 %v8681
        %8806 = vmatprep.subr.bf16.mxu0 %v8686
        %8807 = vmatpush1.bf16.msra.mxu0 %v8685
        %8808 = vmatprep.subr.bf16.mxu0 %v8690
        %8809 = vmatpush1.bf16.msra.mxu0 %v8689
        %8810 = vmatprep.subr.bf16.mxu0 %v8694
        %8811 = vmatpush1.bf16.msra.mxu0 %v8693
        %8812 = vmatprep.mubr.bf16.mxu0 %v7728
        %8813 = vmatmul.mubr.bf16.gmra.mrb[0].mxu0 %v7727
        %v8814 = vpop.f32.mrb[0].mxu0
        %v8815 = vadd.f32 %v8329, %v8814
        %v8816 = vpop.f32.mrb[0].mxu0
        %v8817 = vadd.f32 %v8331, %v8816
        %v8818 = vpop.f32.mrb[0].mxu0
        %v8819 = vpop.f32.mrb[0].mxu0
        %8820 = vdwg.mxu0
        %8821 = vmatprep.subr.bf16.mxu0 %v8698
        %8822 = vmatpush1.bf16.msra.mxu0 %v8697
        %8823 = vmatprep.subr.bf16.mxu0 %v8702
        %8824 = vmatpush1.bf16.msra.mxu0 %v8701
        %8825 = vmatprep.subr.bf16.mxu0 0
        %8826 = vmatpush1.bf16.msra.mxu0 0
        %8827 = vmatprep.subr.bf16.mxu0 0
        %8828 = vmatpush1.bf16.msra.mxu0 0
        %8829 = vmatprep.subr.bf16.mxu0 0
        %8830 = vmatpush1.bf16.msra.mxu0 0
        %8831 = vmatprep.subr.bf16.mxu0 0
        %8832 = vmatpush1.bf16.msra.mxu0 0
        %8833 = vmatprep.subr.bf16.mxu0 0
        %8834 = vmatpush1.bf16.msra.mxu0 0
        %8835 = vmatprep.subr.bf16.mxu0 0
        %8836 = vmatpush1.bf16.msra.mxu0 0
        %8837 = vmatprep.subr.bf16.mxu0 0
        %8838 = vmatpush1.bf16.msra.mxu0 0
        %8839 = vmatprep.subr.bf16.mxu0 0
        %8840 = vmatpush1.bf16.msra.mxu0 0
        %8841 = vmatprep.subr.bf16.mxu0 0
        %8842 = vmatpush1.bf16.msra.mxu0 0
        %8843 = vmatprep.subr.bf16.mxu0 0
        %8844 = vmatpush1.bf16.msra.mxu0 0
        %8845 = vmatprep.subr.bf16.mxu0 0
        %8846 = vmatpush1.bf16.msra.mxu0 0
        %8847 = vmatprep.subr.bf16.mxu0 0
        %8848 = vmatpush1.bf16.msra.mxu0 0
        %8849 = vmatprep.subr.bf16.mxu0 0
        %8850 = vmatpush1.bf16.msra.mxu0 0
        %8851 = vmatprep.subr.bf16.mxu0 0
        %8852 = vmatpush1.bf16.msra.mxu0 0
        %8853 = vmatprep.mubr.bf16.mxu0 0
        %8854 = vmatmul.mubr.bf16.gmra.mrb[0].mxu0 %v8778
        %v8855 = vpop.f32.mrb[0].mxu0
        %v8856 = vadd.f32 %v8815, %v8855
        %v8857 = vpop.f32.mrb[0].mxu0
        %v8858 = vadd.f32 %v8817, %v8857
        %v8859 = vpop.f32.mrb[0].mxu0
        %v8860 = vpop.f32.mrb[0].mxu0
        %8861 = vdwg.mxu0
        %8862 = vmatprep.subr.bf16.mxu0 %v8636
        %8863 = vmatpush1.bf16.msra.mxu0 %v8635
        %8864 = vmatprep.subr.bf16.mxu0 %v8640
        %8865 = vmatpush1.bf16.msra.mxu0 %v8639
        %8866 = vmatprep.subr.bf16.mxu0 %v8644
        %8867 = vmatpush1.bf16.msra.mxu0 %v8643
        %8868 = vmatprep.subr.bf16.mxu0 %v8648
        %8869 = vmatpush1.bf16.msra.mxu0 %v8647
        %8870 = vmatprep.subr.bf16.mxu0 %v8652
        %8871 = vmatpush1.bf16.msra.mxu0 %v8651
        %8872 = vmatprep.subr.bf16.mxu0 %v8656
        %8873 = vmatpush1.bf16.msra.mxu0 %v8655
        %8874 = vmatprep.subr.bf16.mxu0 %v8660
        %8875 = vmatpush1.bf16.msra.mxu0 %v8659
        %8876 = vmatprep.subr.bf16.mxu0 %v8664
        %8877 = vmatpush1.bf16.msra.mxu0 %v8663
        %8878 = vmatprep.subr.bf16.mxu0 %v8668
        %8879 = vmatpush1.bf16.msra.mxu0 %v8667
        %8880 = vmatprep.subr.bf16.mxu0 %v8672
        %8881 = vmatpush1.bf16.msra.mxu0 %v8671
        %8882 = vmatprep.subr.bf16.mxu0 %v8676
        %8883 = vmatpush1.bf16.msra.mxu0 %v8675
        %8884 = vmatprep.subr.bf16.mxu0 %v8680
        %8885 = vmatpush1.bf16.msra.mxu0 %v8679
        %8886 = vmatprep.subr.bf16.mxu0 %v8684
        %8887 = vmatpush1.bf16.msra.mxu0 %v8683
        %8888 = vmatprep.subr.bf16.mxu0 %v8688
        %8889 = vmatpush1.bf16.msra.mxu0 %v8687
        %8890 = vmatprep.subr.bf16.mxu0 %v8692
        %8891 = vmatpush1.bf16.msra.mxu0 %v8691
        %8892 = vmatprep.subr.bf16.mxu0 %v8696
        %8893 = vmatpush1.bf16.msra.mxu0 %v8695
        %8894 = vmatprep.mubr.bf16.mxu0 %v7728
        %8895 = vmatmul.mubr.bf16.gmra.mrb[0].mxu0 %v7727
        %v8896 = vpop.f32.mrb[0].mxu0
        %v8897 = vadd.f32 %v8411, %v8896
        %v8898 = vpop.f32.mrb[0].mxu0
        %v8899 = vadd.f32 %v8413, %v8898
        %v8900 = vpop.f32.mrb[0].mxu0
        %v8901 = vpop.f32.mrb[0].mxu0
        %8902 = vdwg.mxu0
        %8903 = vmatprep.subr.bf16.mxu0 %v8700
        %8904 = vmatpush1.bf16.msra.mxu0 %v8699
        %8905 = vmatprep.subr.bf16.mxu0 %v8704
        %8906 = vmatpush1.bf16.msra.mxu0 %v8703
        %8907 = vmatprep.subr.bf16.mxu0 0
        %8908 = vmatpush1.bf16.msra.mxu0 0
        %8909 = vmatprep.subr.bf16.mxu0 0
        %8910 = vmatpush1.bf16.msra.mxu0 0
        %8911 = vmatprep.subr.bf16.mxu0 0
        %8912 = vmatpush1.bf16.msra.mxu0 0
        %8913 = vmatprep.subr.bf16.mxu0 0
        %8914 = vmatpush1.bf16.msra.mxu0 0
        %8915 = vmatprep.subr.bf16.mxu0 0
        %8916 = vmatpush1.bf16.msra.mxu0 0
        %8917 = vmatprep.subr.bf16.mxu0 0
        %8918 = vmatpush1.bf16.msra.mxu0 0
        %8919 = vmatprep.subr.bf16.mxu0 0
        %8920 = vmatpush1.bf16.msra.mxu0 0
        %8921 = vmatprep.subr.bf16.mxu0 0
        %8922 = vmatpush1.bf16.msra.mxu0 0
        %8923 = vmatprep.subr.bf16.mxu0 0
        %8924 = vmatpush1.bf16.msra.mxu0 0
        %8925 = vmatprep.subr.bf16.mxu0 0
        %8926 = vmatpush1.bf16.msra.mxu0 0
        %8927 = vmatprep.subr.bf16.mxu0 0
        %8928 = vmatpush1.bf16.msra.mxu0 0
        %8929 = vmatprep.subr.bf16.mxu0 0
        %8930 = vmatpush1.bf16.msra.mxu0 0
        %8931 = vmatprep.subr.bf16.mxu0 0
        %8932 = vmatpush1.bf16.msra.mxu0 0
        %8933 = vmatprep.subr.bf16.mxu0 0
        %8934 = vmatpush1.bf16.msra.mxu0 0
        %8935 = vmatprep.mubr.bf16.mxu0 0
        %8936 = vmatmul.mubr.bf16.gmra.mrb[0].mxu0 %v8778
        %v8937 = vpop.f32.mrb[0].mxu0
        %v8938 = vadd.f32 %v8897, %v8937
        %v8939 = vpop.f32.mrb[0].mxu0
        %v8940 = vadd.f32 %v8899, %v8939
        %v8941 = vpop.f32.mrb[0].mxu0
        %v8942 = vpop.f32.mrb[0].mxu0
        %8943 = vdwg.mxu0
        %s8944 = scalar_lea.vmem %s11, 1152
        %v8945 = vld [vmem:[%s8944] sm:$0xff]
        %v8946 = vld [vmem:[%s8944 + $0x8] sm:$0xff]
        %v8947 = vld [vmem:[%s8944 + $0x10] sm:$0xff]
        %v8948 = vld [vmem:[%s8944 + $0x18] sm:$0xff]
        %v8949 = vld [vmem:[%s8944 + $0x20] sm:$0xff]
        %v8950 = vld [vmem:[%s8944 + $0x28] sm:$0xff]
        %v8951 = vld [vmem:[%s8944 + $0x30] sm:$0xff]
        %v8952 = vld [vmem:[%s8944 + $0x38] sm:$0xff]
        %v8953 = vld [vmem:[%s8944 + $0x40] sm:$0xff]
        %v8954 = vld [vmem:[%s8944 + $0x48] sm:$0xff]
        %v8955 = vld [vmem:[%s8944 + $0x50] sm:$0xff]
        %v8956 = vld [vmem:[%s8944 + $0x58] sm:$0xff]
        %v8957 = vld [vmem:[%s8944 + $0x60] sm:$0xff]
        %v8958 = vld [vmem:[%s8944 + $0x68] sm:$0xff]
        %v8959 = vld [vmem:[%s8944 + $0x70] sm:$0xff]
        %v8960 = vld [vmem:[%s8944 + $0x78] sm:$0xff]
        %v8961 = vld [vmem:[%s8944 + $0x80] sm:$0xff]
        %v8962 = vld [vmem:[%s8944 + $0x88] sm:$0xff]
        %v8963 = vld [vmem:[%s8944 + $0x90] sm:$0xff]
        %v8964 = vld [vmem:[%s8944 + $0x98] sm:$0xff]
        %v8965 = vld [vmem:[%s8944 + $0xa0] sm:$0xff]
        %v8966 = vld [vmem:[%s8944 + $0xa8] sm:$0xff]
        %v8967 = vld [vmem:[%s8944 + $0xb0] sm:$0xff]
        %v8968 = vld [vmem:[%s8944 + $0xb8] sm:$0xff]
        %v8969 = vld [vmem:[%s8944 + $0xc0] sm:$0xff]
        %v8970 = vld [vmem:[%s8944 + $0xc8] sm:$0xff]
        %v8971 = vld [vmem:[%s8944 + $0xd0] sm:$0xff]
        %v8972 = vld [vmem:[%s8944 + $0xd8] sm:$0xff]
        %v8973 = vld [vmem:[%s8944 + $0xe0] sm:$0xff]
        %v8974 = vld [vmem:[%s8944 + $0xe8] sm:$0xff]
        %v8975 = vld [vmem:[%s8944 + $0xf0] sm:$0xff]
        %v8976 = vld [vmem:[%s8944 + $0xf8] sm:$0xff]
        %v8977 = vld [vmem:[%s8944 + $0x100] sm:$0xff]
        %v8978 = vld [vmem:[%s8944 + $0x108] sm:$0xff]
        %v8979 = vld [vmem:[%s8944 + $0x110] sm:$0xff]
        %v8980 = vld [vmem:[%s8944 + $0x118] sm:$0xff]
        %v8981 = vld [vmem:[%s8944 + $0x120] sm:$0xff]
        %v8982 = vld [vmem:[%s8944 + $0x128] sm:$0xff]
        %v8983 = vld [vmem:[%s8944 + $0x130] sm:$0xff]
        %v8984 = vld [vmem:[%s8944 + $0x138] sm:$0xff]
        %v8985 = vld [vmem:[%s8944 + $0x140] sm:$0xff]
        %v8986 = vld [vmem:[%s8944 + $0x148] sm:$0xff]
        %v8987 = vld [vmem:[%s8944 + $0x150] sm:$0xff]
        %v8988 = vld [vmem:[%s8944 + $0x158] sm:$0xff]
        %v8989 = vld [vmem:[%s8944 + $0x160] sm:$0xff]
        %v8990 = vld [vmem:[%s8944 + $0x168] sm:$0xff]
        %v8991 = vld [vmem:[%s8944 + $0x170] sm:$0xff]
        %v8992 = vld [vmem:[%s8944 + $0x178] sm:$0xff]
        %v8993 = vld [vmem:[%s8944 + $0x180] sm:$0xff]
        %v8994 = vld [vmem:[%s8944 + $0x188] sm:$0xff]
        %v8995 = vld [vmem:[%s8944 + $0x190] sm:$0xff]
        %v8996 = vld [vmem:[%s8944 + $0x198] sm:$0xff]
        %v8997 = vld [vmem:[%s8944 + $0x1a0] sm:$0xff]
        %v8998 = vld [vmem:[%s8944 + $0x1a8] sm:$0xff]
        %v8999 = vld [vmem:[%s8944 + $0x1b0] sm:$0xff]
        %v9000 = vld [vmem:[%s8944 + $0x1b8] sm:$0xff]
        %v9001 = vld [vmem:[%s8944 + $0x1c0] sm:$0xff]
        %v9002 = vld [vmem:[%s8944 + $0x1c8] sm:$0xff]
        %v9003 = vld [vmem:[%s8944 + $0x1d0] sm:$0xff]
        %v9004 = vld [vmem:[%s8944 + $0x1d8] sm:$0xff]
        %v9005 = vld [vmem:[%s8944 + $0x1e0] sm:$0xff]
        %v9006 = vld [vmem:[%s8944 + $0x1e8] sm:$0xff]
        %v9007 = vld [vmem:[%s8944 + $0x1f0] sm:$0xff]
        %v9008 = vld [vmem:[%s8944 + $0x1f8] sm:$0xff]
        %v9009 = vld [vmem:[%s8944 + $0x200] sm:$0xff]
        %v9010 = vld [vmem:[%s8944 + $0x208] sm:$0xff]
        %v9011 = vld [vmem:[%s8944 + $0x210] sm:$0xff]
        %v9012 = vld [vmem:[%s8944 + $0x218] sm:$0xff]
        %v9013 = vld [vmem:[%s8944 + $0x220] sm:$0xff]
        %v9014 = vld [vmem:[%s8944 + $0x228] sm:$0xff]
        %v9015 = vld [vmem:[%s8944 + $0x230] sm:$0xff]
        %v9016 = vld [vmem:[%s8944 + $0x238] sm:$0xff]
        %v9089 = vunpack.c.l.b16 %v8945
        %v9090 = vunpack.c.h.b16 %v8945
        %v9091 = vunpack.c.l.b16 %v8946
        %v9092 = vunpack.c.h.b16 %v8946
        %v9093 = vunpack.c.l.b16 %v8947
        %v9094 = vunpack.c.h.b16 %v8947
        %v9095 = vunpack.c.l.b16 %v8948
        %v9096 = vunpack.c.h.b16 %v8948
        %v9097 = vunpack.c.l.b16 %v8949
        %v9098 = vunpack.c.h.b16 %v8949
        %v9099 = vunpack.c.l.b16 %v8950
        %v9100 = vunpack.c.h.b16 %v8950
        %v9101 = vunpack.c.l.b16 %v8951
        %v9102 = vunpack.c.h.b16 %v8951
        %v9103 = vunpack.c.l.b16 %v8952
        %v9104 = vunpack.c.h.b16 %v8952
        %v9105 = vunpack.c.l.b16 %v8953
        %v9106 = vunpack.c.h.b16 %v8953
        %v9107 = vunpack.c.l.b16 %v8954
        %v9108 = vunpack.c.h.b16 %v8954
        %v9109 = vunpack.c.l.b16 %v8955
        %v9110 = vunpack.c.h.b16 %v8955
        %v9111 = vunpack.c.l.b16 %v8956
        %v9112 = vunpack.c.h.b16 %v8956
        %v9113 = vunpack.c.l.b16 %v8957
        %v9114 = vunpack.c.h.b16 %v8957
        %v9115 = vunpack.c.l.b16 %v8958
        %v9116 = vunpack.c.h.b16 %v8958
        %v9117 = vunpack.c.l.b16 %v8959
        %v9118 = vunpack.c.h.b16 %v8959
        %v9119 = vunpack.c.l.b16 %v8960
        %v9120 = vunpack.c.h.b16 %v8960
        %v9121 = vunpack.c.l.b16 %v8961
        %v9122 = vunpack.c.h.b16 %v8961
        %v9123 = vunpack.c.l.b16 %v8962
        %v9124 = vunpack.c.h.b16 %v8962
        %v9125 = vunpack.c.l.b16 %v8963
        %v9126 = vunpack.c.h.b16 %v8963
        %v9127 = vunpack.c.l.b16 %v8964
        %v9128 = vunpack.c.h.b16 %v8964
        %v9129 = vunpack.c.l.b16 %v8965
        %v9130 = vunpack.c.h.b16 %v8965
        %v9131 = vunpack.c.l.b16 %v8966
        %v9132 = vunpack.c.h.b16 %v8966
        %v9133 = vunpack.c.l.b16 %v8967
        %v9134 = vunpack.c.h.b16 %v8967
        %v9135 = vunpack.c.l.b16 %v8968
        %v9136 = vunpack.c.h.b16 %v8968
        %v9137 = vunpack.c.l.b16 %v8969
        %v9138 = vunpack.c.h.b16 %v8969
        %v9139 = vunpack.c.l.b16 %v8970
        %v9140 = vunpack.c.h.b16 %v8970
        %v9141 = vunpack.c.l.b16 %v8971
        %v9142 = vunpack.c.h.b16 %v8971
        %v9143 = vunpack.c.l.b16 %v8972
        %v9144 = vunpack.c.h.b16 %v8972
        %v9145 = vunpack.c.l.b16 %v8973
        %v9146 = vunpack.c.h.b16 %v8973
        %v9147 = vunpack.c.l.b16 %v8974
        %v9148 = vunpack.c.h.b16 %v8974
        %v9149 = vunpack.c.l.b16 %v8975
        %v9150 = vunpack.c.h.b16 %v8975
        %v9151 = vunpack.c.l.b16 %v8976
        %v9152 = vunpack.c.h.b16 %v8976
        %v9153 = vunpack.c.l.b16 %v8977
        %v9154 = vunpack.c.h.b16 %v8977
        %v9155 = vunpack.c.l.b16 %v8978
        %v9156 = vunpack.c.h.b16 %v8978
        %v9157 = vunpack.c.l.b16 %v8979
        %v9158 = vunpack.c.h.b16 %v8979
        %v9159 = vunpack.c.l.b16 %v8980
        %v9160 = vunpack.c.h.b16 %v8980
        %v9161 = vunpack.c.l.b16 %v8981
        %v9162 = vunpack.c.h.b16 %v8981
        %v9163 = vunpack.c.l.b16 %v8982
        %v9164 = vunpack.c.h.b16 %v8982
        %v9165 = vunpack.c.l.b16 %v8983
        %v9166 = vunpack.c.h.b16 %v8983
        %v9167 = vunpack.c.l.b16 %v8984
        %v9168 = vunpack.c.h.b16 %v8984
        %v9169 = vunpack.c.l.b16 %v8985
        %v9170 = vunpack.c.h.b16 %v8985
        %v9171 = vunpack.c.l.b16 %v8986
        %v9172 = vunpack.c.h.b16 %v8986
        %v9173 = vunpack.c.l.b16 %v8987
        %v9174 = vunpack.c.h.b16 %v8987
        %v9175 = vunpack.c.l.b16 %v8988
        %v9176 = vunpack.c.h.b16 %v8988
        %v9177 = vunpack.c.l.b16 %v8989
        %v9178 = vunpack.c.h.b16 %v8989
        %v9179 = vunpack.c.l.b16 %v8990
        %v9180 = vunpack.c.h.b16 %v8990
        %v9181 = vunpack.c.l.b16 %v8991
        %v9182 = vunpack.c.h.b16 %v8991
        %v9183 = vunpack.c.l.b16 %v8992
        %v9184 = vunpack.c.h.b16 %v8992
        %v9185 = vunpack.c.l.b16 %v8993
        %v9186 = vunpack.c.h.b16 %v8993
        %v9187 = vunpack.c.l.b16 %v8994
        %v9188 = vunpack.c.h.b16 %v8994
        %v9189 = vunpack.c.l.b16 %v8995
        %v9190 = vunpack.c.h.b16 %v8995
        %v9191 = vunpack.c.l.b16 %v8996
        %v9192 = vunpack.c.h.b16 %v8996
        %v9193 = vunpack.c.l.b16 %v8997
        %v9194 = vunpack.c.h.b16 %v8997
        %v9195 = vunpack.c.l.b16 %v8998
        %v9196 = vunpack.c.h.b16 %v8998
        %v9197 = vunpack.c.l.b16 %v8999
        %v9198 = vunpack.c.h.b16 %v8999
        %v9199 = vunpack.c.l.b16 %v9000
        %v9200 = vunpack.c.h.b16 %v9000
        %v9201 = vunpack.c.l.b16 %v9001
        %v9202 = vunpack.c.h.b16 %v9001
        %v9203 = vunpack.c.l.b16 %v9002
        %v9204 = vunpack.c.h.b16 %v9002
        %v9205 = vunpack.c.l.b16 %v9003
        %v9206 = vunpack.c.h.b16 %v9003
        %v9207 = vunpack.c.l.b16 %v9004
        %v9208 = vunpack.c.h.b16 %v9004
        %v9209 = vunpack.c.l.b16 %v9005
        %v9210 = vunpack.c.h.b16 %v9005
        %v9211 = vunpack.c.l.b16 %v9006
        %v9212 = vunpack.c.h.b16 %v9006
        %v9213 = vunpack.c.l.b16 %v9007
        %v9214 = vunpack.c.h.b16 %v9007
        %v9215 = vunpack.c.l.b16 %v9008
        %v9216 = vunpack.c.h.b16 %v9008
        %v9217 = vunpack.c.l.b16 %v9009
        %v9218 = vunpack.c.h.b16 %v9009
        %v9219 = vunpack.c.l.b16 %v9010
        %v9220 = vunpack.c.h.b16 %v9010
        %v9221 = vunpack.c.l.b16 %v9011
        %v9222 = vunpack.c.h.b16 %v9011
        %v9223 = vunpack.c.l.b16 %v9012
        %v9224 = vunpack.c.h.b16 %v9012
        %v9225 = vunpack.c.l.b16 %v9013
        %v9226 = vunpack.c.h.b16 %v9013
        %v9227 = vunpack.c.l.b16 %v9014
        %v9228 = vunpack.c.h.b16 %v9014
        %v9229 = vunpack.c.l.b16 %v9015
        %v9230 = vunpack.c.h.b16 %v9015
        %v9231 = vunpack.c.l.b16 %v9016
        %v9232 = vunpack.c.h.b16 %v9016
        %v9233 = vpack.c.b16 %v9093, %v9089
        %v9234 = vpack.c.b16 %v9094, %v9090
        %v9235 = vpack.c.b16 %v9095, %v9091
        %v9236 = vpack.c.b16 %v9096, %v9092
        %v9237 = vpack.c.b16 %v9101, %v9097
        %v9238 = vpack.c.b16 %v9102, %v9098
        %v9239 = vpack.c.b16 %v9103, %v9099
        %v9240 = vpack.c.b16 %v9104, %v9100
        %v9241 = vpack.c.b16 %v9109, %v9105
        %v9242 = vpack.c.b16 %v9110, %v9106
        %v9243 = vpack.c.b16 %v9111, %v9107
        %v9244 = vpack.c.b16 %v9112, %v9108
        %v9245 = vpack.c.b16 %v9117, %v9113
        %v9246 = vpack.c.b16 %v9118, %v9114
        %v9247 = vpack.c.b16 %v9119, %v9115
        %v9248 = vpack.c.b16 %v9120, %v9116
        %v9249 = vpack.c.b16 %v9125, %v9121
        %v9250 = vpack.c.b16 %v9126, %v9122
        %v9251 = vpack.c.b16 %v9127, %v9123
        %v9252 = vpack.c.b16 %v9128, %v9124
        %v9253 = vpack.c.b16 %v9133, %v9129
        %v9254 = vpack.c.b16 %v9134, %v9130
        %v9255 = vpack.c.b16 %v9135, %v9131
        %v9256 = vpack.c.b16 %v9136, %v9132
        %v9257 = vpack.c.b16 %v9141, %v9137
        %v9258 = vpack.c.b16 %v9142, %v9138
        %v9259 = vpack.c.b16 %v9143, %v9139
        %v9260 = vpack.c.b16 %v9144, %v9140
        %v9261 = vpack.c.b16 %v9149, %v9145
        %v9262 = vpack.c.b16 %v9150, %v9146
        %v9263 = vpack.c.b16 %v9151, %v9147
        %v9264 = vpack.c.b16 %v9152, %v9148
        %v9265 = vpack.c.b16 %v9157, %v9153
        %v9266 = vpack.c.b16 %v9158, %v9154
        %v9267 = vpack.c.b16 %v9159, %v9155
        %v9268 = vpack.c.b16 %v9160, %v9156
        %v9269 = vpack.c.b16 %v9165, %v9161
        %v9270 = vpack.c.b16 %v9166, %v9162
        %v9271 = vpack.c.b16 %v9167, %v9163
        %v9272 = vpack.c.b16 %v9168, %v9164
        %v9273 = vpack.c.b16 %v9173, %v9169
        %v9274 = vpack.c.b16 %v9174, %v9170
        %v9275 = vpack.c.b16 %v9175, %v9171
        %v9276 = vpack.c.b16 %v9176, %v9172
        %v9277 = vpack.c.b16 %v9181, %v9177
        %v9278 = vpack.c.b16 %v9182, %v9178
        %v9279 = vpack.c.b16 %v9183, %v9179
        %v9280 = vpack.c.b16 %v9184, %v9180
        %v9281 = vpack.c.b16 %v9189, %v9185
        %v9282 = vpack.c.b16 %v9190, %v9186
        %v9283 = vpack.c.b16 %v9191, %v9187
        %v9284 = vpack.c.b16 %v9192, %v9188
        %v9285 = vpack.c.b16 %v9197, %v9193
        %v9286 = vpack.c.b16 %v9198, %v9194
        %v9287 = vpack.c.b16 %v9199, %v9195
        %v9288 = vpack.c.b16 %v9200, %v9196
        %v9289 = vpack.c.b16 %v9205, %v9201
        %v9290 = vpack.c.b16 %v9206, %v9202
        %v9291 = vpack.c.b16 %v9207, %v9203
        %v9292 = vpack.c.b16 %v9208, %v9204
        %v9293 = vpack.c.b16 %v9213, %v9209
        %v9294 = vpack.c.b16 %v9214, %v9210
        %v9295 = vpack.c.b16 %v9215, %v9211
        %v9296 = vpack.c.b16 %v9216, %v9212
        %v9297 = vpack.c.b16 %v9221, %v9217
        %v9298 = vpack.c.b16 %v9222, %v9218
        %v9299 = vpack.c.b16 %v9223, %v9219
        %v9300 = vpack.c.b16 %v9224, %v9220
        %v9301 = vpack.c.b16 %v9229, %v9225
        %v9302 = vpack.c.b16 %v9230, %v9226
        %v9303 = vpack.c.b16 %v9231, %v9227
        %v9304 = vpack.c.b16 %v9232, %v9228
        %v9378 = vsel %vm8249, %v7732, 0
        %9380 = vmatprep.subr.bf16.mxu0 %v9234
        %9381 = vmatpush1.bf16.msra.mxu0 %v9233
        %9382 = vmatprep.subr.bf16.mxu0 %v9238
        %9383 = vmatpush1.bf16.msra.mxu0 %v9237
        %9384 = vmatprep.subr.bf16.mxu0 %v9242
        %9385 = vmatpush1.bf16.msra.mxu0 %v9241
        %9386 = vmatprep.subr.bf16.mxu0 %v9246
        %9387 = vmatpush1.bf16.msra.mxu0 %v9245
        %9388 = vmatprep.subr.bf16.mxu0 %v9250
        %9389 = vmatpush1.bf16.msra.mxu0 %v9249
        %9390 = vmatprep.subr.bf16.mxu0 %v9254
        %9391 = vmatpush1.bf16.msra.mxu0 %v9253
        %9392 = vmatprep.subr.bf16.mxu0 %v9258
        %9393 = vmatpush1.bf16.msra.mxu0 %v9257
        %9394 = vmatprep.subr.bf16.mxu0 %v9262
        %9395 = vmatpush1.bf16.msra.mxu0 %v9261
        %9396 = vmatprep.subr.bf16.mxu0 %v9266
        %9397 = vmatpush1.bf16.msra.mxu0 %v9265
        %9398 = vmatprep.subr.bf16.mxu0 %v9270
        %9399 = vmatpush1.bf16.msra.mxu0 %v9269
        %9400 = vmatprep.subr.bf16.mxu0 %v9274
        %9401 = vmatpush1.bf16.msra.mxu0 %v9273
        %9402 = vmatprep.subr.bf16.mxu0 %v9278
        %9403 = vmatpush1.bf16.msra.mxu0 %v9277
        %9404 = vmatprep.subr.bf16.mxu0 %v9282
        %9405 = vmatpush1.bf16.msra.mxu0 %v9281
        %9406 = vmatprep.subr.bf16.mxu0 %v9286
        %9407 = vmatpush1.bf16.msra.mxu0 %v9285
        %9408 = vmatprep.subr.bf16.mxu0 %v9290
        %9409 = vmatpush1.bf16.msra.mxu0 %v9289
        %9410 = vmatprep.subr.bf16.mxu0 %v9294
        %9411 = vmatpush1.bf16.msra.mxu0 %v9293
        %9412 = vmatprep.mubr.bf16.mxu0 %v7731
        %9413 = vmatmul.mubr.bf16.gmra.mrb[0].mxu0 %v7730
        %v9414 = vpop.f32.mrb[0].mxu0
        %v9415 = vadd.f32 0.0, %v9414
        %v9416 = vpop.f32.mrb[0].mxu0
        %v9417 = vadd.f32 0.0, %v9416
        %v9418 = vpop.f32.mrb[0].mxu0
        %v9419 = vpop.f32.mrb[0].mxu0
        %9420 = vdwg.mxu0
        %9421 = vmatprep.subr.bf16.mxu0 %v9298
        %9422 = vmatpush1.bf16.msra.mxu0 %v9297
        %9423 = vmatprep.subr.bf16.mxu0 %v9302
        %9424 = vmatpush1.bf16.msra.mxu0 %v9301
        %9425 = vmatprep.subr.bf16.mxu0 0
        %9426 = vmatpush1.bf16.msra.mxu0 0
        %9427 = vmatprep.subr.bf16.mxu0 0
        %9428 = vmatpush1.bf16.msra.mxu0 0
        %9429 = vmatprep.subr.bf16.mxu0 0
        %9430 = vmatpush1.bf16.msra.mxu0 0
        %9431 = vmatprep.subr.bf16.mxu0 0
        %9432 = vmatpush1.bf16.msra.mxu0 0
        %9433 = vmatprep.subr.bf16.mxu0 0
        %9434 = vmatpush1.bf16.msra.mxu0 0
        %9435 = vmatprep.subr.bf16.mxu0 0
        %9436 = vmatpush1.bf16.msra.mxu0 0
        %9437 = vmatprep.subr.bf16.mxu0 0
        %9438 = vmatpush1.bf16.msra.mxu0 0
        %9439 = vmatprep.subr.bf16.mxu0 0
        %9440 = vmatpush1.bf16.msra.mxu0 0
        %9441 = vmatprep.subr.bf16.mxu0 0
        %9442 = vmatpush1.bf16.msra.mxu0 0
        %9443 = vmatprep.subr.bf16.mxu0 0
        %9444 = vmatpush1.bf16.msra.mxu0 0
        %9445 = vmatprep.subr.bf16.mxu0 0
        %9446 = vmatpush1.bf16.msra.mxu0 0
        %9447 = vmatprep.subr.bf16.mxu0 0
        %9448 = vmatpush1.bf16.msra.mxu0 0
        %9449 = vmatprep.subr.bf16.mxu0 0
        %9450 = vmatpush1.bf16.msra.mxu0 0
        %9451 = vmatprep.subr.bf16.mxu0 0
        %9452 = vmatpush1.bf16.msra.mxu0 0
        %9453 = vmatprep.mubr.bf16.mxu0 0
        %9454 = vmatmul.mubr.bf16.gmra.mrb[0].mxu0 %v9378
        %v9455 = vpop.f32.mrb[0].mxu0
        %v9456 = vadd.f32 %v9415, %v9455
        %v9457 = vpop.f32.mrb[0].mxu0
        %v9458 = vadd.f32 %v9417, %v9457
        %v9459 = vpop.f32.mrb[0].mxu0
        %v9460 = vpop.f32.mrb[0].mxu0
        %9461 = vdwg.mxu0
        %9462 = vmatprep.subr.bf16.mxu0 %v9236
        %9463 = vmatpush1.bf16.msra.mxu0 %v9235
        %9464 = vmatprep.subr.bf16.mxu0 %v9240
        %9465 = vmatpush1.bf16.msra.mxu0 %v9239
        %9466 = vmatprep.subr.bf16.mxu0 %v9244
        %9467 = vmatpush1.bf16.msra.mxu0 %v9243
        %9468 = vmatprep.subr.bf16.mxu0 %v9248
        %9469 = vmatpush1.bf16.msra.mxu0 %v9247
        %9470 = vmatprep.subr.bf16.mxu0 %v9252
        %9471 = vmatpush1.bf16.msra.mxu0 %v9251
        %9472 = vmatprep.subr.bf16.mxu0 %v9256
        %9473 = vmatpush1.bf16.msra.mxu0 %v9255
        %9474 = vmatprep.subr.bf16.mxu0 %v9260
        %9475 = vmatpush1.bf16.msra.mxu0 %v9259
        %9476 = vmatprep.subr.bf16.mxu0 %v9264
        %9477 = vmatpush1.bf16.msra.mxu0 %v9263
        %9478 = vmatprep.subr.bf16.mxu0 %v9268
        %9479 = vmatpush1.bf16.msra.mxu0 %v9267
        %9480 = vmatprep.subr.bf16.mxu0 %v9272
        %9481 = vmatpush1.bf16.msra.mxu0 %v9271
        %9482 = vmatprep.subr.bf16.mxu0 %v9276
        %9483 = vmatpush1.bf16.msra.mxu0 %v9275
        %9484 = vmatprep.subr.bf16.mxu0 %v9280
        %9485 = vmatpush1.bf16.msra.mxu0 %v9279
        %9486 = vmatprep.subr.bf16.mxu0 %v9284
        %9487 = vmatpush1.bf16.msra.mxu0 %v9283
        %9488 = vmatprep.subr.bf16.mxu0 %v9288
        %9489 = vmatpush1.bf16.msra.mxu0 %v9287
        %9490 = vmatprep.subr.bf16.mxu0 %v9292
        %9491 = vmatpush1.bf16.msra.mxu0 %v9291
        %9492 = vmatprep.subr.bf16.mxu0 %v9296
        %9493 = vmatpush1.bf16.msra.mxu0 %v9295
        %9494 = vmatprep.mubr.bf16.mxu0 %v7731
        %9495 = vmatmul.mubr.bf16.gmra.mrb[0].mxu0 %v7730
        %v9496 = vpop.f32.mrb[0].mxu0
        %v9497 = vadd.f32 0.0, %v9496
        %v9498 = vpop.f32.mrb[0].mxu0
        %v9499 = vadd.f32 0.0, %v9498
        %v9500 = vpop.f32.mrb[0].mxu0
        %v9501 = vpop.f32.mrb[0].mxu0
        %9502 = vdwg.mxu0
        %9503 = vmatprep.subr.bf16.mxu0 %v9300
        %9504 = vmatpush1.bf16.msra.mxu0 %v9299
        %9505 = vmatprep.subr.bf16.mxu0 %v9304
        %9506 = vmatpush1.bf16.msra.mxu0 %v9303
        %9507 = vmatprep.subr.bf16.mxu0 0
        %9508 = vmatpush1.bf16.msra.mxu0 0
        %9509 = vmatprep.subr.bf16.mxu0 0
        %9510 = vmatpush1.bf16.msra.mxu0 0
        %9511 = vmatprep.subr.bf16.mxu0 0
        %9512 = vmatpush1.bf16.msra.mxu0 0
        %9513 = vmatprep.subr.bf16.mxu0 0
        %9514 = vmatpush1.bf16.msra.mxu0 0
        %9515 = vmatprep.subr.bf16.mxu0 0
        %9516 = vmatpush1.bf16.msra.mxu0 0
        %9517 = vmatprep.subr.bf16.mxu0 0
        %9518 = vmatpush1.bf16.msra.mxu0 0
        %9519 = vmatprep.subr.bf16.mxu0 0
        %9520 = vmatpush1.bf16.msra.mxu0 0
        %9521 = vmatprep.subr.bf16.mxu0 0
        %9522 = vmatpush1.bf16.msra.mxu0 0
        %9523 = vmatprep.subr.bf16.mxu0 0
        %9524 = vmatpush1.bf16.msra.mxu0 0
        %9525 = vmatprep.subr.bf16.mxu0 0
        %9526 = vmatpush1.bf16.msra.mxu0 0
        %9527 = vmatprep.subr.bf16.mxu0 0
        %9528 = vmatpush1.bf16.msra.mxu0 0
        %9529 = vmatprep.subr.bf16.mxu0 0
        %9530 = vmatpush1.bf16.msra.mxu0 0
        %9531 = vmatprep.subr.bf16.mxu0 0
        %9532 = vmatpush1.bf16.msra.mxu0 0
        %9533 = vmatprep.subr.bf16.mxu0 0
        %9534 = vmatpush1.bf16.msra.mxu0 0
        %9535 = vmatprep.mubr.bf16.mxu0 0
        %9536 = vmatmul.mubr.bf16.gmra.mrb[0].mxu0 %v9378
        %v9537 = vpop.f32.mrb[0].mxu0
        %v9538 = vadd.f32 %v9497, %v9537
        %v9539 = vpop.f32.mrb[0].mxu0
        %v9540 = vadd.f32 %v9499, %v9539
        %v9541 = vpop.f32.mrb[0].mxu0
        %v9542 = vpop.f32.mrb[0].mxu0
        %9543 = vdwg.mxu0
        %v9544 = vadd.f32 %v8856, %v9456
        %v9545 = vadd.f32 %v8858, %v9458
        %v9546 = vadd.f32 %v8938, %v9538
        %v9547 = vadd.f32 %v8940, %v9540
        %s9548 = scalar_lea.vmem %s11, 1728
        %v9549 = vld [vmem:[%s9548] sm:$0xff]
        %v9550 = vld [vmem:[%s9548 + $0x8] sm:$0xff]
        %v9551 = vld [vmem:[%s9548 + $0x10] sm:$0xff]
        %v9552 = vld [vmem:[%s9548 + $0x18] sm:$0xff]
        %v9553 = vld [vmem:[%s9548 + $0x20] sm:$0xff]
        %v9554 = vld [vmem:[%s9548 + $0x28] sm:$0xff]
        %v9555 = vld [vmem:[%s9548 + $0x30] sm:$0xff]
        %v9556 = vld [vmem:[%s9548 + $0x38] sm:$0xff]
        %v9557 = vld [vmem:[%s9548 + $0x40] sm:$0xff]
        %v9558 = vld [vmem:[%s9548 + $0x48] sm:$0xff]
        %v9559 = vld [vmem:[%s9548 + $0x50] sm:$0xff]
        %v9560 = vld [vmem:[%s9548 + $0x58] sm:$0xff]
        %v9561 = vld [vmem:[%s9548 + $0x60] sm:$0xff]
        %v9562 = vld [vmem:[%s9548 + $0x68] sm:$0xff]
        %v9563 = vld [vmem:[%s9548 + $0x70] sm:$0xff]
        %v9564 = vld [vmem:[%s9548 + $0x78] sm:$0xff]
        %v9565 = vld [vmem:[%s9548 + $0x80] sm:$0xff]
        %v9566 = vld [vmem:[%s9548 + $0x88] sm:$0xff]
        %v9567 = vld [vmem:[%s9548 + $0x90] sm:$0xff]
        %v9568 = vld [vmem:[%s9548 + $0x98] sm:$0xff]
        %v9569 = vld [vmem:[%s9548 + $0xa0] sm:$0xff]
        %v9570 = vld [vmem:[%s9548 + $0xa8] sm:$0xff]
        %v9571 = vld [vmem:[%s9548 + $0xb0] sm:$0xff]
        %v9572 = vld [vmem:[%s9548 + $0xb8] sm:$0xff]
        %v9573 = vld [vmem:[%s9548 + $0xc0] sm:$0xff]
        %v9574 = vld [vmem:[%s9548 + $0xc8] sm:$0xff]
        %v9575 = vld [vmem:[%s9548 + $0xd0] sm:$0xff]
        %v9576 = vld [vmem:[%s9548 + $0xd8] sm:$0xff]
        %v9577 = vld [vmem:[%s9548 + $0xe0] sm:$0xff]
        %v9578 = vld [vmem:[%s9548 + $0xe8] sm:$0xff]
        %v9579 = vld [vmem:[%s9548 + $0xf0] sm:$0xff]
        %v9580 = vld [vmem:[%s9548 + $0xf8] sm:$0xff]
        %v9581 = vld [vmem:[%s9548 + $0x100] sm:$0xff]
        %v9582 = vld [vmem:[%s9548 + $0x108] sm:$0xff]
        %v9583 = vld [vmem:[%s9548 + $0x110] sm:$0xff]
        %v9584 = vld [vmem:[%s9548 + $0x118] sm:$0xff]
        %v9585 = vld [vmem:[%s9548 + $0x120] sm:$0xff]
        %v9586 = vld [vmem:[%s9548 + $0x128] sm:$0xff]
        %v9587 = vld [vmem:[%s9548 + $0x130] sm:$0xff]
        %v9588 = vld [vmem:[%s9548 + $0x138] sm:$0xff]
        %v9589 = vld [vmem:[%s9548 + $0x140] sm:$0xff]
        %v9590 = vld [vmem:[%s9548 + $0x148] sm:$0xff]
        %v9591 = vld [vmem:[%s9548 + $0x150] sm:$0xff]
        %v9592 = vld [vmem:[%s9548 + $0x158] sm:$0xff]
        %v9593 = vld [vmem:[%s9548 + $0x160] sm:$0xff]
        %v9594 = vld [vmem:[%s9548 + $0x168] sm:$0xff]
        %v9595 = vld [vmem:[%s9548 + $0x170] sm:$0xff]
        %v9596 = vld [vmem:[%s9548 + $0x178] sm:$0xff]
        %v9597 = vld [vmem:[%s9548 + $0x180] sm:$0xff]
        %v9598 = vld [vmem:[%s9548 + $0x188] sm:$0xff]
        %v9599 = vld [vmem:[%s9548 + $0x190] sm:$0xff]
        %v9600 = vld [vmem:[%s9548 + $0x198] sm:$0xff]
        %v9601 = vld [vmem:[%s9548 + $0x1a0] sm:$0xff]
        %v9602 = vld [vmem:[%s9548 + $0x1a8] sm:$0xff]
        %v9603 = vld [vmem:[%s9548 + $0x1b0] sm:$0xff]
        %v9604 = vld [vmem:[%s9548 + $0x1b8] sm:$0xff]
        %v9605 = vld [vmem:[%s9548 + $0x1c0] sm:$0xff]
        %v9606 = vld [vmem:[%s9548 + $0x1c8] sm:$0xff]
        %v9607 = vld [vmem:[%s9548 + $0x1d0] sm:$0xff]
        %v9608 = vld [vmem:[%s9548 + $0x1d8] sm:$0xff]
        %v9609 = vld [vmem:[%s9548 + $0x1e0] sm:$0xff]
        %v9610 = vld [vmem:[%s9548 + $0x1e8] sm:$0xff]
        %v9611 = vld [vmem:[%s9548 + $0x1f0] sm:$0xff]
        %v9612 = vld [vmem:[%s9548 + $0x1f8] sm:$0xff]
        %v9613 = vld [vmem:[%s9548 + $0x200] sm:$0xff]
        %v9614 = vld [vmem:[%s9548 + $0x208] sm:$0xff]
        %v9615 = vld [vmem:[%s9548 + $0x210] sm:$0xff]
        %v9616 = vld [vmem:[%s9548 + $0x218] sm:$0xff]
        %v9617 = vld [vmem:[%s9548 + $0x220] sm:$0xff]
        %v9618 = vld [vmem:[%s9548 + $0x228] sm:$0xff]
        %v9619 = vld [vmem:[%s9548 + $0x230] sm:$0xff]
        %v9620 = vld [vmem:[%s9548 + $0x238] sm:$0xff]
        %v9624 = vrot.slane %v7730, 4
        %v9625 = vrot.slane %v7731, 4
        %v9626 = vrot.slane %v7732, 4
        %v9701 = vunpack.c.l.b16 %v9549
        %v9702 = vunpack.c.h.b16 %v9549
        %v9703 = vunpack.c.l.b16 %v9550
        %v9704 = vunpack.c.h.b16 %v9550
        %v9705 = vunpack.c.l.b16 %v9551
        %v9706 = vunpack.c.h.b16 %v9551
        %v9707 = vunpack.c.l.b16 %v9552
        %v9708 = vunpack.c.h.b16 %v9552
        %v9709 = vunpack.c.l.b16 %v9553
        %v9710 = vunpack.c.h.b16 %v9553
        %v9711 = vunpack.c.l.b16 %v9554
        %v9712 = vunpack.c.h.b16 %v9554
        %v9713 = vunpack.c.l.b16 %v9555
        %v9714 = vunpack.c.h.b16 %v9555
        %v9715 = vunpack.c.l.b16 %v9556
        %v9716 = vunpack.c.h.b16 %v9556
        %v9717 = vunpack.c.l.b16 %v9557
        %v9718 = vunpack.c.h.b16 %v9557
        %v9719 = vunpack.c.l.b16 %v9558
        %v9720 = vunpack.c.h.b16 %v9558
        %v9721 = vunpack.c.l.b16 %v9559
        %v9722 = vunpack.c.h.b16 %v9559
        %v9723 = vunpack.c.l.b16 %v9560
        %v9724 = vunpack.c.h.b16 %v9560
        %v9725 = vunpack.c.l.b16 %v9561
        %v9726 = vunpack.c.h.b16 %v9561
        %v9727 = vunpack.c.l.b16 %v9562
        %v9728 = vunpack.c.h.b16 %v9562
        %v9729 = vunpack.c.l.b16 %v9563
        %v9730 = vunpack.c.h.b16 %v9563
        %v9731 = vunpack.c.l.b16 %v9564
        %v9732 = vunpack.c.h.b16 %v9564
        %v9733 = vunpack.c.l.b16 %v9565
        %v9734 = vunpack.c.h.b16 %v9565
        %v9735 = vunpack.c.l.b16 %v9566
        %v9736 = vunpack.c.h.b16 %v9566
        %v9737 = vunpack.c.l.b16 %v9567
        %v9738 = vunpack.c.h.b16 %v9567
        %v9739 = vunpack.c.l.b16 %v9568
        %v9740 = vunpack.c.h.b16 %v9568
        %v9741 = vunpack.c.l.b16 %v9569
        %v9742 = vunpack.c.h.b16 %v9569
        %v9743 = vunpack.c.l.b16 %v9570
        %v9744 = vunpack.c.h.b16 %v9570
        %v9745 = vunpack.c.l.b16 %v9571
        %v9746 = vunpack.c.h.b16 %v9571
        %v9747 = vunpack.c.l.b16 %v9572
        %v9748 = vunpack.c.h.b16 %v9572
        %v9749 = vunpack.c.l.b16 %v9573
        %v9750 = vunpack.c.h.b16 %v9573
        %v9751 = vunpack.c.l.b16 %v9574
        %v9752 = vunpack.c.h.b16 %v9574
        %v9753 = vunpack.c.l.b16 %v9575
        %v9754 = vunpack.c.h.b16 %v9575
        %v9755 = vunpack.c.l.b16 %v9576
        %v9756 = vunpack.c.h.b16 %v9576
        %v9757 = vunpack.c.l.b16 %v9577
        %v9758 = vunpack.c.h.b16 %v9577
        %v9759 = vunpack.c.l.b16 %v9578
        %v9760 = vunpack.c.h.b16 %v9578
        %v9761 = vunpack.c.l.b16 %v9579
        %v9762 = vunpack.c.h.b16 %v9579
        %v9763 = vunpack.c.l.b16 %v9580
        %v9764 = vunpack.c.h.b16 %v9580
        %v9765 = vunpack.c.l.b16 %v9581
        %v9766 = vunpack.c.h.b16 %v9581
        %v9767 = vunpack.c.l.b16 %v9582
        %v9768 = vunpack.c.h.b16 %v9582
        %v9769 = vunpack.c.l.b16 %v9583
        %v9770 = vunpack.c.h.b16 %v9583
        %v9771 = vunpack.c.l.b16 %v9584
        %v9772 = vunpack.c.h.b16 %v9584
        %v9773 = vunpack.c.l.b16 %v9585
        %v9774 = vunpack.c.h.b16 %v9585
        %v9775 = vunpack.c.l.b16 %v9586
        %v9776 = vunpack.c.h.b16 %v9586
        %v9777 = vunpack.c.l.b16 %v9587
        %v9778 = vunpack.c.h.b16 %v9587
        %v9779 = vunpack.c.l.b16 %v9588
        %v9780 = vunpack.c.h.b16 %v9588
        %v9781 = vunpack.c.l.b16 %v9589
        %v9782 = vunpack.c.h.b16 %v9589
        %v9783 = vunpack.c.l.b16 %v9590
        %v9784 = vunpack.c.h.b16 %v9590
        %v9785 = vunpack.c.l.b16 %v9591
        %v9786 = vunpack.c.h.b16 %v9591
        %v9787 = vunpack.c.l.b16 %v9592
        %v9788 = vunpack.c.h.b16 %v9592
        %v9789 = vunpack.c.l.b16 %v9593
        %v9790 = vunpack.c.h.b16 %v9593
        %v9791 = vunpack.c.l.b16 %v9594
        %v9792 = vunpack.c.h.b16 %v9594
        %v9793 = vunpack.c.l.b16 %v9595
        %v9794 = vunpack.c.h.b16 %v9595
        %v9795 = vunpack.c.l.b16 %v9596
        %v9796 = vunpack.c.h.b16 %v9596
        %v9797 = vunpack.c.l.b16 %v9597
        %v9798 = vunpack.c.h.b16 %v9597
        %v9799 = vunpack.c.l.b16 %v9598
        %v9800 = vunpack.c.h.b16 %v9598
        %v9801 = vunpack.c.l.b16 %v9599
        %v9802 = vunpack.c.h.b16 %v9599
        %v9803 = vunpack.c.l.b16 %v9600
        %v9804 = vunpack.c.h.b16 %v9600
        %v9805 = vunpack.c.l.b16 %v9601
        %v9806 = vunpack.c.h.b16 %v9601
        %v9807 = vunpack.c.l.b16 %v9602
        %v9808 = vunpack.c.h.b16 %v9602
        %v9809 = vunpack.c.l.b16 %v9603
        %v9810 = vunpack.c.h.b16 %v9603
        %v9811 = vunpack.c.l.b16 %v9604
        %v9812 = vunpack.c.h.b16 %v9604
        %v9813 = vunpack.c.l.b16 %v9605
        %v9814 = vunpack.c.h.b16 %v9605
        %v9815 = vunpack.c.l.b16 %v9606
        %v9816 = vunpack.c.h.b16 %v9606
        %v9817 = vunpack.c.l.b16 %v9607
        %v9818 = vunpack.c.h.b16 %v9607
        %v9819 = vunpack.c.l.b16 %v9608
        %v9820 = vunpack.c.h.b16 %v9608
        %v9821 = vunpack.c.l.b16 %v9609
        %v9822 = vunpack.c.h.b16 %v9609
        %v9823 = vunpack.c.l.b16 %v9610
        %v9824 = vunpack.c.h.b16 %v9610
        %v9825 = vunpack.c.l.b16 %v9611
        %v9826 = vunpack.c.h.b16 %v9611
        %v9827 = vunpack.c.l.b16 %v9612
        %v9828 = vunpack.c.h.b16 %v9612
        %v9829 = vunpack.c.l.b16 %v9613
        %v9830 = vunpack.c.h.b16 %v9613
        %v9831 = vunpack.c.l.b16 %v9614
        %v9832 = vunpack.c.h.b16 %v9614
        %v9833 = vunpack.c.l.b16 %v9615
        %v9834 = vunpack.c.h.b16 %v9615
        %v9835 = vunpack.c.l.b16 %v9616
        %v9836 = vunpack.c.h.b16 %v9616
        %v9837 = vunpack.c.l.b16 %v9617
        %v9838 = vunpack.c.h.b16 %v9617
        %v9839 = vunpack.c.l.b16 %v9618
        %v9840 = vunpack.c.h.b16 %v9618
        %v9841 = vunpack.c.l.b16 %v9619
        %v9842 = vunpack.c.h.b16 %v9619
        %v9843 = vunpack.c.l.b16 %v9620
        %v9844 = vunpack.c.h.b16 %v9620
        %v9845 = vpack.c.b16 %v9705, %v9701
        %v9846 = vpack.c.b16 %v9706, %v9702
        %v9847 = vpack.c.b16 %v9707, %v9703
        %v9848 = vpack.c.b16 %v9708, %v9704
        %v9849 = vpack.c.b16 %v9713, %v9709
        %v9850 = vpack.c.b16 %v9714, %v9710
        %v9851 = vpack.c.b16 %v9715, %v9711
        %v9852 = vpack.c.b16 %v9716, %v9712
        %v9853 = vpack.c.b16 %v9721, %v9717
        %v9854 = vpack.c.b16 %v9722, %v9718
        %v9855 = vpack.c.b16 %v9723, %v9719
        %v9856 = vpack.c.b16 %v9724, %v9720
        %v9857 = vpack.c.b16 %v9729, %v9725
        %v9858 = vpack.c.b16 %v9730, %v9726
        %v9859 = vpack.c.b16 %v9731, %v9727
        %v9860 = vpack.c.b16 %v9732, %v9728
        %v9861 = vpack.c.b16 %v9737, %v9733
        %v9862 = vpack.c.b16 %v9738, %v9734
        %v9863 = vpack.c.b16 %v9739, %v9735
        %v9864 = vpack.c.b16 %v9740, %v9736
        %v9865 = vpack.c.b16 %v9745, %v9741
        %v9866 = vpack.c.b16 %v9746, %v9742
        %v9867 = vpack.c.b16 %v9747, %v9743
        %v9868 = vpack.c.b16 %v9748, %v9744
        %v9869 = vpack.c.b16 %v9753, %v9749
        %v9870 = vpack.c.b16 %v9754, %v9750
        %v9871 = vpack.c.b16 %v9755, %v9751
        %v9872 = vpack.c.b16 %v9756, %v9752
        %v9873 = vpack.c.b16 %v9761, %v9757
        %v9874 = vpack.c.b16 %v9762, %v9758
        %v9875 = vpack.c.b16 %v9763, %v9759
        %v9876 = vpack.c.b16 %v9764, %v9760
        %v9877 = vpack.c.b16 %v9769, %v9765
        %v9878 = vpack.c.b16 %v9770, %v9766
        %v9879 = vpack.c.b16 %v9771, %v9767
        %v9880 = vpack.c.b16 %v9772, %v9768
        %v9881 = vpack.c.b16 %v9777, %v9773
        %v9882 = vpack.c.b16 %v9778, %v9774
        %v9883 = vpack.c.b16 %v9779, %v9775
        %v9884 = vpack.c.b16 %v9780, %v9776
        %v9885 = vpack.c.b16 %v9785, %v9781
        %v9886 = vpack.c.b16 %v9786, %v9782
        %v9887 = vpack.c.b16 %v9787, %v9783
        %v9888 = vpack.c.b16 %v9788, %v9784
        %v9889 = vpack.c.b16 %v9793, %v9789
        %v9890 = vpack.c.b16 %v9794, %v9790
        %v9891 = vpack.c.b16 %v9795, %v9791
        %v9892 = vpack.c.b16 %v9796, %v9792
        %v9893 = vpack.c.b16 %v9801, %v9797
        %v9894 = vpack.c.b16 %v9802, %v9798
        %v9895 = vpack.c.b16 %v9803, %v9799
        %v9896 = vpack.c.b16 %v9804, %v9800
        %v9897 = vpack.c.b16 %v9809, %v9805
        %v9898 = vpack.c.b16 %v9810, %v9806
        %v9899 = vpack.c.b16 %v9811, %v9807
        %v9900 = vpack.c.b16 %v9812, %v9808
        %v9901 = vpack.c.b16 %v9817, %v9813
        %v9902 = vpack.c.b16 %v9818, %v9814
        %v9903 = vpack.c.b16 %v9819, %v9815
        %v9904 = vpack.c.b16 %v9820, %v9816
        %v9905 = vpack.c.b16 %v9825, %v9821
        %v9906 = vpack.c.b16 %v9826, %v9822
        %v9907 = vpack.c.b16 %v9827, %v9823
        %v9908 = vpack.c.b16 %v9828, %v9824
        %v9909 = vpack.c.b16 %v9833, %v9829
        %v9910 = vpack.c.b16 %v9834, %v9830
        %v9911 = vpack.c.b16 %v9835, %v9831
        %v9912 = vpack.c.b16 %v9836, %v9832
        %v9913 = vpack.c.b16 %v9841, %v9837
        %v9914 = vpack.c.b16 %v9842, %v9838
        %v9915 = vpack.c.b16 %v9843, %v9839
        %v9916 = vpack.c.b16 %v9844, %v9840
        %v9990 = vsel %vm8249, %v9626, 0
        %9992 = vmatprep.subr.bf16.mxu0 %v9846
        %9993 = vmatpush1.bf16.msra.mxu0 %v9845
        %9994 = vmatprep.subr.bf16.mxu0 %v9850
        %9995 = vmatpush1.bf16.msra.mxu0 %v9849
        %9996 = vmatprep.subr.bf16.mxu0 %v9854
        %9997 = vmatpush1.bf16.msra.mxu0 %v9853
        %9998 = vmatprep.subr.bf16.mxu0 %v9858
        %9999 = vmatpush1.bf16.msra.mxu0 %v9857
        %10000 = vmatprep.subr.bf16.mxu0 %v9862
        %10001 = vmatpush1.bf16.msra.mxu0 %v9861
        %10002 = vmatprep.subr.bf16.mxu0 %v9866
        %10003 = vmatpush1.bf16.msra.mxu0 %v9865
        %10004 = vmatprep.subr.bf16.mxu0 %v9870
        %10005 = vmatpush1.bf16.msra.mxu0 %v9869
        %10006 = vmatprep.subr.bf16.mxu0 %v9874
        %10007 = vmatpush1.bf16.msra.mxu0 %v9873
        %10008 = vmatprep.subr.bf16.mxu0 %v9878
        %10009 = vmatpush1.bf16.msra.mxu0 %v9877
        %10010 = vmatprep.subr.bf16.mxu0 %v9882
        %10011 = vmatpush1.bf16.msra.mxu0 %v9881
        %10012 = vmatprep.subr.bf16.mxu0 %v9886
        %10013 = vmatpush1.bf16.msra.mxu0 %v9885
        %10014 = vmatprep.subr.bf16.mxu0 %v9890
        %10015 = vmatpush1.bf16.msra.mxu0 %v9889
        %10016 = vmatprep.subr.bf16.mxu0 %v9894
        %10017 = vmatpush1.bf16.msra.mxu0 %v9893
        %10018 = vmatprep.subr.bf16.mxu0 %v9898
        %10019 = vmatpush1.bf16.msra.mxu0 %v9897
        %10020 = vmatprep.subr.bf16.mxu0 %v9902
        %10021 = vmatpush1.bf16.msra.mxu0 %v9901
        %10022 = vmatprep.subr.bf16.mxu0 %v9906
        %10023 = vmatpush1.bf16.msra.mxu0 %v9905
        %10024 = vmatprep.mubr.bf16.mxu0 %v9625
        %10025 = vmatmul.mubr.bf16.gmra.mrb[0].mxu0 %v9624
        %v10026 = vpop.f32.mrb[0].mxu0
        %v10027 = vadd.f32 0.0, %v10026
        %v10028 = vpop.f32.mrb[0].mxu0
        %v10029 = vadd.f32 0.0, %v10028
        %v10030 = vpop.f32.mrb[0].mxu0
        %v10031 = vpop.f32.mrb[0].mxu0
        %10032 = vdwg.mxu0
        %10033 = vmatprep.subr.bf16.mxu0 %v9910
        %10034 = vmatpush1.bf16.msra.mxu0 %v9909
        %10035 = vmatprep.subr.bf16.mxu0 %v9914
        %10036 = vmatpush1.bf16.msra.mxu0 %v9913
        %10037 = vmatprep.subr.bf16.mxu0 0
        %10038 = vmatpush1.bf16.msra.mxu0 0
        %10039 = vmatprep.subr.bf16.mxu0 0
        %10040 = vmatpush1.bf16.msra.mxu0 0
        %10041 = vmatprep.subr.bf16.mxu0 0
        %10042 = vmatpush1.bf16.msra.mxu0 0
        %10043 = vmatprep.subr.bf16.mxu0 0
        %10044 = vmatpush1.bf16.msra.mxu0 0
        %10045 = vmatprep.subr.bf16.mxu0 0
        %10046 = vmatpush1.bf16.msra.mxu0 0
        %10047 = vmatprep.subr.bf16.mxu0 0
        %10048 = vmatpush1.bf16.msra.mxu0 0
        %10049 = vmatprep.subr.bf16.mxu0 0
        %10050 = vmatpush1.bf16.msra.mxu0 0
        %10051 = vmatprep.subr.bf16.mxu0 0
        %10052 = vmatpush1.bf16.msra.mxu0 0
        %10053 = vmatprep.subr.bf16.mxu0 0
        %10054 = vmatpush1.bf16.msra.mxu0 0
        %10055 = vmatprep.subr.bf16.mxu0 0
        %10056 = vmatpush1.bf16.msra.mxu0 0
        %10057 = vmatprep.subr.bf16.mxu0 0
        %10058 = vmatpush1.bf16.msra.mxu0 0
        %10059 = vmatprep.subr.bf16.mxu0 0
        %10060 = vmatpush1.bf16.msra.mxu0 0
        %10061 = vmatprep.subr.bf16.mxu0 0
        %10062 = vmatpush1.bf16.msra.mxu0 0
        %10063 = vmatprep.subr.bf16.mxu0 0
        %10064 = vmatpush1.bf16.msra.mxu0 0
        %10065 = vmatprep.mubr.bf16.mxu0 0
        %10066 = vmatmul.mubr.bf16.gmra.mrb[0].mxu0 %v9990
        %v10067 = vpop.f32.mrb[0].mxu0
        %v10068 = vadd.f32 %v10027, %v10067
        %v10069 = vpop.f32.mrb[0].mxu0
        %v10070 = vadd.f32 %v10029, %v10069
        %v10071 = vpop.f32.mrb[0].mxu0
        %v10072 = vpop.f32.mrb[0].mxu0
        %10073 = vdwg.mxu0
        %10074 = vmatprep.subr.bf16.mxu0 %v9848
        %10075 = vmatpush1.bf16.msra.mxu0 %v9847
        %10076 = vmatprep.subr.bf16.mxu0 %v9852
        %10077 = vmatpush1.bf16.msra.mxu0 %v9851
        %10078 = vmatprep.subr.bf16.mxu0 %v9856
        %10079 = vmatpush1.bf16.msra.mxu0 %v9855
        %10080 = vmatprep.subr.bf16.mxu0 %v9860
        %10081 = vmatpush1.bf16.msra.mxu0 %v9859
        %10082 = vmatprep.subr.bf16.mxu0 %v9864
        %10083 = vmatpush1.bf16.msra.mxu0 %v9863
        %10084 = vmatprep.subr.bf16.mxu0 %v9868
        %10085 = vmatpush1.bf16.msra.mxu0 %v9867
        %10086 = vmatprep.subr.bf16.mxu0 %v9872
        %10087 = vmatpush1.bf16.msra.mxu0 %v9871
        %10088 = vmatprep.subr.bf16.mxu0 %v9876
        %10089 = vmatpush1.bf16.msra.mxu0 %v9875
        %10090 = vmatprep.subr.bf16.mxu0 %v9880
        %10091 = vmatpush1.bf16.msra.mxu0 %v9879
        %10092 = vmatprep.subr.bf16.mxu0 %v9884
        %10093 = vmatpush1.bf16.msra.mxu0 %v9883
        %10094 = vmatprep.subr.bf16.mxu0 %v9888
        %10095 = vmatpush1.bf16.msra.mxu0 %v9887
        %10096 = vmatprep.subr.bf16.mxu0 %v9892
        %10097 = vmatpush1.bf16.msra.mxu0 %v9891
        %10098 = vmatprep.subr.bf16.mxu0 %v9896
        %10099 = vmatpush1.bf16.msra.mxu0 %v9895
        %10100 = vmatprep.subr.bf16.mxu0 %v9900
        %10101 = vmatpush1.bf16.msra.mxu0 %v9899
        %10102 = vmatprep.subr.bf16.mxu0 %v9904
        %10103 = vmatpush1.bf16.msra.mxu0 %v9903
        %10104 = vmatprep.subr.bf16.mxu0 %v9908
        %10105 = vmatpush1.bf16.msra.mxu0 %v9907
        %10106 = vmatprep.mubr.bf16.mxu0 %v9625
        %10107 = vmatmul.mubr.bf16.gmra.mrb[0].mxu0 %v9624
        %v10108 = vpop.f32.mrb[0].mxu0
        %v10109 = vadd.f32 0.0, %v10108
        %v10110 = vpop.f32.mrb[0].mxu0
        %v10111 = vadd.f32 0.0, %v10110
        %v10112 = vpop.f32.mrb[0].mxu0
        %v10113 = vpop.f32.mrb[0].mxu0
        %10114 = vdwg.mxu0
        %10115 = vmatprep.subr.bf16.mxu0 %v9912
        %10116 = vmatpush1.bf16.msra.mxu0 %v9911
        %10117 = vmatprep.subr.bf16.mxu0 %v9916
        %10118 = vmatpush1.bf16.msra.mxu0 %v9915
        %10119 = vmatprep.subr.bf16.mxu0 0
        %10120 = vmatpush1.bf16.msra.mxu0 0
        %10121 = vmatprep.subr.bf16.mxu0 0
        %10122 = vmatpush1.bf16.msra.mxu0 0
        %10123 = vmatprep.subr.bf16.mxu0 0
        %10124 = vmatpush1.bf16.msra.mxu0 0
        %10125 = vmatprep.subr.bf16.mxu0 0
        %10126 = vmatpush1.bf16.msra.mxu0 0
        %10127 = vmatprep.subr.bf16.mxu0 0
        %10128 = vmatpush1.bf16.msra.mxu0 0
        %10129 = vmatprep.subr.bf16.mxu0 0
        %10130 = vmatpush1.bf16.msra.mxu0 0
        %10131 = vmatprep.subr.bf16.mxu0 0
        %10132 = vmatpush1.bf16.msra.mxu0 0
        %10133 = vmatprep.subr.bf16.mxu0 0
        %10134 = vmatpush1.bf16.msra.mxu0 0
        %10135 = vmatprep.subr.bf16.mxu0 0
        %10136 = vmatpush1.bf16.msra.mxu0 0
        %10137 = vmatprep.subr.bf16.mxu0 0
        %10138 = vmatpush1.bf16.msra.mxu0 0
        %10139 = vmatprep.subr.bf16.mxu0 0
        %10140 = vmatpush1.bf16.msra.mxu0 0
        %10141 = vmatprep.subr.bf16.mxu0 0
        %10142 = vmatpush1.bf16.msra.mxu0 0
        %10143 = vmatprep.subr.bf16.mxu0 0
        %10144 = vmatpush1.bf16.msra.mxu0 0
        %10145 = vmatprep.subr.bf16.mxu0 0
        %10146 = vmatpush1.bf16.msra.mxu0 0
        %10147 = vmatprep.mubr.bf16.mxu0 0
        %10148 = vmatmul.mubr.bf16.gmra.mrb[0].mxu0 %v9990
        %v10149 = vpop.f32.mrb[0].mxu0
        %v10150 = vadd.f32 %v10109, %v10149
        %v10151 = vpop.f32.mrb[0].mxu0
        %v10152 = vadd.f32 %v10111, %v10151
        %v10153 = vpop.f32.mrb[0].mxu0
        %v10154 = vpop.f32.mrb[0].mxu0
        %10155 = vdwg.mxu0
        %v10156 = vadd.f32 %v9544, %v10068
        %v10157 = vadd.f32 %v9545, %v10070
        %v10158 = vadd.f32 %v9546, %v10150
        %v10159 = vadd.f32 %v9547, %v10152
        %s10160 = scalar_lea.vmem %s11, 2304
        %v10161 = vld [vmem:[%s10160] sm:$0xff]
        %v10162 = vld [vmem:[%s10160 + $0x8] sm:$0xff]
        %v10163 = vld [vmem:[%s10160 + $0x10] sm:$0xff]
        %v10164 = vld [vmem:[%s10160 + $0x18] sm:$0xff]
        %v10165 = vld [vmem:[%s10160 + $0x20] sm:$0xff]
        %v10166 = vld [vmem:[%s10160 + $0x28] sm:$0xff]
        %v10167 = vld [vmem:[%s10160 + $0x30] sm:$0xff]
        %v10168 = vld [vmem:[%s10160 + $0x38] sm:$0xff]
        %v10169 = vld [vmem:[%s10160 + $0x40] sm:$0xff]
        %v10170 = vld [vmem:[%s10160 + $0x48] sm:$0xff]
        %v10171 = vld [vmem:[%s10160 + $0x50] sm:$0xff]
        %v10172 = vld [vmem:[%s10160 + $0x58] sm:$0xff]
        %v10173 = vld [vmem:[%s10160 + $0x60] sm:$0xff]
        %v10174 = vld [vmem:[%s10160 + $0x68] sm:$0xff]
        %v10175 = vld [vmem:[%s10160 + $0x70] sm:$0xff]
        %v10176 = vld [vmem:[%s10160 + $0x78] sm:$0xff]
        %v10177 = vld [vmem:[%s10160 + $0x80] sm:$0xff]
        %v10178 = vld [vmem:[%s10160 + $0x88] sm:$0xff]
        %v10179 = vld [vmem:[%s10160 + $0x90] sm:$0xff]
        %v10180 = vld [vmem:[%s10160 + $0x98] sm:$0xff]
        %v10181 = vld [vmem:[%s10160 + $0xa0] sm:$0xff]
        %v10182 = vld [vmem:[%s10160 + $0xa8] sm:$0xff]
        %v10183 = vld [vmem:[%s10160 + $0xb0] sm:$0xff]
        %v10184 = vld [vmem:[%s10160 + $0xb8] sm:$0xff]
        %v10185 = vld [vmem:[%s10160 + $0xc0] sm:$0xff]
        %v10186 = vld [vmem:[%s10160 + $0xc8] sm:$0xff]
        %v10187 = vld [vmem:[%s10160 + $0xd0] sm:$0xff]
        %v10188 = vld [vmem:[%s10160 + $0xd8] sm:$0xff]
        %v10189 = vld [vmem:[%s10160 + $0xe0] sm:$0xff]
        %v10190 = vld [vmem:[%s10160 + $0xe8] sm:$0xff]
        %v10191 = vld [vmem:[%s10160 + $0xf0] sm:$0xff]
        %v10192 = vld [vmem:[%s10160 + $0xf8] sm:$0xff]
        %v10193 = vld [vmem:[%s10160 + $0x100] sm:$0xff]
        %v10194 = vld [vmem:[%s10160 + $0x108] sm:$0xff]
        %v10195 = vld [vmem:[%s10160 + $0x110] sm:$0xff]
        %v10196 = vld [vmem:[%s10160 + $0x118] sm:$0xff]
        %v10197 = vld [vmem:[%s10160 + $0x120] sm:$0xff]
        %v10198 = vld [vmem:[%s10160 + $0x128] sm:$0xff]
        %v10199 = vld [vmem:[%s10160 + $0x130] sm:$0xff]
        %v10200 = vld [vmem:[%s10160 + $0x138] sm:$0xff]
        %v10201 = vld [vmem:[%s10160 + $0x140] sm:$0xff]
        %v10202 = vld [vmem:[%s10160 + $0x148] sm:$0xff]
        %v10203 = vld [vmem:[%s10160 + $0x150] sm:$0xff]
        %v10204 = vld [vmem:[%s10160 + $0x158] sm:$0xff]
        %v10205 = vld [vmem:[%s10160 + $0x160] sm:$0xff]
        %v10206 = vld [vmem:[%s10160 + $0x168] sm:$0xff]
        %v10207 = vld [vmem:[%s10160 + $0x170] sm:$0xff]
        %v10208 = vld [vmem:[%s10160 + $0x178] sm:$0xff]
        %v10209 = vld [vmem:[%s10160 + $0x180] sm:$0xff]
        %v10210 = vld [vmem:[%s10160 + $0x188] sm:$0xff]
        %v10211 = vld [vmem:[%s10160 + $0x190] sm:$0xff]
        %v10212 = vld [vmem:[%s10160 + $0x198] sm:$0xff]
        %v10213 = vld [vmem:[%s10160 + $0x1a0] sm:$0xff]
        %v10214 = vld [vmem:[%s10160 + $0x1a8] sm:$0xff]
        %v10215 = vld [vmem:[%s10160 + $0x1b0] sm:$0xff]
        %v10216 = vld [vmem:[%s10160 + $0x1b8] sm:$0xff]
        %v10217 = vld [vmem:[%s10160 + $0x1c0] sm:$0xff]
        %v10218 = vld [vmem:[%s10160 + $0x1c8] sm:$0xff]
        %v10219 = vld [vmem:[%s10160 + $0x1d0] sm:$0xff]
        %v10220 = vld [vmem:[%s10160 + $0x1d8] sm:$0xff]
        %v10221 = vld [vmem:[%s10160 + $0x1e0] sm:$0xff]
        %v10222 = vld [vmem:[%s10160 + $0x1e8] sm:$0xff]
        %v10223 = vld [vmem:[%s10160 + $0x1f0] sm:$0xff]
        %v10224 = vld [vmem:[%s10160 + $0x1f8] sm:$0xff]
        %v10225 = vld [vmem:[%s10160 + $0x200] sm:$0xff]
        %v10226 = vld [vmem:[%s10160 + $0x208] sm:$0xff]
        %v10227 = vld [vmem:[%s10160 + $0x210] sm:$0xff]
        %v10228 = vld [vmem:[%s10160 + $0x218] sm:$0xff]
        %v10229 = vld [vmem:[%s10160 + $0x220] sm:$0xff]
        %v10230 = vld [vmem:[%s10160 + $0x228] sm:$0xff]
        %v10231 = vld [vmem:[%s10160 + $0x230] sm:$0xff]
        %v10232 = vld [vmem:[%s10160 + $0x238] sm:$0xff]
        %v10305 = vunpack.c.l.b16 %v10161
        %v10306 = vunpack.c.h.b16 %v10161
        %v10307 = vunpack.c.l.b16 %v10162
        %v10308 = vunpack.c.h.b16 %v10162
        %v10309 = vunpack.c.l.b16 %v10163
        %v10310 = vunpack.c.h.b16 %v10163
        %v10311 = vunpack.c.l.b16 %v10164
        %v10312 = vunpack.c.h.b16 %v10164
        %v10313 = vunpack.c.l.b16 %v10165
        %v10314 = vunpack.c.h.b16 %v10165
        %v10315 = vunpack.c.l.b16 %v10166
        %v10316 = vunpack.c.h.b16 %v10166
        %v10317 = vunpack.c.l.b16 %v10167
        %v10318 = vunpack.c.h.b16 %v10167
        %v10319 = vunpack.c.l.b16 %v10168
        %v10320 = vunpack.c.h.b16 %v10168
        %v10321 = vunpack.c.l.b16 %v10169
        %v10322 = vunpack.c.h.b16 %v10169
        %v10323 = vunpack.c.l.b16 %v10170
        %v10324 = vunpack.c.h.b16 %v10170
        %v10325 = vunpack.c.l.b16 %v10171
        %v10326 = vunpack.c.h.b16 %v10171
        %v10327 = vunpack.c.l.b16 %v10172
        %v10328 = vunpack.c.h.b16 %v10172
        %v10329 = vunpack.c.l.b16 %v10173
        %v10330 = vunpack.c.h.b16 %v10173
        %v10331 = vunpack.c.l.b16 %v10174
        %v10332 = vunpack.c.h.b16 %v10174
        %v10333 = vunpack.c.l.b16 %v10175
        %v10334 = vunpack.c.h.b16 %v10175
        %v10335 = vunpack.c.l.b16 %v10176
        %v10336 = vunpack.c.h.b16 %v10176
        %v10337 = vunpack.c.l.b16 %v10177
        %v10338 = vunpack.c.h.b16 %v10177
        %v10339 = vunpack.c.l.b16 %v10178
        %v10340 = vunpack.c.h.b16 %v10178
        %v10341 = vunpack.c.l.b16 %v10179
        %v10342 = vunpack.c.h.b16 %v10179
        %v10343 = vunpack.c.l.b16 %v10180
        %v10344 = vunpack.c.h.b16 %v10180
        %v10345 = vunpack.c.l.b16 %v10181
        %v10346 = vunpack.c.h.b16 %v10181
        %v10347 = vunpack.c.l.b16 %v10182
        %v10348 = vunpack.c.h.b16 %v10182
        %v10349 = vunpack.c.l.b16 %v10183
        %v10350 = vunpack.c.h.b16 %v10183
        %v10351 = vunpack.c.l.b16 %v10184
        %v10352 = vunpack.c.h.b16 %v10184
        %v10353 = vunpack.c.l.b16 %v10185
        %v10354 = vunpack.c.h.b16 %v10185
        %v10355 = vunpack.c.l.b16 %v10186
        %v10356 = vunpack.c.h.b16 %v10186
        %v10357 = vunpack.c.l.b16 %v10187
        %v10358 = vunpack.c.h.b16 %v10187
        %v10359 = vunpack.c.l.b16 %v10188
        %v10360 = vunpack.c.h.b16 %v10188
        %v10361 = vunpack.c.l.b16 %v10189
        %v10362 = vunpack.c.h.b16 %v10189
        %v10363 = vunpack.c.l.b16 %v10190
        %v10364 = vunpack.c.h.b16 %v10190
        %v10365 = vunpack.c.l.b16 %v10191
        %v10366 = vunpack.c.h.b16 %v10191
        %v10367 = vunpack.c.l.b16 %v10192
        %v10368 = vunpack.c.h.b16 %v10192
        %v10369 = vunpack.c.l.b16 %v10193
        %v10370 = vunpack.c.h.b16 %v10193
        %v10371 = vunpack.c.l.b16 %v10194
        %v10372 = vunpack.c.h.b16 %v10194
        %v10373 = vunpack.c.l.b16 %v10195
        %v10374 = vunpack.c.h.b16 %v10195
        %v10375 = vunpack.c.l.b16 %v10196
        %v10376 = vunpack.c.h.b16 %v10196
        %v10377 = vunpack.c.l.b16 %v10197
        %v10378 = vunpack.c.h.b16 %v10197
        %v10379 = vunpack.c.l.b16 %v10198
        %v10380 = vunpack.c.h.b16 %v10198
        %v10381 = vunpack.c.l.b16 %v10199
        %v10382 = vunpack.c.h.b16 %v10199
        %v10383 = vunpack.c.l.b16 %v10200
        %v10384 = vunpack.c.h.b16 %v10200
        %v10385 = vunpack.c.l.b16 %v10201
        %v10386 = vunpack.c.h.b16 %v10201
        %v10387 = vunpack.c.l.b16 %v10202
        %v10388 = vunpack.c.h.b16 %v10202
        %v10389 = vunpack.c.l.b16 %v10203
        %v10390 = vunpack.c.h.b16 %v10203
        %v10391 = vunpack.c.l.b16 %v10204
        %v10392 = vunpack.c.h.b16 %v10204
        %v10393 = vunpack.c.l.b16 %v10205
        %v10394 = vunpack.c.h.b16 %v10205
        %v10395 = vunpack.c.l.b16 %v10206
        %v10396 = vunpack.c.h.b16 %v10206
        %v10397 = vunpack.c.l.b16 %v10207
        %v10398 = vunpack.c.h.b16 %v10207
        %v10399 = vunpack.c.l.b16 %v10208
        %v10400 = vunpack.c.h.b16 %v10208
        %v10401 = vunpack.c.l.b16 %v10209
        %v10402 = vunpack.c.h.b16 %v10209
        %v10403 = vunpack.c.l.b16 %v10210
        %v10404 = vunpack.c.h.b16 %v10210
        %v10405 = vunpack.c.l.b16 %v10211
        %v10406 = vunpack.c.h.b16 %v10211
        %v10407 = vunpack.c.l.b16 %v10212
        %v10408 = vunpack.c.h.b16 %v10212
        %v10409 = vunpack.c.l.b16 %v10213
        %v10410 = vunpack.c.h.b16 %v10213
        %v10411 = vunpack.c.l.b16 %v10214
        %v10412 = vunpack.c.h.b16 %v10214
        %v10413 = vunpack.c.l.b16 %v10215
        %v10414 = vunpack.c.h.b16 %v10215
        %v10415 = vunpack.c.l.b16 %v10216
        %v10416 = vunpack.c.h.b16 %v10216
        %v10417 = vunpack.c.l.b16 %v10217
        %v10418 = vunpack.c.h.b16 %v10217
        %v10419 = vunpack.c.l.b16 %v10218
        %v10420 = vunpack.c.h.b16 %v10218
        %v10421 = vunpack.c.l.b16 %v10219
        %v10422 = vunpack.c.h.b16 %v10219
        %v10423 = vunpack.c.l.b16 %v10220
        %v10424 = vunpack.c.h.b16 %v10220
        %v10425 = vunpack.c.l.b16 %v10221
        %v10426 = vunpack.c.h.b16 %v10221
        %v10427 = vunpack.c.l.b16 %v10222
        %v10428 = vunpack.c.h.b16 %v10222
        %v10429 = vunpack.c.l.b16 %v10223
        %v10430 = vunpack.c.h.b16 %v10223
        %v10431 = vunpack.c.l.b16 %v10224
        %v10432 = vunpack.c.h.b16 %v10224
        %v10433 = vunpack.c.l.b16 %v10225
        %v10434 = vunpack.c.h.b16 %v10225
        %v10435 = vunpack.c.l.b16 %v10226
        %v10436 = vunpack.c.h.b16 %v10226
        %v10437 = vunpack.c.l.b16 %v10227
        %v10438 = vunpack.c.h.b16 %v10227
        %v10439 = vunpack.c.l.b16 %v10228
        %v10440 = vunpack.c.h.b16 %v10228
        %v10441 = vunpack.c.l.b16 %v10229
        %v10442 = vunpack.c.h.b16 %v10229
        %v10443 = vunpack.c.l.b16 %v10230
        %v10444 = vunpack.c.h.b16 %v10230
        %v10445 = vunpack.c.l.b16 %v10231
        %v10446 = vunpack.c.h.b16 %v10231
        %v10447 = vunpack.c.l.b16 %v10232
        %v10448 = vunpack.c.h.b16 %v10232
        %v10449 = vpack.c.b16 %v10309, %v10305
        %v10450 = vpack.c.b16 %v10310, %v10306
        %v10451 = vpack.c.b16 %v10311, %v10307
        %v10452 = vpack.c.b16 %v10312, %v10308
        %v10453 = vpack.c.b16 %v10317, %v10313
        %v10454 = vpack.c.b16 %v10318, %v10314
        %v10455 = vpack.c.b16 %v10319, %v10315
        %v10456 = vpack.c.b16 %v10320, %v10316
        %v10457 = vpack.c.b16 %v10325, %v10321
        %v10458 = vpack.c.b16 %v10326, %v10322
        %v10459 = vpack.c.b16 %v10327, %v10323
        %v10460 = vpack.c.b16 %v10328, %v10324
        %v10461 = vpack.c.b16 %v10333, %v10329
        %v10462 = vpack.c.b16 %v10334, %v10330
        %v10463 = vpack.c.b16 %v10335, %v10331
        %v10464 = vpack.c.b16 %v10336, %v10332
        %v10465 = vpack.c.b16 %v10341, %v10337
        %v10466 = vpack.c.b16 %v10342, %v10338
        %v10467 = vpack.c.b16 %v10343, %v10339
        %v10468 = vpack.c.b16 %v10344, %v10340
        %v10469 = vpack.c.b16 %v10349, %v10345
        %v10470 = vpack.c.b16 %v10350, %v10346
        %v10471 = vpack.c.b16 %v10351, %v10347
        %v10472 = vpack.c.b16 %v10352, %v10348
        %v10473 = vpack.c.b16 %v10357, %v10353
        %v10474 = vpack.c.b16 %v10358, %v10354
        %v10475 = vpack.c.b16 %v10359, %v10355
        %v10476 = vpack.c.b16 %v10360, %v10356
        %v10477 = vpack.c.b16 %v10365, %v10361
        %v10478 = vpack.c.b16 %v10366, %v10362
        %v10479 = vpack.c.b16 %v10367, %v10363
        %v10480 = vpack.c.b16 %v10368, %v10364
        %v10481 = vpack.c.b16 %v10373, %v10369
        %v10482 = vpack.c.b16 %v10374, %v10370
        %v10483 = vpack.c.b16 %v10375, %v10371
        %v10484 = vpack.c.b16 %v10376, %v10372
        %v10485 = vpack.c.b16 %v10381, %v10377
        %v10486 = vpack.c.b16 %v10382, %v10378
        %v10487 = vpack.c.b16 %v10383, %v10379
        %v10488 = vpack.c.b16 %v10384, %v10380
        %v10489 = vpack.c.b16 %v10389, %v10385
        %v10490 = vpack.c.b16 %v10390, %v10386
        %v10491 = vpack.c.b16 %v10391, %v10387
        %v10492 = vpack.c.b16 %v10392, %v10388
        %v10493 = vpack.c.b16 %v10397, %v10393
        %v10494 = vpack.c.b16 %v10398, %v10394
        %v10495 = vpack.c.b16 %v10399, %v10395
        %v10496 = vpack.c.b16 %v10400, %v10396
        %v10497 = vpack.c.b16 %v10405, %v10401
        %v10498 = vpack.c.b16 %v10406, %v10402
        %v10499 = vpack.c.b16 %v10407, %v10403
        %v10500 = vpack.c.b16 %v10408, %v10404
        %v10501 = vpack.c.b16 %v10413, %v10409
        %v10502 = vpack.c.b16 %v10414, %v10410
        %v10503 = vpack.c.b16 %v10415, %v10411
        %v10504 = vpack.c.b16 %v10416, %v10412
        %v10505 = vpack.c.b16 %v10421, %v10417
        %v10506 = vpack.c.b16 %v10422, %v10418
        %v10507 = vpack.c.b16 %v10423, %v10419
        %v10508 = vpack.c.b16 %v10424, %v10420
        %v10509 = vpack.c.b16 %v10429, %v10425
        %v10510 = vpack.c.b16 %v10430, %v10426
        %v10511 = vpack.c.b16 %v10431, %v10427
        %v10512 = vpack.c.b16 %v10432, %v10428
        %v10513 = vpack.c.b16 %v10437, %v10433
        %v10514 = vpack.c.b16 %v10438, %v10434
        %v10515 = vpack.c.b16 %v10439, %v10435
        %v10516 = vpack.c.b16 %v10440, %v10436
        %v10517 = vpack.c.b16 %v10445, %v10441
        %v10518 = vpack.c.b16 %v10446, %v10442
        %v10519 = vpack.c.b16 %v10447, %v10443
        %v10520 = vpack.c.b16 %v10448, %v10444
        %v10594 = vsel %vm8249, %v7735, 0
        %10596 = vmatprep.subr.bf16.mxu0 %v10450
        %10597 = vmatpush1.bf16.msra.mxu0 %v10449
        %10598 = vmatprep.subr.bf16.mxu0 %v10454
        %10599 = vmatpush1.bf16.msra.mxu0 %v10453
        %10600 = vmatprep.subr.bf16.mxu0 %v10458
        %10601 = vmatpush1.bf16.msra.mxu0 %v10457
        %10602 = vmatprep.subr.bf16.mxu0 %v10462
        %10603 = vmatpush1.bf16.msra.mxu0 %v10461
        %10604 = vmatprep.subr.bf16.mxu0 %v10466
        %10605 = vmatpush1.bf16.msra.mxu0 %v10465
        %10606 = vmatprep.subr.bf16.mxu0 %v10470
        %10607 = vmatpush1.bf16.msra.mxu0 %v10469
        %10608 = vmatprep.subr.bf16.mxu0 %v10474
        %10609 = vmatpush1.bf16.msra.mxu0 %v10473
        %10610 = vmatprep.subr.bf16.mxu0 %v10478
        %10611 = vmatpush1.bf16.msra.mxu0 %v10477
        %10612 = vmatprep.subr.bf16.mxu0 %v10482
        %10613 = vmatpush1.bf16.msra.mxu0 %v10481
        %10614 = vmatprep.subr.bf16.mxu0 %v10486
        %10615 = vmatpush1.bf16.msra.mxu0 %v10485
        %10616 = vmatprep.subr.bf16.mxu0 %v10490
        %10617 = vmatpush1.bf16.msra.mxu0 %v10489
        %10618 = vmatprep.subr.bf16.mxu0 %v10494
        %10619 = vmatpush1.bf16.msra.mxu0 %v10493
        %10620 = vmatprep.subr.bf16.mxu0 %v10498
        %10621 = vmatpush1.bf16.msra.mxu0 %v10497
        %10622 = vmatprep.subr.bf16.mxu0 %v10502
        %10623 = vmatpush1.bf16.msra.mxu0 %v10501
        %10624 = vmatprep.subr.bf16.mxu0 %v10506
        %10625 = vmatpush1.bf16.msra.mxu0 %v10505
        %10626 = vmatprep.subr.bf16.mxu0 %v10510
        %10627 = vmatpush1.bf16.msra.mxu0 %v10509
        %10628 = vmatprep.mubr.bf16.mxu0 %v7734
        %10629 = vmatmul.mubr.bf16.gmra.mrb[0].mxu0 %v7733
        %v10630 = vpop.f32.mrb[0].mxu0
        %v10631 = vadd.f32 0.0, %v10630
        %v10632 = vpop.f32.mrb[0].mxu0
        %v10633 = vadd.f32 0.0, %v10632
        %v10634 = vpop.f32.mrb[0].mxu0
        %v10635 = vpop.f32.mrb[0].mxu0
        %10636 = vdwg.mxu0
        %10637 = vmatprep.subr.bf16.mxu0 %v10514
        %10638 = vmatpush1.bf16.msra.mxu0 %v10513
        %10639 = vmatprep.subr.bf16.mxu0 %v10518
        %10640 = vmatpush1.bf16.msra.mxu0 %v10517
        %10641 = vmatprep.subr.bf16.mxu0 0
        %10642 = vmatpush1.bf16.msra.mxu0 0
        %10643 = vmatprep.subr.bf16.mxu0 0
        %10644 = vmatpush1.bf16.msra.mxu0 0
        %10645 = vmatprep.subr.bf16.mxu0 0
        %10646 = vmatpush1.bf16.msra.mxu0 0
        %10647 = vmatprep.subr.bf16.mxu0 0
        %10648 = vmatpush1.bf16.msra.mxu0 0
        %10649 = vmatprep.subr.bf16.mxu0 0
        %10650 = vmatpush1.bf16.msra.mxu0 0
        %10651 = vmatprep.subr.bf16.mxu0 0
        %10652 = vmatpush1.bf16.msra.mxu0 0
        %10653 = vmatprep.subr.bf16.mxu0 0
        %10654 = vmatpush1.bf16.msra.mxu0 0
        %10655 = vmatprep.subr.bf16.mxu0 0
        %10656 = vmatpush1.bf16.msra.mxu0 0
        %10657 = vmatprep.subr.bf16.mxu0 0
        %10658 = vmatpush1.bf16.msra.mxu0 0
        %10659 = vmatprep.subr.bf16.mxu0 0
        %10660 = vmatpush1.bf16.msra.mxu0 0
        %10661 = vmatprep.subr.bf16.mxu0 0
        %10662 = vmatpush1.bf16.msra.mxu0 0
        %10663 = vmatprep.subr.bf16.mxu0 0
        %10664 = vmatpush1.bf16.msra.mxu0 0
        %10665 = vmatprep.subr.bf16.mxu0 0
        %10666 = vmatpush1.bf16.msra.mxu0 0
        %10667 = vmatprep.subr.bf16.mxu0 0
        %10668 = vmatpush1.bf16.msra.mxu0 0
        %10669 = vmatprep.mubr.bf16.mxu0 0
        %10670 = vmatmul.mubr.bf16.gmra.mrb[0].mxu0 %v10594
        %v10671 = vpop.f32.mrb[0].mxu0
        %v10672 = vadd.f32 %v10631, %v10671
        %v10673 = vpop.f32.mrb[0].mxu0
        %v10674 = vadd.f32 %v10633, %v10673
        %v10675 = vpop.f32.mrb[0].mxu0
        %v10676 = vpop.f32.mrb[0].mxu0
        %10677 = vdwg.mxu0
        %10678 = vmatprep.subr.bf16.mxu0 %v10452
        %10679 = vmatpush1.bf16.msra.mxu0 %v10451
        %10680 = vmatprep.subr.bf16.mxu0 %v10456
        %10681 = vmatpush1.bf16.msra.mxu0 %v10455
        %10682 = vmatprep.subr.bf16.mxu0 %v10460
        %10683 = vmatpush1.bf16.msra.mxu0 %v10459
        %10684 = vmatprep.subr.bf16.mxu0 %v10464
        %10685 = vmatpush1.bf16.msra.mxu0 %v10463
        %10686 = vmatprep.subr.bf16.mxu0 %v10468
        %10687 = vmatpush1.bf16.msra.mxu0 %v10467
        %10688 = vmatprep.subr.bf16.mxu0 %v10472
        %10689 = vmatpush1.bf16.msra.mxu0 %v10471
        %10690 = vmatprep.subr.bf16.mxu0 %v10476
        %10691 = vmatpush1.bf16.msra.mxu0 %v10475
        %10692 = vmatprep.subr.bf16.mxu0 %v10480
        %10693 = vmatpush1.bf16.msra.mxu0 %v10479
        %10694 = vmatprep.subr.bf16.mxu0 %v10484
        %10695 = vmatpush1.bf16.msra.mxu0 %v10483
        %10696 = vmatprep.subr.bf16.mxu0 %v10488
        %10697 = vmatpush1.bf16.msra.mxu0 %v10487
        %10698 = vmatprep.subr.bf16.mxu0 %v10492
        %10699 = vmatpush1.bf16.msra.mxu0 %v10491
        %10700 = vmatprep.subr.bf16.mxu0 %v10496
        %10701 = vmatpush1.bf16.msra.mxu0 %v10495
        %10702 = vmatprep.subr.bf16.mxu0 %v10500
        %10703 = vmatpush1.bf16.msra.mxu0 %v10499
        %10704 = vmatprep.subr.bf16.mxu0 %v10504
        %10705 = vmatpush1.bf16.msra.mxu0 %v10503
        %10706 = vmatprep.subr.bf16.mxu0 %v10508
        %10707 = vmatpush1.bf16.msra.mxu0 %v10507
        %10708 = vmatprep.subr.bf16.mxu0 %v10512
        %10709 = vmatpush1.bf16.msra.mxu0 %v10511
        %10710 = vmatprep.mubr.bf16.mxu0 %v7734
        %10711 = vmatmul.mubr.bf16.gmra.mrb[0].mxu0 %v7733
        %v10712 = vpop.f32.mrb[0].mxu0
        %v10713 = vadd.f32 0.0, %v10712
        %v10714 = vpop.f32.mrb[0].mxu0
        %v10715 = vadd.f32 0.0, %v10714
        %v10716 = vpop.f32.mrb[0].mxu0
        %v10717 = vpop.f32.mrb[0].mxu0
        %10718 = vdwg.mxu0
        %10719 = vmatprep.subr.bf16.mxu0 %v10516
        %10720 = vmatpush1.bf16.msra.mxu0 %v10515
        %10721 = vmatprep.subr.bf16.mxu0 %v10520
        %10722 = vmatpush1.bf16.msra.mxu0 %v10519
        %10723 = vmatprep.subr.bf16.mxu0 0
        %10724 = vmatpush1.bf16.msra.mxu0 0
        %10725 = vmatprep.subr.bf16.mxu0 0
        %10726 = vmatpush1.bf16.msra.mxu0 0
        %10727 = vmatprep.subr.bf16.mxu0 0
        %10728 = vmatpush1.bf16.msra.mxu0 0
        %10729 = vmatprep.subr.bf16.mxu0 0
        %10730 = vmatpush1.bf16.msra.mxu0 0
        %10731 = vmatprep.subr.bf16.mxu0 0
        %10732 = vmatpush1.bf16.msra.mxu0 0
        %10733 = vmatprep.subr.bf16.mxu0 0
        %10734 = vmatpush1.bf16.msra.mxu0 0
        %10735 = vmatprep.subr.bf16.mxu0 0
        %10736 = vmatpush1.bf16.msra.mxu0 0
        %10737 = vmatprep.subr.bf16.mxu0 0
        %10738 = vmatpush1.bf16.msra.mxu0 0
        %10739 = vmatprep.subr.bf16.mxu0 0
        %10740 = vmatpush1.bf16.msra.mxu0 0
        %10741 = vmatprep.subr.bf16.mxu0 0
        %10742 = vmatpush1.bf16.msra.mxu0 0
        %10743 = vmatprep.subr.bf16.mxu0 0
        %10744 = vmatpush1.bf16.msra.mxu0 0
        %10745 = vmatprep.subr.bf16.mxu0 0
        %10746 = vmatpush1.bf16.msra.mxu0 0
        %10747 = vmatprep.subr.bf16.mxu0 0
        %10748 = vmatpush1.bf16.msra.mxu0 0
        %10749 = vmatprep.subr.bf16.mxu0 0
        %10750 = vmatpush1.bf16.msra.mxu0 0
        %10751 = vmatprep.mubr.bf16.mxu0 0
        %10752 = vmatmul.mubr.bf16.gmra.mrb[0].mxu0 %v10594
        %v10753 = vpop.f32.mrb[0].mxu0
        %v10754 = vadd.f32 %v10713, %v10753
        %v10755 = vpop.f32.mrb[0].mxu0
        %v10756 = vadd.f32 %v10715, %v10755
        %v10757 = vpop.f32.mrb[0].mxu0
        %v10758 = vpop.f32.mrb[0].mxu0
        %10759 = vdwg.mxu0
        %v10760 = vadd.f32 %v10156, %v10672
        %v10761 = vadd.f32 %v10157, %v10674
        %v10762 = vadd.f32 %v10158, %v10754
        %v10763 = vadd.f32 %v10159, %v10756
        %v10764 = vld [vmem:[%s12] sm:$0xf]
        %v10766 = vlaneseq
        %v10767 = vshrl.u32 %v10766, 7
        %v10768 = vsub.s32 0, %v10767
        %v10769 = vrot.slane %v10764, %v10768
        %v10770 = vlaneseq
        %v10771 = vshrl.u32 %v10770, 7
        %v10772 = vsub.s32 1, %v10771
        %v10773 = vrot.slane %v10764, %v10772
        %v10774 = vlaneseq
        %v10775 = vshrl.u32 %v10774, 7
        %v10776 = vsub.s32 2, %v10775
        %v10777 = vrot.slane %v10764, %v10776
        %v10778 = vlaneseq
        %v10779 = vshrl.u32 %v10778, 7
        %v10780 = vsub.s32 3, %v10779
        %v10781 = vrot.slane %v10764, %v10780
        %v10786 = vadd.f32 %v10760, %v10769
        %v10787 = vadd.f32 %v10761, %v10773
        %v10788 = vadd.f32 %v10762, %v10777
        %v10789 = vadd.f32 %v10763, %v10781
        %v10790 = vmax.f32 %v10786, 0.0
        %v10791 = vmax.f32 %v10787, 0.0
        %v10792 = vmax.f32 %v10788, 0.0
        %v10793 = vmax.f32 %v10789, 0.0
        %v10794 = vpack.c.bf16 %v10790, %v10790
        %v10795 = vpack.c.bf16 %v10791, %v10791
        %v10796 = vpack.c.bf16 %v10792, %v10792
        %v10797 = vpack.c.bf16 %v10793, %v10793
        %v10798 = vld [vmem:[%s13] sm:$0xff]
        %v10799 = vld [vmem:[%s13 + $0x8] sm:$0xff]
        %v10800 = vld [vmem:[%s13 + $0x10] sm:$0xff]
        %v10801 = vld [vmem:[%s13 + $0x18] sm:$0xff]
        %v10802 = vld [vmem:[%s13 + $0x20] sm:$0xff]
        %v10803 = vld [vmem:[%s13 + $0x28] sm:$0xff]
        %v10804 = vld [vmem:[%s13 + $0x30] sm:$0xff]
        %v10805 = vld [vmem:[%s13 + $0x38] sm:$0xff]
        %v10806 = vld [vmem:[%s13 + $0x40] sm:$0xff]
        %v10807 = vld [vmem:[%s13 + $0x48] sm:$0xff]
        %v10808 = vld [vmem:[%s13 + $0x50] sm:$0xff]
        %v10809 = vld [vmem:[%s13 + $0x58] sm:$0xff]
        %v10810 = vld [vmem:[%s13 + $0x60] sm:$0xff]
        %v10811 = vld [vmem:[%s13 + $0x68] sm:$0xff]
        %v10812 = vld [vmem:[%s13 + $0x70] sm:$0xff]
        %v10813 = vld [vmem:[%s13 + $0x78] sm:$0xff]
        %v10814 = vld [vmem:[%s13 + $0x80] sm:$0xff]
        %v10815 = vld [vmem:[%s13 + $0x88] sm:$0xff]
        %v10816 = vld [vmem:[%s13 + $0x90] sm:$0xff]
        %v10817 = vld [vmem:[%s13 + $0x98] sm:$0xff]
        %v10818 = vld [vmem:[%s13 + $0xa0] sm:$0xff]
        %v10819 = vld [vmem:[%s13 + $0xa8] sm:$0xff]
        %v10820 = vld [vmem:[%s13 + $0xb0] sm:$0xff]
        %v10821 = vld [vmem:[%s13 + $0xb8] sm:$0xff]
        %v10822 = vld [vmem:[%s13 + $0xc0] sm:$0xff]
        %v10823 = vld [vmem:[%s13 + $0xc8] sm:$0xff]
        %v10824 = vld [vmem:[%s13 + $0xd0] sm:$0xff]
        %v10825 = vld [vmem:[%s13 + $0xd8] sm:$0xff]
        %v10826 = vld [vmem:[%s13 + $0xe0] sm:$0xff]
        %v10827 = vld [vmem:[%s13 + $0xe8] sm:$0xff]
        %v10828 = vld [vmem:[%s13 + $0xf0] sm:$0xff]
        %v10829 = vld [vmem:[%s13 + $0xf8] sm:$0xff]
        %v10830 = vld [vmem:[%s13 + $0x100] sm:$0xff]
        %v10831 = vld [vmem:[%s13 + $0x108] sm:$0xff]
        %v10832 = vld [vmem:[%s13 + $0x110] sm:$0xff]
        %v10833 = vld [vmem:[%s13 + $0x118] sm:$0xff]
        %v10834 = vld [vmem:[%s13 + $0x120] sm:$0xff]
        %v10835 = vld [vmem:[%s13 + $0x128] sm:$0xff]
        %v10836 = vld [vmem:[%s13 + $0x130] sm:$0xff]
        %v10837 = vld [vmem:[%s13 + $0x138] sm:$0xff]
        %v10838 = vld [vmem:[%s13 + $0x140] sm:$0xff]
        %v10839 = vld [vmem:[%s13 + $0x148] sm:$0xff]
        %v10840 = vld [vmem:[%s13 + $0x150] sm:$0xff]
        %v10841 = vld [vmem:[%s13 + $0x158] sm:$0xff]
        %v10842 = vld [vmem:[%s13 + $0x160] sm:$0xff]
        %v10843 = vld [vmem:[%s13 + $0x168] sm:$0xff]
        %v10844 = vld [vmem:[%s13 + $0x170] sm:$0xff]
        %v10845 = vld [vmem:[%s13 + $0x178] sm:$0xff]
        %v10846 = vld [vmem:[%s13 + $0x180] sm:$0xff]
        %v10847 = vld [vmem:[%s13 + $0x188] sm:$0xff]
        %v10848 = vld [vmem:[%s13 + $0x190] sm:$0xff]
        %v10849 = vld [vmem:[%s13 + $0x198] sm:$0xff]
        %v10850 = vld [vmem:[%s13 + $0x1a0] sm:$0xff]
        %v10851 = vld [vmem:[%s13 + $0x1a8] sm:$0xff]
        %v10852 = vld [vmem:[%s13 + $0x1b0] sm:$0xff]
        %v10853 = vld [vmem:[%s13 + $0x1b8] sm:$0xff]
        %v10854 = vld [vmem:[%s13 + $0x1c0] sm:$0xff]
        %v10855 = vld [vmem:[%s13 + $0x1c8] sm:$0xff]
        %v10856 = vld [vmem:[%s13 + $0x1d0] sm:$0xff]
        %v10857 = vld [vmem:[%s13 + $0x1d8] sm:$0xff]
        %v10858 = vld [vmem:[%s13 + $0x1e0] sm:$0xff]
        %v10859 = vld [vmem:[%s13 + $0x1e8] sm:$0xff]
        %v10860 = vld [vmem:[%s13 + $0x1f0] sm:$0xff]
        %v10861 = vld [vmem:[%s13 + $0x1f8] sm:$0xff]
        %v10862 = vld [vmem:[%s14] sm:$0x3]
        %v10864 = vlaneseq
        %v10865 = vshrl.u32 %v10864, 7
        %v10866 = vsub.s32 0, %v10865
        %v10867 = vrot.slane %v10862, %v10866
        %v10868 = vlaneseq
        %v10869 = vshrl.u32 %v10868, 7
        %v10870 = vsub.s32 1, %v10869
        %v10871 = vrot.slane %v10862, %v10870
        %v10938 = vunpack.c.l.b16 %v10798
        %v10939 = vunpack.c.h.b16 %v10798
        %v10940 = vunpack.c.l.b16 %v10799
        %v10941 = vunpack.c.h.b16 %v10799
        %v10942 = vunpack.c.l.b16 %v10800
        %v10943 = vunpack.c.h.b16 %v10800
        %v10944 = vunpack.c.l.b16 %v10801
        %v10945 = vunpack.c.h.b16 %v10801
        %v10946 = vunpack.c.l.b16 %v10802
        %v10947 = vunpack.c.h.b16 %v10802
        %v10948 = vunpack.c.l.b16 %v10803
        %v10949 = vunpack.c.h.b16 %v10803
        %v10950 = vunpack.c.l.b16 %v10804
        %v10951 = vunpack.c.h.b16 %v10804
        %v10952 = vunpack.c.l.b16 %v10805
        %v10953 = vunpack.c.h.b16 %v10805
        %v10954 = vunpack.c.l.b16 %v10806
        %v10955 = vunpack.c.h.b16 %v10806
        %v10956 = vunpack.c.l.b16 %v10807
        %v10957 = vunpack.c.h.b16 %v10807
        %v10958 = vunpack.c.l.b16 %v10808
        %v10959 = vunpack.c.h.b16 %v10808
        %v10960 = vunpack.c.l.b16 %v10809
        %v10961 = vunpack.c.h.b16 %v10809
        %v10962 = vunpack.c.l.b16 %v10810
        %v10963 = vunpack.c.h.b16 %v10810
        %v10964 = vunpack.c.l.b16 %v10811
        %v10965 = vunpack.c.h.b16 %v10811
        %v10966 = vunpack.c.l.b16 %v10812
        %v10967 = vunpack.c.h.b16 %v10812
        %v10968 = vunpack.c.l.b16 %v10813
        %v10969 = vunpack.c.h.b16 %v10813
        %v10970 = vunpack.c.l.b16 %v10814
        %v10971 = vunpack.c.h.b16 %v10814
        %v10972 = vunpack.c.l.b16 %v10815
        %v10973 = vunpack.c.h.b16 %v10815
        %v10974 = vunpack.c.l.b16 %v10816
        %v10975 = vunpack.c.h.b16 %v10816
        %v10976 = vunpack.c.l.b16 %v10817
        %v10977 = vunpack.c.h.b16 %v10817
        %v10978 = vunpack.c.l.b16 %v10818
        %v10979 = vunpack.c.h.b16 %v10818
        %v10980 = vunpack.c.l.b16 %v10819
        %v10981 = vunpack.c.h.b16 %v10819
        %v10982 = vunpack.c.l.b16 %v10820
        %v10983 = vunpack.c.h.b16 %v10820
        %v10984 = vunpack.c.l.b16 %v10821
        %v10985 = vunpack.c.h.b16 %v10821
        %v10986 = vunpack.c.l.b16 %v10822
        %v10987 = vunpack.c.h.b16 %v10822
        %v10988 = vunpack.c.l.b16 %v10823
        %v10989 = vunpack.c.h.b16 %v10823
        %v10990 = vunpack.c.l.b16 %v10824
        %v10991 = vunpack.c.h.b16 %v10824
        %v10992 = vunpack.c.l.b16 %v10825
        %v10993 = vunpack.c.h.b16 %v10825
        %v10994 = vunpack.c.l.b16 %v10826
        %v10995 = vunpack.c.h.b16 %v10826
        %v10996 = vunpack.c.l.b16 %v10827
        %v10997 = vunpack.c.h.b16 %v10827
        %v10998 = vunpack.c.l.b16 %v10828
        %v10999 = vunpack.c.h.b16 %v10828
        %v11000 = vunpack.c.l.b16 %v10829
        %v11001 = vunpack.c.h.b16 %v10829
        %v11002 = vunpack.c.l.b16 %v10830
        %v11003 = vunpack.c.h.b16 %v10830
        %v11004 = vunpack.c.l.b16 %v10831
        %v11005 = vunpack.c.h.b16 %v10831
        %v11006 = vunpack.c.l.b16 %v10832
        %v11007 = vunpack.c.h.b16 %v10832
        %v11008 = vunpack.c.l.b16 %v10833
        %v11009 = vunpack.c.h.b16 %v10833
        %v11010 = vunpack.c.l.b16 %v10834
        %v11011 = vunpack.c.h.b16 %v10834
        %v11012 = vunpack.c.l.b16 %v10835
        %v11013 = vunpack.c.h.b16 %v10835
        %v11014 = vunpack.c.l.b16 %v10836
        %v11015 = vunpack.c.h.b16 %v10836
        %v11016 = vunpack.c.l.b16 %v10837
        %v11017 = vunpack.c.h.b16 %v10837
        %v11018 = vunpack.c.l.b16 %v10838
        %v11019 = vunpack.c.h.b16 %v10838
        %v11020 = vunpack.c.l.b16 %v10839
        %v11021 = vunpack.c.h.b16 %v10839
        %v11022 = vunpack.c.l.b16 %v10840
        %v11023 = vunpack.c.h.b16 %v10840
        %v11024 = vunpack.c.l.b16 %v10841
        %v11025 = vunpack.c.h.b16 %v10841
        %v11026 = vunpack.c.l.b16 %v10842
        %v11027 = vunpack.c.h.b16 %v10842
        %v11028 = vunpack.c.l.b16 %v10843
        %v11029 = vunpack.c.h.b16 %v10843
        %v11030 = vunpack.c.l.b16 %v10844
        %v11031 = vunpack.c.h.b16 %v10844
        %v11032 = vunpack.c.l.b16 %v10845
        %v11033 = vunpack.c.h.b16 %v10845
        %v11034 = vunpack.c.l.b16 %v10846
        %v11035 = vunpack.c.h.b16 %v10846
        %v11036 = vunpack.c.l.b16 %v10847
        %v11037 = vunpack.c.h.b16 %v10847
        %v11038 = vunpack.c.l.b16 %v10848
        %v11039 = vunpack.c.h.b16 %v10848
        %v11040 = vunpack.c.l.b16 %v10849
        %v11041 = vunpack.c.h.b16 %v10849
        %v11042 = vunpack.c.l.b16 %v10850
        %v11043 = vunpack.c.h.b16 %v10850
        %v11044 = vunpack.c.l.b16 %v10851
        %v11045 = vunpack.c.h.b16 %v10851
        %v11046 = vunpack.c.l.b16 %v10852
        %v11047 = vunpack.c.h.b16 %v10852
        %v11048 = vunpack.c.l.b16 %v10853
        %v11049 = vunpack.c.h.b16 %v10853
        %v11050 = vunpack.c.l.b16 %v10854
        %v11051 = vunpack.c.h.b16 %v10854
        %v11052 = vunpack.c.l.b16 %v10855
        %v11053 = vunpack.c.h.b16 %v10855
        %v11054 = vunpack.c.l.b16 %v10856
        %v11055 = vunpack.c.h.b16 %v10856
        %v11056 = vunpack.c.l.b16 %v10857
        %v11057 = vunpack.c.h.b16 %v10857
        %v11058 = vunpack.c.l.b16 %v10858
        %v11059 = vunpack.c.h.b16 %v10858
        %v11060 = vunpack.c.l.b16 %v10859
        %v11061 = vunpack.c.h.b16 %v10859
        %v11062 = vunpack.c.l.b16 %v10860
        %v11063 = vunpack.c.h.b16 %v10860
        %v11064 = vunpack.c.l.b16 %v10861
        %v11065 = vunpack.c.h.b16 %v10861
        %v11066 = vpack.c.b16 %v10940, %v10938
        %v11067 = vpack.c.b16 %v10941, %v10939
        %v11068 = vpack.c.b16 %v10944, %v10942
        %v11069 = vpack.c.b16 %v10945, %v10943
        %v11070 = vpack.c.b16 %v10948, %v10946
        %v11071 = vpack.c.b16 %v10949, %v10947
        %v11072 = vpack.c.b16 %v10952, %v10950
        %v11073 = vpack.c.b16 %v10953, %v10951
        %v11074 = vpack.c.b16 %v10956, %v10954
        %v11075 = vpack.c.b16 %v10957, %v10955
        %v11076 = vpack.c.b16 %v10960, %v10958
        %v11077 = vpack.c.b16 %v10961, %v10959
        %v11078 = vpack.c.b16 %v10964, %v10962
        %v11079 = vpack.c.b16 %v10965, %v10963
        %v11080 = vpack.c.b16 %v10968, %v10966
        %v11081 = vpack.c.b16 %v10969, %v10967
        %v11082 = vpack.c.b16 %v10972, %v10970
        %v11083 = vpack.c.b16 %v10973, %v10971
        %v11084 = vpack.c.b16 %v10976, %v10974
        %v11085 = vpack.c.b16 %v10977, %v10975
        %v11086 = vpack.c.b16 %v10980, %v10978
        %v11087 = vpack.c.b16 %v10981, %v10979
        %v11088 = vpack.c.b16 %v10984, %v10982
        %v11089 = vpack.c.b16 %v10985, %v10983
        %v11090 = vpack.c.b16 %v10988, %v10986
        %v11091 = vpack.c.b16 %v10989, %v10987
        %v11092 = vpack.c.b16 %v10992, %v10990
        %v11093 = vpack.c.b16 %v10993, %v10991
        %v11094 = vpack.c.b16 %v10996, %v10994
        %v11095 = vpack.c.b16 %v10997, %v10995
        %v11096 = vpack.c.b16 %v11000, %v10998
        %v11097 = vpack.c.b16 %v11001, %v10999
        %v11098 = vpack.c.b16 %v11004, %v11002
        %v11099 = vpack.c.b16 %v11005, %v11003
        %v11100 = vpack.c.b16 %v11008, %v11006
        %v11101 = vpack.c.b16 %v11009, %v11007
        %v11102 = vpack.c.b16 %v11012, %v11010
        %v11103 = vpack.c.b16 %v11013, %v11011
        %v11104 = vpack.c.b16 %v11016, %v11014
        %v11105 = vpack.c.b16 %v11017, %v11015
        %v11106 = vpack.c.b16 %v11020, %v11018
        %v11107 = vpack.c.b16 %v11021, %v11019
        %v11108 = vpack.c.b16 %v11024, %v11022
        %v11109 = vpack.c.b16 %v11025, %v11023
        %v11110 = vpack.c.b16 %v11028, %v11026
        %v11111 = vpack.c.b16 %v11029, %v11027
        %v11112 = vpack.c.b16 %v11032, %v11030
        %v11113 = vpack.c.b16 %v11033, %v11031
        %v11114 = vpack.c.b16 %v11036, %v11034
        %v11115 = vpack.c.b16 %v11037, %v11035
        %v11116 = vpack.c.b16 %v11040, %v11038
        %v11117 = vpack.c.b16 %v11041, %v11039
        %v11118 = vpack.c.b16 %v11044, %v11042
        %v11119 = vpack.c.b16 %v11045, %v11043
        %v11120 = vpack.c.b16 %v11048, %v11046
        %v11121 = vpack.c.b16 %v11049, %v11047
        %v11122 = vpack.c.b16 %v11052, %v11050
        %v11123 = vpack.c.b16 %v11053, %v11051
        %v11124 = vpack.c.b16 %v11056, %v11054
        %v11125 = vpack.c.b16 %v11057, %v11055
        %v11126 = vpack.c.b16 %v11060, %v11058
        %v11127 = vpack.c.b16 %v11061, %v11059
        %v11128 = vpack.c.b16 %v11064, %v11062
        %v11129 = vpack.c.b16 %v11065, %v11063
        %11194 = vmatprep.subr.bf16.mxu0 %v11067
        %11195 = vmatpush1.bf16.msra.mxu0 %v11066
        %11196 = vmatprep.subr.bf16.mxu0 %v11069
        %11197 = vmatpush1.bf16.msra.mxu0 %v11068
        %11198 = vmatprep.subr.bf16.mxu0 %v11071
        %11199 = vmatpush1.bf16.msra.mxu0 %v11070
        %11200 = vmatprep.subr.bf16.mxu0 %v11073
        %11201 = vmatpush1.bf16.msra.mxu0 %v11072
        %11202 = vmatprep.subr.bf16.mxu0 %v11075
        %11203 = vmatpush1.bf16.msra.mxu0 %v11074
        %11204 = vmatprep.subr.bf16.mxu0 %v11077
        %11205 = vmatpush1.bf16.msra.mxu0 %v11076
        %11206 = vmatprep.subr.bf16.mxu0 %v11079
        %11207 = vmatpush1.bf16.msra.mxu0 %v11078
        %11208 = vmatprep.subr.bf16.mxu0 %v11081
        %11209 = vmatpush1.bf16.msra.mxu0 %v11080
        %11210 = vmatprep.subr.bf16.mxu0 %v11083
        %11211 = vmatpush1.bf16.msra.mxu0 %v11082
        %11212 = vmatprep.subr.bf16.mxu0 %v11085
        %11213 = vmatpush1.bf16.msra.mxu0 %v11084
        %11214 = vmatprep.subr.bf16.mxu0 %v11087
        %11215 = vmatpush1.bf16.msra.mxu0 %v11086
        %11216 = vmatprep.subr.bf16.mxu0 %v11089
        %11217 = vmatpush1.bf16.msra.mxu0 %v11088
        %11218 = vmatprep.subr.bf16.mxu0 %v11091
        %11219 = vmatpush1.bf16.msra.mxu0 %v11090
        %11220 = vmatprep.subr.bf16.mxu0 %v11093
        %11221 = vmatpush1.bf16.msra.mxu0 %v11092
        %11222 = vmatprep.subr.bf16.mxu0 %v11095
        %11223 = vmatpush1.bf16.msra.mxu0 %v11094
        %11224 = vmatprep.subr.bf16.mxu0 %v11097
        %11225 = vmatpush1.bf16.msra.mxu0 %v11096
        %11226 = vmatprep.mubr.bf16.mxu0 %v10795
        %11227 = vmatmul.mubr.bf16.gmra.mrb[0].mxu0 %v10794
        %v11228 = vpop.f32.mrb[0].mxu0
        %v11229 = vadd.f32 %v10867, %v11228
        %v11230 = vpop.f32.mrb[0].mxu0
        %v11231 = vadd.f32 %v10871, %v11230
        %v11232 = vpop.f32.mrb[0].mxu0
        %v11233 = vpop.f32.mrb[0].mxu0
        %11234 = vdwg.mxu0
        %11235 = vmatprep.subr.bf16.mxu0 %v11099
        %11236 = vmatpush1.bf16.msra.mxu0 %v11098
        %11237 = vmatprep.subr.bf16.mxu0 %v11101
        %11238 = vmatpush1.bf16.msra.mxu0 %v11100
        %11239 = vmatprep.subr.bf16.mxu0 %v11103
        %11240 = vmatpush1.bf16.msra.mxu0 %v11102
        %11241 = vmatprep.subr.bf16.mxu0 %v11105
        %11242 = vmatpush1.bf16.msra.mxu0 %v11104
        %11243 = vmatprep.subr.bf16.mxu0 %v11107
        %11244 = vmatpush1.bf16.msra.mxu0 %v11106
        %11245 = vmatprep.subr.bf16.mxu0 %v11109
        %11246 = vmatpush1.bf16.msra.mxu0 %v11108
        %11247 = vmatprep.subr.bf16.mxu0 %v11111
        %11248 = vmatpush1.bf16.msra.mxu0 %v11110
        %11249 = vmatprep.subr.bf16.mxu0 %v11113
        %11250 = vmatpush1.bf16.msra.mxu0 %v11112
        %11251 = vmatprep.subr.bf16.mxu0 %v11115
        %11252 = vmatpush1.bf16.msra.mxu0 %v11114
        %11253 = vmatprep.subr.bf16.mxu0 %v11117
        %11254 = vmatpush1.bf16.msra.mxu0 %v11116
        %11255 = vmatprep.subr.bf16.mxu0 %v11119
        %11256 = vmatpush1.bf16.msra.mxu0 %v11118
        %11257 = vmatprep.subr.bf16.mxu0 %v11121
        %11258 = vmatpush1.bf16.msra.mxu0 %v11120
        %11259 = vmatprep.subr.bf16.mxu0 %v11123
        %11260 = vmatpush1.bf16.msra.mxu0 %v11122
        %11261 = vmatprep.subr.bf16.mxu0 %v11125
        %11262 = vmatpush1.bf16.msra.mxu0 %v11124
        %11263 = vmatprep.subr.bf16.mxu0 %v11127
        %11264 = vmatpush1.bf16.msra.mxu0 %v11126
        %11265 = vmatprep.subr.bf16.mxu0 %v11129
        %11266 = vmatpush1.bf16.msra.mxu0 %v11128
        %11267 = vmatprep.mubr.bf16.mxu0 %v10797
        %11268 = vmatmul.mubr.bf16.gmra.mrb[0].mxu0 %v10796
        %v11269 = vpop.f32.mrb[0].mxu0
        %v11270 = vadd.f32 %v11229, %v11269
        %v11271 = vpop.f32.mrb[0].mxu0
        %v11272 = vadd.f32 %v11231, %v11271
        %v11273 = vpop.f32.mrb[0].mxu0
        %v11274 = vpop.f32.mrb[0].mxu0
        %11275 = vdwg.mxu0
        %v11276 = vmax.f32 %v11270, 0.0
        %v11277 = vmax.f32 %v11272, 0.0
        %v11278 = vpack.c.bf16 %v11276, %v11276
        %v11279 = vpack.c.bf16 %v11277, %v11277
        %v11280 = vld [vmem:[%s15] sm:$0xf]
        %v11281 = vld [vmem:[%s15 + $0x4] sm:$0xf]
        %v11282 = vld [vmem:[%s15 + $0x8] sm:$0xf]
        %v11283 = vld [vmem:[%s15 + $0xc] sm:$0xf]
        %v11284 = vld [vmem:[%s15 + $0x10] sm:$0xf]
        %v11285 = vld [vmem:[%s15 + $0x14] sm:$0xf]
        %v11286 = vld [vmem:[%s15 + $0x18] sm:$0xf]
        %v11287 = vld [vmem:[%s15 + $0x1c] sm:$0xf]
        %v11288 = vld [vmem:[%s15 + $0x20] sm:$0xf]
        %v11289 = vld [vmem:[%s15 + $0x24] sm:$0xf]
        %v11290 = vld [vmem:[%s15 + $0x28] sm:$0xf]
        %v11291 = vld [vmem:[%s15 + $0x2c] sm:$0xf]
        %v11292 = vld [vmem:[%s15 + $0x30] sm:$0xf]
        %v11293 = vld [vmem:[%s15 + $0x34] sm:$0xf]
        %v11294 = vld [vmem:[%s15 + $0x38] sm:$0xf]
        %v11295 = vld [vmem:[%s15 + $0x3c] sm:$0xf]
        %v11296 = vld [vmem:[%s15 + $0x40] sm:$0xf]
        %v11297 = vld [vmem:[%s15 + $0x44] sm:$0xf]
        %v11298 = vld [vmem:[%s15 + $0x48] sm:$0xf]
        %v11299 = vld [vmem:[%s15 + $0x4c] sm:$0xf]
        %v11300 = vld [vmem:[%s15 + $0x50] sm:$0xf]
        %v11301 = vld [vmem:[%s15 + $0x54] sm:$0xf]
        %v11302 = vld [vmem:[%s15 + $0x58] sm:$0xf]
        %v11303 = vld [vmem:[%s15 + $0x5c] sm:$0xf]
        %v11304 = vld [vmem:[%s15 + $0x60] sm:$0xf]
        %v11305 = vld [vmem:[%s15 + $0x64] sm:$0xf]
        %v11306 = vld [vmem:[%s15 + $0x68] sm:$0xf]
        %v11307 = vld [vmem:[%s15 + $0x6c] sm:$0xf]
        %v11308 = vld [vmem:[%s15 + $0x70] sm:$0xf]
        %v11309 = vld [vmem:[%s15 + $0x74] sm:$0xf]
        %v11310 = vld [vmem:[%s15 + $0x78] sm:$0xf]
        %v11311 = vld [vmem:[%s15 + $0x7c] sm:$0xf]
        %v11312 = vld [vmem:[%s16] sm:$0x1]
        %v11314 = vlaneseq
        %v11315 = vshrl.u32 %v11314, 7
        %v11316 = vsub.s32 0, %v11315
        %v11317 = vrot.slane %v11312, %v11316
        %v11351 = vunpack.c.l.b16 %v11280
        %v11352 = vunpack.c.l.b16 %v11281
        %v11353 = vunpack.c.l.b16 %v11282
        %v11354 = vunpack.c.l.b16 %v11283
        %v11355 = vunpack.c.l.b16 %v11284
        %v11356 = vunpack.c.l.b16 %v11285
        %v11357 = vunpack.c.l.b16 %v11286
        %v11358 = vunpack.c.l.b16 %v11287
        %v11359 = vunpack.c.l.b16 %v11288
        %v11360 = vunpack.c.l.b16 %v11289
        %v11361 = vunpack.c.l.b16 %v11290
        %v11362 = vunpack.c.l.b16 %v11291
        %v11363 = vunpack.c.l.b16 %v11292
        %v11364 = vunpack.c.l.b16 %v11293
        %v11365 = vunpack.c.l.b16 %v11294
        %v11366 = vunpack.c.l.b16 %v11295
        %v11367 = vunpack.c.l.b16 %v11296
        %v11368 = vunpack.c.l.b16 %v11297
        %v11369 = vunpack.c.l.b16 %v11298
        %v11370 = vunpack.c.l.b16 %v11299
        %v11371 = vunpack.c.l.b16 %v11300
        %v11372 = vunpack.c.l.b16 %v11301
        %v11373 = vunpack.c.l.b16 %v11302
        %v11374 = vunpack.c.l.b16 %v11303
        %v11375 = vunpack.c.l.b16 %v11304
        %v11376 = vunpack.c.l.b16 %v11305
        %v11377 = vunpack.c.l.b16 %v11306
        %v11378 = vunpack.c.l.b16 %v11307
        %v11379 = vunpack.c.l.b16 %v11308
        %v11380 = vunpack.c.l.b16 %v11309
        %v11381 = vunpack.c.l.b16 %v11310
        %v11382 = vunpack.c.l.b16 %v11311
        %v11383 = vpack.c.b16 %v11352, %v11351
        %v11384 = vpack.c.b16 %v11354, %v11353
        %v11385 = vpack.c.b16 %v11356, %v11355
        %v11386 = vpack.c.b16 %v11358, %v11357
        %v11387 = vpack.c.b16 %v11360, %v11359
        %v11388 = vpack.c.b16 %v11362, %v11361
        %v11389 = vpack.c.b16 %v11364, %v11363
        %v11390 = vpack.c.b16 %v11366, %v11365
        %v11391 = vpack.c.b16 %v11368, %v11367
        %v11392 = vpack.c.b16 %v11370, %v11369
        %v11393 = vpack.c.b16 %v11372, %v11371
        %v11394 = vpack.c.b16 %v11374, %v11373
        %v11395 = vpack.c.b16 %v11376, %v11375
        %v11396 = vpack.c.b16 %v11378, %v11377
        %v11397 = vpack.c.b16 %v11380, %v11379
        %v11398 = vpack.c.b16 %v11382, %v11381
        %11415 = vmatprep.subr.bf16.mxu0 0
        %11416 = vmatpush1.bf16.msra.mxu0 %v11383
        %11417 = vmatprep.subr.bf16.mxu0 0
        %11418 = vmatpush1.bf16.msra.mxu0 %v11384
        %11419 = vmatprep.subr.bf16.mxu0 0
        %11420 = vmatpush1.bf16.msra.mxu0 %v11385
        %11421 = vmatprep.subr.bf16.mxu0 0
        %11422 = vmatpush1.bf16.msra.mxu0 %v11386
        %11423 = vmatprep.subr.bf16.mxu0 0
        %11424 = vmatpush1.bf16.msra.mxu0 %v11387
        %11425 = vmatprep.subr.bf16.mxu0 0
        %11426 = vmatpush1.bf16.msra.mxu0 %v11388
        %11427 = vmatprep.subr.bf16.mxu0 0
        %11428 = vmatpush1.bf16.msra.mxu0 %v11389
        %11429 = vmatprep.subr.bf16.mxu0 0
        %11430 = vmatpush1.bf16.msra.mxu0 %v11390
        %11431 = vmatprep.subr.bf16.mxu0 0
        %11432 = vmatpush1.bf16.msra.mxu0 %v11391
        %11433 = vmatprep.subr.bf16.mxu0 0
        %11434 = vmatpush1.bf16.msra.mxu0 %v11392
        %11435 = vmatprep.subr.bf16.mxu0 0
        %11436 = vmatpush1.bf16.msra.mxu0 %v11393
        %11437 = vmatprep.subr.bf16.mxu0 0
        %11438 = vmatpush1.bf16.msra.mxu0 %v11394
        %11439 = vmatprep.subr.bf16.mxu0 0
        %11440 = vmatpush1.bf16.msra.mxu0 %v11395
        %11441 = vmatprep.subr.bf16.mxu0 0
        %11442 = vmatpush1.bf16.msra.mxu0 %v11396
        %11443 = vmatprep.subr.bf16.mxu0 0
        %11444 = vmatpush1.bf16.msra.mxu0 %v11397
        %11445 = vmatprep.subr.bf16.mxu0 0
        %11446 = vmatpush1.bf16.msra.mxu0 %v11398
        %11447 = vmatprep.mubr.bf16.mxu0 %v11279
        %11448 = vmatmul.mubr.bf16.gmra.mrb[0].mxu0 %v11278
        %v11449 = vpop.f32.mrb[0].mxu0
        %v11450 = vadd.f32 %v11317, %v11449
        %v11451 = vpop.f32.mrb[0].mxu0
        %v11452 = vpop.f32.mrb[0].mxu0
        %v11453 = vpop.f32.mrb[0].mxu0
        %11454 = vdwg.mxu0
        %v11455 = vmax.f32 %v11450, 0.0
        %v11456 = vld [vmem:[%s17] sm:$0xff]
        %v11457 = vld [vmem:[%s17 + $0x8] sm:$0xff]
        %v11458 = vld [vmem:[%s17 + $0x10] sm:$0xff]
        %v11459 = vld [vmem:[%s17 + $0x18] sm:$0xff]
        %v11460 = vld [vmem:[%s17 + $0x20] sm:$0xff]
        %v11461 = vld [vmem:[%s17 + $0x28] sm:$0xff]
        %v11462 = vld [vmem:[%s17 + $0x30] sm:$0xff]
        %v11463 = vld [vmem:[%s17 + $0x38] sm:$0xff]
        %v11464 = vld [vmem:[%s17 + $0x40] sm:$0xff]
        %v11465 = vld [vmem:[%s17 + $0x48] sm:$0xff]
        %v11466 = vld [vmem:[%s17 + $0x50] sm:$0xff]
        %v11467 = vld [vmem:[%s17 + $0x58] sm:$0xff]
        %v11468 = vld [vmem:[%s17 + $0x60] sm:$0xff]
        %v11469 = vld [vmem:[%s17 + $0x68] sm:$0xff]
        %v11470 = vld [vmem:[%s17 + $0x70] sm:$0xff]
        %v11471 = vld [vmem:[%s17 + $0x78] sm:$0xff]
        %v11472 = vld [vmem:[%s18] sm:$0x1]
        %v11474 = vlaneseq
        %v11475 = vshrl.u32 %v11474, 7
        %v11476 = vsub.s32 0, %v11475
        %v11477 = vrot.slane %v11472, %v11476
        %11479 = vmatprep.subr.mxu0 0.0
        %11480 = vmatpush1.msra.mxu0 %v11456
        %11481 = vmatprep.subr.mxu0 0.0
        %11482 = vmatpush1.msra.mxu0 %v11457
        %11483 = vmatprep.subr.mxu0 0.0
        %11484 = vmatpush1.msra.mxu0 %v11458
        %11485 = vmatprep.subr.mxu0 0.0
        %11486 = vmatpush1.msra.mxu0 %v11459
        %11487 = vmatprep.subr.mxu0 0.0
        %11488 = vmatpush1.msra.mxu0 %v11460
        %11489 = vmatprep.subr.mxu0 0.0
        %11490 = vmatpush1.msra.mxu0 %v11461
        %11491 = vmatprep.subr.mxu0 0.0
        %11492 = vmatpush1.msra.mxu0 %v11462
        %11493 = vmatprep.subr.mxu0 0.0
        %11494 = vmatpush1.msra.mxu0 %v11463
        %11495 = vmatprep.subr.mxu0 0.0
        %11496 = vmatpush1.msra.mxu0 %v11464
        %11497 = vmatprep.subr.mxu0 0.0
        %11498 = vmatpush1.msra.mxu0 %v11465
        %11499 = vmatprep.subr.mxu0 0.0
        %11500 = vmatpush1.msra.mxu0 %v11466
        %11501 = vmatprep.subr.mxu0 0.0
        %11502 = vmatpush1.msra.mxu0 %v11467
        %11503 = vmatprep.subr.mxu0 0.0
        %11504 = vmatpush1.msra.mxu0 %v11468
        %11505 = vmatprep.subr.mxu0 0.0
        %11506 = vmatpush1.msra.mxu0 %v11469
        %11507 = vmatprep.subr.mxu0 0.0
        %11508 = vmatpush1.msra.mxu0 %v11470
        %11509 = vmatprep.subr.mxu0 0.0
        %11510 = vmatpush1.msra.mxu0 %v11471
        %11511 = vmatprep.subr.mxu0 0.0
        %11512 = vmatpush1.msra.mxu0 0.0
        %11513 = vmatprep.subr.mxu0 0.0
        %11514 = vmatpush1.msra.mxu0 0.0
        %11515 = vmatprep.subr.mxu0 0.0
        %11516 = vmatpush1.msra.mxu0 0.0
        %11517 = vmatprep.subr.mxu0 0.0
        %11518 = vmatpush1.msra.mxu0 0.0
        %11519 = vmatprep.subr.mxu0 0.0
        %11520 = vmatpush1.msra.mxu0 0.0
        %11521 = vmatprep.subr.mxu0 0.0
        %11522 = vmatpush1.msra.mxu0 0.0
        %11523 = vmatprep.subr.mxu0 0.0
        %11524 = vmatpush1.msra.mxu0 0.0
        %11525 = vmatprep.subr.mxu0 0.0
        %11526 = vmatpush1.msra.mxu0 0.0
        %11527 = vmatprep.subr.mxu0 0.0
        %11528 = vmatpush1.msra.mxu0 0.0
        %11529 = vmatprep.subr.mxu0 0.0
        %11530 = vmatpush1.msra.mxu0 0.0
        %11531 = vmatprep.subr.mxu0 0.0
        %11532 = vmatpush1.msra.mxu0 0.0
        %11533 = vmatprep.subr.mxu0 0.0
        %11534 = vmatpush1.msra.mxu0 0.0
        %11535 = vmatprep.subr.mxu0 0.0
        %11536 = vmatpush1.msra.mxu0 0.0
        %11537 = vmatprep.subr.mxu0 0.0
        %11538 = vmatpush1.msra.mxu0 0.0
        %11539 = vmatprep.subr.mxu0 0.0
        %11540 = vmatpush1.msra.mxu0 0.0
        %11541 = vmatprep.subr.mxu0 0.0
        %11542 = vmatpush1.msra.mxu0 0.0
        %11543 = vmatprep.mubr.f32.mxu0 0.0
        %11544 = vmatmul.mubr.f32.gmra.mrb[0].mxu0 %v11455
        %v11545 = vpop.f32.mrb[0].mxu0
        %v11546 = vadd.f32 %v11477, %v11545
        %v11547 = vpop.f32.mrb[0].mxu0
        %11548 = vdwg.mxu0
        %v11549 = vtanh.pop %v11546
        %11550 = vst [vmem:[%s596] sm:$0xff] %v11549
        %s11551 = sand.u32 %s445, 1
        %s11552 = scalar_lea.sflag [#allocation3], %s11551
        %s11553 = sand.u32 %s445, 1
        %s11554 = smul.addr %s11553, 8
        %s11555 = scalar_lea.vmem [#allocation2], %s11554
        // Predicated region
        $region97: #{encoder_forward.1} parent=95 // pred_check
          %p11556 = pneg %p455
        $region98: #{encoder_forward.1} parent=95 // pred_check_branch
          %11558 = sbr.rel (%p11556) target = $region100
        $region99: #{encoder_forward.1} parent=95 // pred_region
          %s11560 = ssub.s32 128, 128
          %11561 = vsyncadd %s11552, %s11560
          %s11562 = smul.addr %s33, 128
          %s11563 = scalar_lea.hbm %s19, %s11562
          %s11565 = sshll.u32 %s11555, 4
          %s11566 = int_to_ptr.vmem [resolvable:$true] %s11565
          %11568 = dma.vmem_to_hbm [thread:$0]  %s11566, 128, %s11563, %s11552
        $region100: #{encoder_forward.1} parent=95 // pred_fallthru
          _
      $region96: #{encoder_forward.1} parent=5 // pred_fallthru
        _
      %p11569 = scmp.le.s32.totalorder 2, %s28
      // Predicated region
      $region101: #{encoder_forward.1} parent=5 // pred_check
        %p11570 = pneg %p11569
      $region102: #{encoder_forward.1} parent=5 // pred_check_branch
        %11572 = sbr.rel (%p11570) target = $region104
      $region103: #{encoder_forward.1} parent=5 // pred_region
        %s11573 = ssub.s32 %s28, 2
        // Predicated region
        $region105: #{encoder_forward.1} parent=103 // pred_check
          %p11574 = pneg %p461
        $region106: #{encoder_forward.1} parent=103 // pred_check_branch
          %11576 = sbr.rel (%p11574) target = $region108
        $region107: #{encoder_forward.1} parent=103 // pred_region
          %s11577 = sand.u32 %s446, 1
          %s11578 = scalar_lea.sflag [#allocation3], %s11577
          %s11579 = sand.u32 %s446, 1
          %s11580 = smul.addr %s11579, 8
          %s11581 = scalar_lea.vmem [#allocation2], %s11580
          %11582 = dma.done %s11578, 128
        $region108: #{encoder_forward.1} parent=103 // pred_fallthru
          _
      $region104: #{encoder_forward.1} parent=5 // pred_fallthru
        _
    $region6: #{encoder_forward.1} parent=1 // loop_footer
      %s32 = sadd.s32 1, %s28
    $region7: #{encoder_forward.1} parent=1 // loop_footer_branch
      %27 = sbr.rel target = $region3
    $region8: #{encoder_forward.1} parent=1 // loop_exit
      _
    %11583 = vsyncpa [#allocation3], 1
    %s11584 = scalar_lea.sflag [#allocation3], 1
    %11585 = vsyncpa %s11584, 1

</llo_original>
